<compile_context>
chip_gen: v7x
topology: tpu7x:2x2x1
jax: 0.10.0
libtpu: 0.0.40
codegen_flags: <defaults>
</compile_context>

<pallas_src>
import functools

import jax
import jax.numpy as jnp
from jax.experimental import pallas as pl
from jax.experimental.pallas import tpu as pltpu

C_STEM = 64        # stem output channels
C_EXP = 256        # MBConv expanded channels (expand ratio 4)
C_SE = 16          # squeeze-excite bottleneck
C_HEAD = 2560      # EfficientNet-B7 head feature width (matches _fc in_features)
N_CLASSES = 350    # replaced classifier: nn.Linear(2560, 350)
N_CLASSES_PAD = 384  # lane-dense (multiple of 128) classifier width

_VMEM = pl.BlockSpec(memory_space=pltpu.MemorySpace.VMEM)


def _row_tile(total, cap=512):
    """Largest row-tile <= cap that divides `total` (multiple of 8 if possible)."""
    if total <= cap:
        return total
    for t in range(cap, 7, -8):
        if total % t == 0:
            return t
    return total  # TODO(synk): pad ragged row counts instead of falling back.


# ---------------------------------------------------------------------------
# Kernel 1: stem 3x3 conv (as im2col matmul) + swish, fused with expand 1x1 +
# swish.  Row-tiled over P = N*Ho*Wo; weights resident via constant index_map.
# ---------------------------------------------------------------------------
def _stem_expand_kernel(pm_ref, sw_ref, sb_ref, ew_ref, eb_ref, h_ref, e_ref):
    x = pm_ref[...]                                                   # (T, 27) bf16
    y = jnp.dot(x, sw_ref[...], preferred_element_type=jnp.float32)
    y = y + sb_ref[...]
    y = y * jax.nn.sigmoid(y)                                         # swish (f32)
    h_ref[...] = y.astype(h_ref.dtype)                                # (T, 64)

    z = jnp.dot(y.astype(jnp.bfloat16), ew_ref[...],
                preferred_element_type=jnp.float32)
    z = z + eb_ref[...]
    z = z * jax.nn.sigmoid(z)                                         # swish (f32)
    e_ref[...] = z.astype(e_ref.dtype)                                # (T, 256)


def stem_expand(pm, params):
    P, K = pm.shape
    tp = _row_tile(P)
    return pl.pallas_call(
        _stem_expand_kernel,
        grid=(P // tp,),
        in_specs=[
            pl.BlockSpec((tp, K), lambda i: (i, 0)),
            pl.BlockSpec((K, C_STEM), lambda i: (0, 0)),
            pl.BlockSpec((1, C_STEM), lambda i: (0, 0)),
            pl.BlockSpec((C_STEM, C_EXP), lambda i: (0, 0)),
            pl.BlockSpec((1, C_EXP), lambda i: (0, 0)),
        ],
        out_specs=(
            pl.BlockSpec((tp, C_STEM), lambda i: (i, 0)),
            pl.BlockSpec((tp, C_EXP), lambda i: (i, 0)),
        ),
        out_shape=(
            jax.ShapeDtypeStruct((P, C_STEM), jnp.bfloat16),
            jax.ShapeDtypeStruct((P, C_EXP), jnp.bfloat16),
        ),
        compiler_params=pltpu.CompilerParams(dimension_semantics=("parallel",)),
    )(pm, params["stem_w"], params["stem_b"], params["exp_w"], params["exp_b"])


# ---------------------------------------------------------------------------
# Kernel 2: 3x3 depthwise conv + swish with the SE global-average squeeze
# folded in.  Taps are formed by static slices of the padded block in VMEM
# (no 9x im2col HBM materialization).  Grid over batch (parallel).
# TODO(synk): for large spatial sizes tile H with a 1-row halo instead of a
# whole padded image per grid step.
# ---------------------------------------------------------------------------
def _dw_se_kernel(ep_ref, w_ref, b_ref, d_ref, sq_ref):
    hp, wp, c = ep_ref.shape[1], ep_ref.shape[2], ep_ref.shape[3]
    ho, wo = hp - 2, wp - 2

    ep = ep_ref[0]                                   # (Hp, Wp, C) bf16
    w = w_ref[...]                                   # (9, 1, 1, C) f32
    acc = ep[0:ho, 0:wo, :].astype(jnp.float32) * w[0]
    for k in range(1, 9):
        di, dj = k // 3, k % 3
        acc = acc + ep[di:di + ho, dj:dj + wo, :].astype(jnp.float32) * w[k]

    y = acc + b_ref[...]                             # (Ho, Wo, C) + (1, 1, C)
    y = y * jax.nn.sigmoid(y)                        # swish (f32)

    y2 = y.reshape(ho * wo, c)
    d_ref[...] = y2.reshape(1, ho * wo, c).astype(d_ref.dtype)
    sq_ref[...] = (jnp.sum(y2, axis=0, keepdims=True)
                   * (1.0 / (ho * wo))).reshape(1, 1, c)


def depthwise_se_squeeze(e_pad, params):
    n, hp, wp, c = e_pad.shape
    ho, wo = hp - 2, wp - 2
    hw = ho * wo
    return pl.pallas_call(
        _dw_se_kernel,
        grid=(n,),
        in_specs=[
            pl.BlockSpec((1, hp, wp, c), lambda b: (b, 0, 0, 0)),
            pl.BlockSpec((9, 1, 1, c), lambda b: (0, 0, 0, 0)),
            pl.BlockSpec((1, 1, c), lambda b: (0, 0, 0)),
        ],
        out_specs=(
            pl.BlockSpec((1, hw, c), lambda b: (b, 0, 0)),
            pl.BlockSpec((1, 1, c), lambda b: (b, 0, 0)),
        ),
        out_shape=(
            jax.ShapeDtypeStruct((n, hw, c), jnp.bfloat16),
            jax.ShapeDtypeStruct((n, 1, c), jnp.float32),
        ),
        compiler_params=pltpu.CompilerParams(dimension_semantics=("parallel",)),
    )(e_pad, params["dw_w"], params["dw_b"])


# ---------------------------------------------------------------------------
# Kernel 3: SE bottleneck (256 -> 16 swish -> 256 sigmoid), tiny, whole-array.
# ---------------------------------------------------------------------------
def _se_fc_kernel(sq_ref, w1_ref, b1_ref, w2_ref, b2_ref, o_ref):
    n = sq_ref.shape[0]
    x = sq_ref[...].reshape(n, -1)                               # (N, 256) f32
    y = jnp.dot(x.astype(jnp.bfloat16), w1_ref[...],
                preferred_element_type=jnp.float32) + b1_ref[...]
    y = y * jax.nn.sigmoid(y)                                    # swish
    z = jnp.dot(y.astype(jnp.bfloat16), w2_ref[...],
                preferred_element_type=jnp.float32) + b2_ref[...]
    o_ref[...] = jax.nn.sigmoid(z).reshape(n, 1, -1)             # (N, 1, 256)


def se_fc(sq, params):
    n = sq.shape[0]
    return pl.pallas_call(
        _se_fc_kernel,
        in_specs=[_VMEM, _VMEM, _VMEM, _VMEM, _VMEM],
        out_specs=_VMEM,
        out_shape=jax.ShapeDtypeStruct((n, 1, C_EXP), jnp.float32),
    )(sq, params["se1_w"], params["se1_b"], params["se2_w"], params["se2_b"])


# ---------------------------------------------------------------------------
# Kernel 4 (the big fusion): SE scaling * project 1x1 + residual + head 1x1
# + swish + global average pool.  Grid (N, HW//T); the (N, 1, 2560) pooled
# output is the accumulator (same block across the reduction axis), so the
# (P, 2560) and (P, 64) activations never hit HBM.
# ---------------------------------------------------------------------------
def _se_proj_head_pool_kernel(d_ref, s2_ref, h_ref, pw_ref, pb_ref,
                              hw_ref, hb_ref, o_ref, *, inv_hw):
    s = pl.program_id(1)

    @pl.when(s == 0)
    def _():
        o_ref[...] = jnp.zeros_like(o_ref)

    scale = s2_ref[...].reshape(1, -1)                                # (1, 256) f32
    d = d_ref[0].astype(jnp.float32) * scale                          # SE scaling
    pr = jnp.dot(d.astype(jnp.bfloat16), pw_ref[...],
                 preferred_element_type=jnp.float32)                  # (T, 64)
    pr = pr + pb_ref[...] + h_ref[0].astype(jnp.float32)              # bias + skip
    ft = jnp.dot(pr.astype(jnp.bfloat16), hw_ref[...],
                 preferred_element_type=jnp.float32)                  # (T, 2560)
    ft = ft + hb_ref[...]
    ft = ft * jax.nn.sigmoid(ft)                                      # swish (f32)
    o_ref[...] += (jnp.sum(ft, axis=0, keepdims=True) * inv_hw).reshape(1, 1, -1)


def se_proj_head_pool(d, s2, h3, params):
    n, hw, _ = d.shape
    t = _row_tile(hw)
    return pl.pallas_call(
        functools.partial(_se_proj_head_pool_kernel, inv_hw=1.0 / hw),
        grid=(n, hw // t),
        in_specs=[
            pl.BlockSpec((1, t, C_EXP), lambda b, s: (b, s, 0)),
            pl.BlockSpec((1, 1, C_EXP), lambda b, s: (b, 0, 0)),
            pl.BlockSpec((1, t, C_STEM), lambda b, s: (b, s, 0)),
            pl.BlockSpec((C_EXP, C_STEM), lambda b, s: (0, 0)),
            pl.BlockSpec((1, C_STEM), lambda b, s: (0, 0)),
            pl.BlockSpec((C_STEM, C_HEAD), lambda b, s: (0, 0)),
            pl.BlockSpec((1, C_HEAD), lambda b, s: (0, 0)),
        ],
        out_specs=pl.BlockSpec((1, 1, C_HEAD), lambda b, s: (b, 0, 0)),
        out_shape=jax.ShapeDtypeStruct((n, 1, C_HEAD), jnp.float32),
        compiler_params=pltpu.CompilerParams(
            dimension_semantics=("parallel", "arbitrary")),
    )(d, s2, h3, params["proj_w"], params["proj_b"],
      params["head_w"], params["head_b"])


# ---------------------------------------------------------------------------
# Kernel 5: classifier Linear(2560, 350) padded to lane-dense 384 columns.
# ---------------------------------------------------------------------------
def _fc_kernel(x_ref, w_ref, b_ref, o_ref):
    y = jnp.dot(x_ref[...].astype(jnp.bfloat16), w_ref[...],
                preferred_element_type=jnp.float32)
    o_ref[...] = y + b_ref[...]


def fc_head(pooled, params):
    n = pooled.shape[0]
    return pl.pallas_call(
        _fc_kernel,
        in_specs=[_VMEM, _VMEM, _VMEM],
        out_specs=_VMEM,
        out_shape=jax.ShapeDtypeStruct((n, N_CLASSES_PAD), jnp.float32),
    )(pooled, params["fc_w"], params["fc_b"])


# ---------------------------------------------------------------------------
# Plain-JAX glue: im2col for the 3-channel stem only (tiny), pad for the
# depthwise halo, layout transposes/reshapes.
# ---------------------------------------------------------------------------
def im2col_stem(x, k, stride, pad):
    """x: (N, H, W, C) -> ((N*Ho*Wo, k*k*C), Ho, Wo)."""
    x = jnp.pad(x, ((0, 0), (pad, pad), (pad, pad), (0, 0)))
    n, hp, wp, c = x.shape
    ho = (hp - k) // stride + 1
    wo = (wp - k) // stride + 1
    taps = []
    for di in range(k):
        for dj in range(k):
            taps.append(x[:, di:di + stride * ho:stride, dj:dj + stride * wo:stride, :])
    pm = jnp.stack(taps, axis=3)                       # (N, Ho, Wo, k*k, C)
    return pm.reshape(n * ho * wo, k * k * c), ho, wo


def init_params(key):
    keys = jax.random.split(key, 16)

    def nrm(k, shape, scale=0.05, dtype=jnp.float32):
        return (jax.random.normal(k, shape, dtype=jnp.float32) * scale).astype(dtype)

    fc_w = nrm(keys[14], (C_HEAD, N_CLASSES))
    fc_b = nrm(keys[15], (N_CLASSES,), 0.01)

    # BN affine params are folded into conv weight/bias (eval-mode semantics).
    # MXU weights in bf16; biases / depthwise (VPU) weights in f32.
    return {
        "stem_w": nrm(keys[0], (3 * 3 * 3, C_STEM), dtype=jnp.bfloat16),
        "stem_b": nrm(keys[1], (1, C_STEM), 0.01),
        "exp_w": nrm(keys[2], (C_STEM, C_EXP), dtype=jnp.bfloat16),
        "exp_b": nrm(keys[3], (1, C_EXP), 0.01),
        "dw_w": nrm(keys[4], (9, 1, 1, C_EXP)),
        "dw_b": nrm(keys[5], (1, 1, C_EXP), 0.01),
        "se1_w": nrm(keys[6], (C_EXP, C_SE), dtype=jnp.bfloat16),
        "se1_b": nrm(keys[7], (1, C_SE), 0.01),
        "se2_w": nrm(keys[8], (C_SE, C_EXP), dtype=jnp.bfloat16),
        "se2_b": nrm(keys[9], (1, C_EXP), 0.01),
        "proj_w": nrm(keys[10], (C_EXP, C_STEM), dtype=jnp.bfloat16),
        "proj_b": nrm(keys[11], (1, C_STEM), 0.01),
        "head_w": nrm(keys[12], (C_STEM, C_HEAD), dtype=jnp.bfloat16),
        "head_b": nrm(keys[13], (1, C_HEAD), 0.01),
        "fc_w": jnp.pad(fc_w, ((0, 0), (0, N_CLASSES_PAD - N_CLASSES))).astype(jnp.bfloat16),
        "fc_b": jnp.pad(fc_b, (0, N_CLASSES_PAD - N_CLASSES)).reshape(1, -1),
    }


def efficientnet_forward(x_nchw, params):
    """x_nchw: (N, 3, H, W) float32 -> logits (N, 350)."""
    n = x_nchw.shape[0]
    x = jnp.transpose(x_nchw, (0, 2, 3, 1)).astype(jnp.float32)   # NCHW -> NHWC

    # --- stem 3x3 s2 + swish fused with expand 1x1 + swish ---
    pm, ho, wo = im2col_stem(x, k=3, stride=2, pad=1)             # (P, 27)
    hw = ho * wo
    h, e = stem_expand(pm.astype(jnp.bfloat16), params)           # (P,64), (P,256) bf16

    # --- depthwise 3x3 + swish fused with SE squeeze (global avg) ---
    e_pad = jnp.pad(e.reshape(n, ho, wo, C_EXP),
                    ((0, 0), (1, 1), (1, 1), (0, 0)))             # halo for 3x3
    d, sq = depthwise_se_squeeze(e_pad, params)                   # (N,HW,256), (N,1,256)

    # --- SE bottleneck FCs ---
    s2 = se_fc(sq, params)                                        # (N,1,256) f32

    # --- SE scale + project + residual + head 1x1 + swish + global avg pool ---
    pooled = se_proj_head_pool(d, s2, h.reshape(n, hw, C_STEM), params)  # (N,1,2560)

    # --- classifier Linear(2560, 350) (padded to 384 lanes, sliced back) ---
    logits = fc_head(pooled.reshape(n, C_HEAD), params)           # (N, 384)
    return logits[:, :N_CLASSES]                                  # (N, 350)


if __name__ == "__main__":
    key = jax.random.PRNGKey(0)
    pkey, xkey = jax.random.split(key)
    params = init_params(pkey)

    # Small synthetic image batch, NCHW like the PyTorch module.
    x = jax.random.normal(xkey, (2, 3, 16, 16), dtype=jnp.float32)

    fwd = jax.jit(lambda img: efficientnet_forward(img, params))
    out = fwd(x)
    jax.block_until_ready(out)

    assert out.shape == (2, N_CLASSES), out.shape
    assert out.dtype == jnp.float32
    print("KERNEL_OK")
</pallas_src>

<mosaic_0001>
module attributes {stable_mosaic.version = 11 : i64} {
  func.func @_stem_expand_kernel(%arg0: i32, %arg1: memref<128x27xbf16, #tpu.memory_space<vmem>>, %arg2: memref<27x64xbf16, #tpu.memory_space<vmem>>, %arg3: memref<1x64xf32, #tpu.memory_space<vmem>>, %arg4: memref<64x256xbf16, #tpu.memory_space<vmem>>, %arg5: memref<1x256xf32, #tpu.memory_space<vmem>>, %arg6: memref<128x64xbf16, #tpu.memory_space<vmem>>, %arg7: memref<128x256xbf16, #tpu.memory_space<vmem>>) attributes {dimension_semantics = [#tpu.dimension_semantics<parallel>], iteration_bounds = array<i64: 1>, scalar_prefetch = 0 : i64, scratch_operands = 0 : i64, tpu.core_type = #tpu.core_type<tc>, window_params = [{transform_indices = @transform_0, window_bounds = array<i64: 128, 27>}, {pipeline_mode = #tpu.pipeline_mode<synchronous>, transform_indices = @transform_1, window_bounds = array<i64: 27, 64>}, {pipeline_mode = #tpu.pipeline_mode<synchronous>, transform_indices = @transform_2, window_bounds = array<i64: 1, 64>}, {pipeline_mode = #tpu.pipeline_mode<synchronous>, transform_indices = @transform_3, window_bounds = array<i64: 64, 256>}, {pipeline_mode = #tpu.pipeline_mode<synchronous>, transform_indices = @transform_4, window_bounds = array<i64: 1, 256>}, {transform_indices = @transform_5, window_bounds = array<i64: 128, 64>}, {transform_indices = @transform_6, window_bounds = array<i64: 128, 256>}]} {
    %c0 = arith.constant 0 : index
    %c0_0 = arith.constant 0 : index
    %0 = vector.load %arg1[%c0, %c0_0] : memref<128x27xbf16, #tpu.memory_space<vmem>>, vector<128x27xbf16>
    %c0_1 = arith.constant 0 : index
    %c0_2 = arith.constant 0 : index
    %1 = vector.load %arg2[%c0_1, %c0_2] : memref<27x64xbf16, #tpu.memory_space<vmem>>, vector<27x64xbf16>
    %cst = arith.constant dense<0.000000e+00> : vector<128x64xf32>
    %2 = tpu.matmul %0, %1, %cst {dimension_numbers = #tpu.dot_dimension_numbers<[1], [0], [0], [1], [0, 0, 1, 1], [], []>} : vector<128x27xbf16>, vector<27x64xbf16>, vector<128x64xf32> -> vector<128x64xf32>
    %c0_3 = arith.constant 0 : index
    %c0_4 = arith.constant 0 : index
    %3 = vector.load %arg3[%c0_3, %c0_4] : memref<1x64xf32, #tpu.memory_space<vmem>>, vector<1x64xf32>
    %4 = vector.broadcast %3 : vector<1x64xf32> to vector<128x64xf32>
    %5 = arith.addf %2, %4 : vector<128x64xf32>
    %6 = arith.negf %5 : vector<128x64xf32>
    %7 = math.exp %6 : vector<128x64xf32>
    %cst_5 = arith.constant 1.000000e+00 : f32
    %8 = vector.broadcast %cst_5 : f32 to vector<128x64xf32>
    %9 = arith.addf %8, %7 : vector<128x64xf32>
    %10 = arith.divf %8, %9 : vector<128x64xf32>
    %11 = arith.mulf %5, %10 : vector<128x64xf32>
    %12 = arith.truncf %11 : vector<128x64xf32> to vector<128x64xbf16>
    %c0_6 = arith.constant 0 : index
    %c0_7 = arith.constant 0 : index
    %13 = vector.load %arg6[%c0_6, %c0_7] : memref<128x64xbf16, #tpu.memory_space<vmem>>, vector<128x64xbf16>
    tpu.vector_store %arg6[%c0_6, %c0_7], %12 {strides = array<i32>} : memref<128x64xbf16, #tpu.memory_space<vmem>>, vector<128x64xbf16>,
    %14 = arith.truncf %11 : vector<128x64xf32> to vector<128x64xbf16>
    %c0_8 = arith.constant 0 : index
    %c0_9 = arith.constant 0 : index
    %15 = vector.load %arg4[%c0_8, %c0_9] : memref<64x256xbf16, #tpu.memory_space<vmem>>, vector<64x256xbf16>
    %cst_10 = arith.constant dense<0.000000e+00> : vector<128x256xf32>
    %16 = tpu.matmul %14, %15, %cst_10 {dimension_numbers = #tpu.dot_dimension_numbers<[1], [0], [0], [1], [0, 0, 1, 1], [], []>} : vector<128x64xbf16>, vector<64x256xbf16>, vector<128x256xf32> -> vector<128x256xf32>
    %c0_11 = arith.constant 0 : index
    %c0_12 = arith.constant 0 : index
    %17 = vector.load %arg5[%c0_11, %c0_12] : memref<1x256xf32, #tpu.memory_space<vmem>>, vector<1x256xf32>
    %18 = vector.broadcast %17 : vector<1x256xf32> to vector<128x256xf32>
    %19 = arith.addf %16, %18 : vector<128x256xf32>
    %20 = arith.negf %19 : vector<128x256xf32>
    %21 = math.exp %20 : vector<128x256xf32>
    %cst_13 = arith.constant 1.000000e+00 : f32
    %22 = vector.broadcast %cst_13 : f32 to vector<128x256xf32>
    %23 = arith.addf %22, %21 : vector<128x256xf32>
    %24 = arith.divf %22, %23 : vector<128x256xf32>
    %25 = arith.mulf %19, %24 : vector<128x256xf32>
    %26 = arith.truncf %25 : vector<128x256xf32> to vector<128x256xbf16>
    %c0_14 = arith.constant 0 : index
    %c0_15 = arith.constant 0 : index
    %27 = vector.load %arg7[%c0_14, %c0_15] : memref<128x256xbf16, #tpu.memory_space<vmem>>, vector<128x256xbf16>
    tpu.vector_store %arg7[%c0_14, %c0_15], %26 {strides = array<i32>} : memref<128x256xbf16, #tpu.memory_space<vmem>>, vector<128x256xbf16>,
    return
  }
  func.func @transform_0(%arg0: i32) -> (i32, i32) {
    %c0_i32 = arith.constant 0 : i32
    %c0_i32_0 = arith.constant 0 : i32
    return %arg0, %c0_i32 : i32, i32
  }
  func.func @transform_1(%arg0: i32) -> (i32, i32) {
    %c0_i32 = arith.constant 0 : i32
    %c0_i32_0 = arith.constant 0 : i32
    %c0_i32_1 = arith.constant 0 : i32
    return %c0_i32, %c0_i32_0 : i32, i32
  }
  func.func @transform_2(%arg0: i32) -> (i32, i32) {
    %c0_i32 = arith.constant 0 : i32
    %c0_i32_0 = arith.constant 0 : i32
    %c0_i32_1 = arith.constant 0 : i32
    return %c0_i32, %c0_i32_0 : i32, i32
  }
  func.func @transform_3(%arg0: i32) -> (i32, i32) {
    %c0_i32 = arith.constant 0 : i32
    %c0_i32_0 = arith.constant 0 : i32
    %c0_i32_1 = arith.constant 0 : i32
    return %c0_i32, %c0_i32_0 : i32, i32
  }
  func.func @transform_4(%arg0: i32) -> (i32, i32) {
    %c0_i32 = arith.constant 0 : i32
    %c0_i32_0 = arith.constant 0 : i32
    %c0_i32_1 = arith.constant 0 : i32
    return %c0_i32, %c0_i32_0 : i32, i32
  }
  func.func @transform_5(%arg0: i32) -> (i32, i32) {
    %c0_i32 = arith.constant 0 : i32
    %c0_i32_0 = arith.constant 0 : i32
    return %arg0, %c0_i32 : i32, i32
  }
  func.func @transform_6(%arg0: i32) -> (i32, i32) {
    %c0_i32 = arith.constant 0 : i32
    %c0_i32_0 = arith.constant 0 : i32
    return %arg0, %c0_i32 : i32, i32
  }
}

module attributes {stable_mosaic.version = 11 : i64} {
  func.func @_dw_se_kernel(%arg0: i32, %arg1: memref<1x10x10x256xbf16, #tpu.memory_space<vmem>>, %arg2: memref<9x1x1x256xf32, #tpu.memory_space<vmem>>, %arg3: memref<1x1x256xf32, #tpu.memory_space<vmem>>, %arg4: memref<1x64x256xbf16, #tpu.memory_space<vmem>>, %arg5: memref<1x1x256xf32, #tpu.memory_space<vmem>>) attributes {dimension_semantics = [#tpu.dimension_semantics<parallel>], iteration_bounds = array<i64: 2>, scalar_prefetch = 0 : i64, scratch_operands = 0 : i64, tpu.core_type = #tpu.core_type<tc>, window_params = [{transform_indices = @transform_0, window_bounds = array<i64: 1, 10, 10, 256>}, {pipeline_mode = #tpu.pipeline_mode<synchronous>, transform_indices = @transform_1, window_bounds = array<i64: 9, 1, 1, 256>}, {pipeline_mode = #tpu.pipeline_mode<synchronous>, transform_indices = @transform_2, window_bounds = array<i64: 1, 1, 256>}, {transform_indices = @transform_3, window_bounds = array<i64: 1, 64, 256>}, {transform_indices = @transform_4, window_bounds = array<i64: 1, 1, 256>}]} {
    %c0 = arith.constant 0 : index
    %c0_0 = arith.constant 0 : index
    %c0_1 = arith.constant 0 : index
    %c0_2 = arith.constant 0 : index
    %0 = vector.load %arg1[%c0, %c0_0, %c0_1, %c0_2] : memref<1x10x10x256xbf16, #tpu.memory_space<vmem>>, vector<1x10x10x256xbf16>
    %1 = vector.shape_cast %0 : vector<1x10x10x256xbf16> to vector<10x10x256xbf16>
    %c0_3 = arith.constant 0 : index
    %c0_4 = arith.constant 0 : index
    %c0_5 = arith.constant 0 : index
    %c0_6 = arith.constant 0 : index
    %2 = vector.load %arg2[%c0_3, %c0_4, %c0_5, %c0_6] : memref<9x1x1x256xf32, #tpu.memory_space<vmem>>, vector<9x1x1x256xf32>
    %3 = vector.extract_strided_slice %1 {offsets = [0, 0, 0], sizes = [8, 8, 256], strides = [1, 1, 1]} : vector<10x10x256xbf16> to vector<8x8x256xbf16>
    %4 = arith.extf %3 : vector<8x8x256xbf16> to vector<8x8x256xf32>
    %5 = vector.extract_strided_slice %2 {offsets = [0, 0, 0, 0], sizes = [1, 1, 1, 256], strides = [1, 1, 1, 1]} : vector<9x1x1x256xf32> to vector<1x1x1x256xf32>
    %6 = vector.shape_cast %5 : vector<1x1x1x256xf32> to vector<1x1x256xf32>
    %7 = vector.broadcast %6 : vector<1x1x256xf32> to vector<8x8x256xf32>
    %8 = arith.mulf %4, %7 : vector<8x8x256xf32>
    %9 = vector.extract_strided_slice %1 {offsets = [0, 1, 0], sizes = [8, 8, 256], strides = [1, 1, 1]} : vector<10x10x256xbf16> to vector<8x8x256xbf16>
    %10 = arith.extf %9 : vector<8x8x256xbf16> to vector<8x8x256xf32>
    %11 = vector.extract_strided_slice %2 {offsets = [1, 0, 0, 0], sizes = [1, 1, 1, 256], strides = [1, 1, 1, 1]} : vector<9x1x1x256xf32> to vector<1x1x1x256xf32>
    %12 = vector.shape_cast %11 : vector<1x1x1x256xf32> to vector<1x1x256xf32>
    %13 = vector.broadcast %12 : vector<1x1x256xf32> to vector<8x8x256xf32>
    %14 = arith.mulf %10, %13 : vector<8x8x256xf32>
    %15 = arith.addf %8, %14 : vector<8x8x256xf32>
    %16 = vector.extract_strided_slice %1 {offsets = [0, 2, 0], sizes = [8, 8, 256], strides = [1, 1, 1]} : vector<10x10x256xbf16> to vector<8x8x256xbf16>
    %17 = arith.extf %16 : vector<8x8x256xbf16> to vector<8x8x256xf32>
    %18 = vector.extract_strided_slice %2 {offsets = [2, 0, 0, 0], sizes = [1, 1, 1, 256], strides = [1, 1, 1, 1]} : vector<9x1x1x256xf32> to vector<1x1x1x256xf32>
    %19 = vector.shape_cast %18 : vector<1x1x1x256xf32> to vector<1x1x256xf32>
    %20 = vector.broadcast %19 : vector<1x1x256xf32> to vector<8x8x256xf32>
    %21 = arith.mulf %17, %20 : vector<8x8x256xf32>
    %22 = arith.addf %15, %21 : vector<8x8x256xf32>
    %23 = vector.extract_strided_slice %1 {offsets = [1, 0, 0], sizes = [8, 8, 256], strides = [1, 1, 1]} : vector<10x10x256xbf16> to vector<8x8x256xbf16>
    %24 = arith.extf %23 : vector<8x8x256xbf16> to vector<8x8x256xf32>
    %25 = vector.extract_strided_slice %2 {offsets = [3, 0, 0, 0], sizes = [1, 1, 1, 256], strides = [1, 1, 1, 1]} : vector<9x1x1x256xf32> to vector<1x1x1x256xf32>
    %26 = vector.shape_cast %25 : vector<1x1x1x256xf32> to vector<1x1x256xf32>
    %27 = vector.broadcast %26 : vector<1x1x256xf32> to vector<8x8x256xf32>
    %28 = arith.mulf %24, %27 : vector<8x8x256xf32>
    %29 = arith.addf %22, %28 : vector<8x8x256xf32>
    %30 = vector.extract_strided_slice %1 {offsets = [1, 1, 0], sizes = [8, 8, 256], strides = [1, 1, 1]} : vector<10x10x256xbf16> to vector<8x8x256xbf16>
    %31 = arith.extf %30 : vector<8x8x256xbf16> to vector<8x8x256xf32>
    %32 = vector.extract_strided_slice %2 {offsets = [4, 0, 0, 0], sizes = [1, 1, 1, 256], strides = [1, 1, 1, 1]} : vector<9x1x1x256xf32> to vector<1x1x1x256xf32>
    %33 = vector.shape_cast %32 : vector<1x1x1x256xf32> to vector<1x1x256xf32>
    %34 = vector.broadcast %33 : vector<1x1x256xf32> to vector<8x8x256xf32>
    %35 = arith.mulf %31, %34 : vector<8x8x256xf32>
    %36 = arith.addf %29, %35 : vector<8x8x256xf32>
    %37 = vector.extract_strided_slice %1 {offsets = [1, 2, 0], sizes = [8, 8, 256], strides = [1, 1, 1]} : vector<10x10x256xbf16> to vector<8x8x256xbf16>
    %38 = arith.extf %37 : vector<8x8x256xbf16> to vector<8x8x256xf32>
    %39 = vector.extract_strided_slice %2 {offsets = [5, 0, 0, 0], sizes = [1, 1, 1, 256], strides = [1, 1, 1, 1]} : vector<9x1x1x256xf32> to vector<1x1x1x256xf32>
    %40 = vector.shape_cast %39 : vector<1x1x1x256xf32> to vector<1x1x256xf32>
    %41 = vector.broadcast %40 : vector<1x1x256xf32> to vector<8x8x256xf32>
    %42 = arith.mulf %38, %41 : vector<8x8x256xf32>
    %43 = arith.addf %36, %42 : vector<8x8x256xf32>
    %44 = vector.extract_strided_slice %1 {offsets = [2, 0, 0], sizes = [8, 8, 256], strides = [1, 1, 1]} : vector<10x10x256xbf16> to vector<8x8x256xbf16>
    %45 = arith.extf %44 : vector<8x8x256xbf16> to vector<8x8x256xf32>
    %46 = vector.extract_strided_slice %2 {offsets = [6, 0, 0, 0], sizes = [1, 1, 1, 256], strides = [1, 1, 1, 1]} : vector<9x1x1x256xf32> to vector<1x1x1x256xf32>
    %47 = vector.shape_cast %46 : vector<1x1x1x256xf32> to vector<1x1x256xf32>
    %48 = vector.broadcast %47 : vector<1x1x256xf32> to vector<8x8x256xf32>
    %49 = arith.mulf %45, %48 : vector<8x8x256xf32>
    %50 = arith.addf %43, %49 : vector<8x8x256xf32>
    %51 = vector.extract_strided_slice %1 {offsets = [2, 1, 0], sizes = [8, 8, 256], strides = [1, 1, 1]} : vector<10x10x256xbf16> to vector<8x8x256xbf16>
    %52 = arith.extf %51 : vector<8x8x256xbf16> to vector<8x8x256xf32>
    %53 = vector.extract_strided_slice %2 {offsets = [7, 0, 0, 0], sizes = [1, 1, 1, 256], strides = [1, 1, 1, 1]} : vector<9x1x1x256xf32> to vector<1x1x1x256xf32>
    %54 = vector.shape_cast %53 : vector<1x1x1x256xf32> to vector<1x1x256xf32>
    %55 = vector.broadcast %54 : vector<1x1x256xf32> to vector<8x8x256xf32>
    %56 = arith.mulf %52, %55 : vector<8x8x256xf32>
    %57 = arith.addf %50, %56 : vector<8x8x256xf32>
    %58 = vector.extract_strided_slice %1 {offsets = [2, 2, 0], sizes = [8, 8, 256], strides = [1, 1, 1]} : vector<10x10x256xbf16> to vector<8x8x256xbf16>
    %59 = arith.extf %58 : vector<8x8x256xbf16> to vector<8x8x256xf32>
    %60 = vector.extract_strided_slice %2 {offsets = [8, 0, 0, 0], sizes = [1, 1, 1, 256], strides = [1, 1, 1, 1]} : vector<9x1x1x256xf32> to vector<1x1x1x256xf32>
    %61 = vector.shape_cast %60 : vector<1x1x1x256xf32> to vector<1x1x256xf32>
    %62 = vector.broadcast %61 : vector<1x1x256xf32> to vector<8x8x256xf32>
    %63 = arith.mulf %59, %62 : vector<8x8x256xf32>
    %64 = arith.addf %57, %63 : vector<8x8x256xf32>
    %c0_7 = arith.constant 0 : index
    %c0_8 = arith.constant 0 : index
    %c0_9 = arith.constant 0 : index
    %65 = vector.load %arg3[%c0_7, %c0_8, %c0_9] : memref<1x1x256xf32, #tpu.memory_space<vmem>>, vector<1x1x256xf32>
    %66 = vector.broadcast %65 : vector<1x1x256xf32> to vector<8x8x256xf32>
    %67 = arith.addf %64, %66 : vector<8x8x256xf32>
    %68 = arith.negf %67 : vector<8x8x256xf32>
    %69 = math.exp %68 : vector<8x8x256xf32>
    %cst = arith.constant 1.000000e+00 : f32
    %70 = vector.broadcast %cst : f32 to vector<8x8x256xf32>
    %71 = arith.addf %70, %69 : vector<8x8x256xf32>
    %72 = arith.divf %70, %71 : vector<8x8x256xf32>
    %73 = arith.mulf %67, %72 : vector<8x8x256xf32>
    %74 = vector.shape_cast %73 : vector<8x8x256xf32> to vector<64x256xf32>
    %75 = vector.shape_cast %74 : vector<64x256xf32> to vector<1x64x256xf32>
    %76 = arith.truncf %75 : vector<1x64x256xf32> to vector<1x64x256xbf16>
    %c0_10 = arith.constant 0 : index
    %c0_11 = arith.constant 0 : index
    %c0_12 = arith.constant 0 : index
    %77 = vector.load %arg4[%c0_10, %c0_11, %c0_12] : memref<1x64x256xbf16, #tpu.memory_space<vmem>>, vector<1x64x256xbf16>
    tpu.vector_store %arg4[%c0_10, %c0_11, %c0_12], %76 {strides = array<i32>} : memref<1x64x256xbf16, #tpu.memory_space<vmem>>, vector<1x64x256xbf16>,
    %cst_13 = arith.constant dense<0.000000e+00> : vector<256xf32>
    %78 = vector.multi_reduction <add>, %74, %cst_13 [0] : vector<64x256xf32> to vector<256xf32>
    %79 = vector.shape_cast %78 : vector<256xf32> to vector<1x256xf32>
    %cst_14 = arith.constant 1.562500e-02 : f32
    %80 = vector.broadcast %cst_14 : f32 to vector<1x256xf32>
    %81 = arith.mulf %79, %80 : vector<1x256xf32>
    %82 = vector.shape_cast %81 : vector<1x256xf32> to vector<1x1x256xf32>
    %c0_15 = arith.constant 0 : index
    %c0_16 = arith.constant 0 : index
    %c0_17 = arith.constant 0 : index
    %83 = vector.load %arg5[%c0_15, %c0_16, %c0_17] : memref<1x1x256xf32, #tpu.memory_space<vmem>>, vector<1x1x256xf32>
    tpu.vector_store %arg5[%c0_15, %c0_16, %c0_17], %82 {strides = array<i32>} : memref<1x1x256xf32, #tpu.memory_space<vmem>>, vector<1x1x256xf32>,
    return
  }
  func.func @transform_0(%arg0: i32) -> (i32, i32, i32, i32) {
    %c0_i32 = arith.constant 0 : i32
    %c0_i32_0 = arith.constant 0 : i32
    %c0_i32_1 = arith.constant 0 : i32
    %c0_i32_2 = arith.constant 0 : i32
    return %arg0, %c0_i32, %c0_i32_0, %c0_i32_1 : i32, i32, i32, i32
  }
  func.func @transform_1(%arg0: i32) -> (i32, i32, i32, i32) {
    %c0_i32 = arith.constant 0 : i32
    %c0_i32_0 = arith.constant 0 : i32
    %c0_i32_1 = arith.constant 0 : i32
    %c0_i32_2 = arith.constant 0 : i32
    %c0_i32_3 = arith.constant 0 : i32
    return %c0_i32, %c0_i32_0, %c0_i32_1, %c0_i32_2 : i32, i32, i32, i32
  }
  func.func @transform_2(%arg0: i32) -> (i32, i32, i32) {
    %c0_i32 = arith.constant 0 : i32
    %c0_i32_0 = arith.constant 0 : i32
    %c0_i32_1 = arith.constant 0 : i32
    %c0_i32_2 = arith.constant 0 : i32
    return %c0_i32, %c0_i32_0, %c0_i32_1 : i32, i32, i32
  }
  func.func @transform_3(%arg0: i32) -> (i32, i32, i32) {
    %c0_i32 = arith.constant 0 : i32
    %c0_i32_0 = arith.constant 0 : i32
    %c0_i32_1 = arith.constant 0 : i32
    return %arg0, %c0_i32, %c0_i32_0 : i32, i32, i32
  }
  func.func @transform_4(%arg0: i32) -> (i32, i32, i32) {
    %c0_i32 = arith.constant 0 : i32
    %c0_i32_0 = arith.constant 0 : i32
    %c0_i32_1 = arith.constant 0 : i32
    return %arg0, %c0_i32, %c0_i32_0 : i32, i32, i32
  }
}

module attributes {stable_mosaic.version = 11 : i64} {
  func.func @_se_fc_kernel(%arg0: memref<2x1x256xf32, #tpu.memory_space<vmem>>, %arg1: memref<256x16xbf16, #tpu.memory_space<vmem>>, %arg2: memref<1x16xf32, #tpu.memory_space<vmem>>, %arg3: memref<16x256xbf16, #tpu.memory_space<vmem>>, %arg4: memref<1x256xf32, #tpu.memory_space<vmem>>, %arg5: memref<2x1x256xf32, #tpu.memory_space<vmem>>) attributes {dimension_semantics = [], scalar_prefetch = 0 : i64, scratch_operands = 0 : i64, tpu.core_type = #tpu.core_type<tc>} {
    %c0 = arith.constant 0 : index
    %c0_0 = arith.constant 0 : index
    %c0_1 = arith.constant 0 : index
    %0 = vector.load %arg0[%c0, %c0_0, %c0_1] : memref<2x1x256xf32, #tpu.memory_space<vmem>>, vector<2x1x256xf32>
    %1 = vector.shape_cast %0 : vector<2x1x256xf32> to vector<2x256xf32>
    %2 = arith.truncf %1 : vector<2x256xf32> to vector<2x256xbf16>
    %c0_2 = arith.constant 0 : index
    %c0_3 = arith.constant 0 : index
    %3 = vector.load %arg1[%c0_2, %c0_3] : memref<256x16xbf16, #tpu.memory_space<vmem>>, vector<256x16xbf16>
    %cst = arith.constant dense<0.000000e+00> : vector<2x16xf32>
    %4 = tpu.matmul %2, %3, %cst {dimension_numbers = #tpu.dot_dimension_numbers<[1], [0], [0], [1], [0, 0, 1, 1], [], []>} : vector<2x256xbf16>, vector<256x16xbf16>, vector<2x16xf32> -> vector<2x16xf32>
    %c0_4 = arith.constant 0 : index
    %c0_5 = arith.constant 0 : index
    %5 = vector.load %arg2[%c0_4, %c0_5] : memref<1x16xf32, #tpu.memory_space<vmem>>, vector<1x16xf32>
    %6 = vector.broadcast %5 : vector<1x16xf32> to vector<2x16xf32>
    %7 = arith.addf %4, %6 : vector<2x16xf32>
    %8 = arith.negf %7 : vector<2x16xf32>
    %9 = math.exp %8 : vector<2x16xf32>
    %cst_6 = arith.constant 1.000000e+00 : f32
    %10 = vector.broadcast %cst_6 : f32 to vector<2x16xf32>
    %11 = arith.addf %10, %9 : vector<2x16xf32>
    %12 = arith.divf %10, %11 : vector<2x16xf32>
    %13 = arith.mulf %7, %12 : vector<2x16xf32>
    %14 = arith.truncf %13 : vector<2x16xf32> to vector<2x16xbf16>
    %c0_7 = arith.constant 0 : index
    %c0_8 = arith.constant 0 : index
    %15 = vector.load %arg3[%c0_7, %c0_8] : memref<16x256xbf16, #tpu.memory_space<vmem>>, vector<16x256xbf16>
    %cst_9 = arith.constant dense<0.000000e+00> : vector<2x256xf32>
    %16 = tpu.matmul %14, %15, %cst_9 {dimension_numbers = #tpu.dot_dimension_numbers<[1], [0], [0], [1], [0, 0, 1, 1], [], []>} : vector<2x16xbf16>, vector<16x256xbf16>, vector<2x256xf32> -> vector<2x256xf32>
    %c0_10 = arith.constant 0 : index
    %c0_11 = arith.constant 0 : index
    %17 = vector.load %arg4[%c0_10, %c0_11] : memref<1x256xf32, #tpu.memory_space<vmem>>, vector<1x256xf32>
    %18 = vector.broadcast %17 : vector<1x256xf32> to vector<2x256xf32>
    %19 = arith.addf %16, %18 : vector<2x256xf32>
    %20 = arith.negf %19 : vector<2x256xf32>
    %21 = math.exp %20 : vector<2x256xf32>
    %cst_12 = arith.constant 1.000000e+00 : f32
    %22 = vector.broadcast %cst_12 : f32 to vector<2x256xf32>
    %23 = arith.addf %22, %21 : vector<2x256xf32>
    %24 = arith.divf %22, %23 : vector<2x256xf32>
    %25 = vector.shape_cast %24 : vector<2x256xf32> to vector<2x1x256xf32>
    %c0_13 = arith.constant 0 : index
    %c0_14 = arith.constant 0 : index
    %c0_15 = arith.constant 0 : index
    %26 = vector.load %arg5[%c0_13, %c0_14, %c0_15] : memref<2x1x256xf32, #tpu.memory_space<vmem>>, vector<2x1x256xf32>
    tpu.vector_store %arg5[%c0_13, %c0_14, %c0_15], %25 {strides = array<i32>} : memref<2x1x256xf32, #tpu.memory_space<vmem>>, vector<2x1x256xf32>,
    return
  }
}

module attributes {stable_mosaic.version = 11 : i64} {
  func.func @_se_proj_head_pool_kernel(%arg0: i32, %arg1: i32, %arg2: memref<1x64x256xbf16, #tpu.memory_space<vmem>>, %arg3: memref<1x1x256xf32, #tpu.memory_space<vmem>>, %arg4: memref<1x64x64xbf16, #tpu.memory_space<vmem>>, %arg5: memref<256x64xbf16, #tpu.memory_space<vmem>>, %arg6: memref<1x64xf32, #tpu.memory_space<vmem>>, %arg7: memref<64x2560xbf16, #tpu.memory_space<vmem>>, %arg8: memref<1x2560xf32, #tpu.memory_space<vmem>>, %arg9: memref<1x1x2560xf32, #tpu.memory_space<vmem>>) attributes {dimension_semantics = [#tpu.dimension_semantics<parallel>, #tpu.dimension_semantics<arbitrary>], iteration_bounds = array<i64: 2, 1>, scalar_prefetch = 0 : i64, scratch_operands = 0 : i64, tpu.core_type = #tpu.core_type<tc>, window_params = [{transform_indices = @transform_0, window_bounds = array<i64: 1, 64, 256>}, {transform_indices = @transform_1, window_bounds = array<i64: 1, 1, 256>}, {transform_indices = @transform_2, window_bounds = array<i64: 1, 64, 64>}, {pipeline_mode = #tpu.pipeline_mode<synchronous>, transform_indices = @transform_3, window_bounds = array<i64: 256, 64>}, {pipeline_mode = #tpu.pipeline_mode<synchronous>, transform_indices = @transform_4, window_bounds = array<i64: 1, 64>}, {pipeline_mode = #tpu.pipeline_mode<synchronous>, transform_indices = @transform_5, window_bounds = array<i64: 64, 2560>}, {pipeline_mode = #tpu.pipeline_mode<synchronous>, transform_indices = @transform_6, window_bounds = array<i64: 1, 2560>}, {transform_indices = @transform_7, window_bounds = array<i64: 1, 1, 2560>}]} {
    %c0_i32 = arith.constant 0 : i32
    %0 = arith.cmpi eq, %arg1, %c0_i32 : i32
    %1 = arith.extui %0 : i1 to i32
    %c0_i32_0 = arith.constant 0 : i32
    %2 = arith.cmpi ne, %1, %c0_i32_0 : i32
    scf.if %2 {
      %cst_27 = arith.constant 0.000000e+00 : f32
      %40 = vector.broadcast %cst_27 : f32 to vector<1x1x2560xf32>
      %c0_28 = arith.constant 0 : index
      %c0_29 = arith.constant 0 : index
      %c0_30 = arith.constant 0 : index
      %41 = vector.load %arg9[%c0_28, %c0_29, %c0_30] : memref<1x1x2560xf32, #tpu.memory_space<vmem>>, vector<1x1x2560xf32>
      tpu.vector_store %arg9[%c0_28, %c0_29, %c0_30], %40 {strides = array<i32>} : memref<1x1x2560xf32, #tpu.memory_space<vmem>>, vector<1x1x2560xf32>,
    } else {
    }
    %c0 = arith.constant 0 : index
    %c0_1 = arith.constant 0 : index
    %c0_2 = arith.constant 0 : index
    %3 = vector.load %arg3[%c0, %c0_1, %c0_2] : memref<1x1x256xf32, #tpu.memory_space<vmem>>, vector<1x1x256xf32>
    %4 = vector.shape_cast %3 : vector<1x1x256xf32> to vector<1x256xf32>
    %c0_3 = arith.constant 0 : index
    %c0_4 = arith.constant 0 : index
    %c0_5 = arith.constant 0 : index
    %5 = vector.load %arg2[%c0_3, %c0_4, %c0_5] : memref<1x64x256xbf16, #tpu.memory_space<vmem>>, vector<1x64x256xbf16>
    %6 = vector.shape_cast %5 : vector<1x64x256xbf16> to vector<64x256xbf16>
    %7 = arith.extf %6 : vector<64x256xbf16> to vector<64x256xf32>
    %8 = vector.broadcast %4 : vector<1x256xf32> to vector<64x256xf32>
    %9 = arith.mulf %7, %8 : vector<64x256xf32>
    %10 = arith.truncf %9 : vector<64x256xf32> to vector<64x256xbf16>
    %c0_6 = arith.constant 0 : index
    %c0_7 = arith.constant 0 : index
    %11 = vector.load %arg5[%c0_6, %c0_7] : memref<256x64xbf16, #tpu.memory_space<vmem>>, vector<256x64xbf16>
    %cst = arith.constant dense<0.000000e+00> : vector<64x64xf32>
    %12 = tpu.matmul %10, %11, %cst {dimension_numbers = #tpu.dot_dimension_numbers<[1], [0], [0], [1], [0, 0, 1, 1], [], []>} : vector<64x256xbf16>, vector<256x64xbf16>, vector<64x64xf32> -> vector<64x64xf32>
    %c0_8 = arith.constant 0 : index
    %c0_9 = arith.constant 0 : index
    %13 = vector.load %arg6[%c0_8, %c0_9] : memref<1x64xf32, #tpu.memory_space<vmem>>, vector<1x64xf32>
    %14 = vector.broadcast %13 : vector<1x64xf32> to vector<64x64xf32>
    %15 = arith.addf %12, %14 : vector<64x64xf32>
    %c0_10 = arith.constant 0 : index
    %c0_11 = arith.constant 0 : index
    %c0_12 = arith.constant 0 : index
    %16 = vector.load %arg4[%c0_10, %c0_11, %c0_12] : memref<1x64x64xbf16, #tpu.memory_space<vmem>>, vector<1x64x64xbf16>
    %17 = vector.shape_cast %16 : vector<1x64x64xbf16> to vector<64x64xbf16>
    %18 = arith.extf %17 : vector<64x64xbf16> to vector<64x64xf32>
    %19 = arith.addf %15, %18 : vector<64x64xf32>
    %20 = arith.truncf %19 : vector<64x64xf32> to vector<64x64xbf16>
    %c0_13 = arith.constant 0 : index
    %c0_14 = arith.constant 0 : index
    %21 = vector.load %arg7[%c0_13, %c0_14] : memref<64x2560xbf16, #tpu.memory_space<vmem>>, vector<64x2560xbf16>
    %cst_15 = arith.constant dense<0.000000e+00> : vector<64x2560xf32>
    %22 = tpu.matmul %20, %21, %cst_15 {dimension_numbers = #tpu.dot_dimension_numbers<[1], [0], [0], [1], [0, 0, 1, 1], [], []>} : vector<64x64xbf16>, vector<64x2560xbf16>, vector<64x2560xf32> -> vector<64x2560xf32>
    %c0_16 = arith.constant 0 : index
    %c0_17 = arith.constant 0 : index
    %23 = vector.load %arg8[%c0_16, %c0_17] : memref<1x2560xf32, #tpu.memory_space<vmem>>, vector<1x2560xf32>
    %24 = vector.broadcast %23 : vector<1x2560xf32> to vector<64x2560xf32>
    %25 = arith.addf %22, %24 : vector<64x2560xf32>
    %26 = arith.negf %25 : vector<64x2560xf32>
    %27 = math.exp %26 : vector<64x2560xf32>
    %cst_18 = arith.constant 1.000000e+00 : f32
    %28 = vector.broadcast %cst_18 : f32 to vector<64x2560xf32>
    %29 = arith.addf %28, %27 : vector<64x2560xf32>
    %30 = arith.divf %28, %29 : vector<64x2560xf32>
    %31 = arith.mulf %25, %30 : vector<64x2560xf32>
    %c0_19 = arith.constant 0 : index
    %c0_20 = arith.constant 0 : index
    %c0_21 = arith.constant 0 : index
    %32 = vector.load %arg9[%c0_19, %c0_20, %c0_21] : memref<1x1x2560xf32, #tpu.memory_space<vmem>>, vector<1x1x2560xf32>
    %cst_22 = arith.constant dense<0.000000e+00> : vector<2560xf32>
    %33 = vector.multi_reduction <add>, %31, %cst_22 [0] : vector<64x2560xf32> to vector<2560xf32>
    %34 = vector.shape_cast %33 : vector<2560xf32> to vector<1x2560xf32>
    %cst_23 = arith.constant 1.562500e-02 : f32
    %35 = vector.broadcast %cst_23 : f32 to vector<1x2560xf32>
    %36 = arith.mulf %34, %35 : vector<1x2560xf32>
    %37 = vector.shape_cast %36 : vector<1x2560xf32> to vector<1x1x2560xf32>
    %38 = arith.addf %32, %37 : vector<1x1x2560xf32>
    %c0_24 = arith.constant 0 : index
    %c0_25 = arith.constant 0 : index
    %c0_26 = arith.constant 0 : index
    %39 = vector.load %arg9[%c0_24, %c0_25, %c0_26] : memref<1x1x2560xf32, #tpu.memory_space<vmem>>, vector<1x1x2560xf32>
    tpu.vector_store %arg9[%c0_24, %c0_25, %c0_26], %38 {strides = array<i32>} : memref<1x1x2560xf32, #tpu.memory_space<vmem>>, vector<1x1x2560xf32>,
    return
  }
  func.func @transform_0(%arg0: i32, %arg1: i32) -> (i32, i32, i32) {
    %c0_i32 = arith.constant 0 : i32
    %c0_i32_0 = arith.constant 0 : i32
    return %arg0, %arg1, %c0_i32 : i32, i32, i32
  }
  func.func @transform_1(%arg0: i32, %arg1: i32) -> (i32, i32, i32) {
    %c0_i32 = arith.constant 0 : i32
    %c0_i32_0 = arith.constant 0 : i32
    %c0_i32_1 = arith.constant 0 : i32
    return %arg0, %c0_i32, %c0_i32_0 : i32, i32, i32
  }
  func.func @transform_2(%arg0: i32, %arg1: i32) -> (i32, i32, i32) {
    %c0_i32 = arith.constant 0 : i32
    %c0_i32_0 = arith.constant 0 : i32
    return %arg0, %arg1, %c0_i32 : i32, i32, i32
  }
  func.func @transform_3(%arg0: i32, %arg1: i32) -> (i32, i32) {
    %c0_i32 = arith.constant 0 : i32
    %c0_i32_0 = arith.constant 0 : i32
    %c0_i32_1 = arith.constant 0 : i32
    return %c0_i32, %c0_i32_0 : i32, i32
  }
  func.func @transform_4(%arg0: i32, %arg1: i32) -> (i32, i32) {
    %c0_i32 = arith.constant 0 : i32
    %c0_i32_0 = arith.constant 0 : i32
    %c0_i32_1 = arith.constant 0 : i32
    return %c0_i32, %c0_i32_0 : i32, i32
  }
  func.func @transform_5(%arg0: i32, %arg1: i32) -> (i32, i32) {
    %c0_i32 = arith.constant 0 : i32
    %c0_i32_0 = arith.constant 0 : i32
    %c0_i32_1 = arith.constant 0 : i32
    return %c0_i32, %c0_i32_0 : i32, i32
  }
  func.func @transform_6(%arg0: i32, %arg1: i32) -> (i32, i32) {
    %c0_i32 = arith.constant 0 : i32
    %c0_i32_0 = arith.constant 0 : i32
    %c0_i32_1 = arith.constant 0 : i32
    return %c0_i32, %c0_i32_0 : i32, i32
  }
  func.func @transform_7(%arg0: i32, %arg1: i32) -> (i32, i32, i32) {
    %c0_i32 = arith.constant 0 : i32
    %c0_i32_0 = arith.constant 0 : i32
    %c0_i32_1 = arith.constant 0 : i32
    return %arg0, %c0_i32, %c0_i32_0 : i32, i32, i32
  }
}

module attributes {stable_mosaic.version = 11 : i64} {
  func.func @_fc_kernel(%arg0: memref<2x2560xf32, #tpu.memory_space<vmem>>, %arg1: memref<2560x384xbf16, #tpu.memory_space<vmem>>, %arg2: memref<1x384xf32, #tpu.memory_space<vmem>>, %arg3: memref<2x384xf32, #tpu.memory_space<vmem>>) attributes {dimension_semantics = [], scalar_prefetch = 0 : i64, scratch_operands = 0 : i64, tpu.core_type = #tpu.core_type<tc>} {
    %c0 = arith.constant 0 : index
    %c0_0 = arith.constant 0 : index
    %0 = vector.load %arg0[%c0, %c0_0] : memref<2x2560xf32, #tpu.memory_space<vmem>>, vector<2x2560xf32>
    %1 = arith.truncf %0 : vector<2x2560xf32> to vector<2x2560xbf16>
    %c0_1 = arith.constant 0 : index
    %c0_2 = arith.constant 0 : index
    %2 = vector.load %arg1[%c0_1, %c0_2] : memref<2560x384xbf16, #tpu.memory_space<vmem>>, vector<2560x384xbf16>
    %cst = arith.constant dense<0.000000e+00> : vector<2x384xf32>
    %3 = tpu.matmul %1, %2, %cst {dimension_numbers = #tpu.dot_dimension_numbers<[1], [0], [0], [1], [0, 0, 1, 1], [], []>} : vector<2x2560xbf16>, vector<2560x384xbf16>, vector<2x384xf32> -> vector<2x384xf32>
    %c0_3 = arith.constant 0 : index
    %c0_4 = arith.constant 0 : index
    %4 = vector.load %arg2[%c0_3, %c0_4] : memref<1x384xf32, #tpu.memory_space<vmem>>, vector<1x384xf32>
    %5 = vector.broadcast %4 : vector<1x384xf32> to vector<2x384xf32>
    %6 = arith.addf %3, %5 : vector<2x384xf32>
    %c0_5 = arith.constant 0 : index
    %c0_6 = arith.constant 0 : index
    %7 = vector.load %arg3[%c0_5, %c0_6] : memref<2x384xf32, #tpu.memory_space<vmem>>, vector<2x384xf32>
    tpu.vector_store %arg3[%c0_5, %c0_6], %6 {strides = array<i32>} : memref<2x384xf32, #tpu.memory_space<vmem>>, vector<2x384xf32>,
    return
  }
}

</mosaic_0001>

<llo_original>
// kernel: _lambda_.7
$region0: #{_lambda_.7}
  #allocation0 [shape = 'u32[]', space=smem, size = 0x4, offset = 0x4, fixed_abs, tag = 'smem constant byte address 0x4 - core index']
  #allocation1 [shape = 'u32[144,128]{1,0:T(1,128)}', space=vmem, size = 0x12000, scoped, tag = 'internal scratch']
  %s0 = inlined_call_operand.vmem [shape: f32[2,1,256], index: 0, kind: input, shape index: {}]
  %s1 = inlined_call_operand.hbm [shape: bf16[256,16], index: 1, kind: input, shape index: {}]
  %s2 = inlined_call_operand.hbm [shape: f32[1,16], index: 2, kind: input, shape index: {}]
  %s3 = inlined_call_operand.vmem [shape: bf16[16,256], index: 3, kind: input, shape index: {}]
  %s4 = inlined_call_operand.hbm [shape: f32[1,256], index: 4, kind: input, shape index: {}]
  %s5 = inlined_call_operand.vmem [shape: f32[2,1,256], index: 5, kind: output, shape index: {}]
  %s6 = sld [smem:[#allocation0]]
  $region42: #{_lambda_.7} parent=0
    _
  %s8 = ssub.s32 1, %s6
  %s9 = scalar_select 0, %s8, %s6
  $region1: #{_lambda_.7} parent=0
    #allocation2 [shape = 'u8[65536]{0}', space=vmem, size = 0x10000, scoped, tag = 'input window, operand 1, single buffered']
    #allocation3 [shape = 's32[1]{0}', space=sflag, size = 0x4, scoped, tag = 'scoped memory for _lambda_.7']
    #allocation4 [shape = 'u8[512]{0}', space=vmem, size = 0x400, scoped, tag = 'input window, operand 2, single buffered']
    #allocation5 [shape = 's32[1]{0}', space=sflag, size = 0x4, scoped, tag = 'scoped memory for _lambda_.7']
    #allocation6 [shape = 'u8[1024]{0}', space=vmem, size = 0x400, scoped, tag = 'input window, operand 4, single buffered']
    %10 = vsyncpa [#allocation3], 0
    %11 = vsyncpa [#allocation5], 0
    // Predicated region
    $region2: #{_lambda_.7} parent=1 // pred_check
      _
    $region3: #{_lambda_.7} parent=1 // pred_check_branch
      %13 = sbr.rel (0) target = $region5
    $region4: #{_lambda_.7} parent=1 // pred_region
      _
    $region5: #{_lambda_.7} parent=1 // pred_fallthru
      _
    // Predicated region
    $region6: #{_lambda_.7} parent=1 // pred_check
      _
    $region7: #{_lambda_.7} parent=1 // pred_check_branch
      %15 = sbr.rel (0) target = $region9
    $region8: #{_lambda_.7} parent=1 // pred_region
      %s17 = ssub.s32 2048, 2048
      %18 = vsyncadd [#allocation3], %s17
      %s19 = sshll.u32 [#allocation2], 4
      %s20 = int_to_ptr.vmem [resolvable:$true] %s19
      %25 = dma.hbm_to_vmem [thread:$0]  %s1, 2048, %s20, [#allocation3], 64, 64, 4
    $region9: #{_lambda_.7} parent=1 // pred_fallthru
      _
    // Predicated region
    $region10: #{_lambda_.7} parent=1 // pred_check
      _
    $region11: #{_lambda_.7} parent=1 // pred_check_branch
      %27 = sbr.rel (0) target = $region13
    $region12: #{_lambda_.7} parent=1 // pred_region
      %s29 = ssub.s32 16, 16
      %30 = vsyncadd [#allocation5], %s29
      %s32 = sshll.u32 [#allocation4], 4
      %s33 = int_to_ptr.vmem [resolvable:$true] %s32
      %35 = dma.hbm_to_vmem [thread:$0]  %s2, 16, %s33, [#allocation5]
    $region13: #{_lambda_.7} parent=1 // pred_fallthru
      _
    // Predicated region
    $region14: #{_lambda_.7} parent=1 // pred_check
      _
    $region15: #{_lambda_.7} parent=1 // pred_check_branch
      %37 = sbr.rel (0) target = $region17
    $region16: #{_lambda_.7} parent=1 // pred_region
      _
    $region17: #{_lambda_.7} parent=1 // pred_fallthru
      _
    // Predicated region
    $region18: #{_lambda_.7} parent=1 // pred_check
      _
    $region19: #{_lambda_.7} parent=1 // pred_check_branch
      %39 = sbr.rel (0) target = $region21
    $region20: #{_lambda_.7} parent=1 // pred_region
      %s41 = ssub.s32 32, 32
      %42 = vsyncadd [#allocation5], %s41
      %s44 = sshll.u32 [#allocation6], 4
      %s45 = int_to_ptr.vmem [resolvable:$true] %s44
      %47 = dma.hbm_to_vmem [thread:$0]  %s4, 32, %s45, [#allocation5]
    $region21: #{_lambda_.7} parent=1 // pred_fallthru
      _
    // Predicated region
    $region22: #{_lambda_.7} parent=1 // pred_check
      _
    $region23: #{_lambda_.7} parent=1 // pred_check_branch
      %49 = sbr.rel (0) target = $region25
    $region24: #{_lambda_.7} parent=1 // pred_region
      %50 = dma.done [#allocation3], 2048
    $region25: #{_lambda_.7} parent=1 // pred_fallthru
      _
    // Predicated region
    $region26: #{_lambda_.7} parent=1 // pred_check
      _
    $region27: #{_lambda_.7} parent=1 // pred_check_branch
      %52 = sbr.rel (0) target = $region29
    $region28: #{_lambda_.7} parent=1 // pred_region
      %53 = dma.done [#allocation5], 16
    $region29: #{_lambda_.7} parent=1 // pred_fallthru
      _
    // Predicated region
    $region30: #{_lambda_.7} parent=1 // pred_check
      _
    $region31: #{_lambda_.7} parent=1 // pred_check_branch
      %55 = sbr.rel (0) target = $region33
    $region32: #{_lambda_.7} parent=1 // pred_region
      %56 = dma.done [#allocation5], 32
    $region33: #{_lambda_.7} parent=1 // pred_fallthru
      _
    %v58 = vld [vmem:[%s0] sm:$0x3]
    %v59 = vld [vmem:[%s0 + $0x2] sm:$0x3]
    %v62 = vlaneseq
    %v63 = vshrl.u32 %v62, 7
    %v64 = vsub.s32 0, %v63
    %v65 = vrot.slane %v58, %v64
    %v66 = vlaneseq
    %v67 = vshrl.u32 %v66, 7
    %v68 = vsub.s32 1, %v67
    %v69 = vrot.slane %v58, %v68
    %v70 = vlaneseq
    %v71 = vshrl.u32 %v70, 7
    %v72 = vsub.s32 0, %v71
    %v73 = vrot.slane %v59, %v72
    %v74 = vlaneseq
    %v75 = vshrl.u32 %v74, 7
    %v76 = vsub.s32 1, %v75
    %v77 = vrot.slane %v59, %v76
    %v82 = vpack.c.bf16 %v65, %v65
    %v83 = vpack.c.bf16 %v69, %v69
    %v84 = vpack.c.bf16 %v73, %v73
    %v85 = vpack.c.bf16 %v77, %v77
    %v86 = vld [vmem:[#allocation2] sm:$0xf]
    %v87 = vld [vmem:[#allocation2 + $0x4] sm:$0xf]
    %v88 = vld [vmem:[#allocation2 + $0x8] sm:$0xf]
    %v89 = vld [vmem:[#allocation2 + $0xc] sm:$0xf]
    %v90 = vld [vmem:[#allocation2 + $0x10] sm:$0xf]
    %v91 = vld [vmem:[#allocation2 + $0x14] sm:$0xf]
    %v92 = vld [vmem:[#allocation2 + $0x18] sm:$0xf]
    %v93 = vld [vmem:[#allocation2 + $0x1c] sm:$0xf]
    %v94 = vld [vmem:[#allocation2 + $0x20] sm:$0xf]
    %v95 = vld [vmem:[#allocation2 + $0x24] sm:$0xf]
    %v96 = vld [vmem:[#allocation2 + $0x28] sm:$0xf]
    %v97 = vld [vmem:[#allocation2 + $0x2c] sm:$0xf]
    %v98 = vld [vmem:[#allocation2 + $0x30] sm:$0xf]
    %v99 = vld [vmem:[#allocation2 + $0x34] sm:$0xf]
    %v100 = vld [vmem:[#allocation2 + $0x38] sm:$0xf]
    %v101 = vld [vmem:[#allocation2 + $0x3c] sm:$0xf]
    %v102 = vld [vmem:[#allocation2 + $0x40] sm:$0xf]
    %v103 = vld [vmem:[#allocation2 + $0x44] sm:$0xf]
    %v104 = vld [vmem:[#allocation2 + $0x48] sm:$0xf]
    %v105 = vld [vmem:[#allocation2 + $0x4c] sm:$0xf]
    %v106 = vld [vmem:[#allocation2 + $0x50] sm:$0xf]
    %v107 = vld [vmem:[#allocation2 + $0x54] sm:$0xf]
    %v108 = vld [vmem:[#allocation2 + $0x58] sm:$0xf]
    %v109 = vld [vmem:[#allocation2 + $0x5c] sm:$0xf]
    %v110 = vld [vmem:[#allocation2 + $0x60] sm:$0xf]
    %v111 = vld [vmem:[#allocation2 + $0x64] sm:$0xf]
    %v112 = vld [vmem:[#allocation2 + $0x68] sm:$0xf]
    %v113 = vld [vmem:[#allocation2 + $0x6c] sm:$0xf]
    %v114 = vld [vmem:[#allocation2 + $0x70] sm:$0xf]
    %v115 = vld [vmem:[#allocation2 + $0x74] sm:$0xf]
    %v116 = vld [vmem:[#allocation2 + $0x78] sm:$0xf]
    %v117 = vld [vmem:[#allocation2 + $0x7c] sm:$0xf]
    %v118 = vld [vmem:[#allocation4] sm:$0x1]
    %v120 = vlaneseq
    %v121 = vshrl.u32 %v120, 7
    %v122 = vsub.s32 0, %v121
    %v123 = vrot.slane %v118, %v122
    %v129 = vunpack.c.l.b16 %v82
    %v130 = vunpack.c.l.b16 %v83
    %v131 = vunpack.c.l.b16 %v84
    %v132 = vunpack.c.l.b16 %v85
    %v133 = vrot.slane %v131, 7
    %vm134 = vcmask 1041409
    %v135 = vsel %vm134, %v133, %v129
    %v136 = vrot.slane %v132, 7
    %v137 = vsel %vm134, %v136, %v130
    %v138 = vpack.c.b16 %v135, %v135
    %v139 = vpack.c.b16 %v137, %v137
    %v174 = vunpack.c.l.b16 %v86
    %v175 = vunpack.c.l.b16 %v87
    %v176 = vunpack.c.l.b16 %v88
    %v177 = vunpack.c.l.b16 %v89
    %v178 = vunpack.c.l.b16 %v90
    %v179 = vunpack.c.l.b16 %v91
    %v180 = vunpack.c.l.b16 %v92
    %v181 = vunpack.c.l.b16 %v93
    %v182 = vunpack.c.l.b16 %v94
    %v183 = vunpack.c.l.b16 %v95
    %v184 = vunpack.c.l.b16 %v96
    %v185 = vunpack.c.l.b16 %v97
    %v186 = vunpack.c.l.b16 %v98
    %v187 = vunpack.c.l.b16 %v99
    %v188 = vunpack.c.l.b16 %v100
    %v189 = vunpack.c.l.b16 %v101
    %v190 = vunpack.c.l.b16 %v102
    %v191 = vunpack.c.l.b16 %v103
    %v192 = vunpack.c.l.b16 %v104
    %v193 = vunpack.c.l.b16 %v105
    %v194 = vunpack.c.l.b16 %v106
    %v195 = vunpack.c.l.b16 %v107
    %v196 = vunpack.c.l.b16 %v108
    %v197 = vunpack.c.l.b16 %v109
    %v198 = vunpack.c.l.b16 %v110
    %v199 = vunpack.c.l.b16 %v111
    %v200 = vunpack.c.l.b16 %v112
    %v201 = vunpack.c.l.b16 %v113
    %v202 = vunpack.c.l.b16 %v114
    %v203 = vunpack.c.l.b16 %v115
    %v204 = vunpack.c.l.b16 %v116
    %v205 = vunpack.c.l.b16 %v117
    %v206 = vpack.c.b16 %v175, %v174
    %v207 = vpack.c.b16 %v177, %v176
    %v208 = vpack.c.b16 %v179, %v178
    %v209 = vpack.c.b16 %v181, %v180
    %v210 = vpack.c.b16 %v183, %v182
    %v211 = vpack.c.b16 %v185, %v184
    %v212 = vpack.c.b16 %v187, %v186
    %v213 = vpack.c.b16 %v189, %v188
    %v214 = vpack.c.b16 %v191, %v190
    %v215 = vpack.c.b16 %v193, %v192
    %v216 = vpack.c.b16 %v195, %v194
    %v217 = vpack.c.b16 %v197, %v196
    %v218 = vpack.c.b16 %v199, %v198
    %v219 = vpack.c.b16 %v201, %v200
    %v220 = vpack.c.b16 %v203, %v202
    %v221 = vpack.c.b16 %v205, %v204
    %238 = vmatprep.subr.bf16.mxu0 0
    %239 = vmatpush1.bf16.msra.mxu0 %v206
    %240 = vmatprep.subr.bf16.mxu0 0
    %241 = vmatpush1.bf16.msra.mxu0 %v207
    %242 = vmatprep.subr.bf16.mxu0 0
    %243 = vmatpush1.bf16.msra.mxu0 %v208
    %244 = vmatprep.subr.bf16.mxu0 0
    %245 = vmatpush1.bf16.msra.mxu0 %v209
    %246 = vmatprep.subr.bf16.mxu0 0
    %247 = vmatpush1.bf16.msra.mxu0 %v210
    %248 = vmatprep.subr.bf16.mxu0 0
    %249 = vmatpush1.bf16.msra.mxu0 %v211
    %250 = vmatprep.subr.bf16.mxu0 0
    %251 = vmatpush1.bf16.msra.mxu0 %v212
    %252 = vmatprep.subr.bf16.mxu0 0
    %253 = vmatpush1.bf16.msra.mxu0 %v213
    %254 = vmatprep.subr.bf16.mxu0 0
    %255 = vmatpush1.bf16.msra.mxu0 %v214
    %256 = vmatprep.subr.bf16.mxu0 0
    %257 = vmatpush1.bf16.msra.mxu0 %v215
    %258 = vmatprep.subr.bf16.mxu0 0
    %259 = vmatpush1.bf16.msra.mxu0 %v216
    %260 = vmatprep.subr.bf16.mxu0 0
    %261 = vmatpush1.bf16.msra.mxu0 %v217
    %262 = vmatprep.subr.bf16.mxu0 0
    %263 = vmatpush1.bf16.msra.mxu0 %v218
    %264 = vmatprep.subr.bf16.mxu0 0
    %265 = vmatpush1.bf16.msra.mxu0 %v219
    %266 = vmatprep.subr.bf16.mxu0 0
    %267 = vmatpush1.bf16.msra.mxu0 %v220
    %268 = vmatprep.subr.bf16.mxu0 0
    %269 = vmatpush1.bf16.msra.mxu0 %v221
    %270 = vmatprep.mubr.bf16.mxu0 %v139
    %271 = vmatmul.mubr.bf16.gmra.mrb[0].mxu0 %v138
    %v272 = vpop.f32.mrb[0].mxu0
    %v273 = vadd.f32 %v123, %v272
    %v274 = vpop.f32.mrb[0].mxu0
    %v275 = vpop.f32.mrb[0].mxu0
    %v276 = vpop.f32.mrb[0].mxu0
    %277 = vdwg.mxu0
    %v278 = vxor.u32 %v273, 2147483648
    %v279 = vmul.f32 %v278, 1.442695
    %v280 = vpow.pop %v279
    %v281 = vadd.f32 %v280, 1.0
    %v282 = vrcp.pop %v281
    %v283 = vmul.f32 1.0, %v282
    %v284 = vmul.f32 %v273, %v283
    %v285 = vpack.c.bf16 %v284, %v284
    %v286 = vld [vmem:[%s3] sm:$0xff]
    %v287 = vld [vmem:[%s3 + $0x8] sm:$0xff]
    %v288 = vld [vmem:[#allocation6] sm:$0x3]
    %v290 = vlaneseq
    %v291 = vshrl.u32 %v290, 7
    %v292 = vsub.s32 0, %v291
    %v293 = vrot.slane %v288, %v292
    %v294 = vlaneseq
    %v295 = vshrl.u32 %v294, 7
    %v296 = vsub.s32 1, %v295
    %v297 = vrot.slane %v288, %v296
    %v302 = vunpack.c.l.b16 %v286
    %v303 = vunpack.c.h.b16 %v286
    %v304 = vunpack.c.l.b16 %v287
    %v305 = vunpack.c.h.b16 %v287
    %v306 = vpack.c.b16 %v304, %v302
    %v307 = vpack.c.b16 %v305, %v303
    %vm310 = vcmask 130048
    %v312 = vsel %vm310, %v285, 0
    %314 = vmatprep.subr.bf16.mxu0 %v307
    %315 = vmatpush1.bf16.msra.mxu0 %v306
    %316 = vmatprep.subr.bf16.mxu0 0
    %317 = vmatpush1.bf16.msra.mxu0 0
    %318 = vmatprep.subr.bf16.mxu0 0
    %319 = vmatpush1.bf16.msra.mxu0 0
    %320 = vmatprep.subr.bf16.mxu0 0
    %321 = vmatpush1.bf16.msra.mxu0 0
    %322 = vmatprep.subr.bf16.mxu0 0
    %323 = vmatpush1.bf16.msra.mxu0 0
    %324 = vmatprep.subr.bf16.mxu0 0
    %325 = vmatpush1.bf16.msra.mxu0 0
    %326 = vmatprep.subr.bf16.mxu0 0
    %327 = vmatpush1.bf16.msra.mxu0 0
    %328 = vmatprep.subr.bf16.mxu0 0
    %329 = vmatpush1.bf16.msra.mxu0 0
    %330 = vmatprep.subr.bf16.mxu0 0
    %331 = vmatpush1.bf16.msra.mxu0 0
    %332 = vmatprep.subr.bf16.mxu0 0
    %333 = vmatpush1.bf16.msra.mxu0 0
    %334 = vmatprep.subr.bf16.mxu0 0
    %335 = vmatpush1.bf16.msra.mxu0 0
    %336 = vmatprep.subr.bf16.mxu0 0
    %337 = vmatpush1.bf16.msra.mxu0 0
    %338 = vmatprep.subr.bf16.mxu0 0
    %339 = vmatpush1.bf16.msra.mxu0 0
    %340 = vmatprep.subr.bf16.mxu0 0
    %341 = vmatpush1.bf16.msra.mxu0 0
    %342 = vmatprep.subr.bf16.mxu0 0
    %343 = vmatpush1.bf16.msra.mxu0 0
    %344 = vmatprep.subr.bf16.mxu0 0
    %345 = vmatpush1.bf16.msra.mxu0 0
    %346 = vmatprep.mubr.bf16.mxu0 0
    %347 = vmatmul.mubr.bf16.gmra.mrb[0].mxu0 %v312
    %v348 = vpop.f32.mrb[0].mxu0
    %v349 = vadd.f32 %v293, %v348
    %v350 = vpop.f32.mrb[0].mxu0
    %v351 = vadd.f32 %v297, %v350
    %v352 = vpop.f32.mrb[0].mxu0
    %v353 = vpop.f32.mrb[0].mxu0
    %354 = vdwg.mxu0
    %v355 = vxor.u32 %v349, 2147483648
    %v356 = vxor.u32 %v351, 2147483648
    %v357 = vmul.f32 %v355, 1.442695
    %v358 = vpow.pop %v357
    %v359 = vmul.f32 %v356, 1.442695
    %v360 = vpow.pop %v359
    %v361 = vadd.f32 %v358, 1.0
    %v362 = vadd.f32 %v360, 1.0
    %v363 = vrcp.pop %v361
    %v364 = vmul.f32 1.0, %v363
    %v365 = vrcp.pop %v362
    %v366 = vmul.f32 1.0, %v365
    %v369 = vcombine.low %v364, %v366
    %v371 = vunpack.c.l.s4 1966171168
    %v372 = vunpack.c.0.s8 %v371
    %v373 = vlaneseq
    %v374 = vshrl.u32 %v373, 7
    %v375 = vsub.s32 %v372, %v374
    %v376 = vrot.slane %v369, %v375
    %v377 = vcombine.high %v376, %v376
    %v379 = vunpack.c.l.s4 1966171168
    %v380 = vunpack.c.0.s8 %v379
    %v381 = vlaneseq
    %v382 = vshrl.u32 %v381, 7
    %v383 = vsub.s32 %v380, %v382
    %v384 = vrot.slane %v376, %v383
    %v386 = vunpack.c.l.s4 1966171168
    %v387 = vunpack.c.0.s8 %v386
    %v388 = vlaneseq
    %v389 = vshrl.u32 %v388, 7
    %v390 = vsub.s32 %v387, %v389
    %v391 = vrot.slane %v377, %v390
    %v394 = vlaneseq
    %vm395 = vcmp.ge.s32.totalorder %v394, 0
    %vm396 = vcmp.lt.s32.totalorder %v394, 256
    %vm397 = vmand %vm395, %vm396
    %398 = vst.msk [vmem:[%s5] sm:$0x3] %vm397, %v384
    %399 = vst.msk [vmem:[%s5 + $0x2] sm:$0x3] %vm397, %v391
    // Predicated region
    $region34: #{_lambda_.7} parent=1 // pred_check
      _
    $region35: #{_lambda_.7} parent=1 // pred_check_branch
      %401 = sbr.rel (0) target = $region37
    $region36: #{_lambda_.7} parent=1 // pred_region
      _
    $region37: #{_lambda_.7} parent=1 // pred_fallthru
      _
    // Predicated region
    $region38: #{_lambda_.7} parent=1 // pred_check
      _
    $region39: #{_lambda_.7} parent=1 // pred_check_branch
      %403 = sbr.rel (0) target = $region41
    $region40: #{_lambda_.7} parent=1 // pred_region
      _
    $region41: #{_lambda_.7} parent=1 // pred_fallthru
      _
    %404 = vsyncpa [#allocation3], 1
    %405 = vsyncpa [#allocation5], 1

// kernel: _lambda_.5
$region0: #{_lambda_.5}
  #allocation0 [shape = 'u32[]', space=smem, size = 0x4, offset = 0x4, fixed_abs, tag = 'smem constant byte address 0x4 - core index']
  #allocation1 [shape = 'u32[144,128]{1,0:T(1,128)}', space=vmem, size = 0x12000, scoped, tag = 'internal scratch']
  %s0 = inlined_call_operand.vmem [shape: bf16[128,27], index: 0, kind: input, shape index: {}]
  %s1 = inlined_call_operand.hbm [shape: bf16[27,64], index: 1, kind: input, shape index: {}]
  %s2 = inlined_call_operand.hbm [shape: f32[1,64], index: 2, kind: input, shape index: {}]
  %s3 = inlined_call_operand.vmem [shape: bf16[64,256], index: 3, kind: input, shape index: {}]
  %s4 = inlined_call_operand.hbm [shape: f32[1,256], index: 4, kind: input, shape index: {}]
  %s5 = inlined_call_operand.vmem [shape: bf16[128,64], index: 5, kind: output, shape index: {0}]
  %s6 = inlined_call_operand.vmem [shape: bf16[128,256], index: 6, kind: output, shape index: {1}]
  %7 = xla_tuple %s5, %s6
  %s8 = sld [smem:[#allocation0]]
  $region50: #{_lambda_.5} parent=0
    _
  %s10 = ssub.s32 1, %s8
  %s11 = scalar_select 0, %s10, %s8
  $region1: #{_lambda_.5} parent=0
    #allocation2 [shape = 'u8[8192]{0}', space=vmem, size = 0x2000, scoped, tag = 'input window, operand 1, single buffered']
    #allocation3 [shape = 's32[1]{0}', space=sflag, size = 0x4, scoped, tag = 'scoped memory for _lambda_.5']
    #allocation4 [shape = 'u8[512]{0}', space=vmem, size = 0x400, scoped, tag = 'input window, operand 2, single buffered']
    #allocation5 [shape = 's32[1]{0}', space=sflag, size = 0x4, scoped, tag = 'scoped memory for _lambda_.5']
    #allocation6 [shape = 'u8[1024]{0}', space=vmem, size = 0x400, scoped, tag = 'input window, operand 4, single buffered']
    %12 = vsyncpa [#allocation3], 0
    %13 = vsyncpa [#allocation5], 0
    // Predicated region
    $region2: #{_lambda_.5} parent=1 // pred_check
      _
    $region3: #{_lambda_.5} parent=1 // pred_check_branch
      %15 = sbr.rel (0) target = $region5
    $region4: #{_lambda_.5} parent=1 // pred_region
      _
    $region5: #{_lambda_.5} parent=1 // pred_fallthru
      _
    // Predicated region
    $region6: #{_lambda_.5} parent=1 // pred_check
      _
    $region7: #{_lambda_.5} parent=1 // pred_check_branch
      %17 = sbr.rel (0) target = $region9
    $region8: #{_lambda_.5} parent=1 // pred_region
      %s19 = ssub.s32 256, 256
      %20 = vsyncadd [#allocation3], %s19
      %s21 = sshll.u32 [#allocation2], 4
      %s22 = int_to_ptr.vmem [resolvable:$true] %s21
      %27 = dma.hbm_to_vmem [thread:$0]  %s1, 256, %s22, [#allocation3], 64, 64, 4
    $region9: #{_lambda_.5} parent=1 // pred_fallthru
      _
    // Predicated region
    $region10: #{_lambda_.5} parent=1 // pred_check
      _
    $region11: #{_lambda_.5} parent=1 // pred_check_branch
      %29 = sbr.rel (0) target = $region13
    $region12: #{_lambda_.5} parent=1 // pred_region
      %s31 = ssub.s32 16, 16
      %32 = vsyncadd [#allocation5], %s31
      %s34 = sshll.u32 [#allocation4], 4
      %s35 = int_to_ptr.vmem [resolvable:$true] %s34
      %37 = dma.hbm_to_vmem [thread:$0]  %s2, 16, %s35, [#allocation5]
    $region13: #{_lambda_.5} parent=1 // pred_fallthru
      _
    // Predicated region
    $region14: #{_lambda_.5} parent=1 // pred_check
      _
    $region15: #{_lambda_.5} parent=1 // pred_check_branch
      %39 = sbr.rel (0) target = $region17
    $region16: #{_lambda_.5} parent=1 // pred_region
      _
    $region17: #{_lambda_.5} parent=1 // pred_fallthru
      _
    // Predicated region
    $region18: #{_lambda_.5} parent=1 // pred_check
      _
    $region19: #{_lambda_.5} parent=1 // pred_check_branch
      %41 = sbr.rel (0) target = $region21
    $region20: #{_lambda_.5} parent=1 // pred_region
      %s43 = ssub.s32 32, 32
      %44 = vsyncadd [#allocation5], %s43
      %s46 = sshll.u32 [#allocation6], 4
      %s47 = int_to_ptr.vmem [resolvable:$true] %s46
      %49 = dma.hbm_to_vmem [thread:$0]  %s4, 32, %s47, [#allocation5]
    $region21: #{_lambda_.5} parent=1 // pred_fallthru
      _
    // Predicated region
    $region22: #{_lambda_.5} parent=1 // pred_check
      _
    $region23: #{_lambda_.5} parent=1 // pred_check_branch
      %51 = sbr.rel (0) target = $region25
    $region24: #{_lambda_.5} parent=1 // pred_region
      %52 = dma.done [#allocation3], 256
    $region25: #{_lambda_.5} parent=1 // pred_fallthru
      _
    // Predicated region
    $region26: #{_lambda_.5} parent=1 // pred_check
      _
    $region27: #{_lambda_.5} parent=1 // pred_check_branch
      %54 = sbr.rel (0) target = $region29
    $region28: #{_lambda_.5} parent=1 // pred_region
      %55 = dma.done [#allocation5], 16
    $region29: #{_lambda_.5} parent=1 // pred_fallthru
      _
    // Predicated region
    $region30: #{_lambda_.5} parent=1 // pred_check
      _
    $region31: #{_lambda_.5} parent=1 // pred_check_branch
      %57 = sbr.rel (0) target = $region33
    $region32: #{_lambda_.5} parent=1 // pred_region
      %58 = dma.done [#allocation5], 32
    $region33: #{_lambda_.5} parent=1 // pred_fallthru
      _
    %v60 = vld [vmem:[%s0] sm:$0xf]
    %v61 = vld [vmem:[%s0 + $0x4] sm:$0xf]
    %v62 = vld [vmem:[%s0 + $0x8] sm:$0xf]
    %v63 = vld [vmem:[%s0 + $0xc] sm:$0xf]
    %v64 = vld [vmem:[%s0 + $0x10] sm:$0xf]
    %v65 = vld [vmem:[%s0 + $0x14] sm:$0xf]
    %v66 = vld [vmem:[%s0 + $0x18] sm:$0xf]
    %v67 = vld [vmem:[%s0 + $0x1c] sm:$0xf]
    %v68 = vld [vmem:[%s0 + $0x20] sm:$0xf]
    %v69 = vld [vmem:[%s0 + $0x24] sm:$0xf]
    %v70 = vld [vmem:[%s0 + $0x28] sm:$0xf]
    %v71 = vld [vmem:[%s0 + $0x2c] sm:$0xf]
    %v72 = vld [vmem:[%s0 + $0x30] sm:$0xf]
    %v73 = vld [vmem:[%s0 + $0x34] sm:$0xf]
    %v74 = vld [vmem:[%s0 + $0x38] sm:$0xf]
    %v75 = vld [vmem:[%s0 + $0x3c] sm:$0xf]
    %v76 = vld [vmem:[#allocation2] sm:$0xf]
    %v77 = vld [vmem:[#allocation2 + $0x4] sm:$0xf]
    %v78 = vld [vmem:[#allocation2 + $0x8] sm:$0xf]
    %v79 = vld [vmem:[#allocation2 + $0xc] sm:$0x3]
    %v80 = vld [vmem:[#allocation4] sm:$0x1]
    %v82 = vlaneseq
    %v83 = vshrl.u32 %v82, 7
    %v84 = vsub.s32 0, %v83
    %v85 = vrot.slane %v80, %v84
    %v103 = vunpack.c.l.b16 %v60
    %v104 = vunpack.c.l.b16 %v61
    %v105 = vunpack.c.l.b16 %v62
    %v106 = vunpack.c.l.b16 %v63
    %v107 = vunpack.c.l.b16 %v64
    %v108 = vunpack.c.l.b16 %v65
    %v109 = vunpack.c.l.b16 %v66
    %v110 = vunpack.c.l.b16 %v67
    %v111 = vunpack.c.l.b16 %v68
    %v112 = vunpack.c.l.b16 %v69
    %v113 = vunpack.c.l.b16 %v70
    %v114 = vunpack.c.l.b16 %v71
    %v115 = vunpack.c.l.b16 %v72
    %v116 = vunpack.c.l.b16 %v73
    %v117 = vunpack.c.l.b16 %v74
    %v118 = vunpack.c.l.b16 %v75
    %v119 = vpack.c.b16 %v104, %v103
    %v120 = vpack.c.b16 %v106, %v105
    %v121 = vpack.c.b16 %v108, %v107
    %v122 = vpack.c.b16 %v110, %v109
    %v123 = vpack.c.b16 %v112, %v111
    %v124 = vpack.c.b16 %v114, %v113
    %v125 = vpack.c.b16 %v116, %v115
    %v126 = vpack.c.b16 %v118, %v117
    %v131 = vunpack.c.l.b16 %v76
    %v132 = vunpack.c.l.b16 %v77
    %v133 = vunpack.c.l.b16 %v78
    %v134 = vunpack.c.l.b16 %v79
    %v135 = vpack.c.b16 %v132, %v131
    %v136 = vpack.c.b16 %v134, %v133
    %vm138 = vcmask 220160
    %v140 = vsel %vm138, %v119, 0
    %v143 = vsel %vm138, %v120, 0
    %v146 = vsel %vm138, %v121, 0
    %v149 = vsel %vm138, %v122, 0
    %v152 = vsel %vm138, %v123, 0
    %v155 = vsel %vm138, %v124, 0
    %v158 = vsel %vm138, %v125, 0
    %v161 = vsel %vm138, %v126, 0
    %vm163 = vcmask 1044480
    %vm164 = vcmask 1045504
    %v165 = vsel %vm163, 4294967295, 65535
    %v166 = vsel %vm164, %v165, 0
    %v168 = vand.u32 %v136, %v166
    %170 = vmatprep.subr.bf16.mxu0 0
    %171 = vmatpush1.bf16.msra.mxu0 %v135
    %172 = vmatprep.subr.bf16.mxu0 0
    %173 = vmatpush1.bf16.msra.mxu0 %v168
    %174 = vmatprep.subr.bf16.mxu0 0
    %175 = vmatpush1.bf16.msra.mxu0 0
    %176 = vmatprep.subr.bf16.mxu0 0
    %177 = vmatpush1.bf16.msra.mxu0 0
    %178 = vmatprep.subr.bf16.mxu0 0
    %179 = vmatpush1.bf16.msra.mxu0 0
    %180 = vmatprep.subr.bf16.mxu0 0
    %181 = vmatpush1.bf16.msra.mxu0 0
    %182 = vmatprep.subr.bf16.mxu0 0
    %183 = vmatpush1.bf16.msra.mxu0 0
    %184 = vmatprep.subr.bf16.mxu0 0
    %185 = vmatpush1.bf16.msra.mxu0 0
    %186 = vmatprep.subr.bf16.mxu0 0
    %187 = vmatpush1.bf16.msra.mxu0 0
    %188 = vmatprep.subr.bf16.mxu0 0
    %189 = vmatpush1.bf16.msra.mxu0 0
    %190 = vmatprep.subr.bf16.mxu0 0
    %191 = vmatpush1.bf16.msra.mxu0 0
    %192 = vmatprep.subr.bf16.mxu0 0
    %193 = vmatpush1.bf16.msra.mxu0 0
    %194 = vmatprep.subr.bf16.mxu0 0
    %195 = vmatpush1.bf16.msra.mxu0 0
    %196 = vmatprep.subr.bf16.mxu0 0
    %197 = vmatpush1.bf16.msra.mxu0 0
    %198 = vmatprep.subr.bf16.mxu0 0
    %199 = vmatpush1.bf16.msra.mxu0 0
    %200 = vmatprep.subr.bf16.mxu0 0
    %201 = vmatpush1.bf16.msra.mxu0 0
    %202 = vmatprep.mubr.bf16.mxu0 0
    %203 = vmatmul.mubr.bf16.gmra.mrb[0].mxu0 %v140
    %v204 = vpop.f32.mrb[0].mxu0
    %v205 = vadd.f32 %v85, %v204
    %v206 = vpop.f32.mrb[0].mxu0
    %v207 = vpop.f32.mrb[0].mxu0
    %v208 = vadd.f32 %v85, %v207
    %v209 = vpop.f32.mrb[0].mxu0
    %210 = vmatprep.mubr.bf16.mxu0 0
    %211 = vmatmul.mubr.bf16.gmra.mrb[0].mxu0 %v143
    %v212 = vpop.f32.mrb[0].mxu0
    %v213 = vadd.f32 %v85, %v212
    %v214 = vpop.f32.mrb[0].mxu0
    %v215 = vpop.f32.mrb[0].mxu0
    %v216 = vadd.f32 %v85, %v215
    %v217 = vpop.f32.mrb[0].mxu0
    %218 = vmatprep.mubr.bf16.mxu0 0
    %219 = vmatmul.mubr.bf16.gmra.mrb[0].mxu0 %v146
    %v220 = vpop.f32.mrb[0].mxu0
    %v221 = vadd.f32 %v85, %v220
    %v222 = vpop.f32.mrb[0].mxu0
    %v223 = vpop.f32.mrb[0].mxu0
    %v224 = vadd.f32 %v85, %v223
    %v225 = vpop.f32.mrb[0].mxu0
    %226 = vmatprep.mubr.bf16.mxu0 0
    %227 = vmatmul.mubr.bf16.gmra.mrb[0].mxu0 %v149
    %v228 = vpop.f32.mrb[0].mxu0
    %v229 = vadd.f32 %v85, %v228
    %v230 = vpop.f32.mrb[0].mxu0
    %v231 = vpop.f32.mrb[0].mxu0
    %v232 = vadd.f32 %v85, %v231
    %v233 = vpop.f32.mrb[0].mxu0
    %234 = vmatprep.mubr.bf16.mxu0 0
    %235 = vmatmul.mubr.bf16.gmra.mrb[0].mxu0 %v152
    %v236 = vpop.f32.mrb[0].mxu0
    %v237 = vadd.f32 %v85, %v236
    %v238 = vpop.f32.mrb[0].mxu0
    %v239 = vpop.f32.mrb[0].mxu0
    %v240 = vadd.f32 %v85, %v239
    %v241 = vpop.f32.mrb[0].mxu0
    %242 = vmatprep.mubr.bf16.mxu0 0
    %243 = vmatmul.mubr.bf16.gmra.mrb[0].mxu0 %v155
    %v244 = vpop.f32.mrb[0].mxu0
    %v245 = vadd.f32 %v85, %v244
    %v246 = vpop.f32.mrb[0].mxu0
    %v247 = vpop.f32.mrb[0].mxu0
    %v248 = vadd.f32 %v85, %v247
    %v249 = vpop.f32.mrb[0].mxu0
    %250 = vmatprep.mubr.bf16.mxu0 0
    %251 = vmatmul.mubr.bf16.gmra.mrb[0].mxu0 %v158
    %v252 = vpop.f32.mrb[0].mxu0
    %v253 = vadd.f32 %v85, %v252
    %v254 = vpop.f32.mrb[0].mxu0
    %v255 = vpop.f32.mrb[0].mxu0
    %v256 = vadd.f32 %v85, %v255
    %v257 = vpop.f32.mrb[0].mxu0
    %258 = vmatprep.mubr.bf16.mxu0 0
    %259 = vmatmul.mubr.bf16.gmra.mrb[0].mxu0 %v161
    %v260 = vpop.f32.mrb[0].mxu0
    %v261 = vadd.f32 %v85, %v260
    %v262 = vpop.f32.mrb[0].mxu0
    %v263 = vpop.f32.mrb[0].mxu0
    %v264 = vadd.f32 %v85, %v263
    %v265 = vpop.f32.mrb[0].mxu0
    %266 = vdwg.mxu0
    %v267 = vxor.u32 %v205, 2147483648
    %v268 = vxor.u32 %v208, 2147483648
    %v269 = vxor.u32 %v213, 2147483648
    %v270 = vxor.u32 %v216, 2147483648
    %v271 = vxor.u32 %v221, 2147483648
    %v272 = vxor.u32 %v224, 2147483648
    %v273 = vxor.u32 %v229, 2147483648
    %v274 = vxor.u32 %v232, 2147483648
    %v275 = vxor.u32 %v237, 2147483648
    %v276 = vxor.u32 %v240, 2147483648
    %v277 = vxor.u32 %v245, 2147483648
    %v278 = vxor.u32 %v248, 2147483648
    %v279 = vxor.u32 %v253, 2147483648
    %v280 = vxor.u32 %v256, 2147483648
    %v281 = vxor.u32 %v261, 2147483648
    %v282 = vxor.u32 %v264, 2147483648
    %v283 = vmul.f32 %v267, 1.442695
    %v284 = vpow.pop %v283
    %v285 = vmul.f32 %v268, 1.442695
    %v286 = vpow.pop %v285
    %v287 = vmul.f32 %v269, 1.442695
    %v288 = vpow.pop %v287
    %v289 = vmul.f32 %v270, 1.442695
    %v290 = vpow.pop %v289
    %v291 = vmul.f32 %v271, 1.442695
    %v292 = vpow.pop %v291
    %v293 = vmul.f32 %v272, 1.442695
    %v294 = vpow.pop %v293
    %v295 = vmul.f32 %v273, 1.442695
    %v296 = vpow.pop %v295
    %v297 = vmul.f32 %v274, 1.442695
    %v298 = vpow.pop %v297
    %v299 = vmul.f32 %v275, 1.442695
    %v300 = vpow.pop %v299
    %v301 = vmul.f32 %v276, 1.442695
    %v302 = vpow.pop %v301
    %v303 = vmul.f32 %v277, 1.442695
    %v304 = vpow.pop %v303
    %v305 = vmul.f32 %v278, 1.442695
    %v306 = vpow.pop %v305
    %v307 = vmul.f32 %v279, 1.442695
    %v308 = vpow.pop %v307
    %v309 = vmul.f32 %v280, 1.442695
    %v310 = vpow.pop %v309
    %v311 = vmul.f32 %v281, 1.442695
    %v312 = vpow.pop %v311
    %v313 = vmul.f32 %v282, 1.442695
    %v314 = vpow.pop %v313
    %v315 = vadd.f32 %v284, 1.0
    %v316 = vadd.f32 %v286, 1.0
    %v317 = vadd.f32 %v288, 1.0
    %v318 = vadd.f32 %v290, 1.0
    %v319 = vadd.f32 %v292, 1.0
    %v320 = vadd.f32 %v294, 1.0
    %v321 = vadd.f32 %v296, 1.0
    %v322 = vadd.f32 %v298, 1.0
    %v323 = vadd.f32 %v300, 1.0
    %v324 = vadd.f32 %v302, 1.0
    %v325 = vadd.f32 %v304, 1.0
    %v326 = vadd.f32 %v306, 1.0
    %v327 = vadd.f32 %v308, 1.0
    %v328 = vadd.f32 %v310, 1.0
    %v329 = vadd.f32 %v312, 1.0
    %v330 = vadd.f32 %v314, 1.0
    %v331 = vrcp.pop %v315
    %v332 = vmul.f32 1.0, %v331
    %v333 = vrcp.pop %v316
    %v334 = vmul.f32 1.0, %v333
    %v335 = vrcp.pop %v317
    %v336 = vmul.f32 1.0, %v335
    %v337 = vrcp.pop %v318
    %v338 = vmul.f32 1.0, %v337
    %v339 = vrcp.pop %v319
    %v340 = vmul.f32 1.0, %v339
    %v341 = vrcp.pop %v320
    %v342 = vmul.f32 1.0, %v341
    %v343 = vrcp.pop %v321
    %v344 = vmul.f32 1.0, %v343
    %v345 = vrcp.pop %v322
    %v346 = vmul.f32 1.0, %v345
    %v347 = vrcp.pop %v323
    %v348 = vmul.f32 1.0, %v347
    %v349 = vrcp.pop %v324
    %v350 = vmul.f32 1.0, %v349
    %v351 = vrcp.pop %v325
    %v352 = vmul.f32 1.0, %v351
    %v353 = vrcp.pop %v326
    %v354 = vmul.f32 1.0, %v353
    %v355 = vrcp.pop %v327
    %v356 = vmul.f32 1.0, %v355
    %v357 = vrcp.pop %v328
    %v358 = vmul.f32 1.0, %v357
    %v359 = vrcp.pop %v329
    %v360 = vmul.f32 1.0, %v359
    %v361 = vrcp.pop %v330
    %v362 = vmul.f32 1.0, %v361
    %v363 = vmul.f32 %v205, %v332
    %v364 = vmul.f32 %v208, %v334
    %v365 = vmul.f32 %v213, %v336
    %v366 = vmul.f32 %v216, %v338
    %v367 = vmul.f32 %v221, %v340
    %v368 = vmul.f32 %v224, %v342
    %v369 = vmul.f32 %v229, %v344
    %v370 = vmul.f32 %v232, %v346
    %v371 = vmul.f32 %v237, %v348
    %v372 = vmul.f32 %v240, %v350
    %v373 = vmul.f32 %v245, %v352
    %v374 = vmul.f32 %v248, %v354
    %v375 = vmul.f32 %v253, %v356
    %v376 = vmul.f32 %v256, %v358
    %v377 = vmul.f32 %v261, %v360
    %v378 = vmul.f32 %v264, %v362
    %v379 = vpack.c.bf16 %v364, %v363
    %v380 = vpack.c.bf16 %v366, %v365
    %v381 = vpack.c.bf16 %v368, %v367
    %v382 = vpack.c.bf16 %v370, %v369
    %v383 = vpack.c.bf16 %v372, %v371
    %v384 = vpack.c.bf16 %v374, %v373
    %v385 = vpack.c.bf16 %v376, %v375
    %v386 = vpack.c.bf16 %v378, %v377
    %v395 = vunpack.c.l.b16 %v379
    %v396 = vunpack.c.h.b16 %v379
    %v397 = vunpack.c.l.b16 %v380
    %v398 = vunpack.c.h.b16 %v380
    %v399 = vunpack.c.l.b16 %v381
    %v400 = vunpack.c.h.b16 %v381
    %v401 = vunpack.c.l.b16 %v382
    %v402 = vunpack.c.h.b16 %v382
    %v403 = vunpack.c.l.b16 %v383
    %v404 = vunpack.c.h.b16 %v383
    %v405 = vunpack.c.l.b16 %v384
    %v406 = vunpack.c.h.b16 %v384
    %v407 = vunpack.c.l.b16 %v385
    %v408 = vunpack.c.h.b16 %v385
    %v409 = vunpack.c.l.b16 %v386
    %v410 = vunpack.c.h.b16 %v386
    %v411 = vpack.c.b16 %v395, %v395
    %v412 = vpack.c.b16 %v396, %v396
    %v413 = vpack.c.b16 %v397, %v397
    %v414 = vpack.c.b16 %v398, %v398
    %v415 = vpack.c.b16 %v399, %v399
    %v416 = vpack.c.b16 %v400, %v400
    %v417 = vpack.c.b16 %v401, %v401
    %v418 = vpack.c.b16 %v402, %v402
    %v419 = vpack.c.b16 %v403, %v403
    %v420 = vpack.c.b16 %v404, %v404
    %v421 = vpack.c.b16 %v405, %v405
    %v422 = vpack.c.b16 %v406, %v406
    %v423 = vpack.c.b16 %v407, %v407
    %v424 = vpack.c.b16 %v408, %v408
    %v425 = vpack.c.b16 %v409, %v409
    %v426 = vpack.c.b16 %v410, %v410
    %vm443 = vcmask 519168
    %444 = vst.msk [vmem:[%s5] sm:$0xf] %vm443, %v411
    %445 = vst.msk [vmem:[%s5 + $0x4] sm:$0xf] %vm443, %v412
    %446 = vst.msk [vmem:[%s5 + $0x8] sm:$0xf] %vm443, %v413
    %447 = vst.msk [vmem:[%s5 + $0xc] sm:$0xf] %vm443, %v414
    %448 = vst.msk [vmem:[%s5 + $0x10] sm:$0xf] %vm443, %v415
    %449 = vst.msk [vmem:[%s5 + $0x14] sm:$0xf] %vm443, %v416
    %450 = vst.msk [vmem:[%s5 + $0x18] sm:$0xf] %vm443, %v417
    %451 = vst.msk [vmem:[%s5 + $0x1c] sm:$0xf] %vm443, %v418
    %452 = vst.msk [vmem:[%s5 + $0x20] sm:$0xf] %vm443, %v419
    %453 = vst.msk [vmem:[%s5 + $0x24] sm:$0xf] %vm443, %v420
    %454 = vst.msk [vmem:[%s5 + $0x28] sm:$0xf] %vm443, %v421
    %455 = vst.msk [vmem:[%s5 + $0x2c] sm:$0xf] %vm443, %v422
    %456 = vst.msk [vmem:[%s5 + $0x30] sm:$0xf] %vm443, %v423
    %457 = vst.msk [vmem:[%s5 + $0x34] sm:$0xf] %vm443, %v424
    %458 = vst.msk [vmem:[%s5 + $0x38] sm:$0xf] %vm443, %v425
    %459 = vst.msk [vmem:[%s5 + $0x3c] sm:$0xf] %vm443, %v426
    %v460 = vld [vmem:[%s3] sm:$0xff]
    %v461 = vld [vmem:[%s3 + $0x8] sm:$0xff]
    %v462 = vld [vmem:[%s3 + $0x10] sm:$0xff]
    %v463 = vld [vmem:[%s3 + $0x18] sm:$0xff]
    %v464 = vld [vmem:[%s3 + $0x20] sm:$0xff]
    %v465 = vld [vmem:[%s3 + $0x28] sm:$0xff]
    %v466 = vld [vmem:[%s3 + $0x30] sm:$0xff]
    %v467 = vld [vmem:[%s3 + $0x38] sm:$0xff]
    %v468 = vld [vmem:[#allocation6] sm:$0x3]
    %v470 = vlaneseq
    %v471 = vshrl.u32 %v470, 7
    %v472 = vsub.s32 0, %v471
    %v473 = vrot.slane %v468, %v472
    %v474 = vlaneseq
    %v475 = vshrl.u32 %v474, 7
    %v476 = vsub.s32 1, %v475
    %v477 = vrot.slane %v468, %v476
    %v488 = vunpack.c.l.b16 %v460
    %v489 = vunpack.c.h.b16 %v460
    %v490 = vunpack.c.l.b16 %v461
    %v491 = vunpack.c.h.b16 %v461
    %v492 = vunpack.c.l.b16 %v462
    %v493 = vunpack.c.h.b16 %v462
    %v494 = vunpack.c.l.b16 %v463
    %v495 = vunpack.c.h.b16 %v463
    %v496 = vunpack.c.l.b16 %v464
    %v497 = vunpack.c.h.b16 %v464
    %v498 = vunpack.c.l.b16 %v465
    %v499 = vunpack.c.h.b16 %v465
    %v500 = vunpack.c.l.b16 %v466
    %v501 = vunpack.c.h.b16 %v466
    %v502 = vunpack.c.l.b16 %v467
    %v503 = vunpack.c.h.b16 %v467
    %v504 = vpack.c.b16 %v490, %v488
    %v505 = vpack.c.b16 %v491, %v489
    %v506 = vpack.c.b16 %v494, %v492
    %v507 = vpack.c.b16 %v495, %v493
    %v508 = vpack.c.b16 %v498, %v496
    %v509 = vpack.c.b16 %v499, %v497
    %v510 = vpack.c.b16 %v502, %v500
    %v511 = vpack.c.b16 %v503, %v501
    %vm520 = vcmask 523264
    %v522 = vsel %vm520, %v379, 0
    %v525 = vsel %vm520, %v380, 0
    %v528 = vsel %vm520, %v381, 0
    %v531 = vsel %vm520, %v382, 0
    %v534 = vsel %vm520, %v383, 0
    %v537 = vsel %vm520, %v384, 0
    %v540 = vsel %vm520, %v385, 0
    %v543 = vsel %vm520, %v386, 0
    %545 = vmatprep.subr.bf16.mxu0 %v505
    %546 = vmatpush1.bf16.msra.mxu0 %v504
    %547 = vmatprep.subr.bf16.mxu0 %v507
    %548 = vmatpush1.bf16.msra.mxu0 %v506
    %549 = vmatprep.subr.bf16.mxu0 %v509
    %550 = vmatpush1.bf16.msra.mxu0 %v508
    %551 = vmatprep.subr.bf16.mxu0 %v511
    %552 = vmatpush1.bf16.msra.mxu0 %v510
    %553 = vmatprep.subr.bf16.mxu0 0
    %554 = vmatpush1.bf16.msra.mxu0 0
    %555 = vmatprep.subr.bf16.mxu0 0
    %556 = vmatpush1.bf16.msra.mxu0 0
    %557 = vmatprep.subr.bf16.mxu0 0
    %558 = vmatpush1.bf16.msra.mxu0 0
    %559 = vmatprep.subr.bf16.mxu0 0
    %560 = vmatpush1.bf16.msra.mxu0 0
    %561 = vmatprep.subr.bf16.mxu0 0
    %562 = vmatpush1.bf16.msra.mxu0 0
    %563 = vmatprep.subr.bf16.mxu0 0
    %564 = vmatpush1.bf16.msra.mxu0 0
    %565 = vmatprep.subr.bf16.mxu0 0
    %566 = vmatpush1.bf16.msra.mxu0 0
    %567 = vmatprep.subr.bf16.mxu0 0
    %568 = vmatpush1.bf16.msra.mxu0 0
    %569 = vmatprep.subr.bf16.mxu0 0
    %570 = vmatpush1.bf16.msra.mxu0 0
    %571 = vmatprep.subr.bf16.mxu0 0
    %572 = vmatpush1.bf16.msra.mxu0 0
    %573 = vmatprep.subr.bf16.mxu0 0
    %574 = vmatpush1.bf16.msra.mxu0 0
    %575 = vmatprep.subr.bf16.mxu0 0
    %576 = vmatpush1.bf16.msra.mxu0 0
    %577 = vmatprep.mubr.bf16.mxu0 0
    %578 = vmatmul.mubr.bf16.gmra.mrb[0].mxu0 %v522
    %v579 = vpop.f32.mrb[0].mxu0
    %v580 = vadd.f32 %v473, %v579
    %v581 = vpop.f32.mrb[0].mxu0
    %v582 = vadd.f32 %v477, %v581
    %v583 = vpop.f32.mrb[0].mxu0
    %v584 = vadd.f32 %v473, %v583
    %v585 = vpop.f32.mrb[0].mxu0
    %v586 = vadd.f32 %v477, %v585
    %587 = vmatprep.mubr.bf16.mxu0 0
    %588 = vmatmul.mubr.bf16.gmra.mrb[0].mxu0 %v525
    %v589 = vpop.f32.mrb[0].mxu0
    %v590 = vadd.f32 %v473, %v589
    %v591 = vpop.f32.mrb[0].mxu0
    %v592 = vadd.f32 %v477, %v591
    %v593 = vpop.f32.mrb[0].mxu0
    %v594 = vadd.f32 %v473, %v593
    %v595 = vpop.f32.mrb[0].mxu0
    %v596 = vadd.f32 %v477, %v595
    %597 = vmatprep.mubr.bf16.mxu0 0
    %598 = vmatmul.mubr.bf16.gmra.mrb[0].mxu0 %v528
    %v599 = vpop.f32.mrb[0].mxu0
    %v600 = vadd.f32 %v473, %v599
    %v601 = vpop.f32.mrb[0].mxu0
    %v602 = vadd.f32 %v477, %v601
    %v603 = vpop.f32.mrb[0].mxu0
    %v604 = vadd.f32 %v473, %v603
    %v605 = vpop.f32.mrb[0].mxu0
    %v606 = vadd.f32 %v477, %v605
    %607 = vmatprep.mubr.bf16.mxu0 0
    %608 = vmatmul.mubr.bf16.gmra.mrb[0].mxu0 %v531
    %v609 = vpop.f32.mrb[0].mxu0
    %v610 = vadd.f32 %v473, %v609
    %v611 = vpop.f32.mrb[0].mxu0
    %v612 = vadd.f32 %v477, %v611
    %v613 = vpop.f32.mrb[0].mxu0
    %v614 = vadd.f32 %v473, %v613
    %v615 = vpop.f32.mrb[0].mxu0
    %v616 = vadd.f32 %v477, %v615
    %617 = vmatprep.mubr.bf16.mxu0 0
    %618 = vmatmul.mubr.bf16.gmra.mrb[0].mxu0 %v534
    %v619 = vpop.f32.mrb[0].mxu0
    %v620 = vadd.f32 %v473, %v619
    %v621 = vpop.f32.mrb[0].mxu0
    %v622 = vadd.f32 %v477, %v621
    %v623 = vpop.f32.mrb[0].mxu0
    %v624 = vadd.f32 %v473, %v623
    %v625 = vpop.f32.mrb[0].mxu0
    %v626 = vadd.f32 %v477, %v625
    %627 = vmatprep.mubr.bf16.mxu0 0
    %628 = vmatmul.mubr.bf16.gmra.mrb[0].mxu0 %v537
    %v629 = vpop.f32.mrb[0].mxu0
    %v630 = vadd.f32 %v473, %v629
    %v631 = vpop.f32.mrb[0].mxu0
    %v632 = vadd.f32 %v477, %v631
    %v633 = vpop.f32.mrb[0].mxu0
    %v634 = vadd.f32 %v473, %v633
    %v635 = vpop.f32.mrb[0].mxu0
    %v636 = vadd.f32 %v477, %v635
    %637 = vmatprep.mubr.bf16.mxu0 0
    %638 = vmatmul.mubr.bf16.gmra.mrb[0].mxu0 %v540
    %v639 = vpop.f32.mrb[0].mxu0
    %v640 = vadd.f32 %v473, %v639
    %v641 = vpop.f32.mrb[0].mxu0
    %v642 = vadd.f32 %v477, %v641
    %v643 = vpop.f32.mrb[0].mxu0
    %v644 = vadd.f32 %v473, %v643
    %v645 = vpop.f32.mrb[0].mxu0
    %v646 = vadd.f32 %v477, %v645
    %647 = vmatprep.mubr.bf16.mxu0 0
    %648 = vmatmul.mubr.bf16.gmra.mrb[0].mxu0 %v543
    %v649 = vpop.f32.mrb[0].mxu0
    %v650 = vadd.f32 %v473, %v649
    %v651 = vpop.f32.mrb[0].mxu0
    %v652 = vadd.f32 %v477, %v651
    %v653 = vpop.f32.mrb[0].mxu0
    %v654 = vadd.f32 %v473, %v653
    %v655 = vpop.f32.mrb[0].mxu0
    %v656 = vadd.f32 %v477, %v655
    %657 = vdwg.mxu0
    %v658 = vxor.u32 %v580, 2147483648
    %v659 = vxor.u32 %v582, 2147483648
    %v660 = vxor.u32 %v584, 2147483648
    %v661 = vxor.u32 %v586, 2147483648
    %v662 = vxor.u32 %v590, 2147483648
    %v663 = vxor.u32 %v592, 2147483648
    %v664 = vxor.u32 %v594, 2147483648
    %v665 = vxor.u32 %v596, 2147483648
    %v666 = vxor.u32 %v600, 2147483648
    %v667 = vxor.u32 %v602, 2147483648
    %v668 = vxor.u32 %v604, 2147483648
    %v669 = vxor.u32 %v606, 2147483648
    %v670 = vxor.u32 %v610, 2147483648
    %v671 = vxor.u32 %v612, 2147483648
    %v672 = vxor.u32 %v614, 2147483648
    %v673 = vxor.u32 %v616, 2147483648
    %v674 = vxor.u32 %v620, 2147483648
    %v675 = vxor.u32 %v622, 2147483648
    %v676 = vxor.u32 %v624, 2147483648
    %v677 = vxor.u32 %v626, 2147483648
    %v678 = vxor.u32 %v630, 2147483648
    %v679 = vxor.u32 %v632, 2147483648
    %v680 = vxor.u32 %v634, 2147483648
    %v681 = vxor.u32 %v636, 2147483648
    %v682 = vxor.u32 %v640, 2147483648
    %v683 = vxor.u32 %v642, 2147483648
    %v684 = vxor.u32 %v644, 2147483648
    %v685 = vxor.u32 %v646, 2147483648
    %v686 = vxor.u32 %v650, 2147483648
    %v687 = vxor.u32 %v652, 2147483648
    %v688 = vxor.u32 %v654, 2147483648
    %v689 = vxor.u32 %v656, 2147483648
    %v690 = vmul.f32 %v658, 1.442695
    %v691 = vpow.pop %v690
    %v692 = vmul.f32 %v659, 1.442695
    %v693 = vpow.pop %v692
    %v694 = vmul.f32 %v660, 1.442695
    %v695 = vpow.pop %v694
    %v696 = vmul.f32 %v661, 1.442695
    %v697 = vpow.pop %v696
    %v698 = vmul.f32 %v662, 1.442695
    %v699 = vpow.pop %v698
    %v700 = vmul.f32 %v663, 1.442695
    %v701 = vpow.pop %v700
    %v702 = vmul.f32 %v664, 1.442695
    %v703 = vpow.pop %v702
    %v704 = vmul.f32 %v665, 1.442695
    %v705 = vpow.pop %v704
    %v706 = vmul.f32 %v666, 1.442695
    %v707 = vpow.pop %v706
    %v708 = vmul.f32 %v667, 1.442695
    %v709 = vpow.pop %v708
    %v710 = vmul.f32 %v668, 1.442695
    %v711 = vpow.pop %v710
    %v712 = vmul.f32 %v669, 1.442695
    %v713 = vpow.pop %v712
    %v714 = vmul.f32 %v670, 1.442695
    %v715 = vpow.pop %v714
    %v716 = vmul.f32 %v671, 1.442695
    %v717 = vpow.pop %v716
    %v718 = vmul.f32 %v672, 1.442695
    %v719 = vpow.pop %v718
    %v720 = vmul.f32 %v673, 1.442695
    %v721 = vpow.pop %v720
    %v722 = vmul.f32 %v674, 1.442695
    %v723 = vpow.pop %v722
    %v724 = vmul.f32 %v675, 1.442695
    %v725 = vpow.pop %v724
    %v726 = vmul.f32 %v676, 1.442695
    %v727 = vpow.pop %v726
    %v728 = vmul.f32 %v677, 1.442695
    %v729 = vpow.pop %v728
    %v730 = vmul.f32 %v678, 1.442695
    %v731 = vpow.pop %v730
    %v732 = vmul.f32 %v679, 1.442695
    %v733 = vpow.pop %v732
    %v734 = vmul.f32 %v680, 1.442695
    %v735 = vpow.pop %v734
    %v736 = vmul.f32 %v681, 1.442695
    %v737 = vpow.pop %v736
    %v738 = vmul.f32 %v682, 1.442695
    %v739 = vpow.pop %v738
    %v740 = vmul.f32 %v683, 1.442695
    %v741 = vpow.pop %v740
    %v742 = vmul.f32 %v684, 1.442695
    %v743 = vpow.pop %v742
    %v744 = vmul.f32 %v685, 1.442695
    %v745 = vpow.pop %v744
    %v746 = vmul.f32 %v686, 1.442695
    %v747 = vpow.pop %v746
    %v748 = vmul.f32 %v687, 1.442695
    %v749 = vpow.pop %v748
    %v750 = vmul.f32 %v688, 1.442695
    %v751 = vpow.pop %v750
    %v752 = vmul.f32 %v689, 1.442695
    %v753 = vpow.pop %v752
    %v754 = vadd.f32 %v691, 1.0
    %v755 = vadd.f32 %v693, 1.0
    %v756 = vadd.f32 %v695, 1.0
    %v757 = vadd.f32 %v697, 1.0
    %v758 = vadd.f32 %v699, 1.0
    %v759 = vadd.f32 %v701, 1.0
    %v760 = vadd.f32 %v703, 1.0
    %v761 = vadd.f32 %v705, 1.0
    %v762 = vadd.f32 %v707, 1.0
    %v763 = vadd.f32 %v709, 1.0
    %v764 = vadd.f32 %v711, 1.0
    %v765 = vadd.f32 %v713, 1.0
    %v766 = vadd.f32 %v715, 1.0
    %v767 = vadd.f32 %v717, 1.0
    %v768 = vadd.f32 %v719, 1.0
    %v769 = vadd.f32 %v721, 1.0
    %v770 = vadd.f32 %v723, 1.0
    %v771 = vadd.f32 %v725, 1.0
    %v772 = vadd.f32 %v727, 1.0
    %v773 = vadd.f32 %v729, 1.0
    %v774 = vadd.f32 %v731, 1.0
    %v775 = vadd.f32 %v733, 1.0
    %v776 = vadd.f32 %v735, 1.0
    %v777 = vadd.f32 %v737, 1.0
    %v778 = vadd.f32 %v739, 1.0
    %v779 = vadd.f32 %v741, 1.0
    %v780 = vadd.f32 %v743, 1.0
    %v781 = vadd.f32 %v745, 1.0
    %v782 = vadd.f32 %v747, 1.0
    %v783 = vadd.f32 %v749, 1.0
    %v784 = vadd.f32 %v751, 1.0
    %v785 = vadd.f32 %v753, 1.0
    %v786 = vrcp.pop %v754
    %v787 = vmul.f32 1.0, %v786
    %v788 = vrcp.pop %v755
    %v789 = vmul.f32 1.0, %v788
    %v790 = vrcp.pop %v756
    %v791 = vmul.f32 1.0, %v790
    %v792 = vrcp.pop %v757
    %v793 = vmul.f32 1.0, %v792
    %v794 = vrcp.pop %v758
    %v795 = vmul.f32 1.0, %v794
    %v796 = vrcp.pop %v759
    %v797 = vmul.f32 1.0, %v796
    %v798 = vrcp.pop %v760
    %v799 = vmul.f32 1.0, %v798
    %v800 = vrcp.pop %v761
    %v801 = vmul.f32 1.0, %v800
    %v802 = vrcp.pop %v762
    %v803 = vmul.f32 1.0, %v802
    %v804 = vrcp.pop %v763
    %v805 = vmul.f32 1.0, %v804
    %v806 = vrcp.pop %v764
    %v807 = vmul.f32 1.0, %v806
    %v808 = vrcp.pop %v765
    %v809 = vmul.f32 1.0, %v808
    %v810 = vrcp.pop %v766
    %v811 = vmul.f32 1.0, %v810
    %v812 = vrcp.pop %v767
    %v813 = vmul.f32 1.0, %v812
    %v814 = vrcp.pop %v768
    %v815 = vmul.f32 1.0, %v814
    %v816 = vrcp.pop %v769
    %v817 = vmul.f32 1.0, %v816
    %v818 = vrcp.pop %v770
    %v819 = vmul.f32 1.0, %v818
    %v820 = vrcp.pop %v771
    %v821 = vmul.f32 1.0, %v820
    %v822 = vrcp.pop %v772
    %v823 = vmul.f32 1.0, %v822
    %v824 = vrcp.pop %v773
    %v825 = vmul.f32 1.0, %v824
    %v826 = vrcp.pop %v774
    %v827 = vmul.f32 1.0, %v826
    %v828 = vrcp.pop %v775
    %v829 = vmul.f32 1.0, %v828
    %v830 = vrcp.pop %v776
    %v831 = vmul.f32 1.0, %v830
    %v832 = vrcp.pop %v777
    %v833 = vmul.f32 1.0, %v832
    %v834 = vrcp.pop %v778
    %v835 = vmul.f32 1.0, %v834
    %v836 = vrcp.pop %v779
    %v837 = vmul.f32 1.0, %v836
    %v838 = vrcp.pop %v780
    %v839 = vmul.f32 1.0, %v838
    %v840 = vrcp.pop %v781
    %v841 = vmul.f32 1.0, %v840
    %v842 = vrcp.pop %v782
    %v843 = vmul.f32 1.0, %v842
    %v844 = vrcp.pop %v783
    %v845 = vmul.f32 1.0, %v844
    %v846 = vrcp.pop %v784
    %v847 = vmul.f32 1.0, %v846
    %v848 = vrcp.pop %v785
    %v849 = vmul.f32 1.0, %v848
    %v850 = vmul.f32 %v580, %v787
    %v851 = vmul.f32 %v582, %v789
    %v852 = vmul.f32 %v584, %v791
    %v853 = vmul.f32 %v586, %v793
    %v854 = vmul.f32 %v590, %v795
    %v855 = vmul.f32 %v592, %v797
    %v856 = vmul.f32 %v594, %v799
    %v857 = vmul.f32 %v596, %v801
    %v858 = vmul.f32 %v600, %v803
    %v859 = vmul.f32 %v602, %v805
    %v860 = vmul.f32 %v604, %v807
    %v861 = vmul.f32 %v606, %v809
    %v862 = vmul.f32 %v610, %v811
    %v863 = vmul.f32 %v612, %v813
    %v864 = vmul.f32 %v614, %v815
    %v865 = vmul.f32 %v616, %v817
    %v866 = vmul.f32 %v620, %v819
    %v867 = vmul.f32 %v622, %v821
    %v868 = vmul.f32 %v624, %v823
    %v869 = vmul.f32 %v626, %v825
    %v870 = vmul.f32 %v630, %v827
    %v871 = vmul.f32 %v632, %v829
    %v872 = vmul.f32 %v634, %v831
    %v873 = vmul.f32 %v636, %v833
    %v874 = vmul.f32 %v640, %v835
    %v875 = vmul.f32 %v642, %v837
    %v876 = vmul.f32 %v644, %v839
    %v877 = vmul.f32 %v646, %v841
    %v878 = vmul.f32 %v650, %v843
    %v879 = vmul.f32 %v652, %v845
    %v880 = vmul.f32 %v654, %v847
    %v881 = vmul.f32 %v656, %v849
    %v882 = vpack.c.bf16 %v852, %v850
    %v883 = vpack.c.bf16 %v853, %v851
    %v884 = vpack.c.bf16 %v856, %v854
    %v885 = vpack.c.bf16 %v857, %v855
    %v886 = vpack.c.bf16 %v860, %v858
    %v887 = vpack.c.bf16 %v861, %v859
    %v888 = vpack.c.bf16 %v864, %v862
    %v889 = vpack.c.bf16 %v865, %v863
    %v890 = vpack.c.bf16 %v868, %v866
    %v891 = vpack.c.bf16 %v869, %v867
    %v892 = vpack.c.bf16 %v872, %v870
    %v893 = vpack.c.bf16 %v873, %v871
    %v894 = vpack.c.bf16 %v876, %v874
    %v895 = vpack.c.bf16 %v877, %v875
    %v896 = vpack.c.bf16 %v880, %v878
    %v897 = vpack.c.bf16 %v881, %v879
    %v914 = vunpack.c.l.b16 %v882
    %v915 = vunpack.c.l.b16 %v883
    %v916 = vunpack.c.h.b16 %v882
    %v917 = vunpack.c.h.b16 %v883
    %v918 = vunpack.c.l.b16 %v884
    %v919 = vunpack.c.l.b16 %v885
    %v920 = vunpack.c.h.b16 %v884
    %v921 = vunpack.c.h.b16 %v885
    %v922 = vunpack.c.l.b16 %v886
    %v923 = vunpack.c.l.b16 %v887
    %v924 = vunpack.c.h.b16 %v886
    %v925 = vunpack.c.h.b16 %v887
    %v926 = vunpack.c.l.b16 %v888
    %v927 = vunpack.c.l.b16 %v889
    %v928 = vunpack.c.h.b16 %v888
    %v929 = vunpack.c.h.b16 %v889
    %v930 = vunpack.c.l.b16 %v890
    %v931 = vunpack.c.l.b16 %v891
    %v932 = vunpack.c.h.b16 %v890
    %v933 = vunpack.c.h.b16 %v891
    %v934 = vunpack.c.l.b16 %v892
    %v935 = vunpack.c.l.b16 %v893
    %v936 = vunpack.c.h.b16 %v892
    %v937 = vunpack.c.h.b16 %v893
    %v938 = vunpack.c.l.b16 %v894
    %v939 = vunpack.c.l.b16 %v895
    %v940 = vunpack.c.h.b16 %v894
    %v941 = vunpack.c.h.b16 %v895
    %v942 = vunpack.c.l.b16 %v896
    %v943 = vunpack.c.l.b16 %v897
    %v944 = vunpack.c.h.b16 %v896
    %v945 = vunpack.c.h.b16 %v897
    %v946 = vpack.c.b16 %v915, %v914
    %v947 = vpack.c.b16 %v917, %v916
    %v948 = vpack.c.b16 %v919, %v918
    %v949 = vpack.c.b16 %v921, %v920
    %v950 = vpack.c.b16 %v923, %v922
    %v951 = vpack.c.b16 %v925, %v924
    %v952 = vpack.c.b16 %v927, %v926
    %v953 = vpack.c.b16 %v929, %v928
    %v954 = vpack.c.b16 %v931, %v930
    %v955 = vpack.c.b16 %v933, %v932
    %v956 = vpack.c.b16 %v935, %v934
    %v957 = vpack.c.b16 %v937, %v936
    %v958 = vpack.c.b16 %v939, %v938
    %v959 = vpack.c.b16 %v941, %v940
    %v960 = vpack.c.b16 %v943, %v942
    %v961 = vpack.c.b16 %v945, %v944
    %978 = vst [vmem:[%s6] sm:$0xff] %v946
    %979 = vst [vmem:[%s6 + $0x8] sm:$0xff] %v947
    %980 = vst [vmem:[%s6 + $0x10] sm:$0xff] %v948
    %981 = vst [vmem:[%s6 + $0x18] sm:$0xff] %v949
    %982 = vst [vmem:[%s6 + $0x20] sm:$0xff] %v950
    %983 = vst [vmem:[%s6 + $0x28] sm:$0xff] %v951
    %984 = vst [vmem:[%s6 + $0x30] sm:$0xff] %v952
    %985 = vst [vmem:[%s6 + $0x38] sm:$0xff] %v953
    %986 = vst [vmem:[%s6 + $0x40] sm:$0xff] %v954
    %987 = vst [vmem:[%s6 + $0x48] sm:$0xff] %v955
    %988 = vst [vmem:[%s6 + $0x50] sm:$0xff] %v956
    %989 = vst [vmem:[%s6 + $0x58] sm:$0xff] %v957
    %990 = vst [vmem:[%s6 + $0x60] sm:$0xff] %v958
    %991 = vst [vmem:[%s6 + $0x68] sm:$0xff] %v959
    %992 = vst [vmem:[%s6 + $0x70] sm:$0xff] %v960
    %993 = vst [vmem:[%s6 + $0x78] sm:$0xff] %v961
    // Predicated region
    $region34: #{_lambda_.5} parent=1 // pred_check
      _
    $region35: #{_lambda_.5} parent=1 // pred_check_branch
      %995 = sbr.rel (0) target = $region37
    $region36: #{_lambda_.5} parent=1 // pred_region
      _
    $region37: #{_lambda_.5} parent=1 // pred_fallthru
      _
    // Predicated region
    $region38: #{_lambda_.5} parent=1 // pred_check
      _
    $region39: #{_lambda_.5} parent=1 // pred_check_branch
      %997 = sbr.rel (0) target = $region41
    $region40: #{_lambda_.5} parent=1 // pred_region
      _
    $region41: #{_lambda_.5} parent=1 // pred_fallthru
      _
    // Predicated region
    $region42: #{_lambda_.5} parent=1 // pred_check
      _
    $region43: #{_lambda_.5} parent=1 // pred_check_branch
      %999 = sbr.rel (0) target = $region45
    $region44: #{_lambda_.5} parent=1 // pred_region
      _
    $region45: #{_lambda_.5} parent=1 // pred_fallthru
      _
    // Predicated region
    $region46: #{_lambda_.5} parent=1 // pred_check
      _
    $region47: #{_lambda_.5} parent=1 // pred_check_branch
      %1001 = sbr.rel (0) target = $region49
    $region48: #{_lambda_.5} parent=1 // pred_region
      _
    $region49: #{_lambda_.5} parent=1 // pred_fallthru
      _
    %1002 = vsyncpa [#allocation3], 1
    %1003 = vsyncpa [#allocation5], 1

// kernel: _lambda_.6
$region0: #{_lambda_.6}
  #allocation0 [shape = 'u32[]', space=smem, size = 0x4, offset = 0x4, fixed_abs, tag = 'smem constant byte address 0x4 - core index']
  #allocation1 [shape = 'u32[144,128]{1,0:T(1,128)}', space=vmem, size = 0x12000, scoped, tag = 'internal scratch']
  %s0 = inlined_call_operand.vmem [shape: bf16[2,10,10,256], index: 0, kind: input, shape index: {}]
  %s1 = inlined_call_operand.hbm [shape: f32[9,1,1,256], index: 1, kind: input, shape index: {}]
  %s2 = inlined_call_operand.hbm [shape: f32[1,1,256], index: 2, kind: input, shape index: {}]
  %s3 = inlined_call_operand.vmem [shape: bf16[2,64,256], index: 3, kind: output, shape index: {0}]
  %s4 = inlined_call_operand.vmem [shape: f32[2,1,256], index: 4, kind: output, shape index: {1}]
  %5 = xla_tuple %s3, %s4
  %s6 = sld [smem:[#allocation0]]
  $region61: #{_lambda_.6} parent=0
    _
  %s8 = ssub.s32 1, %s6
  %s9 = scalar_select 0, %s8, %s6
  $region1: #{_lambda_.6} parent=0
    #allocation2 [shape = 'u8[9216]{0}', space=vmem, size = 0x2400, scoped, tag = 'input window, operand 1, single buffered']
    #allocation3 [shape = 's32[2]{0}', space=sflag, size = 0x8, scoped, tag = 'scoped memory for _lambda_.6']
    #allocation4 [shape = 'u8[1024]{0}', space=vmem, size = 0x400, scoped, tag = 'input window, operand 2, single buffered']
    #allocation5 [shape = 's32[1]{0}', space=sflag, size = 0x4, scoped, tag = 'scoped memory for _lambda_.6']
    %10 = vsyncpa [#allocation3], 0
    %11 = vsyncpa [#allocation5], 0
    loop: start=0, step=1, limit=4
    $region2: #{_lambda_.6} parent=1 // loop_pre_header
      _
    $region3: #{_lambda_.6} parent=1 // loop_header
      %s13 = sphi 0, %s17
      %p14 = scmp.ge.s32.totalorder %s13, 4
      %s23 = sphi 0, %s25
      %s26 = sphi 0, %s23
      %s27 = sphi 0, %s26
      %s43 = sphi 0, %s27
      %s47 = sphi 0, %s47
      %s49 = sphi 0, %s47
      %s50 = sphi 0, %s49
      %s64 = sphi 0, %s50
      %s68 = sphi 0, %s68
      %s70 = sphi 0, %s68
      %s71 = sphi 0, %s70
      %s85 = sphi 0, %s71
      %s91 = sphi 0, %s93
      %s94 = sphi 0, %s91
      %s95 = sphi 0, %s94
      %s111 = sphi 0, %s95
      %s117 = sphi 0, %s119
      %s120 = sphi 0, %s117
      %s121 = sphi 0, %s120
      %s137 = sphi 0, %s121
    $region4: #{_lambda_.6} parent=1 // loop_header_branch
      %16 = sbr.rel (%p14) target = $region8
    $region5: #{_lambda_.6} parent=1 // loop_body
      %s18 = ssub.s32 %s13, 1
      %s19 = ssub.s32 %s13, 2
      %s20 = sadd.s32 %s13, 1
      %s21 = ssub.s32 %s13, %s20
      %p22 = scmp.eq.s32.totalorder %s21, 0
      %s24 = sadd.s32 %s23, 1
      %s25 = scalar_select %p22, %s23, %s24
      %p28 = pneg %p22
      %p29 = scmp.eq.s32.totalorder %s13, 1
      %p30 = por %p28, %p29
      %p31 = scmp.ne.s32.totalorder %s23, %s26
      %p32 = scmp.eq.s32.totalorder %s13, 0
      %p33 = por %p31, %p32
      %p34 = scmp.ne.s32.totalorder %s23, %s26
      %p35 = scmp.eq.s32.totalorder %s18, 1
      %p36 = por %p34, %p35
      %p37 = scmp.ne.s32.totalorder %s26, %s27
      %p38 = scmp.eq.s32.totalorder %s18, 0
      %p39 = por %p37, %p38
      %p40 = scmp.ne.s32.totalorder %s26, %s27
      %p41 = scmp.eq.s32.totalorder %s19, 1
      %p42 = por %p40, %p41
      %p44 = scmp.ne.s32.totalorder %s27, %s43
      %p45 = scmp.eq.s32.totalorder %s19, 0
      %p46 = por %p44, %p45
      %s48 = sadd.s32 %s47, 1
      %p51 = scmp.eq.s32.totalorder %s13, 1
      %p52 = scmp.ne.s32.totalorder %s47, %s49
      %p53 = scmp.eq.s32.totalorder %s13, 0
      %p54 = por %p52, %p53
      %p55 = scmp.ne.s32.totalorder %s47, %s49
      %p56 = scmp.eq.s32.totalorder %s18, 1
      %p57 = por %p55, %p56
      %p58 = scmp.ne.s32.totalorder %s49, %s50
      %p59 = scmp.eq.s32.totalorder %s18, 0
      %p60 = por %p58, %p59
      %p61 = scmp.ne.s32.totalorder %s49, %s50
      %p62 = scmp.eq.s32.totalorder %s19, 1
      %p63 = por %p61, %p62
      %p65 = scmp.ne.s32.totalorder %s50, %s64
      %p66 = scmp.eq.s32.totalorder %s19, 0
      %p67 = por %p65, %p66
      %s69 = sadd.s32 %s68, 1
      %p72 = scmp.eq.s32.totalorder %s13, 1
      %p73 = scmp.ne.s32.totalorder %s68, %s70
      %p74 = scmp.eq.s32.totalorder %s13, 0
      %p75 = por %p73, %p74
      %p76 = scmp.ne.s32.totalorder %s68, %s70
      %p77 = scmp.eq.s32.totalorder %s18, 1
      %p78 = por %p76, %p77
      %p79 = scmp.ne.s32.totalorder %s70, %s71
      %p80 = scmp.eq.s32.totalorder %s18, 0
      %p81 = por %p79, %p80
      %p82 = scmp.ne.s32.totalorder %s70, %s71
      %p83 = scmp.eq.s32.totalorder %s19, 1
      %p84 = por %p82, %p83
      %p86 = scmp.ne.s32.totalorder %s71, %s85
      %p87 = scmp.eq.s32.totalorder %s19, 0
      %p88 = por %p86, %p87
      %s89 = ssub.s32 %s13, %s20
      %p90 = scmp.eq.s32.totalorder %s89, 0
      %s92 = sadd.s32 %s91, 1
      %s93 = scalar_select %p90, %s91, %s92
      %p96 = pneg %p90
      %p97 = scmp.eq.s32.totalorder %s13, 1
      %p98 = por %p96, %p97
      %p99 = scmp.ne.s32.totalorder %s91, %s94
      %p100 = scmp.eq.s32.totalorder %s13, 0
      %p101 = por %p99, %p100
      %p102 = scmp.ne.s32.totalorder %s91, %s94
      %p103 = scmp.eq.s32.totalorder %s18, 1
      %p104 = por %p102, %p103
      %p105 = scmp.ne.s32.totalorder %s94, %s95
      %p106 = scmp.eq.s32.totalorder %s18, 0
      %p107 = por %p105, %p106
      %p108 = scmp.ne.s32.totalorder %s94, %s95
      %p109 = scmp.eq.s32.totalorder %s19, 1
      %p110 = por %p108, %p109
      %p112 = scmp.ne.s32.totalorder %s95, %s111
      %p113 = scmp.eq.s32.totalorder %s19, 0
      %p114 = por %p112, %p113
      %s115 = ssub.s32 %s13, %s20
      %p116 = scmp.eq.s32.totalorder %s115, 0
      %s118 = sadd.s32 %s117, 1
      %s119 = scalar_select %p116, %s117, %s118
      %p122 = pneg %p116
      %p123 = scmp.eq.s32.totalorder %s13, 1
      %p124 = por %p122, %p123
      %p125 = scmp.ne.s32.totalorder %s117, %s120
      %p126 = scmp.eq.s32.totalorder %s13, 0
      %p127 = por %p125, %p126
      %p128 = scmp.ne.s32.totalorder %s117, %s120
      %p129 = scmp.eq.s32.totalorder %s18, 1
      %p130 = por %p128, %p129
      %p131 = scmp.ne.s32.totalorder %s120, %s121
      %p132 = scmp.eq.s32.totalorder %s18, 0
      %p133 = por %p131, %p132
      %p134 = scmp.ne.s32.totalorder %s120, %s121
      %p135 = scmp.eq.s32.totalorder %s19, 1
      %p136 = por %p134, %p135
      %p138 = scmp.ne.s32.totalorder %s121, %s137
      %p139 = scmp.eq.s32.totalorder %s19, 0
      %p140 = por %p138, %p139
      %p141 = scmp.le.s32.totalorder 1, %s13
      %p142 = scmp.lt.s32.totalorder %s13, 3
      %p143 = pnand %p141, %p142
      %p144 = pneg %p143
      // Predicated region
      $region9: #{_lambda_.6} parent=5 // pred_check
        _
      $region10: #{_lambda_.6} parent=5 // pred_check_branch
        %146 = sbr.rel (%p143) target = $region12
      $region11: #{_lambda_.6} parent=5 // pred_region
        %s147 = ssub.s32 %s13, 1
        // Predicated region
        $region13: #{_lambda_.6} parent=11 // pred_check
          %p148 = pneg %p60
        $region14: #{_lambda_.6} parent=11 // pred_check_branch
          %150 = sbr.rel (%p148) target = $region16
        $region15: #{_lambda_.6} parent=11 // pred_region
          %s152 = ssub.s32 288, 288
          %153 = vsyncadd [#allocation3], %s152
          %s154 = sshll.u32 [#allocation2], 4
          %s155 = int_to_ptr.vmem [resolvable:$true] %s154
          %160 = dma.hbm_to_vmem [thread:$0]  %s1, 288, %s155, [#allocation3], 32, 32, 2
        $region16: #{_lambda_.6} parent=11 // pred_fallthru
          _
        // Predicated region
        $region17: #{_lambda_.6} parent=11 // pred_check
          %p161 = pneg %p81
        $region18: #{_lambda_.6} parent=11 // pred_check_branch
          %163 = sbr.rel (%p161) target = $region20
        $region19: #{_lambda_.6} parent=11 // pred_region
          %s165 = ssub.s32 32, 32
          %166 = vsyncadd [#allocation5], %s165
          %s168 = sshll.u32 [#allocation4], 4
          %s169 = int_to_ptr.vmem [resolvable:$true] %s168
          %171 = dma.hbm_to_vmem [thread:$0]  %s2, 32, %s169, [#allocation5]
        $region20: #{_lambda_.6} parent=11 // pred_fallthru
          _
      $region12: #{_lambda_.6} parent=5 // pred_fallthru
        _
      %p172 = scmp.lt.s32.totalorder %s13, 2
      // Predicated region
      $region21: #{_lambda_.6} parent=5 // pred_check
        %p173 = pneg %p172
      $region22: #{_lambda_.6} parent=5 // pred_check_branch
        %175 = sbr.rel (%p173) target = $region24
      $region23: #{_lambda_.6} parent=5 // pred_region
        // Predicated region
        $region25: #{_lambda_.6} parent=23 // pred_check
          %p176 = pneg %p33
        $region26: #{_lambda_.6} parent=23 // pred_check_branch
          %178 = sbr.rel (%p176) target = $region28
        $region27: #{_lambda_.6} parent=23 // pred_region
          %p179 = scmp.lt.s32.totalorder %s13, 1
          %s180 = scalar_select %p179, %s13, 1
          %s181 = smul.addr %s180, 40
          %s182 = smul.addr %s181, 4
          %s183 = scalar_lea.vmem %s0, %s182
        $region28: #{_lambda_.6} parent=23 // pred_fallthru
          _
      $region24: #{_lambda_.6} parent=5 // pred_fallthru
        _
      %p184 = scmp.le.s32.totalorder 1, %s13
      %p185 = scmp.lt.s32.totalorder %s13, 3
      %p186 = pnand %p184, %p185
      %p187 = pneg %p186
      // Predicated region
      $region29: #{_lambda_.6} parent=5 // pred_check
        _
      $region30: #{_lambda_.6} parent=5 // pred_check_branch
        %189 = sbr.rel (%p186) target = $region32
      $region31: #{_lambda_.6} parent=5 // pred_region
        %s190 = ssub.s32 %s13, 1
        // Predicated region
        $region33: #{_lambda_.6} parent=31 // pred_check
          %p191 = pneg %p60
        $region34: #{_lambda_.6} parent=31 // pred_check_branch
          %193 = sbr.rel (%p191) target = $region36
        $region35: #{_lambda_.6} parent=31 // pred_region
          %194 = dma.done [#allocation3], 288
        $region36: #{_lambda_.6} parent=31 // pred_fallthru
          _
        // Predicated region
        $region37: #{_lambda_.6} parent=31 // pred_check
          %p195 = pneg %p81
        $region38: #{_lambda_.6} parent=31 // pred_check_branch
          %197 = sbr.rel (%p195) target = $region40
        $region39: #{_lambda_.6} parent=31 // pred_region
          %198 = dma.done [#allocation5], 32
        $region40: #{_lambda_.6} parent=31 // pred_fallthru
          _
        %p199 = scmp.lt.s32.totalorder %s18, 1
        %s200 = scalar_select %p199, %s18, 1
        %s201 = smul.addr %s200, 40
        %s202 = smul.addr %s201, 4
        %s203 = scalar_lea.vmem %s0, %s202
        %p204 = pneg %p39
        %p205 = pneg %p36
        %p206 = pneg %p60
        %p207 = pneg %p57
        %p208 = pneg %p81
        %p209 = pneg %p78
        %p210 = pneg %p107
        %p211 = pneg %p104
        %p212 = scmp.lt.s32.totalorder %s18, 1
        %s213 = scalar_select %p212, %s18, 1
        %s214 = smul.addr %s213, 16
        %s215 = smul.addr %s214, 4
        %s216 = scalar_lea.vmem %s3, %s215
        %p217 = pneg %p133
        %p218 = pneg %p130
        %p219 = scmp.lt.s32.totalorder %s18, 1
        %s220 = scalar_select %p219, %s18, 1
        %s221 = smul.addr %s220, 2
        %s222 = scalar_lea.vmem %s4, %s221
        %p223 = scmp.lt.s32.totalorder %s18, 1
        %s224 = scalar_select %p223, %s18, 1
        %s225 = smul.addr %s224, 40
        %s226 = smul.addr %s225, 4
        %s227 = scalar_lea.vmem %s0, %s226
        %p228 = scmp.lt.s32.totalorder %s18, 1
        %s229 = scalar_select %p228, %s18, 1
        %s230 = smul.addr %s229, 16
        %s231 = smul.addr %s230, 4
        %s232 = scalar_lea.vmem %s3, %s231
        %p233 = scmp.lt.s32.totalorder %s18, 1
        %s234 = scalar_select %p233, %s18, 1
        %s235 = smul.addr %s234, 2
        %s236 = scalar_lea.vmem %s4, %s235
        %v237 = vld [vmem:[%s227] sm:$0xff]
        %v238 = vld [vmem:[%s227 + $0x8] sm:$0x11]
        %v239 = vld [vmem:[%s227 + $0x10] sm:$0xff]
        %v240 = vld [vmem:[%s227 + $0x18] sm:$0x11]
        %v241 = vld [vmem:[%s227 + $0x20] sm:$0xff]
        %v242 = vld [vmem:[%s227 + $0x28] sm:$0x11]
        %v243 = vld [vmem:[%s227 + $0x30] sm:$0xff]
        %v244 = vld [vmem:[%s227 + $0x38] sm:$0x11]
        %v245 = vld [vmem:[%s227 + $0x40] sm:$0xff]
        %v246 = vld [vmem:[%s227 + $0x48] sm:$0x11]
        %v247 = vld [vmem:[%s227 + $0x50] sm:$0xff]
        %v248 = vld [vmem:[%s227 + $0x58] sm:$0x11]
        %v249 = vld [vmem:[%s227 + $0x60] sm:$0xff]
        %v250 = vld [vmem:[%s227 + $0x68] sm:$0x11]
        %v251 = vld [vmem:[%s227 + $0x70] sm:$0xff]
        %v252 = vld [vmem:[%s227 + $0x78] sm:$0x11]
        %v253 = vld [vmem:[%s227 + $0x80] sm:$0xff]
        %v254 = vld [vmem:[%s227 + $0x88] sm:$0x11]
        %v255 = vld [vmem:[%s227 + $0x90] sm:$0xff]
        %v256 = vld [vmem:[%s227 + $0x98] sm:$0x11]
        %v257 = vld [vmem:[#allocation2] sm:$0x3]
        %v258 = vld [vmem:[#allocation2 + $0x2] sm:$0x3]
        %v259 = vld [vmem:[#allocation2 + $0x4] sm:$0x3]
        %v260 = vld [vmem:[#allocation2 + $0x6] sm:$0x3]
        %v261 = vld [vmem:[#allocation2 + $0x8] sm:$0x3]
        %v262 = vld [vmem:[#allocation2 + $0xa] sm:$0x3]
        %v263 = vld [vmem:[#allocation2 + $0xc] sm:$0x3]
        %v264 = vld [vmem:[#allocation2 + $0xe] sm:$0x3]
        %v265 = vld [vmem:[#allocation2 + $0x10] sm:$0x3]
        %v266 = vunpack.c.l.bf16 %v237
        %v267 = vunpack.c.h.bf16 %v237
        %v268 = vunpack.c.l.bf16 %v239
        %v269 = vunpack.c.h.bf16 %v239
        %v270 = vunpack.c.l.bf16 %v241
        %v271 = vunpack.c.h.bf16 %v241
        %v272 = vunpack.c.l.bf16 %v243
        %v273 = vunpack.c.h.bf16 %v243
        %v274 = vunpack.c.l.bf16 %v245
        %v275 = vunpack.c.h.bf16 %v245
        %v276 = vunpack.c.l.bf16 %v247
        %v277 = vunpack.c.h.bf16 %v247
        %v278 = vunpack.c.l.bf16 %v249
        %v279 = vunpack.c.h.bf16 %v249
        %v280 = vunpack.c.l.bf16 %v251
        %v281 = vunpack.c.h.bf16 %v251
        %v283 = vlaneseq
        %v284 = vshrl.u32 %v283, 7
        %v285 = vsub.s32 0, %v284
        %v286 = vrot.slane %v257, %v285
        %v287 = vlaneseq
        %v288 = vshrl.u32 %v287, 7
        %v289 = vsub.s32 1, %v288
        %v290 = vrot.slane %v257, %v289
        %v293 = vmul.f32 %v266, %v286
        %v294 = vmul.f32 %v267, %v290
        %v295 = vmul.f32 %v268, %v286
        %v296 = vmul.f32 %v269, %v290
        %v297 = vmul.f32 %v270, %v286
        %v298 = vmul.f32 %v271, %v290
        %v299 = vmul.f32 %v272, %v286
        %v300 = vmul.f32 %v273, %v290
        %v301 = vmul.f32 %v274, %v286
        %v302 = vmul.f32 %v275, %v290
        %v303 = vmul.f32 %v276, %v286
        %v304 = vmul.f32 %v277, %v290
        %v305 = vmul.f32 %v278, %v286
        %v306 = vmul.f32 %v279, %v290
        %v307 = vmul.f32 %v280, %v286
        %v308 = vmul.f32 %v281, %v290
        %v309 = vunpack.c.l.bf16 %v238
        %v310 = vunpack.c.h.bf16 %v238
        %v311 = vunpack.c.l.bf16 %v240
        %v312 = vunpack.c.h.bf16 %v240
        %v313 = vunpack.c.l.bf16 %v242
        %v314 = vunpack.c.h.bf16 %v242
        %v315 = vunpack.c.l.bf16 %v244
        %v316 = vunpack.c.h.bf16 %v244
        %v317 = vunpack.c.l.bf16 %v246
        %v318 = vunpack.c.h.bf16 %v246
        %v319 = vunpack.c.l.bf16 %v248
        %v320 = vunpack.c.h.bf16 %v248
        %v321 = vunpack.c.l.bf16 %v250
        %v322 = vunpack.c.h.bf16 %v250
        %v323 = vunpack.c.l.bf16 %v252
        %v324 = vunpack.c.h.bf16 %v252
        %v326 = vlaneseq
        %v327 = vshrl.u32 %v326, 7
        %v328 = vsub.s32 0, %v327
        %v329 = vrot.slane %v258, %v328
        %v330 = vlaneseq
        %v331 = vshrl.u32 %v330, 7
        %v332 = vsub.s32 1, %v331
        %v333 = vrot.slane %v258, %v332
        %v336 = vmul.f32 %v266, %v329
        %v337 = vmul.f32 %v267, %v333
        %v338 = vmul.f32 %v309, %v329
        %v339 = vmul.f32 %v310, %v333
        %v340 = vmul.f32 %v268, %v329
        %v341 = vmul.f32 %v269, %v333
        %v342 = vmul.f32 %v311, %v329
        %v343 = vmul.f32 %v312, %v333
        %v344 = vmul.f32 %v270, %v329
        %v345 = vmul.f32 %v271, %v333
        %v346 = vmul.f32 %v313, %v329
        %v347 = vmul.f32 %v314, %v333
        %v348 = vmul.f32 %v272, %v329
        %v349 = vmul.f32 %v273, %v333
        %v350 = vmul.f32 %v315, %v329
        %v351 = vmul.f32 %v316, %v333
        %v352 = vmul.f32 %v274, %v329
        %v353 = vmul.f32 %v275, %v333
        %v354 = vmul.f32 %v317, %v329
        %v355 = vmul.f32 %v318, %v333
        %v356 = vmul.f32 %v276, %v329
        %v357 = vmul.f32 %v277, %v333
        %v358 = vmul.f32 %v319, %v329
        %v359 = vmul.f32 %v320, %v333
        %v360 = vmul.f32 %v278, %v329
        %v361 = vmul.f32 %v279, %v333
        %v362 = vmul.f32 %v321, %v329
        %v363 = vmul.f32 %v322, %v333
        %v364 = vmul.f32 %v280, %v329
        %v365 = vmul.f32 %v281, %v333
        %v366 = vmul.f32 %v323, %v329
        %v367 = vmul.f32 %v324, %v333
        %vm400 = vcmask 1046528
        %v401 = vrot.slane %v336, 1
        %v402 = vrot.slane %v338, 1
        %v403 = vsel %vm400, %v401, %v402
        %v404 = vrot.slane %v337, 1
        %v405 = vrot.slane %v339, 1
        %v406 = vsel %vm400, %v404, %v405
        %v407 = vrot.slane %v340, 1
        %v408 = vrot.slane %v342, 1
        %v409 = vsel %vm400, %v407, %v408
        %v410 = vrot.slane %v341, 1
        %v411 = vrot.slane %v343, 1
        %v412 = vsel %vm400, %v410, %v411
        %v413 = vrot.slane %v344, 1
        %v414 = vrot.slane %v346, 1
        %v415 = vsel %vm400, %v413, %v414
        %v416 = vrot.slane %v345, 1
        %v417 = vrot.slane %v347, 1
        %v418 = vsel %vm400, %v416, %v417
        %v419 = vrot.slane %v348, 1
        %v420 = vrot.slane %v350, 1
        %v421 = vsel %vm400, %v419, %v420
        %v422 = vrot.slane %v349, 1
        %v423 = vrot.slane %v351, 1
        %v424 = vsel %vm400, %v422, %v423
        %v425 = vrot.slane %v352, 1
        %v426 = vrot.slane %v354, 1
        %v427 = vsel %vm400, %v425, %v426
        %v428 = vrot.slane %v353, 1
        %v429 = vrot.slane %v355, 1
        %v430 = vsel %vm400, %v428, %v429
        %v431 = vrot.slane %v356, 1
        %v432 = vrot.slane %v358, 1
        %v433 = vsel %vm400, %v431, %v432
        %v434 = vrot.slane %v357, 1
        %v435 = vrot.slane %v359, 1
        %v436 = vsel %vm400, %v434, %v435
        %v437 = vrot.slane %v360, 1
        %v438 = vrot.slane %v362, 1
        %v439 = vsel %vm400, %v437, %v438
        %v440 = vrot.slane %v361, 1
        %v441 = vrot.slane %v363, 1
        %v442 = vsel %vm400, %v440, %v441
        %v443 = vrot.slane %v364, 1
        %v444 = vrot.slane %v366, 1
        %v445 = vsel %vm400, %v443, %v444
        %v446 = vrot.slane %v365, 1
        %v447 = vrot.slane %v367, 1
        %v448 = vsel %vm400, %v446, %v447
        %v465 = vadd.f32 %v293, %v403
        %v466 = vadd.f32 %v294, %v406
        %v467 = vadd.f32 %v295, %v409
        %v468 = vadd.f32 %v296, %v412
        %v469 = vadd.f32 %v297, %v415
        %v470 = vadd.f32 %v298, %v418
        %v471 = vadd.f32 %v299, %v421
        %v472 = vadd.f32 %v300, %v424
        %v473 = vadd.f32 %v301, %v427
        %v474 = vadd.f32 %v302, %v430
        %v475 = vadd.f32 %v303, %v433
        %v476 = vadd.f32 %v304, %v436
        %v477 = vadd.f32 %v305, %v439
        %v478 = vadd.f32 %v306, %v442
        %v479 = vadd.f32 %v307, %v445
        %v480 = vadd.f32 %v308, %v448
        %v482 = vlaneseq
        %v483 = vshrl.u32 %v482, 7
        %v484 = vsub.s32 0, %v483
        %v485 = vrot.slane %v259, %v484
        %v486 = vlaneseq
        %v487 = vshrl.u32 %v486, 7
        %v488 = vsub.s32 1, %v487
        %v489 = vrot.slane %v259, %v488
        %v492 = vmul.f32 %v266, %v485
        %v493 = vmul.f32 %v267, %v489
        %v494 = vmul.f32 %v309, %v485
        %v495 = vmul.f32 %v310, %v489
        %v496 = vmul.f32 %v268, %v485
        %v497 = vmul.f32 %v269, %v489
        %v498 = vmul.f32 %v311, %v485
        %v499 = vmul.f32 %v312, %v489
        %v500 = vmul.f32 %v270, %v485
        %v501 = vmul.f32 %v271, %v489
        %v502 = vmul.f32 %v313, %v485
        %v503 = vmul.f32 %v314, %v489
        %v504 = vmul.f32 %v272, %v485
        %v505 = vmul.f32 %v273, %v489
        %v506 = vmul.f32 %v315, %v485
        %v507 = vmul.f32 %v316, %v489
        %v508 = vmul.f32 %v274, %v485
        %v509 = vmul.f32 %v275, %v489
        %v510 = vmul.f32 %v317, %v485
        %v511 = vmul.f32 %v318, %v489
        %v512 = vmul.f32 %v276, %v485
        %v513 = vmul.f32 %v277, %v489
        %v514 = vmul.f32 %v319, %v485
        %v515 = vmul.f32 %v320, %v489
        %v516 = vmul.f32 %v278, %v485
        %v517 = vmul.f32 %v279, %v489
        %v518 = vmul.f32 %v321, %v485
        %v519 = vmul.f32 %v322, %v489
        %v520 = vmul.f32 %v280, %v485
        %v521 = vmul.f32 %v281, %v489
        %v522 = vmul.f32 %v323, %v485
        %v523 = vmul.f32 %v324, %v489
        %vm556 = vcmask 1045504
        %v557 = vrot.slane %v492, 2
        %v558 = vrot.slane %v494, 2
        %v559 = vsel %vm556, %v557, %v558
        %v560 = vrot.slane %v493, 2
        %v561 = vrot.slane %v495, 2
        %v562 = vsel %vm556, %v560, %v561
        %v563 = vrot.slane %v496, 2
        %v564 = vrot.slane %v498, 2
        %v565 = vsel %vm556, %v563, %v564
        %v566 = vrot.slane %v497, 2
        %v567 = vrot.slane %v499, 2
        %v568 = vsel %vm556, %v566, %v567
        %v569 = vrot.slane %v500, 2
        %v570 = vrot.slane %v502, 2
        %v571 = vsel %vm556, %v569, %v570
        %v572 = vrot.slane %v501, 2
        %v573 = vrot.slane %v503, 2
        %v574 = vsel %vm556, %v572, %v573
        %v575 = vrot.slane %v504, 2
        %v576 = vrot.slane %v506, 2
        %v577 = vsel %vm556, %v575, %v576
        %v578 = vrot.slane %v505, 2
        %v579 = vrot.slane %v507, 2
        %v580 = vsel %vm556, %v578, %v579
        %v581 = vrot.slane %v508, 2
        %v582 = vrot.slane %v510, 2
        %v583 = vsel %vm556, %v581, %v582
        %v584 = vrot.slane %v509, 2
        %v585 = vrot.slane %v511, 2
        %v586 = vsel %vm556, %v584, %v585
        %v587 = vrot.slane %v512, 2
        %v588 = vrot.slane %v514, 2
        %v589 = vsel %vm556, %v587, %v588
        %v590 = vrot.slane %v513, 2
        %v591 = vrot.slane %v515, 2
        %v592 = vsel %vm556, %v590, %v591
        %v593 = vrot.slane %v516, 2
        %v594 = vrot.slane %v518, 2
        %v595 = vsel %vm556, %v593, %v594
        %v596 = vrot.slane %v517, 2
        %v597 = vrot.slane %v519, 2
        %v598 = vsel %vm556, %v596, %v597
        %v599 = vrot.slane %v520, 2
        %v600 = vrot.slane %v522, 2
        %v601 = vsel %vm556, %v599, %v600
        %v602 = vrot.slane %v521, 2
        %v603 = vrot.slane %v523, 2
        %v604 = vsel %vm556, %v602, %v603
        %v621 = vadd.f32 %v465, %v559
        %v622 = vadd.f32 %v466, %v562
        %v623 = vadd.f32 %v467, %v565
        %v624 = vadd.f32 %v468, %v568
        %v625 = vadd.f32 %v469, %v571
        %v626 = vadd.f32 %v470, %v574
        %v627 = vadd.f32 %v471, %v577
        %v628 = vadd.f32 %v472, %v580
        %v629 = vadd.f32 %v473, %v583
        %v630 = vadd.f32 %v474, %v586
        %v631 = vadd.f32 %v475, %v589
        %v632 = vadd.f32 %v476, %v592
        %v633 = vadd.f32 %v477, %v595
        %v634 = vadd.f32 %v478, %v598
        %v635 = vadd.f32 %v479, %v601
        %v636 = vadd.f32 %v480, %v604
        %v637 = vunpack.c.l.bf16 %v253
        %v638 = vunpack.c.h.bf16 %v253
        %v640 = vlaneseq
        %v641 = vshrl.u32 %v640, 7
        %v642 = vsub.s32 0, %v641
        %v643 = vrot.slane %v260, %v642
        %v644 = vlaneseq
        %v645 = vshrl.u32 %v644, 7
        %v646 = vsub.s32 1, %v645
        %v647 = vrot.slane %v260, %v646
        %v650 = vmul.f32 %v268, %v643
        %v651 = vmul.f32 %v269, %v647
        %v652 = vmul.f32 %v270, %v643
        %v653 = vmul.f32 %v271, %v647
        %v654 = vmul.f32 %v272, %v643
        %v655 = vmul.f32 %v273, %v647
        %v656 = vmul.f32 %v274, %v643
        %v657 = vmul.f32 %v275, %v647
        %v658 = vmul.f32 %v276, %v643
        %v659 = vmul.f32 %v277, %v647
        %v660 = vmul.f32 %v278, %v643
        %v661 = vmul.f32 %v279, %v647
        %v662 = vmul.f32 %v280, %v643
        %v663 = vmul.f32 %v281, %v647
        %v664 = vmul.f32 %v637, %v643
        %v665 = vmul.f32 %v638, %v647
        %v666 = vadd.f32 %v621, %v650
        %v667 = vadd.f32 %v622, %v651
        %v668 = vadd.f32 %v623, %v652
        %v669 = vadd.f32 %v624, %v653
        %v670 = vadd.f32 %v625, %v654
        %v671 = vadd.f32 %v626, %v655
        %v672 = vadd.f32 %v627, %v656
        %v673 = vadd.f32 %v628, %v657
        %v674 = vadd.f32 %v629, %v658
        %v675 = vadd.f32 %v630, %v659
        %v676 = vadd.f32 %v631, %v660
        %v677 = vadd.f32 %v632, %v661
        %v678 = vadd.f32 %v633, %v662
        %v679 = vadd.f32 %v634, %v663
        %v680 = vadd.f32 %v635, %v664
        %v681 = vadd.f32 %v636, %v665
        %v682 = vunpack.c.l.bf16 %v254
        %v683 = vunpack.c.h.bf16 %v254
        %v685 = vlaneseq
        %v686 = vshrl.u32 %v685, 7
        %v687 = vsub.s32 0, %v686
        %v688 = vrot.slane %v261, %v687
        %v689 = vlaneseq
        %v690 = vshrl.u32 %v689, 7
        %v691 = vsub.s32 1, %v690
        %v692 = vrot.slane %v261, %v691
        %v695 = vmul.f32 %v268, %v688
        %v696 = vmul.f32 %v269, %v692
        %v697 = vmul.f32 %v311, %v688
        %v698 = vmul.f32 %v312, %v692
        %v699 = vmul.f32 %v270, %v688
        %v700 = vmul.f32 %v271, %v692
        %v701 = vmul.f32 %v313, %v688
        %v702 = vmul.f32 %v314, %v692
        %v703 = vmul.f32 %v272, %v688
        %v704 = vmul.f32 %v273, %v692
        %v705 = vmul.f32 %v315, %v688
        %v706 = vmul.f32 %v316, %v692
        %v707 = vmul.f32 %v274, %v688
        %v708 = vmul.f32 %v275, %v692
        %v709 = vmul.f32 %v317, %v688
        %v710 = vmul.f32 %v318, %v692
        %v711 = vmul.f32 %v276, %v688
        %v712 = vmul.f32 %v277, %v692
        %v713 = vmul.f32 %v319, %v688
        %v714 = vmul.f32 %v320, %v692
        %v715 = vmul.f32 %v278, %v688
        %v716 = vmul.f32 %v279, %v692
        %v717 = vmul.f32 %v321, %v688
        %v718 = vmul.f32 %v322, %v692
        %v719 = vmul.f32 %v280, %v688
        %v720 = vmul.f32 %v281, %v692
        %v721 = vmul.f32 %v323, %v688
        %v722 = vmul.f32 %v324, %v692
        %v723 = vmul.f32 %v637, %v688
        %v724 = vmul.f32 %v638, %v692
        %v725 = vmul.f32 %v682, %v688
        %v726 = vmul.f32 %v683, %v692
        %v759 = vrot.slane %v695, 1
        %v760 = vrot.slane %v697, 1
        %v761 = vsel %vm400, %v759, %v760
        %v762 = vrot.slane %v696, 1
        %v763 = vrot.slane %v698, 1
        %v764 = vsel %vm400, %v762, %v763
        %v765 = vrot.slane %v699, 1
        %v766 = vrot.slane %v701, 1
        %v767 = vsel %vm400, %v765, %v766
        %v768 = vrot.slane %v700, 1
        %v769 = vrot.slane %v702, 1
        %v770 = vsel %vm400, %v768, %v769
        %v771 = vrot.slane %v703, 1
        %v772 = vrot.slane %v705, 1
        %v773 = vsel %vm400, %v771, %v772
        %v774 = vrot.slane %v704, 1
        %v775 = vrot.slane %v706, 1
        %v776 = vsel %vm400, %v774, %v775
        %v777 = vrot.slane %v707, 1
        %v778 = vrot.slane %v709, 1
        %v779 = vsel %vm400, %v777, %v778
        %v780 = vrot.slane %v708, 1
        %v781 = vrot.slane %v710, 1
        %v782 = vsel %vm400, %v780, %v781
        %v783 = vrot.slane %v711, 1
        %v784 = vrot.slane %v713, 1
        %v785 = vsel %vm400, %v783, %v784
        %v786 = vrot.slane %v712, 1
        %v787 = vrot.slane %v714, 1
        %v788 = vsel %vm400, %v786, %v787
        %v789 = vrot.slane %v715, 1
        %v790 = vrot.slane %v717, 1
        %v791 = vsel %vm400, %v789, %v790
        %v792 = vrot.slane %v716, 1
        %v793 = vrot.slane %v718, 1
        %v794 = vsel %vm400, %v792, %v793
        %v795 = vrot.slane %v719, 1
        %v796 = vrot.slane %v721, 1
        %v797 = vsel %vm400, %v795, %v796
        %v798 = vrot.slane %v720, 1
        %v799 = vrot.slane %v722, 1
        %v800 = vsel %vm400, %v798, %v799
        %v801 = vrot.slane %v723, 1
        %v802 = vrot.slane %v725, 1
        %v803 = vsel %vm400, %v801, %v802
        %v804 = vrot.slane %v724, 1
        %v805 = vrot.slane %v726, 1
        %v806 = vsel %vm400, %v804, %v805
        %v823 = vadd.f32 %v666, %v761
        %v824 = vadd.f32 %v667, %v764
        %v825 = vadd.f32 %v668, %v767
        %v826 = vadd.f32 %v669, %v770
        %v827 = vadd.f32 %v670, %v773
        %v828 = vadd.f32 %v671, %v776
        %v829 = vadd.f32 %v672, %v779
        %v830 = vadd.f32 %v673, %v782
        %v831 = vadd.f32 %v674, %v785
        %v832 = vadd.f32 %v675, %v788
        %v833 = vadd.f32 %v676, %v791
        %v834 = vadd.f32 %v677, %v794
        %v835 = vadd.f32 %v678, %v797
        %v836 = vadd.f32 %v679, %v800
        %v837 = vadd.f32 %v680, %v803
        %v838 = vadd.f32 %v681, %v806
        %v840 = vlaneseq
        %v841 = vshrl.u32 %v840, 7
        %v842 = vsub.s32 0, %v841
        %v843 = vrot.slane %v262, %v842
        %v844 = vlaneseq
        %v845 = vshrl.u32 %v844, 7
        %v846 = vsub.s32 1, %v845
        %v847 = vrot.slane %v262, %v846
        %v850 = vmul.f32 %v268, %v843
        %v851 = vmul.f32 %v269, %v847
        %v852 = vmul.f32 %v311, %v843
        %v853 = vmul.f32 %v312, %v847
        %v854 = vmul.f32 %v270, %v843
        %v855 = vmul.f32 %v271, %v847
        %v856 = vmul.f32 %v313, %v843
        %v857 = vmul.f32 %v314, %v847
        %v858 = vmul.f32 %v272, %v843
        %v859 = vmul.f32 %v273, %v847
        %v860 = vmul.f32 %v315, %v843
        %v861 = vmul.f32 %v316, %v847
        %v862 = vmul.f32 %v274, %v843
        %v863 = vmul.f32 %v275, %v847
        %v864 = vmul.f32 %v317, %v843
        %v865 = vmul.f32 %v318, %v847
        %v866 = vmul.f32 %v276, %v843
        %v867 = vmul.f32 %v277, %v847
        %v868 = vmul.f32 %v319, %v843
        %v869 = vmul.f32 %v320, %v847
        %v870 = vmul.f32 %v278, %v843
        %v871 = vmul.f32 %v279, %v847
        %v872 = vmul.f32 %v321, %v843
        %v873 = vmul.f32 %v322, %v847
        %v874 = vmul.f32 %v280, %v843
        %v875 = vmul.f32 %v281, %v847
        %v876 = vmul.f32 %v323, %v843
        %v877 = vmul.f32 %v324, %v847
        %v878 = vmul.f32 %v637, %v843
        %v879 = vmul.f32 %v638, %v847
        %v880 = vmul.f32 %v682, %v843
        %v881 = vmul.f32 %v683, %v847
        %v914 = vrot.slane %v850, 2
        %v915 = vrot.slane %v852, 2
        %v916 = vsel %vm556, %v914, %v915
        %v917 = vrot.slane %v851, 2
        %v918 = vrot.slane %v853, 2
        %v919 = vsel %vm556, %v917, %v918
        %v920 = vrot.slane %v854, 2
        %v921 = vrot.slane %v856, 2
        %v922 = vsel %vm556, %v920, %v921
        %v923 = vrot.slane %v855, 2
        %v924 = vrot.slane %v857, 2
        %v925 = vsel %vm556, %v923, %v924
        %v926 = vrot.slane %v858, 2
        %v927 = vrot.slane %v860, 2
        %v928 = vsel %vm556, %v926, %v927
        %v929 = vrot.slane %v859, 2
        %v930 = vrot.slane %v861, 2
        %v931 = vsel %vm556, %v929, %v930
        %v932 = vrot.slane %v862, 2
        %v933 = vrot.slane %v864, 2
        %v934 = vsel %vm556, %v932, %v933
        %v935 = vrot.slane %v863, 2
        %v936 = vrot.slane %v865, 2
        %v937 = vsel %vm556, %v935, %v936
        %v938 = vrot.slane %v866, 2
        %v939 = vrot.slane %v868, 2
        %v940 = vsel %vm556, %v938, %v939
        %v941 = vrot.slane %v867, 2
        %v942 = vrot.slane %v869, 2
        %v943 = vsel %vm556, %v941, %v942
        %v944 = vrot.slane %v870, 2
        %v945 = vrot.slane %v872, 2
        %v946 = vsel %vm556, %v944, %v945
        %v947 = vrot.slane %v871, 2
        %v948 = vrot.slane %v873, 2
        %v949 = vsel %vm556, %v947, %v948
        %v950 = vrot.slane %v874, 2
        %v951 = vrot.slane %v876, 2
        %v952 = vsel %vm556, %v950, %v951
        %v953 = vrot.slane %v875, 2
        %v954 = vrot.slane %v877, 2
        %v955 = vsel %vm556, %v953, %v954
        %v956 = vrot.slane %v878, 2
        %v957 = vrot.slane %v880, 2
        %v958 = vsel %vm556, %v956, %v957
        %v959 = vrot.slane %v879, 2
        %v960 = vrot.slane %v881, 2
        %v961 = vsel %vm556, %v959, %v960
        %v978 = vadd.f32 %v823, %v916
        %v979 = vadd.f32 %v824, %v919
        %v980 = vadd.f32 %v825, %v922
        %v981 = vadd.f32 %v826, %v925
        %v982 = vadd.f32 %v827, %v928
        %v983 = vadd.f32 %v828, %v931
        %v984 = vadd.f32 %v829, %v934
        %v985 = vadd.f32 %v830, %v937
        %v986 = vadd.f32 %v831, %v940
        %v987 = vadd.f32 %v832, %v943
        %v988 = vadd.f32 %v833, %v946
        %v989 = vadd.f32 %v834, %v949
        %v990 = vadd.f32 %v835, %v952
        %v991 = vadd.f32 %v836, %v955
        %v992 = vadd.f32 %v837, %v958
        %v993 = vadd.f32 %v838, %v961
        %v994 = vunpack.c.l.bf16 %v255
        %v995 = vunpack.c.h.bf16 %v255
        %v997 = vlaneseq
        %v998 = vshrl.u32 %v997, 7
        %v999 = vsub.s32 0, %v998
        %v1000 = vrot.slane %v263, %v999
        %v1001 = vlaneseq
        %v1002 = vshrl.u32 %v1001, 7
        %v1003 = vsub.s32 1, %v1002
        %v1004 = vrot.slane %v263, %v1003
        %v1007 = vmul.f32 %v270, %v1000
        %v1008 = vmul.f32 %v271, %v1004
        %v1009 = vmul.f32 %v272, %v1000
        %v1010 = vmul.f32 %v273, %v1004
        %v1011 = vmul.f32 %v274, %v1000
        %v1012 = vmul.f32 %v275, %v1004
        %v1013 = vmul.f32 %v276, %v1000
        %v1014 = vmul.f32 %v277, %v1004
        %v1015 = vmul.f32 %v278, %v1000
        %v1016 = vmul.f32 %v279, %v1004
        %v1017 = vmul.f32 %v280, %v1000
        %v1018 = vmul.f32 %v281, %v1004
        %v1019 = vmul.f32 %v637, %v1000
        %v1020 = vmul.f32 %v638, %v1004
        %v1021 = vmul.f32 %v994, %v1000
        %v1022 = vmul.f32 %v995, %v1004
        %v1023 = vadd.f32 %v978, %v1007
        %v1024 = vadd.f32 %v979, %v1008
        %v1025 = vadd.f32 %v980, %v1009
        %v1026 = vadd.f32 %v981, %v1010
        %v1027 = vadd.f32 %v982, %v1011
        %v1028 = vadd.f32 %v983, %v1012
        %v1029 = vadd.f32 %v984, %v1013
        %v1030 = vadd.f32 %v985, %v1014
        %v1031 = vadd.f32 %v986, %v1015
        %v1032 = vadd.f32 %v987, %v1016
        %v1033 = vadd.f32 %v988, %v1017
        %v1034 = vadd.f32 %v989, %v1018
        %v1035 = vadd.f32 %v990, %v1019
        %v1036 = vadd.f32 %v991, %v1020
        %v1037 = vadd.f32 %v992, %v1021
        %v1038 = vadd.f32 %v993, %v1022
        %v1039 = vunpack.c.l.bf16 %v256
        %v1040 = vunpack.c.h.bf16 %v256
        %v1042 = vlaneseq
        %v1043 = vshrl.u32 %v1042, 7
        %v1044 = vsub.s32 0, %v1043
        %v1045 = vrot.slane %v264, %v1044
        %v1046 = vlaneseq
        %v1047 = vshrl.u32 %v1046, 7
        %v1048 = vsub.s32 1, %v1047
        %v1049 = vrot.slane %v264, %v1048
        %v1052 = vmul.f32 %v270, %v1045
        %v1053 = vmul.f32 %v271, %v1049
        %v1054 = vmul.f32 %v313, %v1045
        %v1055 = vmul.f32 %v314, %v1049
        %v1056 = vmul.f32 %v272, %v1045
        %v1057 = vmul.f32 %v273, %v1049
        %v1058 = vmul.f32 %v315, %v1045
        %v1059 = vmul.f32 %v316, %v1049
        %v1060 = vmul.f32 %v274, %v1045
        %v1061 = vmul.f32 %v275, %v1049
        %v1062 = vmul.f32 %v317, %v1045
        %v1063 = vmul.f32 %v318, %v1049
        %v1064 = vmul.f32 %v276, %v1045
        %v1065 = vmul.f32 %v277, %v1049
        %v1066 = vmul.f32 %v319, %v1045
        %v1067 = vmul.f32 %v320, %v1049
        %v1068 = vmul.f32 %v278, %v1045
        %v1069 = vmul.f32 %v279, %v1049
        %v1070 = vmul.f32 %v321, %v1045
        %v1071 = vmul.f32 %v322, %v1049
        %v1072 = vmul.f32 %v280, %v1045
        %v1073 = vmul.f32 %v281, %v1049
        %v1074 = vmul.f32 %v323, %v1045
        %v1075 = vmul.f32 %v324, %v1049
        %v1076 = vmul.f32 %v637, %v1045
        %v1077 = vmul.f32 %v638, %v1049
        %v1078 = vmul.f32 %v682, %v1045
        %v1079 = vmul.f32 %v683, %v1049
        %v1080 = vmul.f32 %v994, %v1045
        %v1081 = vmul.f32 %v995, %v1049
        %v1082 = vmul.f32 %v1039, %v1045
        %v1083 = vmul.f32 %v1040, %v1049
        %v1116 = vrot.slane %v1052, 1
        %v1117 = vrot.slane %v1054, 1
        %v1118 = vsel %vm400, %v1116, %v1117
        %v1119 = vrot.slane %v1053, 1
        %v1120 = vrot.slane %v1055, 1
        %v1121 = vsel %vm400, %v1119, %v1120
        %v1122 = vrot.slane %v1056, 1
        %v1123 = vrot.slane %v1058, 1
        %v1124 = vsel %vm400, %v1122, %v1123
        %v1125 = vrot.slane %v1057, 1
        %v1126 = vrot.slane %v1059, 1
        %v1127 = vsel %vm400, %v1125, %v1126
        %v1128 = vrot.slane %v1060, 1
        %v1129 = vrot.slane %v1062, 1
        %v1130 = vsel %vm400, %v1128, %v1129
        %v1131 = vrot.slane %v1061, 1
        %v1132 = vrot.slane %v1063, 1
        %v1133 = vsel %vm400, %v1131, %v1132
        %v1134 = vrot.slane %v1064, 1
        %v1135 = vrot.slane %v1066, 1
        %v1136 = vsel %vm400, %v1134, %v1135
        %v1137 = vrot.slane %v1065, 1
        %v1138 = vrot.slane %v1067, 1
        %v1139 = vsel %vm400, %v1137, %v1138
        %v1140 = vrot.slane %v1068, 1
        %v1141 = vrot.slane %v1070, 1
        %v1142 = vsel %vm400, %v1140, %v1141
        %v1143 = vrot.slane %v1069, 1
        %v1144 = vrot.slane %v1071, 1
        %v1145 = vsel %vm400, %v1143, %v1144
        %v1146 = vrot.slane %v1072, 1
        %v1147 = vrot.slane %v1074, 1
        %v1148 = vsel %vm400, %v1146, %v1147
        %v1149 = vrot.slane %v1073, 1
        %v1150 = vrot.slane %v1075, 1
        %v1151 = vsel %vm400, %v1149, %v1150
        %v1152 = vrot.slane %v1076, 1
        %v1153 = vrot.slane %v1078, 1
        %v1154 = vsel %vm400, %v1152, %v1153
        %v1155 = vrot.slane %v1077, 1
        %v1156 = vrot.slane %v1079, 1
        %v1157 = vsel %vm400, %v1155, %v1156
        %v1158 = vrot.slane %v1080, 1
        %v1159 = vrot.slane %v1082, 1
        %v1160 = vsel %vm400, %v1158, %v1159
        %v1161 = vrot.slane %v1081, 1
        %v1162 = vrot.slane %v1083, 1
        %v1163 = vsel %vm400, %v1161, %v1162
        %v1180 = vadd.f32 %v1023, %v1118
        %v1181 = vadd.f32 %v1024, %v1121
        %v1182 = vadd.f32 %v1025, %v1124
        %v1183 = vadd.f32 %v1026, %v1127
        %v1184 = vadd.f32 %v1027, %v1130
        %v1185 = vadd.f32 %v1028, %v1133
        %v1186 = vadd.f32 %v1029, %v1136
        %v1187 = vadd.f32 %v1030, %v1139
        %v1188 = vadd.f32 %v1031, %v1142
        %v1189 = vadd.f32 %v1032, %v1145
        %v1190 = vadd.f32 %v1033, %v1148
        %v1191 = vadd.f32 %v1034, %v1151
        %v1192 = vadd.f32 %v1035, %v1154
        %v1193 = vadd.f32 %v1036, %v1157
        %v1194 = vadd.f32 %v1037, %v1160
        %v1195 = vadd.f32 %v1038, %v1163
        %v1197 = vlaneseq
        %v1198 = vshrl.u32 %v1197, 7
        %v1199 = vsub.s32 0, %v1198
        %v1200 = vrot.slane %v265, %v1199
        %v1201 = vlaneseq
        %v1202 = vshrl.u32 %v1201, 7
        %v1203 = vsub.s32 1, %v1202
        %v1204 = vrot.slane %v265, %v1203
        %v1207 = vmul.f32 %v270, %v1200
        %v1208 = vmul.f32 %v271, %v1204
        %v1209 = vmul.f32 %v313, %v1200
        %v1210 = vmul.f32 %v314, %v1204
        %v1211 = vmul.f32 %v272, %v1200
        %v1212 = vmul.f32 %v273, %v1204
        %v1213 = vmul.f32 %v315, %v1200
        %v1214 = vmul.f32 %v316, %v1204
        %v1215 = vmul.f32 %v274, %v1200
        %v1216 = vmul.f32 %v275, %v1204
        %v1217 = vmul.f32 %v317, %v1200
        %v1218 = vmul.f32 %v318, %v1204
        %v1219 = vmul.f32 %v276, %v1200
        %v1220 = vmul.f32 %v277, %v1204
        %v1221 = vmul.f32 %v319, %v1200
        %v1222 = vmul.f32 %v320, %v1204
        %v1223 = vmul.f32 %v278, %v1200
        %v1224 = vmul.f32 %v279, %v1204
        %v1225 = vmul.f32 %v321, %v1200
        %v1226 = vmul.f32 %v322, %v1204
        %v1227 = vmul.f32 %v280, %v1200
        %v1228 = vmul.f32 %v281, %v1204
        %v1229 = vmul.f32 %v323, %v1200
        %v1230 = vmul.f32 %v324, %v1204
        %v1231 = vmul.f32 %v637, %v1200
        %v1232 = vmul.f32 %v638, %v1204
        %v1233 = vmul.f32 %v682, %v1200
        %v1234 = vmul.f32 %v683, %v1204
        %v1235 = vmul.f32 %v994, %v1200
        %v1236 = vmul.f32 %v995, %v1204
        %v1237 = vmul.f32 %v1039, %v1200
        %v1238 = vmul.f32 %v1040, %v1204
        %v1271 = vrot.slane %v1207, 2
        %v1272 = vrot.slane %v1209, 2
        %v1273 = vsel %vm556, %v1271, %v1272
        %v1274 = vrot.slane %v1208, 2
        %v1275 = vrot.slane %v1210, 2
        %v1276 = vsel %vm556, %v1274, %v1275
        %v1277 = vrot.slane %v1211, 2
        %v1278 = vrot.slane %v1213, 2
        %v1279 = vsel %vm556, %v1277, %v1278
        %v1280 = vrot.slane %v1212, 2
        %v1281 = vrot.slane %v1214, 2
        %v1282 = vsel %vm556, %v1280, %v1281
        %v1283 = vrot.slane %v1215, 2
        %v1284 = vrot.slane %v1217, 2
        %v1285 = vsel %vm556, %v1283, %v1284
        %v1286 = vrot.slane %v1216, 2
        %v1287 = vrot.slane %v1218, 2
        %v1288 = vsel %vm556, %v1286, %v1287
        %v1289 = vrot.slane %v1219, 2
        %v1290 = vrot.slane %v1221, 2
        %v1291 = vsel %vm556, %v1289, %v1290
        %v1292 = vrot.slane %v1220, 2
        %v1293 = vrot.slane %v1222, 2
        %v1294 = vsel %vm556, %v1292, %v1293
        %v1295 = vrot.slane %v1223, 2
        %v1296 = vrot.slane %v1225, 2
        %v1297 = vsel %vm556, %v1295, %v1296
        %v1298 = vrot.slane %v1224, 2
        %v1299 = vrot.slane %v1226, 2
        %v1300 = vsel %vm556, %v1298, %v1299
        %v1301 = vrot.slane %v1227, 2
        %v1302 = vrot.slane %v1229, 2
        %v1303 = vsel %vm556, %v1301, %v1302
        %v1304 = vrot.slane %v1228, 2
        %v1305 = vrot.slane %v1230, 2
        %v1306 = vsel %vm556, %v1304, %v1305
        %v1307 = vrot.slane %v1231, 2
        %v1308 = vrot.slane %v1233, 2
        %v1309 = vsel %vm556, %v1307, %v1308
        %v1310 = vrot.slane %v1232, 2
        %v1311 = vrot.slane %v1234, 2
        %v1312 = vsel %vm556, %v1310, %v1311
        %v1313 = vrot.slane %v1235, 2
        %v1314 = vrot.slane %v1237, 2
        %v1315 = vsel %vm556, %v1313, %v1314
        %v1316 = vrot.slane %v1236, 2
        %v1317 = vrot.slane %v1238, 2
        %v1318 = vsel %vm556, %v1316, %v1317
        %v1335 = vadd.f32 %v1180, %v1273
        %v1336 = vadd.f32 %v1181, %v1276
        %v1337 = vadd.f32 %v1182, %v1279
        %v1338 = vadd.f32 %v1183, %v1282
        %v1339 = vadd.f32 %v1184, %v1285
        %v1340 = vadd.f32 %v1185, %v1288
        %v1341 = vadd.f32 %v1186, %v1291
        %v1342 = vadd.f32 %v1187, %v1294
        %v1343 = vadd.f32 %v1188, %v1297
        %v1344 = vadd.f32 %v1189, %v1300
        %v1345 = vadd.f32 %v1190, %v1303
        %v1346 = vadd.f32 %v1191, %v1306
        %v1347 = vadd.f32 %v1192, %v1309
        %v1348 = vadd.f32 %v1193, %v1312
        %v1349 = vadd.f32 %v1194, %v1315
        %v1350 = vadd.f32 %v1195, %v1318
        %v1351 = vld [vmem:[#allocation4] sm:$0x3]
        %v1353 = vlaneseq
        %v1354 = vshrl.u32 %v1353, 7
        %v1355 = vsub.s32 0, %v1354
        %v1356 = vrot.slane %v1351, %v1355
        %v1357 = vlaneseq
        %v1358 = vshrl.u32 %v1357, 7
        %v1359 = vsub.s32 1, %v1358
        %v1360 = vrot.slane %v1351, %v1359
        %v1363 = vadd.f32 %v1335, %v1356
        %v1364 = vadd.f32 %v1336, %v1360
        %v1365 = vadd.f32 %v1337, %v1356
        %v1366 = vadd.f32 %v1338, %v1360
        %v1367 = vadd.f32 %v1339, %v1356
        %v1368 = vadd.f32 %v1340, %v1360
        %v1369 = vadd.f32 %v1341, %v1356
        %v1370 = vadd.f32 %v1342, %v1360
        %v1371 = vadd.f32 %v1343, %v1356
        %v1372 = vadd.f32 %v1344, %v1360
        %v1373 = vadd.f32 %v1345, %v1356
        %v1374 = vadd.f32 %v1346, %v1360
        %v1375 = vadd.f32 %v1347, %v1356
        %v1376 = vadd.f32 %v1348, %v1360
        %v1377 = vadd.f32 %v1349, %v1356
        %v1378 = vadd.f32 %v1350, %v1360
        %v1379 = vxor.u32 %v1363, 2147483648
        %v1380 = vxor.u32 %v1364, 2147483648
        %v1381 = vxor.u32 %v1365, 2147483648
        %v1382 = vxor.u32 %v1366, 2147483648
        %v1383 = vxor.u32 %v1367, 2147483648
        %v1384 = vxor.u32 %v1368, 2147483648
        %v1385 = vxor.u32 %v1369, 2147483648
        %v1386 = vxor.u32 %v1370, 2147483648
        %v1387 = vxor.u32 %v1371, 2147483648
        %v1388 = vxor.u32 %v1372, 2147483648
        %v1389 = vxor.u32 %v1373, 2147483648
        %v1390 = vxor.u32 %v1374, 2147483648
        %v1391 = vxor.u32 %v1375, 2147483648
        %v1392 = vxor.u32 %v1376, 2147483648
        %v1393 = vxor.u32 %v1377, 2147483648
        %v1394 = vxor.u32 %v1378, 2147483648
        %v1395 = vmul.f32 %v1379, 1.442695
        %v1396 = vpow.pop %v1395
        %v1397 = vmul.f32 %v1380, 1.442695
        %v1398 = vpow.pop %v1397
        %v1399 = vmul.f32 %v1381, 1.442695
        %v1400 = vpow.pop %v1399
        %v1401 = vmul.f32 %v1382, 1.442695
        %v1402 = vpow.pop %v1401
        %v1403 = vmul.f32 %v1383, 1.442695
        %v1404 = vpow.pop %v1403
        %v1405 = vmul.f32 %v1384, 1.442695
        %v1406 = vpow.pop %v1405
        %v1407 = vmul.f32 %v1385, 1.442695
        %v1408 = vpow.pop %v1407
        %v1409 = vmul.f32 %v1386, 1.442695
        %v1410 = vpow.pop %v1409
        %v1411 = vmul.f32 %v1387, 1.442695
        %v1412 = vpow.pop %v1411
        %v1413 = vmul.f32 %v1388, 1.442695
        %v1414 = vpow.pop %v1413
        %v1415 = vmul.f32 %v1389, 1.442695
        %v1416 = vpow.pop %v1415
        %v1417 = vmul.f32 %v1390, 1.442695
        %v1418 = vpow.pop %v1417
        %v1419 = vmul.f32 %v1391, 1.442695
        %v1420 = vpow.pop %v1419
        %v1421 = vmul.f32 %v1392, 1.442695
        %v1422 = vpow.pop %v1421
        %v1423 = vmul.f32 %v1393, 1.442695
        %v1424 = vpow.pop %v1423
        %v1425 = vmul.f32 %v1394, 1.442695
        %v1426 = vpow.pop %v1425
        %v1427 = vadd.f32 %v1396, 1.0
        %v1428 = vadd.f32 %v1398, 1.0
        %v1429 = vadd.f32 %v1400, 1.0
        %v1430 = vadd.f32 %v1402, 1.0
        %v1431 = vadd.f32 %v1404, 1.0
        %v1432 = vadd.f32 %v1406, 1.0
        %v1433 = vadd.f32 %v1408, 1.0
        %v1434 = vadd.f32 %v1410, 1.0
        %v1435 = vadd.f32 %v1412, 1.0
        %v1436 = vadd.f32 %v1414, 1.0
        %v1437 = vadd.f32 %v1416, 1.0
        %v1438 = vadd.f32 %v1418, 1.0
        %v1439 = vadd.f32 %v1420, 1.0
        %v1440 = vadd.f32 %v1422, 1.0
        %v1441 = vadd.f32 %v1424, 1.0
        %v1442 = vadd.f32 %v1426, 1.0
        %v1443 = vrcp.pop %v1427
        %v1444 = vmul.f32 1.0, %v1443
        %v1445 = vrcp.pop %v1428
        %v1446 = vmul.f32 1.0, %v1445
        %v1447 = vrcp.pop %v1429
        %v1448 = vmul.f32 1.0, %v1447
        %v1449 = vrcp.pop %v1430
        %v1450 = vmul.f32 1.0, %v1449
        %v1451 = vrcp.pop %v1431
        %v1452 = vmul.f32 1.0, %v1451
        %v1453 = vrcp.pop %v1432
        %v1454 = vmul.f32 1.0, %v1453
        %v1455 = vrcp.pop %v1433
        %v1456 = vmul.f32 1.0, %v1455
        %v1457 = vrcp.pop %v1434
        %v1458 = vmul.f32 1.0, %v1457
        %v1459 = vrcp.pop %v1435
        %v1460 = vmul.f32 1.0, %v1459
        %v1461 = vrcp.pop %v1436
        %v1462 = vmul.f32 1.0, %v1461
        %v1463 = vrcp.pop %v1437
        %v1464 = vmul.f32 1.0, %v1463
        %v1465 = vrcp.pop %v1438
        %v1466 = vmul.f32 1.0, %v1465
        %v1467 = vrcp.pop %v1439
        %v1468 = vmul.f32 1.0, %v1467
        %v1469 = vrcp.pop %v1440
        %v1470 = vmul.f32 1.0, %v1469
        %v1471 = vrcp.pop %v1441
        %v1472 = vmul.f32 1.0, %v1471
        %v1473 = vrcp.pop %v1442
        %v1474 = vmul.f32 1.0, %v1473
        %v1475 = vmul.f32 %v1363, %v1444
        %v1476 = vmul.f32 %v1364, %v1446
        %v1477 = vmul.f32 %v1365, %v1448
        %v1478 = vmul.f32 %v1366, %v1450
        %v1479 = vmul.f32 %v1367, %v1452
        %v1480 = vmul.f32 %v1368, %v1454
        %v1481 = vmul.f32 %v1369, %v1456
        %v1482 = vmul.f32 %v1370, %v1458
        %v1483 = vmul.f32 %v1371, %v1460
        %v1484 = vmul.f32 %v1372, %v1462
        %v1485 = vmul.f32 %v1373, %v1464
        %v1486 = vmul.f32 %v1374, %v1466
        %v1487 = vmul.f32 %v1375, %v1468
        %v1488 = vmul.f32 %v1376, %v1470
        %v1489 = vmul.f32 %v1377, %v1472
        %v1490 = vmul.f32 %v1378, %v1474
        %v1491 = vpack.c.bf16 %v1477, %v1475
        %v1492 = vpack.c.bf16 %v1478, %v1476
        %v1493 = vpack.c.bf16 %v1481, %v1479
        %v1494 = vpack.c.bf16 %v1482, %v1480
        %v1495 = vpack.c.bf16 %v1485, %v1483
        %v1496 = vpack.c.bf16 %v1486, %v1484
        %v1497 = vpack.c.bf16 %v1489, %v1487
        %v1498 = vpack.c.bf16 %v1490, %v1488
        %v1507 = vunpack.c.l.b16 %v1491
        %v1508 = vunpack.c.l.b16 %v1492
        %v1509 = vunpack.c.h.b16 %v1491
        %v1510 = vunpack.c.h.b16 %v1492
        %v1511 = vunpack.c.l.b16 %v1493
        %v1512 = vunpack.c.l.b16 %v1494
        %v1513 = vunpack.c.h.b16 %v1493
        %v1514 = vunpack.c.h.b16 %v1494
        %v1515 = vunpack.c.l.b16 %v1495
        %v1516 = vunpack.c.l.b16 %v1496
        %v1517 = vunpack.c.h.b16 %v1495
        %v1518 = vunpack.c.h.b16 %v1496
        %v1519 = vunpack.c.l.b16 %v1497
        %v1520 = vunpack.c.l.b16 %v1498
        %v1521 = vunpack.c.h.b16 %v1497
        %v1522 = vunpack.c.h.b16 %v1498
        %v1523 = vpack.c.b16 %v1508, %v1507
        %v1524 = vpack.c.b16 %v1510, %v1509
        %v1525 = vpack.c.b16 %v1512, %v1511
        %v1526 = vpack.c.b16 %v1514, %v1513
        %v1527 = vpack.c.b16 %v1516, %v1515
        %v1528 = vpack.c.b16 %v1518, %v1517
        %v1529 = vpack.c.b16 %v1520, %v1519
        %v1530 = vpack.c.b16 %v1522, %v1521
        %1539 = vst [vmem:[%s232] sm:$0xff] %v1523
        %1540 = vst [vmem:[%s232 + $0x8] sm:$0xff] %v1524
        %1541 = vst [vmem:[%s232 + $0x10] sm:$0xff] %v1525
        %1542 = vst [vmem:[%s232 + $0x18] sm:$0xff] %v1526
        %1543 = vst [vmem:[%s232 + $0x20] sm:$0xff] %v1527
        %1544 = vst [vmem:[%s232 + $0x28] sm:$0xff] %v1528
        %1545 = vst [vmem:[%s232 + $0x30] sm:$0xff] %v1529
        %1546 = vst [vmem:[%s232 + $0x38] sm:$0xff] %v1530
        %v1547 = vadd.f32 %v1475, %v1477
        %v1548 = vadd.f32 %v1547, %v1479
        %v1549 = vadd.f32 %v1548, %v1481
        %v1550 = vadd.f32 %v1549, %v1483
        %v1551 = vadd.f32 %v1550, %v1485
        %v1552 = vadd.f32 %v1551, %v1487
        %v1553 = vadd.f32 %v1552, %v1489
        %v1554 = vrot.slane %v1553, 4
        %v1555 = vadd.f32 %v1553, %v1554
        %v1556 = vrot.slane %v1555, 2
        %v1557 = vadd.f32 %v1555, %v1556
        %v1558 = vrot.slane %v1557, 1
        %v1559 = vadd.f32 %v1557, %v1558
        %v1560 = vadd.f32 %v1476, %v1478
        %v1561 = vadd.f32 %v1560, %v1480
        %v1562 = vadd.f32 %v1561, %v1482
        %v1563 = vadd.f32 %v1562, %v1484
        %v1564 = vadd.f32 %v1563, %v1486
        %v1565 = vadd.f32 %v1564, %v1488
        %v1566 = vadd.f32 %v1565, %v1490
        %v1567 = vrot.slane %v1566, 4
        %v1568 = vadd.f32 %v1566, %v1567
        %v1569 = vrot.slane %v1568, 2
        %v1570 = vadd.f32 %v1568, %v1569
        %v1571 = vrot.slane %v1570, 1
        %v1572 = vadd.f32 %v1570, %v1571
        %v1573 = vmul.f32 %v1559, 0.015625
        %v1574 = vmul.f32 %v1572, 0.015625
        %v1577 = vcombine.low %v1573, %v1574
        %v1579 = vunpack.c.l.s4 1966171168
        %v1580 = vunpack.c.0.s8 %v1579
        %v1581 = vlaneseq
        %v1582 = vshrl.u32 %v1581, 7
        %v1583 = vsub.s32 %v1580, %v1582
        %v1584 = vrot.slane %v1577, %v1583
        %v1586 = vunpack.c.l.s4 1966171168
        %v1587 = vunpack.c.0.s8 %v1586
        %v1588 = vlaneseq
        %v1589 = vshrl.u32 %v1588, 7
        %v1590 = vsub.s32 %v1587, %v1589
        %v1591 = vrot.slane %v1584, %v1590
        %v1593 = vlaneseq
        %vm1594 = vcmp.ge.s32.totalorder %v1593, 0
        %vm1595 = vcmp.lt.s32.totalorder %v1593, 256
        %vm1596 = vmand %vm1594, %vm1595
        %1597 = vst.msk [vmem:[%s236] sm:$0x3] %vm1596, %v1591
        %p1598 = scmp.lt.s32.totalorder %s18, 1
        %s1599 = scalar_select %p1598, %s18, 1
        %s1600 = smul.addr %s1599, 16
        %s1601 = smul.addr %s1600, 4
        %s1602 = scalar_lea.vmem %s3, %s1601
        %p1603 = scmp.lt.s32.totalorder %s18, 1
        %s1604 = scalar_select %p1603, %s18, 1
        %s1605 = smul.addr %s1604, 2
        %s1606 = scalar_lea.vmem %s4, %s1605
        // Predicated region
        $region41: #{_lambda_.6} parent=31 // pred_check
          %p1607 = pneg %p104
        $region42: #{_lambda_.6} parent=31 // pred_check_branch
          %1609 = sbr.rel (%p1607) target = $region44
        $region43: #{_lambda_.6} parent=31 // pred_region
          _
        $region44: #{_lambda_.6} parent=31 // pred_fallthru
          _
        // Predicated region
        $region45: #{_lambda_.6} parent=31 // pred_check
          %p1610 = pneg %p130
        $region46: #{_lambda_.6} parent=31 // pred_check_branch
          %1612 = sbr.rel (%p1610) target = $region48
        $region47: #{_lambda_.6} parent=31 // pred_region
          _
        $region48: #{_lambda_.6} parent=31 // pred_fallthru
          _
      $region32: #{_lambda_.6} parent=5 // pred_fallthru
        _
      %p1613 = scmp.le.s32.totalorder 2, %s13
      // Predicated region
      $region49: #{_lambda_.6} parent=5 // pred_check
        %p1614 = pneg %p1613
      $region50: #{_lambda_.6} parent=5 // pred_check_branch
        %1616 = sbr.rel (%p1614) target = $region52
      $region51: #{_lambda_.6} parent=5 // pred_region
        %s1617 = ssub.s32 %s13, 2
        // Predicated region
        $region53: #{_lambda_.6} parent=51 // pred_check
          %p1618 = pneg %p110
        $region54: #{_lambda_.6} parent=51 // pred_check_branch
          %1620 = sbr.rel (%p1618) target = $region56
        $region55: #{_lambda_.6} parent=51 // pred_region
          %p1621 = scmp.lt.s32.totalorder %s19, 1
          %s1622 = scalar_select %p1621, %s19, 1
          %s1623 = smul.addr %s1622, 16
          %s1624 = smul.addr %s1623, 4
          %s1625 = scalar_lea.vmem %s3, %s1624
        $region56: #{_lambda_.6} parent=51 // pred_fallthru
          _
        // Predicated region
        $region57: #{_lambda_.6} parent=51 // pred_check
          %p1626 = pneg %p136
        $region58: #{_lambda_.6} parent=51 // pred_check_branch
          %1628 = sbr.rel (%p1626) target = $region60
        $region59: #{_lambda_.6} parent=51 // pred_region
          %p1629 = scmp.lt.s32.totalorder %s19, 1
          %s1630 = scalar_select %p1629, %s19, 1
          %s1631 = smul.addr %s1630, 2
          %s1632 = scalar_lea.vmem %s4, %s1631
        $region60: #{_lambda_.6} parent=51 // pred_fallthru
          _
      $region52: #{_lambda_.6} parent=5 // pred_fallthru
        _
    $region6: #{_lambda_.6} parent=1 // loop_footer
      %s17 = sadd.s32 1, %s13
    $region7: #{_lambda_.6} parent=1 // loop_footer_branch
      %12 = sbr.rel target = $region3
    $region8: #{_lambda_.6} parent=1 // loop_exit
      _
    %1633 = vsyncpa [#allocation3], 1
    %s1634 = scalar_lea.sflag [#allocation3], 1
    %1635 = vsyncpa %s1634, 1
    %1636 = vsyncpa [#allocation5], 1

// kernel: _lambda_.8
$region0: #{_lambda_.8}
  #allocation0 [shape = 'u32[]', space=smem, size = 0x4, offset = 0x4, fixed_abs, tag = 'smem constant byte address 0x4 - core index']
  #allocation1 [shape = 'u32[144,128]{1,0:T(1,128)}', space=vmem, size = 0x12000, scoped, tag = 'internal scratch']
  %s0 = inlined_call_operand.vmem [shape: bf16[2,64,256], index: 0, kind: input, shape index: {}]
  %s1 = inlined_call_operand.vmem [shape: f32[2,1,256], index: 1, kind: input, shape index: {}]
  %s2 = inlined_call_operand.vmem [shape: bf16[2,64,64], index: 2, kind: input, shape index: {}]
  %s3 = inlined_call_operand.vmem [shape: bf16[256,64], index: 3, kind: input, shape index: {}]
  %s4 = inlined_call_operand.vmem [shape: f32[1,64], index: 4, kind: input, shape index: {}]
  %s5 = inlined_call_operand.vmem [shape: bf16[64,2560], index: 5, kind: input, shape index: {}]
  %s6 = inlined_call_operand.vmem [shape: f32[1,2560], index: 6, kind: input, shape index: {}]
  %s7 = inlined_call_operand.vmem [shape: f32[2,1,2560], index: 7, kind: output, shape index: {}]
  %s8 = sld [smem:[#allocation0]]
  $region65: #{_lambda_.8} parent=0
    _
  %s10 = ssub.s32 1, %s8
  %s11 = scalar_select 0, %s10, %s8
  loop: start=0, step=1, limit=4
  $region2: #{_lambda_.8} parent=0 // loop_pre_header
    _
  $region3: #{_lambda_.8} parent=0 // loop_header
    %s13 = sphi 0, %s17
    %p14 = scmp.ge.s32.totalorder %s13, 4
    %s20 = sphi 0, %s32
    %s21 = sphi 0, %s28
    %s22 = sphi 0, %s20
    %s23 = sphi 0, %s21
    %s24 = sphi 0, %s22
    %s25 = sphi 0, %s23
    %s37 = sphi 0, %s39
    %s40 = sphi 0, %s37
    %s41 = sphi 0, %s40
    %s57 = sphi 0, %s41
    %s63 = sphi 0, %s65
    %s66 = sphi 0, %s63
    %s67 = sphi 0, %s66
    %s83 = sphi 0, %s67
    %s91 = sphi 0, %s93
    %s94 = sphi 0, %s91
    %s95 = sphi 0, %s94
    %s111 = sphi 0, %s95
    %s115 = sphi 0, %s115
    %s117 = sphi 0, %s115
    %s118 = sphi 0, %s117
    %s132 = sphi 0, %s118
    %s136 = sphi 0, %s136
    %s138 = sphi 0, %s136
    %s139 = sphi 0, %s138
    %s153 = sphi 0, %s139
    %s157 = sphi 0, %s157
    %s159 = sphi 0, %s157
    %s160 = sphi 0, %s159
    %s174 = sphi 0, %s160
    %s178 = sphi 0, %s178
    %s180 = sphi 0, %s178
    %s181 = sphi 0, %s180
    %s195 = sphi 0, %s181
    %s201 = sphi 0, %s203
    %s204 = sphi 0, %s201
    %s205 = sphi 0, %s204
    %s221 = sphi 0, %s205
  $region4: #{_lambda_.8} parent=0 // loop_header_branch
    %16 = sbr.rel (%p14) target = $region8
  $region5: #{_lambda_.8} parent=0 // loop_body
    %s18 = ssub.s32 %s13, 1
    %s19 = ssub.s32 %s13, 2
    %s26 = sadd.s32 1, %s21
    %p27 = scmp.ge.s32.totalorder %s26, 1
    %s28 = scalar_select %p27, 0, %s26
    %s29 = sadd.s32 1, %s20
    %s30 = scalar_select %p27, %s29, %s20
    %p31 = scmp.ge.s32.totalorder %s30, 2
    %s32 = scalar_select %p31, 0, %s30
    %s33 = ssub.s32 %s20, %s32
    %s34 = ssub.s32 %s21, %s28
    %s35 = sor.u32 %s33, %s34
    %p36 = scmp.eq.s32.totalorder %s35, 0
    %s38 = sadd.s32 %s37, 1
    %s39 = scalar_select %p36, %s37, %s38
    %p42 = pneg %p36
    %p43 = scmp.eq.s32.totalorder %s13, 1
    %p44 = por %p42, %p43
    %p45 = scmp.ne.s32.totalorder %s37, %s40
    %p46 = scmp.eq.s32.totalorder %s13, 0
    %p47 = por %p45, %p46
    %p48 = scmp.ne.s32.totalorder %s37, %s40
    %p49 = scmp.eq.s32.totalorder %s18, 1
    %p50 = por %p48, %p49
    %p51 = scmp.ne.s32.totalorder %s40, %s41
    %p52 = scmp.eq.s32.totalorder %s18, 0
    %p53 = por %p51, %p52
    %p54 = scmp.ne.s32.totalorder %s40, %s41
    %p55 = scmp.eq.s32.totalorder %s19, 1
    %p56 = por %p54, %p55
    %p58 = scmp.ne.s32.totalorder %s41, %s57
    %p59 = scmp.eq.s32.totalorder %s19, 0
    %p60 = por %p58, %p59
    %s61 = ssub.s32 %s20, %s32
    %p62 = scmp.eq.s32.totalorder %s61, 0
    %s64 = sadd.s32 %s63, 1
    %s65 = scalar_select %p62, %s63, %s64
    %p68 = pneg %p62
    %p69 = scmp.eq.s32.totalorder %s13, 1
    %p70 = por %p68, %p69
    %p71 = scmp.ne.s32.totalorder %s63, %s66
    %p72 = scmp.eq.s32.totalorder %s13, 0
    %p73 = por %p71, %p72
    %p74 = scmp.ne.s32.totalorder %s63, %s66
    %p75 = scmp.eq.s32.totalorder %s18, 1
    %p76 = por %p74, %p75
    %p77 = scmp.ne.s32.totalorder %s66, %s67
    %p78 = scmp.eq.s32.totalorder %s18, 0
    %p79 = por %p77, %p78
    %p80 = scmp.ne.s32.totalorder %s66, %s67
    %p81 = scmp.eq.s32.totalorder %s19, 1
    %p82 = por %p80, %p81
    %p84 = scmp.ne.s32.totalorder %s67, %s83
    %p85 = scmp.eq.s32.totalorder %s19, 0
    %p86 = por %p84, %p85
    %s87 = ssub.s32 %s20, %s32
    %s88 = ssub.s32 %s21, %s28
    %s89 = sor.u32 %s87, %s88
    %p90 = scmp.eq.s32.totalorder %s89, 0
    %s92 = sadd.s32 %s91, 1
    %s93 = scalar_select %p90, %s91, %s92
    %p96 = pneg %p90
    %p97 = scmp.eq.s32.totalorder %s13, 1
    %p98 = por %p96, %p97
    %p99 = scmp.ne.s32.totalorder %s91, %s94
    %p100 = scmp.eq.s32.totalorder %s13, 0
    %p101 = por %p99, %p100
    %p102 = scmp.ne.s32.totalorder %s91, %s94
    %p103 = scmp.eq.s32.totalorder %s18, 1
    %p104 = por %p102, %p103
    %p105 = scmp.ne.s32.totalorder %s94, %s95
    %p106 = scmp.eq.s32.totalorder %s18, 0
    %p107 = por %p105, %p106
    %p108 = scmp.ne.s32.totalorder %s94, %s95
    %p109 = scmp.eq.s32.totalorder %s19, 1
    %p110 = por %p108, %p109
    %p112 = scmp.ne.s32.totalorder %s95, %s111
    %p113 = scmp.eq.s32.totalorder %s19, 0
    %p114 = por %p112, %p113
    %s116 = sadd.s32 %s115, 1
    %p119 = scmp.eq.s32.totalorder %s13, 1
    %p120 = scmp.ne.s32.totalorder %s115, %s117
    %p121 = scmp.eq.s32.totalorder %s13, 0
    %p122 = por %p120, %p121
    %p123 = scmp.ne.s32.totalorder %s115, %s117
    %p124 = scmp.eq.s32.totalorder %s18, 1
    %p125 = por %p123, %p124
    %p126 = scmp.ne.s32.totalorder %s117, %s118
    %p127 = scmp.eq.s32.totalorder %s18, 0
    %p128 = por %p126, %p127
    %p129 = scmp.ne.s32.totalorder %s117, %s118
    %p130 = scmp.eq.s32.totalorder %s19, 1
    %p131 = por %p129, %p130
    %p133 = scmp.ne.s32.totalorder %s118, %s132
    %p134 = scmp.eq.s32.totalorder %s19, 0
    %p135 = por %p133, %p134
    %s137 = sadd.s32 %s136, 1
    %p140 = scmp.eq.s32.totalorder %s13, 1
    %p141 = scmp.ne.s32.totalorder %s136, %s138
    %p142 = scmp.eq.s32.totalorder %s13, 0
    %p143 = por %p141, %p142
    %p144 = scmp.ne.s32.totalorder %s136, %s138
    %p145 = scmp.eq.s32.totalorder %s18, 1
    %p146 = por %p144, %p145
    %p147 = scmp.ne.s32.totalorder %s138, %s139
    %p148 = scmp.eq.s32.totalorder %s18, 0
    %p149 = por %p147, %p148
    %p150 = scmp.ne.s32.totalorder %s138, %s139
    %p151 = scmp.eq.s32.totalorder %s19, 1
    %p152 = por %p150, %p151
    %p154 = scmp.ne.s32.totalorder %s139, %s153
    %p155 = scmp.eq.s32.totalorder %s19, 0
    %p156 = por %p154, %p155
    %s158 = sadd.s32 %s157, 1
    %p161 = scmp.eq.s32.totalorder %s13, 1
    %p162 = scmp.ne.s32.totalorder %s157, %s159
    %p163 = scmp.eq.s32.totalorder %s13, 0
    %p164 = por %p162, %p163
    %p165 = scmp.ne.s32.totalorder %s157, %s159
    %p166 = scmp.eq.s32.totalorder %s18, 1
    %p167 = por %p165, %p166
    %p168 = scmp.ne.s32.totalorder %s159, %s160
    %p169 = scmp.eq.s32.totalorder %s18, 0
    %p170 = por %p168, %p169
    %p171 = scmp.ne.s32.totalorder %s159, %s160
    %p172 = scmp.eq.s32.totalorder %s19, 1
    %p173 = por %p171, %p172
    %p175 = scmp.ne.s32.totalorder %s160, %s174
    %p176 = scmp.eq.s32.totalorder %s19, 0
    %p177 = por %p175, %p176
    %s179 = sadd.s32 %s178, 1
    %p182 = scmp.eq.s32.totalorder %s13, 1
    %p183 = scmp.ne.s32.totalorder %s178, %s180
    %p184 = scmp.eq.s32.totalorder %s13, 0
    %p185 = por %p183, %p184
    %p186 = scmp.ne.s32.totalorder %s178, %s180
    %p187 = scmp.eq.s32.totalorder %s18, 1
    %p188 = por %p186, %p187
    %p189 = scmp.ne.s32.totalorder %s180, %s181
    %p190 = scmp.eq.s32.totalorder %s18, 0
    %p191 = por %p189, %p190
    %p192 = scmp.ne.s32.totalorder %s180, %s181
    %p193 = scmp.eq.s32.totalorder %s19, 1
    %p194 = por %p192, %p193
    %p196 = scmp.ne.s32.totalorder %s181, %s195
    %p197 = scmp.eq.s32.totalorder %s19, 0
    %p198 = por %p196, %p197
    %s199 = ssub.s32 %s20, %s32
    %p200 = scmp.eq.s32.totalorder %s199, 0
    %s202 = sadd.s32 %s201, 1
    %s203 = scalar_select %p200, %s201, %s202
    %p206 = pneg %p200
    %p207 = scmp.eq.s32.totalorder %s13, 1
    %p208 = por %p206, %p207
    %p209 = scmp.ne.s32.totalorder %s201, %s204
    %p210 = scmp.eq.s32.totalorder %s13, 0
    %p211 = por %p209, %p210
    %p212 = scmp.ne.s32.totalorder %s201, %s204
    %p213 = scmp.eq.s32.totalorder %s18, 1
    %p214 = por %p212, %p213
    %p215 = scmp.ne.s32.totalorder %s204, %s205
    %p216 = scmp.eq.s32.totalorder %s18, 0
    %p217 = por %p215, %p216
    %p218 = scmp.ne.s32.totalorder %s204, %s205
    %p219 = scmp.eq.s32.totalorder %s19, 1
    %p220 = por %p218, %p219
    %p222 = scmp.ne.s32.totalorder %s205, %s221
    %p223 = scmp.eq.s32.totalorder %s19, 0
    %p224 = por %p222, %p223
    %p225 = scmp.le.s32.totalorder 1, %s13
    %p226 = scmp.lt.s32.totalorder %s13, 3
    %p227 = pnand %p225, %p226
    %p228 = pneg %p227
    // Predicated region
    $region9: #{_lambda_.8} parent=5 // pred_check
      _
    $region10: #{_lambda_.8} parent=5 // pred_check_branch
      %230 = sbr.rel (%p227) target = $region12
    $region11: #{_lambda_.8} parent=5 // pred_region
      %s231 = ssub.s32 %s13, 1
      // Predicated region
      $region13: #{_lambda_.8} parent=11 // pred_check
        %p232 = pneg %p128
      $region14: #{_lambda_.8} parent=11 // pred_check_branch
        %234 = sbr.rel (%p232) target = $region16
      $region15: #{_lambda_.8} parent=11 // pred_region
        _
      $region16: #{_lambda_.8} parent=11 // pred_fallthru
        _
      // Predicated region
      $region17: #{_lambda_.8} parent=11 // pred_check
        %p235 = pneg %p149
      $region18: #{_lambda_.8} parent=11 // pred_check_branch
        %237 = sbr.rel (%p235) target = $region20
      $region19: #{_lambda_.8} parent=11 // pred_region
        _
      $region20: #{_lambda_.8} parent=11 // pred_fallthru
        _
      // Predicated region
      $region21: #{_lambda_.8} parent=11 // pred_check
        %p238 = pneg %p170
      $region22: #{_lambda_.8} parent=11 // pred_check_branch
        %240 = sbr.rel (%p238) target = $region24
      $region23: #{_lambda_.8} parent=11 // pred_region
        _
      $region24: #{_lambda_.8} parent=11 // pred_fallthru
        _
      // Predicated region
      $region25: #{_lambda_.8} parent=11 // pred_check
        %p241 = pneg %p191
      $region26: #{_lambda_.8} parent=11 // pred_check_branch
        %243 = sbr.rel (%p241) target = $region28
      $region27: #{_lambda_.8} parent=11 // pred_region
        _
      $region28: #{_lambda_.8} parent=11 // pred_fallthru
        _
    $region12: #{_lambda_.8} parent=5 // pred_fallthru
      _
    %p244 = scmp.lt.s32.totalorder %s13, 2
    // Predicated region
    $region29: #{_lambda_.8} parent=5 // pred_check
      %p245 = pneg %p244
    $region30: #{_lambda_.8} parent=5 // pred_check_branch
      %247 = sbr.rel (%p245) target = $region32
    $region31: #{_lambda_.8} parent=5 // pred_region
      // Predicated region
      $region33: #{_lambda_.8} parent=31 // pred_check
        %p248 = pneg %p47
      $region34: #{_lambda_.8} parent=31 // pred_check_branch
        %250 = sbr.rel (%p248) target = $region36
      $region35: #{_lambda_.8} parent=31 // pred_region
        %s251 = smul.u32 8, %s21
        %p252 = scmp.lt.s32.totalorder %s20, 1
        %s253 = scalar_select %p252, %s20, 1
        %p254 = scmp.lt.s32.totalorder %s251, 7
        %s255 = scalar_select %p254, %s251, 7
        %s256 = smul.addr %s255, 2
        %s257 = smul.addr %s253, 16
        %s258 = sadd.s32 %s256, %s257
        %s259 = smul.addr %s258, 4
        %s260 = scalar_lea.vmem %s0, %s259
        %s261 = smul.u32 8, %s21
      $region36: #{_lambda_.8} parent=31 // pred_fallthru
        _
      // Predicated region
      $region37: #{_lambda_.8} parent=31 // pred_check
        %p262 = pneg %p73
      $region38: #{_lambda_.8} parent=31 // pred_check_branch
        %264 = sbr.rel (%p262) target = $region40
      $region39: #{_lambda_.8} parent=31 // pred_region
        %p265 = scmp.lt.s32.totalorder %s20, 1
        %s266 = scalar_select %p265, %s20, 1
        %s267 = smul.addr %s266, 2
        %s268 = scalar_lea.vmem %s1, %s267
      $region40: #{_lambda_.8} parent=31 // pred_fallthru
        _
      // Predicated region
      $region41: #{_lambda_.8} parent=31 // pred_check
        %p269 = pneg %p101
      $region42: #{_lambda_.8} parent=31 // pred_check_branch
        %271 = sbr.rel (%p269) target = $region44
      $region43: #{_lambda_.8} parent=31 // pred_region
        %s272 = smul.u32 8, %s21
        %p273 = scmp.lt.s32.totalorder %s20, 1
        %s274 = scalar_select %p273, %s20, 1
        %p275 = scmp.lt.s32.totalorder %s272, 7
        %s276 = scalar_select %p275, %s272, 7
        %s277 = smul.addr %s274, 8
        %s278 = sadd.s32 %s276, %s277
        %s279 = smul.addr %s278, 4
        %s280 = scalar_lea.vmem %s2, %s279
        %s281 = smul.u32 8, %s21
      $region44: #{_lambda_.8} parent=31 // pred_fallthru
        _
    $region32: #{_lambda_.8} parent=5 // pred_fallthru
      _
    %p282 = scmp.le.s32.totalorder 1, %s13
    %p283 = scmp.lt.s32.totalorder %s13, 3
    %p284 = pnand %p282, %p283
    %p285 = pneg %p284
    // Predicated region
    $region45: #{_lambda_.8} parent=5 // pred_check
      _
    $region46: #{_lambda_.8} parent=5 // pred_check_branch
      %287 = sbr.rel (%p284) target = $region48
    $region47: #{_lambda_.8} parent=5 // pred_region
      %s288 = ssub.s32 %s13, 1
      %s289 = smul.u32 8, %s23
      %p290 = scmp.lt.s32.totalorder %s22, 1
      %s291 = scalar_select %p290, %s22, 1
      %p292 = scmp.lt.s32.totalorder %s289, 7
      %s293 = scalar_select %p292, %s289, 7
      %s294 = smul.addr %s293, 2
      %s295 = smul.addr %s291, 16
      %s296 = sadd.s32 %s294, %s295
      %s297 = smul.addr %s296, 4
      %s298 = scalar_lea.vmem %s0, %s297
      %p299 = pneg %p53
      %p300 = pneg %p50
      %p301 = scmp.lt.s32.totalorder %s22, 1
      %s302 = scalar_select %p301, %s22, 1
      %s303 = smul.addr %s302, 2
      %s304 = scalar_lea.vmem %s1, %s303
      %p305 = pneg %p79
      %p306 = pneg %p76
      %s307 = smul.u32 8, %s23
      %p308 = scmp.lt.s32.totalorder %s22, 1
      %s309 = scalar_select %p308, %s22, 1
      %p310 = scmp.lt.s32.totalorder %s307, 7
      %s311 = scalar_select %p310, %s307, 7
      %s312 = smul.addr %s309, 8
      %s313 = sadd.s32 %s311, %s312
      %s314 = smul.addr %s313, 4
      %s315 = scalar_lea.vmem %s2, %s314
      %p316 = pneg %p107
      %p317 = pneg %p104
      %p318 = pneg %p128
      %p319 = pneg %p125
      %p320 = pneg %p149
      %p321 = pneg %p146
      %p322 = pneg %p170
      %p323 = pneg %p167
      %p324 = pneg %p191
      %p325 = pneg %p188
      %p326 = pneg %p217
      %p327 = pneg %p214
      %p328 = scmp.lt.s32.totalorder %s22, 1
      %s329 = scalar_select %p328, %s22, 1
      %s330 = smul.addr %s329, 20
      %s331 = scalar_lea.vmem %s7, %s330
      %s332 = smul.u32 8, %s23
      %p333 = scmp.lt.s32.totalorder %s22, 1
      %s334 = scalar_select %p333, %s22, 1
      %p335 = scmp.lt.s32.totalorder %s332, 7
      %s336 = scalar_select %p335, %s332, 7
      %s337 = smul.addr %s336, 2
      %s338 = smul.addr %s334, 16
      %s339 = sadd.s32 %s337, %s338
      %s340 = smul.addr %s339, 4
      %s341 = scalar_lea.vmem %s0, %s340
      %s342 = smul.u32 8, %s23
      %p343 = scmp.lt.s32.totalorder %s22, 1
      %s344 = scalar_select %p343, %s22, 1
      %s345 = smul.addr %s344, 2
      %s346 = scalar_lea.vmem %s1, %s345
      %s347 = smul.u32 8, %s23
      %p348 = scmp.lt.s32.totalorder %s22, 1
      %s349 = scalar_select %p348, %s22, 1
      %p350 = scmp.lt.s32.totalorder %s347, 7
      %s351 = scalar_select %p350, %s347, 7
      %s352 = smul.addr %s349, 8
      %s353 = sadd.s32 %s351, %s352
      %s354 = smul.addr %s353, 4
      %s355 = scalar_lea.vmem %s2, %s354
      %s356 = smul.u32 8, %s23
      %p357 = scmp.lt.s32.totalorder %s22, 1
      %s358 = scalar_select %p357, %s22, 1
      %s359 = smul.addr %s358, 20
      %s360 = scalar_lea.vmem %s7, %s359
      %p362 = scmp.eq.s32.totalorder %s23, 0
      // Predicated region
      $region49: #{_lambda_.8} parent=47 // pred_check
        %p363 = pneg %p362
      $region50: #{_lambda_.8} parent=47 // pred_check_branch
        %365 = sbr.rel (%p363) target = $region52
      $region51: #{_lambda_.8} parent=47 // pred_region
        %366 = vst [vmem:[%s360] sm:$0xff] 0.0
        %367 = vst [vmem:[%s360 + $0x8] sm:$0xff] 0.0
        %v368 = vlaneseq
        %vm369 = vcmp.ge.s32.totalorder %v368, 0
        %vm370 = vcmp.lt.s32.totalorder %v368, 512
        %vm371 = vmand %vm369, %vm370
        %372 = vst.msk [vmem:[%s360 + $0x10] sm:$0xf] %vm371, 0.0
      $region52: #{_lambda_.8} parent=47 // pred_fallthru
        _
      %v373 = vld [vmem:[%s346] sm:$0x3]
      %v374 = vld [vmem:[%s341] sm:$0xff]
      %v375 = vld [vmem:[%s341 + $0x8] sm:$0xff]
      %v376 = vld [vmem:[%s341 + $0x10] sm:$0xff]
      %v377 = vld [vmem:[%s341 + $0x18] sm:$0xff]
      %v378 = vld [vmem:[%s341 + $0x20] sm:$0xff]
      %v379 = vld [vmem:[%s341 + $0x28] sm:$0xff]
      %v380 = vld [vmem:[%s341 + $0x30] sm:$0xff]
      %v381 = vld [vmem:[%s341 + $0x38] sm:$0xff]
      %v382 = vunpack.c.l.bf16 %v374
      %v383 = vunpack.c.h.bf16 %v374
      %v384 = vunpack.c.l.bf16 %v375
      %v385 = vunpack.c.h.bf16 %v375
      %v386 = vunpack.c.l.bf16 %v376
      %v387 = vunpack.c.h.bf16 %v376
      %v388 = vunpack.c.l.bf16 %v377
      %v389 = vunpack.c.h.bf16 %v377
      %v390 = vunpack.c.l.bf16 %v378
      %v391 = vunpack.c.h.bf16 %v378
      %v392 = vunpack.c.l.bf16 %v379
      %v393 = vunpack.c.h.bf16 %v379
      %v394 = vunpack.c.l.bf16 %v380
      %v395 = vunpack.c.h.bf16 %v380
      %v396 = vunpack.c.l.bf16 %v381
      %v397 = vunpack.c.h.bf16 %v381
      %v399 = vlaneseq
      %v400 = vshrl.u32 %v399, 7
      %v401 = vsub.s32 0, %v400
      %v402 = vrot.slane %v373, %v401
      %v403 = vlaneseq
      %v404 = vshrl.u32 %v403, 7
      %v405 = vsub.s32 1, %v404
      %v406 = vrot.slane %v373, %v405
      %v409 = vmul.f32 %v382, %v402
      %v410 = vmul.f32 %v383, %v406
      %v411 = vmul.f32 %v384, %v402
      %v412 = vmul.f32 %v385, %v406
      %v413 = vmul.f32 %v386, %v402
      %v414 = vmul.f32 %v387, %v406
      %v415 = vmul.f32 %v388, %v402
      %v416 = vmul.f32 %v389, %v406
      %v417 = vmul.f32 %v390, %v402
      %v418 = vmul.f32 %v391, %v406
      %v419 = vmul.f32 %v392, %v402
      %v420 = vmul.f32 %v393, %v406
      %v421 = vmul.f32 %v394, %v402
      %v422 = vmul.f32 %v395, %v406
      %v423 = vmul.f32 %v396, %v402
      %v424 = vmul.f32 %v397, %v406
      %v425 = vpack.c.bf16 %v411, %v409
      %v426 = vpack.c.bf16 %v412, %v410
      %v427 = vpack.c.bf16 %v415, %v413
      %v428 = vpack.c.bf16 %v416, %v414
      %v429 = vpack.c.bf16 %v419, %v417
      %v430 = vpack.c.bf16 %v420, %v418
      %v431 = vpack.c.bf16 %v423, %v421
      %v432 = vpack.c.bf16 %v424, %v422
      %v433 = vld [vmem:[%s3] sm:$0xf]
      %v434 = vld [vmem:[%s3 + $0x4] sm:$0xf]
      %v435 = vld [vmem:[%s3 + $0x8] sm:$0xf]
      %v436 = vld [vmem:[%s3 + $0xc] sm:$0xf]
      %v437 = vld [vmem:[%s3 + $0x10] sm:$0xf]
      %v438 = vld [vmem:[%s3 + $0x14] sm:$0xf]
      %v439 = vld [vmem:[%s3 + $0x18] sm:$0xf]
      %v440 = vld [vmem:[%s3 + $0x1c] sm:$0xf]
      %v441 = vld [vmem:[%s3 + $0x20] sm:$0xf]
      %v442 = vld [vmem:[%s3 + $0x24] sm:$0xf]
      %v443 = vld [vmem:[%s3 + $0x28] sm:$0xf]
      %v444 = vld [vmem:[%s3 + $0x2c] sm:$0xf]
      %v445 = vld [vmem:[%s3 + $0x30] sm:$0xf]
      %v446 = vld [vmem:[%s3 + $0x34] sm:$0xf]
      %v447 = vld [vmem:[%s3 + $0x38] sm:$0xf]
      %v448 = vld [vmem:[%s3 + $0x3c] sm:$0xf]
      %v449 = vld [vmem:[%s3 + $0x40] sm:$0xf]
      %v450 = vld [vmem:[%s3 + $0x44] sm:$0xf]
      %v451 = vld [vmem:[%s3 + $0x48] sm:$0xf]
      %v452 = vld [vmem:[%s3 + $0x4c] sm:$0xf]
      %v453 = vld [vmem:[%s3 + $0x50] sm:$0xf]
      %v454 = vld [vmem:[%s3 + $0x54] sm:$0xf]
      %v455 = vld [vmem:[%s3 + $0x58] sm:$0xf]
      %v456 = vld [vmem:[%s3 + $0x5c] sm:$0xf]
      %v457 = vld [vmem:[%s3 + $0x60] sm:$0xf]
      %v458 = vld [vmem:[%s3 + $0x64] sm:$0xf]
      %v459 = vld [vmem:[%s3 + $0x68] sm:$0xf]
      %v460 = vld [vmem:[%s3 + $0x6c] sm:$0xf]
      %v461 = vld [vmem:[%s3 + $0x70] sm:$0xf]
      %v462 = vld [vmem:[%s3 + $0x74] sm:$0xf]
      %v463 = vld [vmem:[%s3 + $0x78] sm:$0xf]
      %v464 = vld [vmem:[%s3 + $0x7c] sm:$0xf]
      %v465 = vld [vmem:[%s4] sm:$0x1]
      %v467 = vlaneseq
      %v468 = vshrl.u32 %v467, 7
      %v469 = vsub.s32 0, %v468
      %v470 = vrot.slane %v465, %v469
      %v504 = vunpack.c.l.b16 %v433
      %v505 = vunpack.c.l.b16 %v434
      %v506 = vunpack.c.l.b16 %v435
      %v507 = vunpack.c.l.b16 %v436
      %v508 = vunpack.c.l.b16 %v437
      %v509 = vunpack.c.l.b16 %v438
      %v510 = vunpack.c.l.b16 %v439
      %v511 = vunpack.c.l.b16 %v440
      %v512 = vunpack.c.l.b16 %v441
      %v513 = vunpack.c.l.b16 %v442
      %v514 = vunpack.c.l.b16 %v443
      %v515 = vunpack.c.l.b16 %v444
      %v516 = vunpack.c.l.b16 %v445
      %v517 = vunpack.c.l.b16 %v446
      %v518 = vunpack.c.l.b16 %v447
      %v519 = vunpack.c.l.b16 %v448
      %v520 = vunpack.c.l.b16 %v449
      %v521 = vunpack.c.l.b16 %v450
      %v522 = vunpack.c.l.b16 %v451
      %v523 = vunpack.c.l.b16 %v452
      %v524 = vunpack.c.l.b16 %v453
      %v525 = vunpack.c.l.b16 %v454
      %v526 = vunpack.c.l.b16 %v455
      %v527 = vunpack.c.l.b16 %v456
      %v528 = vunpack.c.l.b16 %v457
      %v529 = vunpack.c.l.b16 %v458
      %v530 = vunpack.c.l.b16 %v459
      %v531 = vunpack.c.l.b16 %v460
      %v532 = vunpack.c.l.b16 %v461
      %v533 = vunpack.c.l.b16 %v462
      %v534 = vunpack.c.l.b16 %v463
      %v535 = vunpack.c.l.b16 %v464
      %v536 = vpack.c.b16 %v505, %v504
      %v537 = vpack.c.b16 %v507, %v506
      %v538 = vpack.c.b16 %v509, %v508
      %v539 = vpack.c.b16 %v511, %v510
      %v540 = vpack.c.b16 %v513, %v512
      %v541 = vpack.c.b16 %v515, %v514
      %v542 = vpack.c.b16 %v517, %v516
      %v543 = vpack.c.b16 %v519, %v518
      %v544 = vpack.c.b16 %v521, %v520
      %v545 = vpack.c.b16 %v523, %v522
      %v546 = vpack.c.b16 %v525, %v524
      %v547 = vpack.c.b16 %v527, %v526
      %v548 = vpack.c.b16 %v529, %v528
      %v549 = vpack.c.b16 %v531, %v530
      %v550 = vpack.c.b16 %v533, %v532
      %v551 = vpack.c.b16 %v535, %v534
      %568 = vmatprep.subr.bf16.mxu0 0
      %569 = vmatpush1.bf16.msra.mxu0 %v536
      %570 = vmatprep.subr.bf16.mxu0 0
      %571 = vmatpush1.bf16.msra.mxu0 %v537
      %572 = vmatprep.subr.bf16.mxu0 0
      %573 = vmatpush1.bf16.msra.mxu0 %v538
      %574 = vmatprep.subr.bf16.mxu0 0
      %575 = vmatpush1.bf16.msra.mxu0 %v539
      %576 = vmatprep.subr.bf16.mxu0 0
      %577 = vmatpush1.bf16.msra.mxu0 %v540
      %578 = vmatprep.subr.bf16.mxu0 0
      %579 = vmatpush1.bf16.msra.mxu0 %v541
      %580 = vmatprep.subr.bf16.mxu0 0
      %581 = vmatpush1.bf16.msra.mxu0 %v542
      %582 = vmatprep.subr.bf16.mxu0 0
      %583 = vmatpush1.bf16.msra.mxu0 %v543
      %584 = vmatprep.subr.bf16.mxu0 0
      %585 = vmatpush1.bf16.msra.mxu0 %v544
      %586 = vmatprep.subr.bf16.mxu0 0
      %587 = vmatpush1.bf16.msra.mxu0 %v545
      %588 = vmatprep.subr.bf16.mxu0 0
      %589 = vmatpush1.bf16.msra.mxu0 %v546
      %590 = vmatprep.subr.bf16.mxu0 0
      %591 = vmatpush1.bf16.msra.mxu0 %v547
      %592 = vmatprep.subr.bf16.mxu0 0
      %593 = vmatpush1.bf16.msra.mxu0 %v548
      %594 = vmatprep.subr.bf16.mxu0 0
      %595 = vmatpush1.bf16.msra.mxu0 %v549
      %596 = vmatprep.subr.bf16.mxu0 0
      %597 = vmatpush1.bf16.msra.mxu0 %v550
      %598 = vmatprep.subr.bf16.mxu0 0
      %599 = vmatpush1.bf16.msra.mxu0 %v551
      %600 = vmatprep.mubr.bf16.mxu0 %v426
      %601 = vmatmul.mubr.bf16.gmra.mrb[0].mxu0 %v425
      %v602 = vpop.f32.mrb[0].mxu0
      %v603 = vadd.f32 %v470, %v602
      %v604 = vpop.f32.mrb[0].mxu0
      %v605 = vpop.f32.mrb[0].mxu0
      %v606 = vadd.f32 %v470, %v605
      %v607 = vpop.f32.mrb[0].mxu0
      %608 = vmatprep.mubr.bf16.mxu0 %v428
      %609 = vmatmul.mubr.bf16.gmra.mrb[0].mxu0 %v427
      %v610 = vpop.f32.mrb[0].mxu0
      %v611 = vadd.f32 %v470, %v610
      %v612 = vpop.f32.mrb[0].mxu0
      %v613 = vpop.f32.mrb[0].mxu0
      %v614 = vadd.f32 %v470, %v613
      %v615 = vpop.f32.mrb[0].mxu0
      %616 = vmatprep.mubr.bf16.mxu0 %v430
      %617 = vmatmul.mubr.bf16.gmra.mrb[0].mxu0 %v429
      %v618 = vpop.f32.mrb[0].mxu0
      %v619 = vadd.f32 %v470, %v618
      %v620 = vpop.f32.mrb[0].mxu0
      %v621 = vpop.f32.mrb[0].mxu0
      %v622 = vadd.f32 %v470, %v621
      %v623 = vpop.f32.mrb[0].mxu0
      %624 = vmatprep.mubr.bf16.mxu0 %v432
      %625 = vmatmul.mubr.bf16.gmra.mrb[0].mxu0 %v431
      %v626 = vpop.f32.mrb[0].mxu0
      %v627 = vadd.f32 %v470, %v626
      %v628 = vpop.f32.mrb[0].mxu0
      %v629 = vpop.f32.mrb[0].mxu0
      %v630 = vadd.f32 %v470, %v629
      %v631 = vpop.f32.mrb[0].mxu0
      %632 = vdwg.mxu0
      %v633 = vld [vmem:[%s355] sm:$0xf]
      %v634 = vld [vmem:[%s355 + $0x4] sm:$0xf]
      %v635 = vld [vmem:[%s355 + $0x8] sm:$0xf]
      %v636 = vld [vmem:[%s355 + $0xc] sm:$0xf]
      %v637 = vld [vmem:[%s355 + $0x10] sm:$0xf]
      %v638 = vld [vmem:[%s355 + $0x14] sm:$0xf]
      %v639 = vld [vmem:[%s355 + $0x18] sm:$0xf]
      %v640 = vld [vmem:[%s355 + $0x1c] sm:$0xf]
      %v641 = vunpack.c.l.bf16 %v633
      %v642 = vunpack.c.l.bf16 %v634
      %v643 = vunpack.c.l.bf16 %v635
      %v644 = vunpack.c.l.bf16 %v636
      %v645 = vunpack.c.l.bf16 %v637
      %v646 = vunpack.c.l.bf16 %v638
      %v647 = vunpack.c.l.bf16 %v639
      %v648 = vunpack.c.l.bf16 %v640
      %v649 = vadd.f32 %v603, %v641
      %v650 = vadd.f32 %v606, %v642
      %v651 = vadd.f32 %v611, %v643
      %v652 = vadd.f32 %v614, %v644
      %v653 = vadd.f32 %v619, %v645
      %v654 = vadd.f32 %v622, %v646
      %v655 = vadd.f32 %v627, %v647
      %v656 = vadd.f32 %v630, %v648
      %v657 = vpack.c.bf16 %v650, %v649
      %v658 = vpack.c.bf16 %v652, %v651
      %v659 = vpack.c.bf16 %v654, %v653
      %v660 = vpack.c.bf16 %v656, %v655
      %v661 = vld [vmem:[%s5] sm:$0xff]
      %v662 = vld [vmem:[%s5 + $0x8] sm:$0xff]
      %v663 = vld [vmem:[%s5 + $0x10] sm:$0xff]
      %v664 = vld [vmem:[%s5 + $0x18] sm:$0xff]
      %v665 = vld [vmem:[%s5 + $0x20] sm:$0xff]
      %v666 = vld [vmem:[%s5 + $0x28] sm:$0xff]
      %v667 = vld [vmem:[%s5 + $0x30] sm:$0xff]
      %v668 = vld [vmem:[%s5 + $0x38] sm:$0xff]
      %v669 = vld [vmem:[%s5 + $0x40] sm:$0xff]
      %v670 = vld [vmem:[%s5 + $0x48] sm:$0xff]
      %v671 = vld [vmem:[%s5 + $0x50] sm:$0xff]
      %v672 = vld [vmem:[%s5 + $0x58] sm:$0xff]
      %v673 = vld [vmem:[%s5 + $0x60] sm:$0xff]
      %v674 = vld [vmem:[%s5 + $0x68] sm:$0xff]
      %v675 = vld [vmem:[%s5 + $0x70] sm:$0xff]
      %v676 = vld [vmem:[%s5 + $0x78] sm:$0xff]
      %v677 = vld [vmem:[%s5 + $0x80] sm:$0xff]
      %v678 = vld [vmem:[%s5 + $0x88] sm:$0xff]
      %v679 = vld [vmem:[%s5 + $0x90] sm:$0xff]
      %v680 = vld [vmem:[%s5 + $0x98] sm:$0xff]
      %v681 = vld [vmem:[%s5 + $0xa0] sm:$0xff]
      %v682 = vld [vmem:[%s5 + $0xa8] sm:$0xff]
      %v683 = vld [vmem:[%s5 + $0xb0] sm:$0xff]
      %v684 = vld [vmem:[%s5 + $0xb8] sm:$0xff]
      %v685 = vld [vmem:[%s5 + $0xc0] sm:$0xff]
      %v686 = vld [vmem:[%s5 + $0xc8] sm:$0xff]
      %v687 = vld [vmem:[%s5 + $0xd0] sm:$0xff]
      %v688 = vld [vmem:[%s5 + $0xd8] sm:$0xff]
      %v689 = vld [vmem:[%s5 + $0xe0] sm:$0xff]
      %v690 = vld [vmem:[%s5 + $0xe8] sm:$0xff]
      %v691 = vld [vmem:[%s5 + $0xf0] sm:$0xff]
      %v692 = vld [vmem:[%s5 + $0xf8] sm:$0xff]
      %v693 = vld [vmem:[%s5 + $0x100] sm:$0xff]
      %v694 = vld [vmem:[%s5 + $0x108] sm:$0xff]
      %v695 = vld [vmem:[%s5 + $0x110] sm:$0xff]
      %v696 = vld [vmem:[%s5 + $0x118] sm:$0xff]
      %v697 = vld [vmem:[%s5 + $0x120] sm:$0xff]
      %v698 = vld [vmem:[%s5 + $0x128] sm:$0xff]
      %v699 = vld [vmem:[%s5 + $0x130] sm:$0xff]
      %v700 = vld [vmem:[%s5 + $0x138] sm:$0xff]
      %v701 = vld [vmem:[%s5 + $0x140] sm:$0xff]
      %v702 = vld [vmem:[%s5 + $0x148] sm:$0xff]
      %v703 = vld [vmem:[%s5 + $0x150] sm:$0xff]
      %v704 = vld [vmem:[%s5 + $0x158] sm:$0xff]
      %v705 = vld [vmem:[%s5 + $0x160] sm:$0xff]
      %v706 = vld [vmem:[%s5 + $0x168] sm:$0xff]
      %v707 = vld [vmem:[%s5 + $0x170] sm:$0xff]
      %v708 = vld [vmem:[%s5 + $0x178] sm:$0xff]
      %v709 = vld [vmem:[%s5 + $0x180] sm:$0xff]
      %v710 = vld [vmem:[%s5 + $0x188] sm:$0xff]
      %v711 = vld [vmem:[%s5 + $0x190] sm:$0xff]
      %v712 = vld [vmem:[%s5 + $0x198] sm:$0xff]
      %v713 = vld [vmem:[%s5 + $0x1a0] sm:$0xff]
      %v714 = vld [vmem:[%s5 + $0x1a8] sm:$0xff]
      %v715 = vld [vmem:[%s5 + $0x1b0] sm:$0xff]
      %v716 = vld [vmem:[%s5 + $0x1b8] sm:$0xff]
      %v717 = vld [vmem:[%s5 + $0x1c0] sm:$0xff]
      %v718 = vld [vmem:[%s5 + $0x1c8] sm:$0xff]
      %v719 = vld [vmem:[%s5 + $0x1d0] sm:$0xff]
      %v720 = vld [vmem:[%s5 + $0x1d8] sm:$0xff]
      %v721 = vld [vmem:[%s5 + $0x1e0] sm:$0xff]
      %v722 = vld [vmem:[%s5 + $0x1e8] sm:$0xff]
      %v723 = vld [vmem:[%s5 + $0x1f0] sm:$0xff]
      %v724 = vld [vmem:[%s5 + $0x1f8] sm:$0xff]
      %v725 = vld [vmem:[%s5 + $0x200] sm:$0xff]
      %v726 = vld [vmem:[%s5 + $0x208] sm:$0xff]
      %v727 = vld [vmem:[%s5 + $0x210] sm:$0xff]
      %v728 = vld [vmem:[%s5 + $0x218] sm:$0xff]
      %v729 = vld [vmem:[%s5 + $0x220] sm:$0xff]
      %v730 = vld [vmem:[%s5 + $0x228] sm:$0xff]
      %v731 = vld [vmem:[%s5 + $0x230] sm:$0xff]
      %v732 = vld [vmem:[%s5 + $0x238] sm:$0xff]
      %v733 = vld [vmem:[%s5 + $0x240] sm:$0xff]
      %v734 = vld [vmem:[%s5 + $0x248] sm:$0xff]
      %v735 = vld [vmem:[%s5 + $0x250] sm:$0xff]
      %v736 = vld [vmem:[%s5 + $0x258] sm:$0xff]
      %v737 = vld [vmem:[%s5 + $0x260] sm:$0xff]
      %v738 = vld [vmem:[%s5 + $0x268] sm:$0xff]
      %v739 = vld [vmem:[%s5 + $0x270] sm:$0xff]
      %v740 = vld [vmem:[%s5 + $0x278] sm:$0xff]
      %v741 = vld [vmem:[%s6] sm:$0xff]
      %v742 = vld [vmem:[%s6 + $0x8] sm:$0xff]
      %v743 = vld [vmem:[%s6 + $0x10] sm:$0xf]
      %v747 = vlaneseq
      %v748 = vshrl.u32 %v747, 7
      %v749 = vsub.s32 0, %v748
      %v750 = vrot.slane %v741, %v749
      %v751 = vlaneseq
      %v752 = vshrl.u32 %v751, 7
      %v753 = vsub.s32 1, %v752
      %v754 = vrot.slane %v741, %v753
      %v755 = vlaneseq
      %v756 = vshrl.u32 %v755, 7
      %v757 = vsub.s32 2, %v756
      %v758 = vrot.slane %v741, %v757
      %v759 = vlaneseq
      %v760 = vshrl.u32 %v759, 7
      %v761 = vsub.s32 3, %v760
      %v762 = vrot.slane %v741, %v761
      %v763 = vlaneseq
      %v764 = vshrl.u32 %v763, 7
      %v765 = vsub.s32 4, %v764
      %v766 = vrot.slane %v741, %v765
      %v767 = vlaneseq
      %v768 = vshrl.u32 %v767, 7
      %v769 = vsub.s32 5, %v768
      %v770 = vrot.slane %v741, %v769
      %v771 = vlaneseq
      %v772 = vshrl.u32 %v771, 7
      %v773 = vsub.s32 6, %v772
      %v774 = vrot.slane %v741, %v773
      %v775 = vlaneseq
      %v776 = vshrl.u32 %v775, 7
      %v777 = vsub.s32 7, %v776
      %v778 = vrot.slane %v741, %v777
      %v779 = vlaneseq
      %v780 = vshrl.u32 %v779, 7
      %v781 = vsub.s32 0, %v780
      %v782 = vrot.slane %v742, %v781
      %v783 = vlaneseq
      %v784 = vshrl.u32 %v783, 7
      %v785 = vsub.s32 1, %v784
      %v786 = vrot.slane %v742, %v785
      %v787 = vlaneseq
      %v788 = vshrl.u32 %v787, 7
      %v789 = vsub.s32 2, %v788
      %v790 = vrot.slane %v742, %v789
      %v791 = vlaneseq
      %v792 = vshrl.u32 %v791, 7
      %v793 = vsub.s32 3, %v792
      %v794 = vrot.slane %v742, %v793
      %v795 = vlaneseq
      %v796 = vshrl.u32 %v795, 7
      %v797 = vsub.s32 4, %v796
      %v798 = vrot.slane %v742, %v797
      %v799 = vlaneseq
      %v800 = vshrl.u32 %v799, 7
      %v801 = vsub.s32 5, %v800
      %v802 = vrot.slane %v742, %v801
      %v803 = vlaneseq
      %v804 = vshrl.u32 %v803, 7
      %v805 = vsub.s32 6, %v804
      %v806 = vrot.slane %v742, %v805
      %v807 = vlaneseq
      %v808 = vshrl.u32 %v807, 7
      %v809 = vsub.s32 7, %v808
      %v810 = vrot.slane %v742, %v809
      %v811 = vlaneseq
      %v812 = vshrl.u32 %v811, 7
      %v813 = vsub.s32 0, %v812
      %v814 = vrot.slane %v743, %v813
      %v815 = vlaneseq
      %v816 = vshrl.u32 %v815, 7
      %v817 = vsub.s32 1, %v816
      %v818 = vrot.slane %v743, %v817
      %v819 = vlaneseq
      %v820 = vshrl.u32 %v819, 7
      %v821 = vsub.s32 2, %v820
      %v822 = vrot.slane %v743, %v821
      %v823 = vlaneseq
      %v824 = vshrl.u32 %v823, 7
      %v825 = vsub.s32 3, %v824
      %v826 = vrot.slane %v743, %v825
      %v927 = vunpack.c.l.b16 %v661
      %v928 = vunpack.c.h.b16 %v661
      %v929 = vunpack.c.l.b16 %v662
      %v930 = vunpack.c.h.b16 %v662
      %v931 = vunpack.c.l.b16 %v663
      %v932 = vunpack.c.h.b16 %v663
      %v933 = vunpack.c.l.b16 %v664
      %v934 = vunpack.c.h.b16 %v664
      %v935 = vunpack.c.l.b16 %v665
      %v936 = vunpack.c.h.b16 %v665
      %v937 = vunpack.c.l.b16 %v666
      %v938 = vunpack.c.h.b16 %v666
      %v939 = vunpack.c.l.b16 %v667
      %v940 = vunpack.c.h.b16 %v667
      %v941 = vunpack.c.l.b16 %v668
      %v942 = vunpack.c.h.b16 %v668
      %v943 = vunpack.c.l.b16 %v669
      %v944 = vunpack.c.h.b16 %v669
      %v945 = vunpack.c.l.b16 %v670
      %v946 = vunpack.c.h.b16 %v670
      %v947 = vunpack.c.l.b16 %v671
      %v948 = vunpack.c.h.b16 %v671
      %v949 = vunpack.c.l.b16 %v672
      %v950 = vunpack.c.h.b16 %v672
      %v951 = vunpack.c.l.b16 %v673
      %v952 = vunpack.c.h.b16 %v673
      %v953 = vunpack.c.l.b16 %v674
      %v954 = vunpack.c.h.b16 %v674
      %v955 = vunpack.c.l.b16 %v675
      %v956 = vunpack.c.h.b16 %v675
      %v957 = vunpack.c.l.b16 %v676
      %v958 = vunpack.c.h.b16 %v676
      %v959 = vunpack.c.l.b16 %v677
      %v960 = vunpack.c.h.b16 %v677
      %v961 = vunpack.c.l.b16 %v678
      %v962 = vunpack.c.h.b16 %v678
      %v963 = vunpack.c.l.b16 %v679
      %v964 = vunpack.c.h.b16 %v679
      %v965 = vunpack.c.l.b16 %v680
      %v966 = vunpack.c.h.b16 %v680
      %v967 = vunpack.c.l.b16 %v681
      %v968 = vunpack.c.h.b16 %v681
      %v969 = vunpack.c.l.b16 %v682
      %v970 = vunpack.c.h.b16 %v682
      %v971 = vunpack.c.l.b16 %v683
      %v972 = vunpack.c.h.b16 %v683
      %v973 = vunpack.c.l.b16 %v684
      %v974 = vunpack.c.h.b16 %v684
      %v975 = vunpack.c.l.b16 %v685
      %v976 = vunpack.c.h.b16 %v685
      %v977 = vunpack.c.l.b16 %v686
      %v978 = vunpack.c.h.b16 %v686
      %v979 = vunpack.c.l.b16 %v687
      %v980 = vunpack.c.h.b16 %v687
      %v981 = vunpack.c.l.b16 %v688
      %v982 = vunpack.c.h.b16 %v688
      %v983 = vunpack.c.l.b16 %v689
      %v984 = vunpack.c.h.b16 %v689
      %v985 = vunpack.c.l.b16 %v690
      %v986 = vunpack.c.h.b16 %v690
      %v987 = vunpack.c.l.b16 %v691
      %v988 = vunpack.c.h.b16 %v691
      %v989 = vunpack.c.l.b16 %v692
      %v990 = vunpack.c.h.b16 %v692
      %v991 = vunpack.c.l.b16 %v693
      %v992 = vunpack.c.h.b16 %v693
      %v993 = vunpack.c.l.b16 %v694
      %v994 = vunpack.c.h.b16 %v694
      %v995 = vunpack.c.l.b16 %v695
      %v996 = vunpack.c.h.b16 %v695
      %v997 = vunpack.c.l.b16 %v696
      %v998 = vunpack.c.h.b16 %v696
      %v999 = vunpack.c.l.b16 %v697
      %v1000 = vunpack.c.h.b16 %v697
      %v1001 = vunpack.c.l.b16 %v698
      %v1002 = vunpack.c.h.b16 %v698
      %v1003 = vunpack.c.l.b16 %v699
      %v1004 = vunpack.c.h.b16 %v699
      %v1005 = vunpack.c.l.b16 %v700
      %v1006 = vunpack.c.h.b16 %v700
      %v1007 = vunpack.c.l.b16 %v701
      %v1008 = vunpack.c.h.b16 %v701
      %v1009 = vunpack.c.l.b16 %v702
      %v1010 = vunpack.c.h.b16 %v702
      %v1011 = vunpack.c.l.b16 %v703
      %v1012 = vunpack.c.h.b16 %v703
      %v1013 = vunpack.c.l.b16 %v704
      %v1014 = vunpack.c.h.b16 %v704
      %v1015 = vunpack.c.l.b16 %v705
      %v1016 = vunpack.c.h.b16 %v705
      %v1017 = vunpack.c.l.b16 %v706
      %v1018 = vunpack.c.h.b16 %v706
      %v1019 = vunpack.c.l.b16 %v707
      %v1020 = vunpack.c.h.b16 %v707
      %v1021 = vunpack.c.l.b16 %v708
      %v1022 = vunpack.c.h.b16 %v708
      %v1023 = vunpack.c.l.b16 %v709
      %v1024 = vunpack.c.h.b16 %v709
      %v1025 = vunpack.c.l.b16 %v710
      %v1026 = vunpack.c.h.b16 %v710
      %v1027 = vunpack.c.l.b16 %v711
      %v1028 = vunpack.c.h.b16 %v711
      %v1029 = vunpack.c.l.b16 %v712
      %v1030 = vunpack.c.h.b16 %v712
      %v1031 = vunpack.c.l.b16 %v713
      %v1032 = vunpack.c.h.b16 %v713
      %v1033 = vunpack.c.l.b16 %v714
      %v1034 = vunpack.c.h.b16 %v714
      %v1035 = vunpack.c.l.b16 %v715
      %v1036 = vunpack.c.h.b16 %v715
      %v1037 = vunpack.c.l.b16 %v716
      %v1038 = vunpack.c.h.b16 %v716
      %v1039 = vunpack.c.l.b16 %v717
      %v1040 = vunpack.c.h.b16 %v717
      %v1041 = vunpack.c.l.b16 %v718
      %v1042 = vunpack.c.h.b16 %v718
      %v1043 = vunpack.c.l.b16 %v719
      %v1044 = vunpack.c.h.b16 %v719
      %v1045 = vunpack.c.l.b16 %v720
      %v1046 = vunpack.c.h.b16 %v720
      %v1047 = vunpack.c.l.b16 %v721
      %v1048 = vunpack.c.h.b16 %v721
      %v1049 = vunpack.c.l.b16 %v722
      %v1050 = vunpack.c.h.b16 %v722
      %v1051 = vunpack.c.l.b16 %v723
      %v1052 = vunpack.c.h.b16 %v723
      %v1053 = vunpack.c.l.b16 %v724
      %v1054 = vunpack.c.h.b16 %v724
      %v1055 = vunpack.c.l.b16 %v725
      %v1056 = vunpack.c.h.b16 %v725
      %v1057 = vunpack.c.l.b16 %v726
      %v1058 = vunpack.c.h.b16 %v726
      %v1059 = vunpack.c.l.b16 %v727
      %v1060 = vunpack.c.h.b16 %v727
      %v1061 = vunpack.c.l.b16 %v728
      %v1062 = vunpack.c.h.b16 %v728
      %v1063 = vunpack.c.l.b16 %v729
      %v1064 = vunpack.c.h.b16 %v729
      %v1065 = vunpack.c.l.b16 %v730
      %v1066 = vunpack.c.h.b16 %v730
      %v1067 = vunpack.c.l.b16 %v731
      %v1068 = vunpack.c.h.b16 %v731
      %v1069 = vunpack.c.l.b16 %v732
      %v1070 = vunpack.c.h.b16 %v732
      %v1071 = vunpack.c.l.b16 %v733
      %v1072 = vunpack.c.h.b16 %v733
      %v1073 = vunpack.c.l.b16 %v734
      %v1074 = vunpack.c.h.b16 %v734
      %v1075 = vunpack.c.l.b16 %v735
      %v1076 = vunpack.c.h.b16 %v735
      %v1077 = vunpack.c.l.b16 %v736
      %v1078 = vunpack.c.h.b16 %v736
      %v1079 = vunpack.c.l.b16 %v737
      %v1080 = vunpack.c.h.b16 %v737
      %v1081 = vunpack.c.l.b16 %v738
      %v1082 = vunpack.c.h.b16 %v738
      %v1083 = vunpack.c.l.b16 %v739
      %v1084 = vunpack.c.h.b16 %v739
      %v1085 = vunpack.c.l.b16 %v740
      %v1086 = vunpack.c.h.b16 %v740
      %v1087 = vpack.c.b16 %v947, %v927
      %v1088 = vpack.c.b16 %v948, %v928
      %v1089 = vpack.c.b16 %v949, %v929
      %v1090 = vpack.c.b16 %v950, %v930
      %v1091 = vpack.c.b16 %v951, %v931
      %v1092 = vpack.c.b16 %v952, %v932
      %v1093 = vpack.c.b16 %v953, %v933
      %v1094 = vpack.c.b16 %v954, %v934
      %v1095 = vpack.c.b16 %v955, %v935
      %v1096 = vpack.c.b16 %v956, %v936
      %v1097 = vpack.c.b16 %v957, %v937
      %v1098 = vpack.c.b16 %v958, %v938
      %v1099 = vpack.c.b16 %v959, %v939
      %v1100 = vpack.c.b16 %v960, %v940
      %v1101 = vpack.c.b16 %v961, %v941
      %v1102 = vpack.c.b16 %v962, %v942
      %v1103 = vpack.c.b16 %v963, %v943
      %v1104 = vpack.c.b16 %v964, %v944
      %v1105 = vpack.c.b16 %v965, %v945
      %v1106 = vpack.c.b16 %v966, %v946
      %v1107 = vpack.c.b16 %v987, %v967
      %v1108 = vpack.c.b16 %v988, %v968
      %v1109 = vpack.c.b16 %v989, %v969
      %v1110 = vpack.c.b16 %v990, %v970
      %v1111 = vpack.c.b16 %v991, %v971
      %v1112 = vpack.c.b16 %v992, %v972
      %v1113 = vpack.c.b16 %v993, %v973
      %v1114 = vpack.c.b16 %v994, %v974
      %v1115 = vpack.c.b16 %v995, %v975
      %v1116 = vpack.c.b16 %v996, %v976
      %v1117 = vpack.c.b16 %v997, %v977
      %v1118 = vpack.c.b16 %v998, %v978
      %v1119 = vpack.c.b16 %v999, %v979
      %v1120 = vpack.c.b16 %v1000, %v980
      %v1121 = vpack.c.b16 %v1001, %v981
      %v1122 = vpack.c.b16 %v1002, %v982
      %v1123 = vpack.c.b16 %v1003, %v983
      %v1124 = vpack.c.b16 %v1004, %v984
      %v1125 = vpack.c.b16 %v1005, %v985
      %v1126 = vpack.c.b16 %v1006, %v986
      %v1127 = vpack.c.b16 %v1027, %v1007
      %v1128 = vpack.c.b16 %v1028, %v1008
      %v1129 = vpack.c.b16 %v1029, %v1009
      %v1130 = vpack.c.b16 %v1030, %v1010
      %v1131 = vpack.c.b16 %v1031, %v1011
      %v1132 = vpack.c.b16 %v1032, %v1012
      %v1133 = vpack.c.b16 %v1033, %v1013
      %v1134 = vpack.c.b16 %v1034, %v1014
      %v1135 = vpack.c.b16 %v1035, %v1015
      %v1136 = vpack.c.b16 %v1036, %v1016
      %v1137 = vpack.c.b16 %v1037, %v1017
      %v1138 = vpack.c.b16 %v1038, %v1018
      %v1139 = vpack.c.b16 %v1039, %v1019
      %v1140 = vpack.c.b16 %v1040, %v1020
      %v1141 = vpack.c.b16 %v1041, %v1021
      %v1142 = vpack.c.b16 %v1042, %v1022
      %v1143 = vpack.c.b16 %v1043, %v1023
      %v1144 = vpack.c.b16 %v1044, %v1024
      %v1145 = vpack.c.b16 %v1045, %v1025
      %v1146 = vpack.c.b16 %v1046, %v1026
      %v1147 = vpack.c.b16 %v1067, %v1047
      %v1148 = vpack.c.b16 %v1068, %v1048
      %v1149 = vpack.c.b16 %v1069, %v1049
      %v1150 = vpack.c.b16 %v1070, %v1050
      %v1151 = vpack.c.b16 %v1071, %v1051
      %v1152 = vpack.c.b16 %v1072, %v1052
      %v1153 = vpack.c.b16 %v1073, %v1053
      %v1154 = vpack.c.b16 %v1074, %v1054
      %v1155 = vpack.c.b16 %v1075, %v1055
      %v1156 = vpack.c.b16 %v1076, %v1056
      %v1157 = vpack.c.b16 %v1077, %v1057
      %v1158 = vpack.c.b16 %v1078, %v1058
      %v1159 = vpack.c.b16 %v1079, %v1059
      %v1160 = vpack.c.b16 %v1080, %v1060
      %v1161 = vpack.c.b16 %v1081, %v1061
      %v1162 = vpack.c.b16 %v1082, %v1062
      %v1163 = vpack.c.b16 %v1083, %v1063
      %v1164 = vpack.c.b16 %v1084, %v1064
      %v1165 = vpack.c.b16 %v1085, %v1065
      %v1166 = vpack.c.b16 %v1086, %v1066
      %vm1247 = vcmask 523264
      %v1249 = vsel %vm1247, %v657, 0
      %v1252 = vsel %vm1247, %v658, 0
      %v1255 = vsel %vm1247, %v659, 0
      %v1258 = vsel %vm1247, %v660, 0
      %1260 = vmatprep.subr.bf16.mxu0 %v1088
      %1261 = vmatpush1.bf16.msra.mxu0 %v1087
      %1262 = vmatprep.subr.bf16.mxu0 %v1108
      %1263 = vmatpush1.bf16.msra.mxu0 %v1107
      %1264 = vmatprep.subr.bf16.mxu0 %v1128
      %1265 = vmatpush1.bf16.msra.mxu0 %v1127
      %1266 = vmatprep.subr.bf16.mxu0 %v1148
      %1267 = vmatpush1.bf16.msra.mxu0 %v1147
      %1268 = vmatprep.subr.bf16.mxu0 0
      %1269 = vmatpush1.bf16.msra.mxu0 0
      %1270 = vmatprep.subr.bf16.mxu0 0
      %1271 = vmatpush1.bf16.msra.mxu0 0
      %1272 = vmatprep.subr.bf16.mxu0 0
      %1273 = vmatpush1.bf16.msra.mxu0 0
      %1274 = vmatprep.subr.bf16.mxu0 0
      %1275 = vmatpush1.bf16.msra.mxu0 0
      %1276 = vmatprep.subr.bf16.mxu0 0
      %1277 = vmatpush1.bf16.msra.mxu0 0
      %1278 = vmatprep.subr.bf16.mxu0 0
      %1279 = vmatpush1.bf16.msra.mxu0 0
      %1280 = vmatprep.subr.bf16.mxu0 0
      %1281 = vmatpush1.bf16.msra.mxu0 0
      %1282 = vmatprep.subr.bf16.mxu0 0
      %1283 = vmatpush1.bf16.msra.mxu0 0
      %1284 = vmatprep.subr.bf16.mxu0 0
      %1285 = vmatpush1.bf16.msra.mxu0 0
      %1286 = vmatprep.subr.bf16.mxu0 0
      %1287 = vmatpush1.bf16.msra.mxu0 0
      %1288 = vmatprep.subr.bf16.mxu0 0
      %1289 = vmatpush1.bf16.msra.mxu0 0
      %1290 = vmatprep.subr.bf16.mxu0 0
      %1291 = vmatpush1.bf16.msra.mxu0 0
      %1292 = vmatprep.mubr.bf16.mxu0 0
      %1293 = vmatmul.mubr.bf16.gmra.mrb[0].mxu0 %v1249
      %v1294 = vpop.f32.mrb[0].mxu0
      %v1295 = vadd.f32 %v750, %v1294
      %v1296 = vpop.f32.mrb[0].mxu0
      %v1297 = vadd.f32 %v754, %v1296
      %v1298 = vpop.f32.mrb[0].mxu0
      %v1299 = vadd.f32 %v750, %v1298
      %v1300 = vpop.f32.mrb[0].mxu0
      %v1301 = vadd.f32 %v754, %v1300
      %1302 = vmatprep.mubr.bf16.mxu0 0
      %1303 = vmatmul.mubr.bf16.gmra.mrb[0].mxu0 %v1252
      %v1304 = vpop.f32.mrb[0].mxu0
      %v1305 = vadd.f32 %v750, %v1304
      %v1306 = vpop.f32.mrb[0].mxu0
      %v1307 = vadd.f32 %v754, %v1306
      %v1308 = vpop.f32.mrb[0].mxu0
      %v1309 = vadd.f32 %v750, %v1308
      %v1310 = vpop.f32.mrb[0].mxu0
      %v1311 = vadd.f32 %v754, %v1310
      %1312 = vmatprep.mubr.bf16.mxu0 0
      %1313 = vmatmul.mubr.bf16.gmra.mrb[0].mxu0 %v1255
      %v1314 = vpop.f32.mrb[0].mxu0
      %v1315 = vadd.f32 %v750, %v1314
      %v1316 = vpop.f32.mrb[0].mxu0
      %v1317 = vadd.f32 %v754, %v1316
      %v1318 = vpop.f32.mrb[0].mxu0
      %v1319 = vadd.f32 %v750, %v1318
      %v1320 = vpop.f32.mrb[0].mxu0
      %v1321 = vadd.f32 %v754, %v1320
      %1322 = vmatprep.mubr.bf16.mxu0 0
      %1323 = vmatmul.mubr.bf16.gmra.mrb[0].mxu0 %v1258
      %v1324 = vpop.f32.mrb[0].mxu0
      %v1325 = vadd.f32 %v750, %v1324
      %v1326 = vpop.f32.mrb[0].mxu0
      %v1327 = vadd.f32 %v754, %v1326
      %v1328 = vpop.f32.mrb[0].mxu0
      %v1329 = vadd.f32 %v750, %v1328
      %v1330 = vpop.f32.mrb[0].mxu0
      %v1331 = vadd.f32 %v754, %v1330
      %1332 = vdwg.mxu0
      %1333 = vmatprep.subr.bf16.mxu0 %v1090
      %1334 = vmatpush1.bf16.msra.mxu0 %v1089
      %1335 = vmatprep.subr.bf16.mxu0 %v1110
      %1336 = vmatpush1.bf16.msra.mxu0 %v1109
      %1337 = vmatprep.subr.bf16.mxu0 %v1130
      %1338 = vmatpush1.bf16.msra.mxu0 %v1129
      %1339 = vmatprep.subr.bf16.mxu0 %v1150
      %1340 = vmatpush1.bf16.msra.mxu0 %v1149
      %1341 = vmatprep.subr.bf16.mxu0 0
      %1342 = vmatpush1.bf16.msra.mxu0 0
      %1343 = vmatprep.subr.bf16.mxu0 0
      %1344 = vmatpush1.bf16.msra.mxu0 0
      %1345 = vmatprep.subr.bf16.mxu0 0
      %1346 = vmatpush1.bf16.msra.mxu0 0
      %1347 = vmatprep.subr.bf16.mxu0 0
      %1348 = vmatpush1.bf16.msra.mxu0 0
      %1349 = vmatprep.subr.bf16.mxu0 0
      %1350 = vmatpush1.bf16.msra.mxu0 0
      %1351 = vmatprep.subr.bf16.mxu0 0
      %1352 = vmatpush1.bf16.msra.mxu0 0
      %1353 = vmatprep.subr.bf16.mxu0 0
      %1354 = vmatpush1.bf16.msra.mxu0 0
      %1355 = vmatprep.subr.bf16.mxu0 0
      %1356 = vmatpush1.bf16.msra.mxu0 0
      %1357 = vmatprep.subr.bf16.mxu0 0
      %1358 = vmatpush1.bf16.msra.mxu0 0
      %1359 = vmatprep.subr.bf16.mxu0 0
      %1360 = vmatpush1.bf16.msra.mxu0 0
      %1361 = vmatprep.subr.bf16.mxu0 0
      %1362 = vmatpush1.bf16.msra.mxu0 0
      %1363 = vmatprep.subr.bf16.mxu0 0
      %1364 = vmatpush1.bf16.msra.mxu0 0
      %1365 = vmatprep.mubr.bf16.mxu0 0
      %1366 = vmatmul.mubr.bf16.gmra.mrb[0].mxu0 %v1249
      %v1367 = vpop.f32.mrb[0].mxu0
      %v1368 = vadd.f32 %v758, %v1367
      %v1369 = vpop.f32.mrb[0].mxu0
      %v1370 = vadd.f32 %v762, %v1369
      %v1371 = vpop.f32.mrb[0].mxu0
      %v1372 = vadd.f32 %v758, %v1371
      %v1373 = vpop.f32.mrb[0].mxu0
      %v1374 = vadd.f32 %v762, %v1373
      %1375 = vmatprep.mubr.bf16.mxu0 0
      %1376 = vmatmul.mubr.bf16.gmra.mrb[0].mxu0 %v1252
      %v1377 = vpop.f32.mrb[0].mxu0
      %v1378 = vadd.f32 %v758, %v1377
      %v1379 = vpop.f32.mrb[0].mxu0
      %v1380 = vadd.f32 %v762, %v1379
      %v1381 = vpop.f32.mrb[0].mxu0
      %v1382 = vadd.f32 %v758, %v1381
      %v1383 = vpop.f32.mrb[0].mxu0
      %v1384 = vadd.f32 %v762, %v1383
      %1385 = vmatprep.mubr.bf16.mxu0 0
      %1386 = vmatmul.mubr.bf16.gmra.mrb[0].mxu0 %v1255
      %v1387 = vpop.f32.mrb[0].mxu0
      %v1388 = vadd.f32 %v758, %v1387
      %v1389 = vpop.f32.mrb[0].mxu0
      %v1390 = vadd.f32 %v762, %v1389
      %v1391 = vpop.f32.mrb[0].mxu0
      %v1392 = vadd.f32 %v758, %v1391
      %v1393 = vpop.f32.mrb[0].mxu0
      %v1394 = vadd.f32 %v762, %v1393
      %1395 = vmatprep.mubr.bf16.mxu0 0
      %1396 = vmatmul.mubr.bf16.gmra.mrb[0].mxu0 %v1258
      %v1397 = vpop.f32.mrb[0].mxu0
      %v1398 = vadd.f32 %v758, %v1397
      %v1399 = vpop.f32.mrb[0].mxu0
      %v1400 = vadd.f32 %v762, %v1399
      %v1401 = vpop.f32.mrb[0].mxu0
      %v1402 = vadd.f32 %v758, %v1401
      %v1403 = vpop.f32.mrb[0].mxu0
      %v1404 = vadd.f32 %v762, %v1403
      %1405 = vdwg.mxu0
      %1406 = vmatprep.subr.bf16.mxu0 %v1092
      %1407 = vmatpush1.bf16.msra.mxu0 %v1091
      %1408 = vmatprep.subr.bf16.mxu0 %v1112
      %1409 = vmatpush1.bf16.msra.mxu0 %v1111
      %1410 = vmatprep.subr.bf16.mxu0 %v1132
      %1411 = vmatpush1.bf16.msra.mxu0 %v1131
      %1412 = vmatprep.subr.bf16.mxu0 %v1152
      %1413 = vmatpush1.bf16.msra.mxu0 %v1151
      %1414 = vmatprep.subr.bf16.mxu0 0
      %1415 = vmatpush1.bf16.msra.mxu0 0
      %1416 = vmatprep.subr.bf16.mxu0 0
      %1417 = vmatpush1.bf16.msra.mxu0 0
      %1418 = vmatprep.subr.bf16.mxu0 0
      %1419 = vmatpush1.bf16.msra.mxu0 0
      %1420 = vmatprep.subr.bf16.mxu0 0
      %1421 = vmatpush1.bf16.msra.mxu0 0
      %1422 = vmatprep.subr.bf16.mxu0 0
      %1423 = vmatpush1.bf16.msra.mxu0 0
      %1424 = vmatprep.subr.bf16.mxu0 0
      %1425 = vmatpush1.bf16.msra.mxu0 0
      %1426 = vmatprep.subr.bf16.mxu0 0
      %1427 = vmatpush1.bf16.msra.mxu0 0
      %1428 = vmatprep.subr.bf16.mxu0 0
      %1429 = vmatpush1.bf16.msra.mxu0 0
      %1430 = vmatprep.subr.bf16.mxu0 0
      %1431 = vmatpush1.bf16.msra.mxu0 0
      %1432 = vmatprep.subr.bf16.mxu0 0
      %1433 = vmatpush1.bf16.msra.mxu0 0
      %1434 = vmatprep.subr.bf16.mxu0 0
      %1435 = vmatpush1.bf16.msra.mxu0 0
      %1436 = vmatprep.subr.bf16.mxu0 0
      %1437 = vmatpush1.bf16.msra.mxu0 0
      %1438 = vmatprep.mubr.bf16.mxu0 0
      %1439 = vmatmul.mubr.bf16.gmra.mrb[0].mxu0 %v1249
      %v1440 = vpop.f32.mrb[0].mxu0
      %v1441 = vadd.f32 %v766, %v1440
      %v1442 = vpop.f32.mrb[0].mxu0
      %v1443 = vadd.f32 %v770, %v1442
      %v1444 = vpop.f32.mrb[0].mxu0
      %v1445 = vadd.f32 %v766, %v1444
      %v1446 = vpop.f32.mrb[0].mxu0
      %v1447 = vadd.f32 %v770, %v1446
      %1448 = vmatprep.mubr.bf16.mxu0 0
      %1449 = vmatmul.mubr.bf16.gmra.mrb[0].mxu0 %v1252
      %v1450 = vpop.f32.mrb[0].mxu0
      %v1451 = vadd.f32 %v766, %v1450
      %v1452 = vpop.f32.mrb[0].mxu0
      %v1453 = vadd.f32 %v770, %v1452
      %v1454 = vpop.f32.mrb[0].mxu0
      %v1455 = vadd.f32 %v766, %v1454
      %v1456 = vpop.f32.mrb[0].mxu0
      %v1457 = vadd.f32 %v770, %v1456
      %1458 = vmatprep.mubr.bf16.mxu0 0
      %1459 = vmatmul.mubr.bf16.gmra.mrb[0].mxu0 %v1255
      %v1460 = vpop.f32.mrb[0].mxu0
      %v1461 = vadd.f32 %v766, %v1460
      %v1462 = vpop.f32.mrb[0].mxu0
      %v1463 = vadd.f32 %v770, %v1462
      %v1464 = vpop.f32.mrb[0].mxu0
      %v1465 = vadd.f32 %v766, %v1464
      %v1466 = vpop.f32.mrb[0].mxu0
      %v1467 = vadd.f32 %v770, %v1466
      %1468 = vmatprep.mubr.bf16.mxu0 0
      %1469 = vmatmul.mubr.bf16.gmra.mrb[0].mxu0 %v1258
      %v1470 = vpop.f32.mrb[0].mxu0
      %v1471 = vadd.f32 %v766, %v1470
      %v1472 = vpop.f32.mrb[0].mxu0
      %v1473 = vadd.f32 %v770, %v1472
      %v1474 = vpop.f32.mrb[0].mxu0
      %v1475 = vadd.f32 %v766, %v1474
      %v1476 = vpop.f32.mrb[0].mxu0
      %v1477 = vadd.f32 %v770, %v1476
      %1478 = vdwg.mxu0
      %1479 = vmatprep.subr.bf16.mxu0 %v1094
      %1480 = vmatpush1.bf16.msra.mxu0 %v1093
      %1481 = vmatprep.subr.bf16.mxu0 %v1114
      %1482 = vmatpush1.bf16.msra.mxu0 %v1113
      %1483 = vmatprep.subr.bf16.mxu0 %v1134
      %1484 = vmatpush1.bf16.msra.mxu0 %v1133
      %1485 = vmatprep.subr.bf16.mxu0 %v1154
      %1486 = vmatpush1.bf16.msra.mxu0 %v1153
      %1487 = vmatprep.subr.bf16.mxu0 0
      %1488 = vmatpush1.bf16.msra.mxu0 0
      %1489 = vmatprep.subr.bf16.mxu0 0
      %1490 = vmatpush1.bf16.msra.mxu0 0
      %1491 = vmatprep.subr.bf16.mxu0 0
      %1492 = vmatpush1.bf16.msra.mxu0 0
      %1493 = vmatprep.subr.bf16.mxu0 0
      %1494 = vmatpush1.bf16.msra.mxu0 0
      %1495 = vmatprep.subr.bf16.mxu0 0
      %1496 = vmatpush1.bf16.msra.mxu0 0
      %1497 = vmatprep.subr.bf16.mxu0 0
      %1498 = vmatpush1.bf16.msra.mxu0 0
      %1499 = vmatprep.subr.bf16.mxu0 0
      %1500 = vmatpush1.bf16.msra.mxu0 0
      %1501 = vmatprep.subr.bf16.mxu0 0
      %1502 = vmatpush1.bf16.msra.mxu0 0
      %1503 = vmatprep.subr.bf16.mxu0 0
      %1504 = vmatpush1.bf16.msra.mxu0 0
      %1505 = vmatprep.subr.bf16.mxu0 0
      %1506 = vmatpush1.bf16.msra.mxu0 0
      %1507 = vmatprep.subr.bf16.mxu0 0
      %1508 = vmatpush1.bf16.msra.mxu0 0
      %1509 = vmatprep.subr.bf16.mxu0 0
      %1510 = vmatpush1.bf16.msra.mxu0 0
      %1511 = vmatprep.mubr.bf16.mxu0 0
      %1512 = vmatmul.mubr.bf16.gmra.mrb[0].mxu0 %v1249
      %v1513 = vpop.f32.mrb[0].mxu0
      %v1514 = vadd.f32 %v774, %v1513
      %v1515 = vpop.f32.mrb[0].mxu0
      %v1516 = vadd.f32 %v778, %v1515
      %v1517 = vpop.f32.mrb[0].mxu0
      %v1518 = vadd.f32 %v774, %v1517
      %v1519 = vpop.f32.mrb[0].mxu0
      %v1520 = vadd.f32 %v778, %v1519
      %1521 = vmatprep.mubr.bf16.mxu0 0
      %1522 = vmatmul.mubr.bf16.gmra.mrb[0].mxu0 %v1252
      %v1523 = vpop.f32.mrb[0].mxu0
      %v1524 = vadd.f32 %v774, %v1523
      %v1525 = vpop.f32.mrb[0].mxu0
      %v1526 = vadd.f32 %v778, %v1525
      %v1527 = vpop.f32.mrb[0].mxu0
      %v1528 = vadd.f32 %v774, %v1527
      %v1529 = vpop.f32.mrb[0].mxu0
      %v1530 = vadd.f32 %v778, %v1529
      %1531 = vmatprep.mubr.bf16.mxu0 0
      %1532 = vmatmul.mubr.bf16.gmra.mrb[0].mxu0 %v1255
      %v1533 = vpop.f32.mrb[0].mxu0
      %v1534 = vadd.f32 %v774, %v1533
      %v1535 = vpop.f32.mrb[0].mxu0
      %v1536 = vadd.f32 %v778, %v1535
      %v1537 = vpop.f32.mrb[0].mxu0
      %v1538 = vadd.f32 %v774, %v1537
      %v1539 = vpop.f32.mrb[0].mxu0
      %v1540 = vadd.f32 %v778, %v1539
      %1541 = vmatprep.mubr.bf16.mxu0 0
      %1542 = vmatmul.mubr.bf16.gmra.mrb[0].mxu0 %v1258
      %v1543 = vpop.f32.mrb[0].mxu0
      %v1544 = vadd.f32 %v774, %v1543
      %v1545 = vpop.f32.mrb[0].mxu0
      %v1546 = vadd.f32 %v778, %v1545
      %v1547 = vpop.f32.mrb[0].mxu0
      %v1548 = vadd.f32 %v774, %v1547
      %v1549 = vpop.f32.mrb[0].mxu0
      %v1550 = vadd.f32 %v778, %v1549
      %1551 = vdwg.mxu0
      %1552 = vmatprep.subr.bf16.mxu0 %v1096
      %1553 = vmatpush1.bf16.msra.mxu0 %v1095
      %1554 = vmatprep.subr.bf16.mxu0 %v1116
      %1555 = vmatpush1.bf16.msra.mxu0 %v1115
      %1556 = vmatprep.subr.bf16.mxu0 %v1136
      %1557 = vmatpush1.bf16.msra.mxu0 %v1135
      %1558 = vmatprep.subr.bf16.mxu0 %v1156
      %1559 = vmatpush1.bf16.msra.mxu0 %v1155
      %1560 = vmatprep.subr.bf16.mxu0 0
      %1561 = vmatpush1.bf16.msra.mxu0 0
      %1562 = vmatprep.subr.bf16.mxu0 0
      %1563 = vmatpush1.bf16.msra.mxu0 0
      %1564 = vmatprep.subr.bf16.mxu0 0
      %1565 = vmatpush1.bf16.msra.mxu0 0
      %1566 = vmatprep.subr.bf16.mxu0 0
      %1567 = vmatpush1.bf16.msra.mxu0 0
      %1568 = vmatprep.subr.bf16.mxu0 0
      %1569 = vmatpush1.bf16.msra.mxu0 0
      %1570 = vmatprep.subr.bf16.mxu0 0
      %1571 = vmatpush1.bf16.msra.mxu0 0
      %1572 = vmatprep.subr.bf16.mxu0 0
      %1573 = vmatpush1.bf16.msra.mxu0 0
      %1574 = vmatprep.subr.bf16.mxu0 0
      %1575 = vmatpush1.bf16.msra.mxu0 0
      %1576 = vmatprep.subr.bf16.mxu0 0
      %1577 = vmatpush1.bf16.msra.mxu0 0
      %1578 = vmatprep.subr.bf16.mxu0 0
      %1579 = vmatpush1.bf16.msra.mxu0 0
      %1580 = vmatprep.subr.bf16.mxu0 0
      %1581 = vmatpush1.bf16.msra.mxu0 0
      %1582 = vmatprep.subr.bf16.mxu0 0
      %1583 = vmatpush1.bf16.msra.mxu0 0
      %1584 = vmatprep.mubr.bf16.mxu0 0
      %1585 = vmatmul.mubr.bf16.gmra.mrb[0].mxu0 %v1249
      %v1586 = vpop.f32.mrb[0].mxu0
      %v1587 = vadd.f32 %v782, %v1586
      %v1588 = vpop.f32.mrb[0].mxu0
      %v1589 = vadd.f32 %v786, %v1588
      %v1590 = vpop.f32.mrb[0].mxu0
      %v1591 = vadd.f32 %v782, %v1590
      %v1592 = vpop.f32.mrb[0].mxu0
      %v1593 = vadd.f32 %v786, %v1592
      %1594 = vmatprep.mubr.bf16.mxu0 0
      %1595 = vmatmul.mubr.bf16.gmra.mrb[0].mxu0 %v1252
      %v1596 = vpop.f32.mrb[0].mxu0
      %v1597 = vadd.f32 %v782, %v1596
      %v1598 = vpop.f32.mrb[0].mxu0
      %v1599 = vadd.f32 %v786, %v1598
      %v1600 = vpop.f32.mrb[0].mxu0
      %v1601 = vadd.f32 %v782, %v1600
      %v1602 = vpop.f32.mrb[0].mxu0
      %v1603 = vadd.f32 %v786, %v1602
      %1604 = vmatprep.mubr.bf16.mxu0 0
      %1605 = vmatmul.mubr.bf16.gmra.mrb[0].mxu0 %v1255
      %v1606 = vpop.f32.mrb[0].mxu0
      %v1607 = vadd.f32 %v782, %v1606
      %v1608 = vpop.f32.mrb[0].mxu0
      %v1609 = vadd.f32 %v786, %v1608
      %v1610 = vpop.f32.mrb[0].mxu0
      %v1611 = vadd.f32 %v782, %v1610
      %v1612 = vpop.f32.mrb[0].mxu0
      %v1613 = vadd.f32 %v786, %v1612
      %1614 = vmatprep.mubr.bf16.mxu0 0
      %1615 = vmatmul.mubr.bf16.gmra.mrb[0].mxu0 %v1258
      %v1616 = vpop.f32.mrb[0].mxu0
      %v1617 = vadd.f32 %v782, %v1616
      %v1618 = vpop.f32.mrb[0].mxu0
      %v1619 = vadd.f32 %v786, %v1618
      %v1620 = vpop.f32.mrb[0].mxu0
      %v1621 = vadd.f32 %v782, %v1620
      %v1622 = vpop.f32.mrb[0].mxu0
      %v1623 = vadd.f32 %v786, %v1622
      %1624 = vdwg.mxu0
      %1625 = vmatprep.subr.bf16.mxu0 %v1098
      %1626 = vmatpush1.bf16.msra.mxu0 %v1097
      %1627 = vmatprep.subr.bf16.mxu0 %v1118
      %1628 = vmatpush1.bf16.msra.mxu0 %v1117
      %1629 = vmatprep.subr.bf16.mxu0 %v1138
      %1630 = vmatpush1.bf16.msra.mxu0 %v1137
      %1631 = vmatprep.subr.bf16.mxu0 %v1158
      %1632 = vmatpush1.bf16.msra.mxu0 %v1157
      %1633 = vmatprep.subr.bf16.mxu0 0
      %1634 = vmatpush1.bf16.msra.mxu0 0
      %1635 = vmatprep.subr.bf16.mxu0 0
      %1636 = vmatpush1.bf16.msra.mxu0 0
      %1637 = vmatprep.subr.bf16.mxu0 0
      %1638 = vmatpush1.bf16.msra.mxu0 0
      %1639 = vmatprep.subr.bf16.mxu0 0
      %1640 = vmatpush1.bf16.msra.mxu0 0
      %1641 = vmatprep.subr.bf16.mxu0 0
      %1642 = vmatpush1.bf16.msra.mxu0 0
      %1643 = vmatprep.subr.bf16.mxu0 0
      %1644 = vmatpush1.bf16.msra.mxu0 0
      %1645 = vmatprep.subr.bf16.mxu0 0
      %1646 = vmatpush1.bf16.msra.mxu0 0
      %1647 = vmatprep.subr.bf16.mxu0 0
      %1648 = vmatpush1.bf16.msra.mxu0 0
      %1649 = vmatprep.subr.bf16.mxu0 0
      %1650 = vmatpush1.bf16.msra.mxu0 0
      %1651 = vmatprep.subr.bf16.mxu0 0
      %1652 = vmatpush1.bf16.msra.mxu0 0
      %1653 = vmatprep.subr.bf16.mxu0 0
      %1654 = vmatpush1.bf16.msra.mxu0 0
      %1655 = vmatprep.subr.bf16.mxu0 0
      %1656 = vmatpush1.bf16.msra.mxu0 0
      %1657 = vmatprep.mubr.bf16.mxu0 0
      %1658 = vmatmul.mubr.bf16.gmra.mrb[0].mxu0 %v1249
      %v1659 = vpop.f32.mrb[0].mxu0
      %v1660 = vadd.f32 %v790, %v1659
      %v1661 = vpop.f32.mrb[0].mxu0
      %v1662 = vadd.f32 %v794, %v1661
      %v1663 = vpop.f32.mrb[0].mxu0
      %v1664 = vadd.f32 %v790, %v1663
      %v1665 = vpop.f32.mrb[0].mxu0
      %v1666 = vadd.f32 %v794, %v1665
      %1667 = vmatprep.mubr.bf16.mxu0 0
      %1668 = vmatmul.mubr.bf16.gmra.mrb[0].mxu0 %v1252
      %v1669 = vpop.f32.mrb[0].mxu0
      %v1670 = vadd.f32 %v790, %v1669
      %v1671 = vpop.f32.mrb[0].mxu0
      %v1672 = vadd.f32 %v794, %v1671
      %v1673 = vpop.f32.mrb[0].mxu0
      %v1674 = vadd.f32 %v790, %v1673
      %v1675 = vpop.f32.mrb[0].mxu0
      %v1676 = vadd.f32 %v794, %v1675
      %1677 = vmatprep.mubr.bf16.mxu0 0
      %1678 = vmatmul.mubr.bf16.gmra.mrb[0].mxu0 %v1255
      %v1679 = vpop.f32.mrb[0].mxu0
      %v1680 = vadd.f32 %v790, %v1679
      %v1681 = vpop.f32.mrb[0].mxu0
      %v1682 = vadd.f32 %v794, %v1681
      %v1683 = vpop.f32.mrb[0].mxu0
      %v1684 = vadd.f32 %v790, %v1683
      %v1685 = vpop.f32.mrb[0].mxu0
      %v1686 = vadd.f32 %v794, %v1685
      %1687 = vmatprep.mubr.bf16.mxu0 0
      %1688 = vmatmul.mubr.bf16.gmra.mrb[0].mxu0 %v1258
      %v1689 = vpop.f32.mrb[0].mxu0
      %v1690 = vadd.f32 %v790, %v1689
      %v1691 = vpop.f32.mrb[0].mxu0
      %v1692 = vadd.f32 %v794, %v1691
      %v1693 = vpop.f32.mrb[0].mxu0
      %v1694 = vadd.f32 %v790, %v1693
      %v1695 = vpop.f32.mrb[0].mxu0
      %v1696 = vadd.f32 %v794, %v1695
      %1697 = vdwg.mxu0
      %1698 = vmatprep.subr.bf16.mxu0 %v1100
      %1699 = vmatpush1.bf16.msra.mxu0 %v1099
      %1700 = vmatprep.subr.bf16.mxu0 %v1120
      %1701 = vmatpush1.bf16.msra.mxu0 %v1119
      %1702 = vmatprep.subr.bf16.mxu0 %v1140
      %1703 = vmatpush1.bf16.msra.mxu0 %v1139
      %1704 = vmatprep.subr.bf16.mxu0 %v1160
      %1705 = vmatpush1.bf16.msra.mxu0 %v1159
      %1706 = vmatprep.subr.bf16.mxu0 0
      %1707 = vmatpush1.bf16.msra.mxu0 0
      %1708 = vmatprep.subr.bf16.mxu0 0
      %1709 = vmatpush1.bf16.msra.mxu0 0
      %1710 = vmatprep.subr.bf16.mxu0 0
      %1711 = vmatpush1.bf16.msra.mxu0 0
      %1712 = vmatprep.subr.bf16.mxu0 0
      %1713 = vmatpush1.bf16.msra.mxu0 0
      %1714 = vmatprep.subr.bf16.mxu0 0
      %1715 = vmatpush1.bf16.msra.mxu0 0
      %1716 = vmatprep.subr.bf16.mxu0 0
      %1717 = vmatpush1.bf16.msra.mxu0 0
      %1718 = vmatprep.subr.bf16.mxu0 0
      %1719 = vmatpush1.bf16.msra.mxu0 0
      %1720 = vmatprep.subr.bf16.mxu0 0
      %1721 = vmatpush1.bf16.msra.mxu0 0
      %1722 = vmatprep.subr.bf16.mxu0 0
      %1723 = vmatpush1.bf16.msra.mxu0 0
      %1724 = vmatprep.subr.bf16.mxu0 0
      %1725 = vmatpush1.bf16.msra.mxu0 0
      %1726 = vmatprep.subr.bf16.mxu0 0
      %1727 = vmatpush1.bf16.msra.mxu0 0
      %1728 = vmatprep.subr.bf16.mxu0 0
      %1729 = vmatpush1.bf16.msra.mxu0 0
      %1730 = vmatprep.mubr.bf16.mxu0 0
      %1731 = vmatmul.mubr.bf16.gmra.mrb[0].mxu0 %v1249
      %v1732 = vpop.f32.mrb[0].mxu0
      %v1733 = vadd.f32 %v798, %v1732
      %v1734 = vpop.f32.mrb[0].mxu0
      %v1735 = vadd.f32 %v802, %v1734
      %v1736 = vpop.f32.mrb[0].mxu0
      %v1737 = vadd.f32 %v798, %v1736
      %v1738 = vpop.f32.mrb[0].mxu0
      %v1739 = vadd.f32 %v802, %v1738
      %1740 = vmatprep.mubr.bf16.mxu0 0
      %1741 = vmatmul.mubr.bf16.gmra.mrb[0].mxu0 %v1252
      %v1742 = vpop.f32.mrb[0].mxu0
      %v1743 = vadd.f32 %v798, %v1742
      %v1744 = vpop.f32.mrb[0].mxu0
      %v1745 = vadd.f32 %v802, %v1744
      %v1746 = vpop.f32.mrb[0].mxu0
      %v1747 = vadd.f32 %v798, %v1746
      %v1748 = vpop.f32.mrb[0].mxu0
      %v1749 = vadd.f32 %v802, %v1748
      %1750 = vmatprep.mubr.bf16.mxu0 0
      %1751 = vmatmul.mubr.bf16.gmra.mrb[0].mxu0 %v1255
      %v1752 = vpop.f32.mrb[0].mxu0
      %v1753 = vadd.f32 %v798, %v1752
      %v1754 = vpop.f32.mrb[0].mxu0
      %v1755 = vadd.f32 %v802, %v1754
      %v1756 = vpop.f32.mrb[0].mxu0
      %v1757 = vadd.f32 %v798, %v1756
      %v1758 = vpop.f32.mrb[0].mxu0
      %v1759 = vadd.f32 %v802, %v1758
      %1760 = vmatprep.mubr.bf16.mxu0 0
      %1761 = vmatmul.mubr.bf16.gmra.mrb[0].mxu0 %v1258
      %v1762 = vpop.f32.mrb[0].mxu0
      %v1763 = vadd.f32 %v798, %v1762
      %v1764 = vpop.f32.mrb[0].mxu0
      %v1765 = vadd.f32 %v802, %v1764
      %v1766 = vpop.f32.mrb[0].mxu0
      %v1767 = vadd.f32 %v798, %v1766
      %v1768 = vpop.f32.mrb[0].mxu0
      %v1769 = vadd.f32 %v802, %v1768
      %1770 = vdwg.mxu0
      %1771 = vmatprep.subr.bf16.mxu0 %v1102
      %1772 = vmatpush1.bf16.msra.mxu0 %v1101
      %1773 = vmatprep.subr.bf16.mxu0 %v1122
      %1774 = vmatpush1.bf16.msra.mxu0 %v1121
      %1775 = vmatprep.subr.bf16.mxu0 %v1142
      %1776 = vmatpush1.bf16.msra.mxu0 %v1141
      %1777 = vmatprep.subr.bf16.mxu0 %v1162
      %1778 = vmatpush1.bf16.msra.mxu0 %v1161
      %1779 = vmatprep.subr.bf16.mxu0 0
      %1780 = vmatpush1.bf16.msra.mxu0 0
      %1781 = vmatprep.subr.bf16.mxu0 0
      %1782 = vmatpush1.bf16.msra.mxu0 0
      %1783 = vmatprep.subr.bf16.mxu0 0
      %1784 = vmatpush1.bf16.msra.mxu0 0
      %1785 = vmatprep.subr.bf16.mxu0 0
      %1786 = vmatpush1.bf16.msra.mxu0 0
      %1787 = vmatprep.subr.bf16.mxu0 0
      %1788 = vmatpush1.bf16.msra.mxu0 0
      %1789 = vmatprep.subr.bf16.mxu0 0
      %1790 = vmatpush1.bf16.msra.mxu0 0
      %1791 = vmatprep.subr.bf16.mxu0 0
      %1792 = vmatpush1.bf16.msra.mxu0 0
      %1793 = vmatprep.subr.bf16.mxu0 0
      %1794 = vmatpush1.bf16.msra.mxu0 0
      %1795 = vmatprep.subr.bf16.mxu0 0
      %1796 = vmatpush1.bf16.msra.mxu0 0
      %1797 = vmatprep.subr.bf16.mxu0 0
      %1798 = vmatpush1.bf16.msra.mxu0 0
      %1799 = vmatprep.subr.bf16.mxu0 0
      %1800 = vmatpush1.bf16.msra.mxu0 0
      %1801 = vmatprep.subr.bf16.mxu0 0
      %1802 = vmatpush1.bf16.msra.mxu0 0
      %1803 = vmatprep.mubr.bf16.mxu0 0
      %1804 = vmatmul.mubr.bf16.gmra.mrb[0].mxu0 %v1249
      %v1805 = vpop.f32.mrb[0].mxu0
      %v1806 = vadd.f32 %v806, %v1805
      %v1807 = vpop.f32.mrb[0].mxu0
      %v1808 = vadd.f32 %v810, %v1807
      %v1809 = vpop.f32.mrb[0].mxu0
      %v1810 = vadd.f32 %v806, %v1809
      %v1811 = vpop.f32.mrb[0].mxu0
      %v1812 = vadd.f32 %v810, %v1811
      %1813 = vmatprep.mubr.bf16.mxu0 0
      %1814 = vmatmul.mubr.bf16.gmra.mrb[0].mxu0 %v1252
      %v1815 = vpop.f32.mrb[0].mxu0
      %v1816 = vadd.f32 %v806, %v1815
      %v1817 = vpop.f32.mrb[0].mxu0
      %v1818 = vadd.f32 %v810, %v1817
      %v1819 = vpop.f32.mrb[0].mxu0
      %v1820 = vadd.f32 %v806, %v1819
      %v1821 = vpop.f32.mrb[0].mxu0
      %v1822 = vadd.f32 %v810, %v1821
      %1823 = vmatprep.mubr.bf16.mxu0 0
      %1824 = vmatmul.mubr.bf16.gmra.mrb[0].mxu0 %v1255
      %v1825 = vpop.f32.mrb[0].mxu0
      %v1826 = vadd.f32 %v806, %v1825
      %v1827 = vpop.f32.mrb[0].mxu0
      %v1828 = vadd.f32 %v810, %v1827
      %v1829 = vpop.f32.mrb[0].mxu0
      %v1830 = vadd.f32 %v806, %v1829
      %v1831 = vpop.f32.mrb[0].mxu0
      %v1832 = vadd.f32 %v810, %v1831
      %1833 = vmatprep.mubr.bf16.mxu0 0
      %1834 = vmatmul.mubr.bf16.gmra.mrb[0].mxu0 %v1258
      %v1835 = vpop.f32.mrb[0].mxu0
      %v1836 = vadd.f32 %v806, %v1835
      %v1837 = vpop.f32.mrb[0].mxu0
      %v1838 = vadd.f32 %v810, %v1837
      %v1839 = vpop.f32.mrb[0].mxu0
      %v1840 = vadd.f32 %v806, %v1839
      %v1841 = vpop.f32.mrb[0].mxu0
      %v1842 = vadd.f32 %v810, %v1841
      %1843 = vdwg.mxu0
      %1844 = vmatprep.subr.bf16.mxu0 %v1104
      %1845 = vmatpush1.bf16.msra.mxu0 %v1103
      %1846 = vmatprep.subr.bf16.mxu0 %v1124
      %1847 = vmatpush1.bf16.msra.mxu0 %v1123
      %1848 = vmatprep.subr.bf16.mxu0 %v1144
      %1849 = vmatpush1.bf16.msra.mxu0 %v1143
      %1850 = vmatprep.subr.bf16.mxu0 %v1164
      %1851 = vmatpush1.bf16.msra.mxu0 %v1163
      %1852 = vmatprep.subr.bf16.mxu0 0
      %1853 = vmatpush1.bf16.msra.mxu0 0
      %1854 = vmatprep.subr.bf16.mxu0 0
      %1855 = vmatpush1.bf16.msra.mxu0 0
      %1856 = vmatprep.subr.bf16.mxu0 0
      %1857 = vmatpush1.bf16.msra.mxu0 0
      %1858 = vmatprep.subr.bf16.mxu0 0
      %1859 = vmatpush1.bf16.msra.mxu0 0
      %1860 = vmatprep.subr.bf16.mxu0 0
      %1861 = vmatpush1.bf16.msra.mxu0 0
      %1862 = vmatprep.subr.bf16.mxu0 0
      %1863 = vmatpush1.bf16.msra.mxu0 0
      %1864 = vmatprep.subr.bf16.mxu0 0
      %1865 = vmatpush1.bf16.msra.mxu0 0
      %1866 = vmatprep.subr.bf16.mxu0 0
      %1867 = vmatpush1.bf16.msra.mxu0 0
      %1868 = vmatprep.subr.bf16.mxu0 0
      %1869 = vmatpush1.bf16.msra.mxu0 0
      %1870 = vmatprep.subr.bf16.mxu0 0
      %1871 = vmatpush1.bf16.msra.mxu0 0
      %1872 = vmatprep.subr.bf16.mxu0 0
      %1873 = vmatpush1.bf16.msra.mxu0 0
      %1874 = vmatprep.subr.bf16.mxu0 0
      %1875 = vmatpush1.bf16.msra.mxu0 0
      %1876 = vmatprep.mubr.bf16.mxu0 0
      %1877 = vmatmul.mubr.bf16.gmra.mrb[0].mxu0 %v1249
      %v1878 = vpop.f32.mrb[0].mxu0
      %v1879 = vadd.f32 %v814, %v1878
      %v1880 = vpop.f32.mrb[0].mxu0
      %v1881 = vadd.f32 %v818, %v1880
      %v1882 = vpop.f32.mrb[0].mxu0
      %v1883 = vadd.f32 %v814, %v1882
      %v1884 = vpop.f32.mrb[0].mxu0
      %v1885 = vadd.f32 %v818, %v1884
      %1886 = vmatprep.mubr.bf16.mxu0 0
      %1887 = vmatmul.mubr.bf16.gmra.mrb[0].mxu0 %v1252
      %v1888 = vpop.f32.mrb[0].mxu0
      %v1889 = vadd.f32 %v814, %v1888
      %v1890 = vpop.f32.mrb[0].mxu0
      %v1891 = vadd.f32 %v818, %v1890
      %v1892 = vpop.f32.mrb[0].mxu0
      %v1893 = vadd.f32 %v814, %v1892
      %v1894 = vpop.f32.mrb[0].mxu0
      %v1895 = vadd.f32 %v818, %v1894
      %1896 = vmatprep.mubr.bf16.mxu0 0
      %1897 = vmatmul.mubr.bf16.gmra.mrb[0].mxu0 %v1255
      %v1898 = vpop.f32.mrb[0].mxu0
      %v1899 = vadd.f32 %v814, %v1898
      %v1900 = vpop.f32.mrb[0].mxu0
      %v1901 = vadd.f32 %v818, %v1900
      %v1902 = vpop.f32.mrb[0].mxu0
      %v1903 = vadd.f32 %v814, %v1902
      %v1904 = vpop.f32.mrb[0].mxu0
      %v1905 = vadd.f32 %v818, %v1904
      %1906 = vmatprep.mubr.bf16.mxu0 0
      %1907 = vmatmul.mubr.bf16.gmra.mrb[0].mxu0 %v1258
      %v1908 = vpop.f32.mrb[0].mxu0
      %v1909 = vadd.f32 %v814, %v1908
      %v1910 = vpop.f32.mrb[0].mxu0
      %v1911 = vadd.f32 %v818, %v1910
      %v1912 = vpop.f32.mrb[0].mxu0
      %v1913 = vadd.f32 %v814, %v1912
      %v1914 = vpop.f32.mrb[0].mxu0
      %v1915 = vadd.f32 %v818, %v1914
      %1916 = vdwg.mxu0
      %1917 = vmatprep.subr.bf16.mxu0 %v1106
      %1918 = vmatpush1.bf16.msra.mxu0 %v1105
      %1919 = vmatprep.subr.bf16.mxu0 %v1126
      %1920 = vmatpush1.bf16.msra.mxu0 %v1125
      %1921 = vmatprep.subr.bf16.mxu0 %v1146
      %1922 = vmatpush1.bf16.msra.mxu0 %v1145
      %1923 = vmatprep.subr.bf16.mxu0 %v1166
      %1924 = vmatpush1.bf16.msra.mxu0 %v1165
      %1925 = vmatprep.subr.bf16.mxu0 0
      %1926 = vmatpush1.bf16.msra.mxu0 0
      %1927 = vmatprep.subr.bf16.mxu0 0
      %1928 = vmatpush1.bf16.msra.mxu0 0
      %1929 = vmatprep.subr.bf16.mxu0 0
      %1930 = vmatpush1.bf16.msra.mxu0 0
      %1931 = vmatprep.subr.bf16.mxu0 0
      %1932 = vmatpush1.bf16.msra.mxu0 0
      %1933 = vmatprep.subr.bf16.mxu0 0
      %1934 = vmatpush1.bf16.msra.mxu0 0
      %1935 = vmatprep.subr.bf16.mxu0 0
      %1936 = vmatpush1.bf16.msra.mxu0 0
      %1937 = vmatprep.subr.bf16.mxu0 0
      %1938 = vmatpush1.bf16.msra.mxu0 0
      %1939 = vmatprep.subr.bf16.mxu0 0
      %1940 = vmatpush1.bf16.msra.mxu0 0
      %1941 = vmatprep.subr.bf16.mxu0 0
      %1942 = vmatpush1.bf16.msra.mxu0 0
      %1943 = vmatprep.subr.bf16.mxu0 0
      %1944 = vmatpush1.bf16.msra.mxu0 0
      %1945 = vmatprep.subr.bf16.mxu0 0
      %1946 = vmatpush1.bf16.msra.mxu0 0
      %1947 = vmatprep.subr.bf16.mxu0 0
      %1948 = vmatpush1.bf16.msra.mxu0 0
      %1949 = vmatprep.mubr.bf16.mxu0 0
      %1950 = vmatmul.mubr.bf16.gmra.mrb[0].mxu0 %v1249
      %v1951 = vpop.f32.mrb[0].mxu0
      %v1952 = vadd.f32 %v822, %v1951
      %v1953 = vpop.f32.mrb[0].mxu0
      %v1954 = vadd.f32 %v826, %v1953
      %v1955 = vpop.f32.mrb[0].mxu0
      %v1956 = vadd.f32 %v822, %v1955
      %v1957 = vpop.f32.mrb[0].mxu0
      %v1958 = vadd.f32 %v826, %v1957
      %1959 = vmatprep.mubr.bf16.mxu0 0
      %1960 = vmatmul.mubr.bf16.gmra.mrb[0].mxu0 %v1252
      %v1961 = vpop.f32.mrb[0].mxu0
      %v1962 = vadd.f32 %v822, %v1961
      %v1963 = vpop.f32.mrb[0].mxu0
      %v1964 = vadd.f32 %v826, %v1963
      %v1965 = vpop.f32.mrb[0].mxu0
      %v1966 = vadd.f32 %v822, %v1965
      %v1967 = vpop.f32.mrb[0].mxu0
      %v1968 = vadd.f32 %v826, %v1967
      %1969 = vmatprep.mubr.bf16.mxu0 0
      %1970 = vmatmul.mubr.bf16.gmra.mrb[0].mxu0 %v1255
      %v1971 = vpop.f32.mrb[0].mxu0
      %v1972 = vadd.f32 %v822, %v1971
      %v1973 = vpop.f32.mrb[0].mxu0
      %v1974 = vadd.f32 %v826, %v1973
      %v1975 = vpop.f32.mrb[0].mxu0
      %v1976 = vadd.f32 %v822, %v1975
      %v1977 = vpop.f32.mrb[0].mxu0
      %v1978 = vadd.f32 %v826, %v1977
      %1979 = vmatprep.mubr.bf16.mxu0 0
      %1980 = vmatmul.mubr.bf16.gmra.mrb[0].mxu0 %v1258
      %v1981 = vpop.f32.mrb[0].mxu0
      %v1982 = vadd.f32 %v822, %v1981
      %v1983 = vpop.f32.mrb[0].mxu0
      %v1984 = vadd.f32 %v826, %v1983
      %v1985 = vpop.f32.mrb[0].mxu0
      %v1986 = vadd.f32 %v822, %v1985
      %v1987 = vpop.f32.mrb[0].mxu0
      %v1988 = vadd.f32 %v826, %v1987
      %1989 = vdwg.mxu0
      %v1990 = vxor.u32 %v1295, 2147483648
      %v1991 = vxor.u32 %v1297, 2147483648
      %v1992 = vxor.u32 %v1368, 2147483648
      %v1993 = vxor.u32 %v1370, 2147483648
      %v1994 = vxor.u32 %v1441, 2147483648
      %v1995 = vxor.u32 %v1443, 2147483648
      %v1996 = vxor.u32 %v1514, 2147483648
      %v1997 = vxor.u32 %v1516, 2147483648
      %v1998 = vxor.u32 %v1587, 2147483648
      %v1999 = vxor.u32 %v1589, 2147483648
      %v2000 = vxor.u32 %v1660, 2147483648
      %v2001 = vxor.u32 %v1662, 2147483648
      %v2002 = vxor.u32 %v1733, 2147483648
      %v2003 = vxor.u32 %v1735, 2147483648
      %v2004 = vxor.u32 %v1806, 2147483648
      %v2005 = vxor.u32 %v1808, 2147483648
      %v2006 = vxor.u32 %v1879, 2147483648
      %v2007 = vxor.u32 %v1881, 2147483648
      %v2008 = vxor.u32 %v1952, 2147483648
      %v2009 = vxor.u32 %v1954, 2147483648
      %v2010 = vxor.u32 %v1299, 2147483648
      %v2011 = vxor.u32 %v1301, 2147483648
      %v2012 = vxor.u32 %v1372, 2147483648
      %v2013 = vxor.u32 %v1374, 2147483648
      %v2014 = vxor.u32 %v1445, 2147483648
      %v2015 = vxor.u32 %v1447, 2147483648
      %v2016 = vxor.u32 %v1518, 2147483648
      %v2017 = vxor.u32 %v1520, 2147483648
      %v2018 = vxor.u32 %v1591, 2147483648
      %v2019 = vxor.u32 %v1593, 2147483648
      %v2020 = vxor.u32 %v1664, 2147483648
      %v2021 = vxor.u32 %v1666, 2147483648
      %v2022 = vxor.u32 %v1737, 2147483648
      %v2023 = vxor.u32 %v1739, 2147483648
      %v2024 = vxor.u32 %v1810, 2147483648
      %v2025 = vxor.u32 %v1812, 2147483648
      %v2026 = vxor.u32 %v1883, 2147483648
      %v2027 = vxor.u32 %v1885, 2147483648
      %v2028 = vxor.u32 %v1956, 2147483648
      %v2029 = vxor.u32 %v1958, 2147483648
      %v2030 = vxor.u32 %v1305, 2147483648
      %v2031 = vxor.u32 %v1307, 2147483648
      %v2032 = vxor.u32 %v1378, 2147483648
      %v2033 = vxor.u32 %v1380, 2147483648
      %v2034 = vxor.u32 %v1451, 2147483648
      %v2035 = vxor.u32 %v1453, 2147483648
      %v2036 = vxor.u32 %v1524, 2147483648
      %v2037 = vxor.u32 %v1526, 2147483648
      %v2038 = vxor.u32 %v1597, 2147483648
      %v2039 = vxor.u32 %v1599, 2147483648
      %v2040 = vxor.u32 %v1670, 2147483648
      %v2041 = vxor.u32 %v1672, 2147483648
      %v2042 = vxor.u32 %v1743, 2147483648
      %v2043 = vxor.u32 %v1745, 2147483648
      %v2044 = vxor.u32 %v1816, 2147483648
      %v2045 = vxor.u32 %v1818, 2147483648
      %v2046 = vxor.u32 %v1889, 2147483648
      %v2047 = vxor.u32 %v1891, 2147483648
      %v2048 = vxor.u32 %v1962, 2147483648
      %v2049 = vxor.u32 %v1964, 2147483648
      %v2050 = vxor.u32 %v1309, 2147483648
      %v2051 = vxor.u32 %v1311, 2147483648
      %v2052 = vxor.u32 %v1382, 2147483648
      %v2053 = vxor.u32 %v1384, 2147483648
      %v2054 = vxor.u32 %v1455, 2147483648
      %v2055 = vxor.u32 %v1457, 2147483648
      %v2056 = vxor.u32 %v1528, 2147483648
      %v2057 = vxor.u32 %v1530, 2147483648
      %v2058 = vxor.u32 %v1601, 2147483648
      %v2059 = vxor.u32 %v1603, 2147483648
      %v2060 = vxor.u32 %v1674, 2147483648
      %v2061 = vxor.u32 %v1676, 2147483648
      %v2062 = vxor.u32 %v1747, 2147483648
      %v2063 = vxor.u32 %v1749, 2147483648
      %v2064 = vxor.u32 %v1820, 2147483648
      %v2065 = vxor.u32 %v1822, 2147483648
      %v2066 = vxor.u32 %v1893, 2147483648
      %v2067 = vxor.u32 %v1895, 2147483648
      %v2068 = vxor.u32 %v1966, 2147483648
      %v2069 = vxor.u32 %v1968, 2147483648
      %v2070 = vxor.u32 %v1315, 2147483648
      %v2071 = vxor.u32 %v1317, 2147483648
      %v2072 = vxor.u32 %v1388, 2147483648
      %v2073 = vxor.u32 %v1390, 2147483648
      %v2074 = vxor.u32 %v1461, 2147483648
      %v2075 = vxor.u32 %v1463, 2147483648
      %v2076 = vxor.u32 %v1534, 2147483648
      %v2077 = vxor.u32 %v1536, 2147483648
      %v2078 = vxor.u32 %v1607, 2147483648
      %v2079 = vxor.u32 %v1609, 2147483648
      %v2080 = vxor.u32 %v1680, 2147483648
      %v2081 = vxor.u32 %v1682, 2147483648
      %v2082 = vxor.u32 %v1753, 2147483648
      %v2083 = vxor.u32 %v1755, 2147483648
      %v2084 = vxor.u32 %v1826, 2147483648
      %v2085 = vxor.u32 %v1828, 2147483648
      %v2086 = vxor.u32 %v1899, 2147483648
      %v2087 = vxor.u32 %v1901, 2147483648
      %v2088 = vxor.u32 %v1972, 2147483648
      %v2089 = vxor.u32 %v1974, 2147483648
      %v2090 = vxor.u32 %v1319, 2147483648
      %v2091 = vxor.u32 %v1321, 2147483648
      %v2092 = vxor.u32 %v1392, 2147483648
      %v2093 = vxor.u32 %v1394, 2147483648
      %v2094 = vxor.u32 %v1465, 2147483648
      %v2095 = vxor.u32 %v1467, 2147483648
      %v2096 = vxor.u32 %v1538, 2147483648
      %v2097 = vxor.u32 %v1540, 2147483648
      %v2098 = vxor.u32 %v1611, 2147483648
      %v2099 = vxor.u32 %v1613, 2147483648
      %v2100 = vxor.u32 %v1684, 2147483648
      %v2101 = vxor.u32 %v1686, 2147483648
      %v2102 = vxor.u32 %v1757, 2147483648
      %v2103 = vxor.u32 %v1759, 2147483648
      %v2104 = vxor.u32 %v1830, 2147483648
      %v2105 = vxor.u32 %v1832, 2147483648
      %v2106 = vxor.u32 %v1903, 2147483648
      %v2107 = vxor.u32 %v1905, 2147483648
      %v2108 = vxor.u32 %v1976, 2147483648
      %v2109 = vxor.u32 %v1978, 2147483648
      %v2110 = vxor.u32 %v1325, 2147483648
      %v2111 = vxor.u32 %v1327, 2147483648
      %v2112 = vxor.u32 %v1398, 2147483648
      %v2113 = vxor.u32 %v1400, 2147483648
      %v2114 = vxor.u32 %v1471, 2147483648
      %v2115 = vxor.u32 %v1473, 2147483648
      %v2116 = vxor.u32 %v1544, 2147483648
      %v2117 = vxor.u32 %v1546, 2147483648
      %v2118 = vxor.u32 %v1617, 2147483648
      %v2119 = vxor.u32 %v1619, 2147483648
      %v2120 = vxor.u32 %v1690, 2147483648
      %v2121 = vxor.u32 %v1692, 2147483648
      %v2122 = vxor.u32 %v1763, 2147483648
      %v2123 = vxor.u32 %v1765, 2147483648
      %v2124 = vxor.u32 %v1836, 2147483648
      %v2125 = vxor.u32 %v1838, 2147483648
      %v2126 = vxor.u32 %v1909, 2147483648
      %v2127 = vxor.u32 %v1911, 2147483648
      %v2128 = vxor.u32 %v1982, 2147483648
      %v2129 = vxor.u32 %v1984, 2147483648
      %v2130 = vxor.u32 %v1329, 2147483648
      %v2131 = vxor.u32 %v1331, 2147483648
      %v2132 = vxor.u32 %v1402, 2147483648
      %v2133 = vxor.u32 %v1404, 2147483648
      %v2134 = vxor.u32 %v1475, 2147483648
      %v2135 = vxor.u32 %v1477, 2147483648
      %v2136 = vxor.u32 %v1548, 2147483648
      %v2137 = vxor.u32 %v1550, 2147483648
      %v2138 = vxor.u32 %v1621, 2147483648
      %v2139 = vxor.u32 %v1623, 2147483648
      %v2140 = vxor.u32 %v1694, 2147483648
      %v2141 = vxor.u32 %v1696, 2147483648
      %v2142 = vxor.u32 %v1767, 2147483648
      %v2143 = vxor.u32 %v1769, 2147483648
      %v2144 = vxor.u32 %v1840, 2147483648
      %v2145 = vxor.u32 %v1842, 2147483648
      %v2146 = vxor.u32 %v1913, 2147483648
      %v2147 = vxor.u32 %v1915, 2147483648
      %v2148 = vxor.u32 %v1986, 2147483648
      %v2149 = vxor.u32 %v1988, 2147483648
      %v2150 = vmul.f32 %v1990, 1.442695
      %v2151 = vpow.pop %v2150
      %v2152 = vmul.f32 %v1991, 1.442695
      %v2153 = vpow.pop %v2152
      %v2154 = vmul.f32 %v1992, 1.442695
      %v2155 = vpow.pop %v2154
      %v2156 = vmul.f32 %v1993, 1.442695
      %v2157 = vpow.pop %v2156
      %v2158 = vmul.f32 %v1994, 1.442695
      %v2159 = vpow.pop %v2158
      %v2160 = vmul.f32 %v1995, 1.442695
      %v2161 = vpow.pop %v2160
      %v2162 = vmul.f32 %v1996, 1.442695
      %v2163 = vpow.pop %v2162
      %v2164 = vmul.f32 %v1997, 1.442695
      %v2165 = vpow.pop %v2164
      %v2166 = vmul.f32 %v1998, 1.442695
      %v2167 = vpow.pop %v2166
      %v2168 = vmul.f32 %v1999, 1.442695
      %v2169 = vpow.pop %v2168
      %v2170 = vmul.f32 %v2000, 1.442695
      %v2171 = vpow.pop %v2170
      %v2172 = vmul.f32 %v2001, 1.442695
      %v2173 = vpow.pop %v2172
      %v2174 = vmul.f32 %v2002, 1.442695
      %v2175 = vpow.pop %v2174
      %v2176 = vmul.f32 %v2003, 1.442695
      %v2177 = vpow.pop %v2176
      %v2178 = vmul.f32 %v2004, 1.442695
      %v2179 = vpow.pop %v2178
      %v2180 = vmul.f32 %v2005, 1.442695
      %v2181 = vpow.pop %v2180
      %v2182 = vmul.f32 %v2006, 1.442695
      %v2183 = vpow.pop %v2182
      %v2184 = vmul.f32 %v2007, 1.442695
      %v2185 = vpow.pop %v2184
      %v2186 = vmul.f32 %v2008, 1.442695
      %v2187 = vpow.pop %v2186
      %v2188 = vmul.f32 %v2009, 1.442695
      %v2189 = vpow.pop %v2188
      %v2190 = vmul.f32 %v2010, 1.442695
      %v2191 = vpow.pop %v2190
      %v2192 = vmul.f32 %v2011, 1.442695
      %v2193 = vpow.pop %v2192
      %v2194 = vmul.f32 %v2012, 1.442695
      %v2195 = vpow.pop %v2194
      %v2196 = vmul.f32 %v2013, 1.442695
      %v2197 = vpow.pop %v2196
      %v2198 = vmul.f32 %v2014, 1.442695
      %v2199 = vpow.pop %v2198
      %v2200 = vmul.f32 %v2015, 1.442695
      %v2201 = vpow.pop %v2200
      %v2202 = vmul.f32 %v2016, 1.442695
      %v2203 = vpow.pop %v2202
      %v2204 = vmul.f32 %v2017, 1.442695
      %v2205 = vpow.pop %v2204
      %v2206 = vmul.f32 %v2018, 1.442695
      %v2207 = vpow.pop %v2206
      %v2208 = vmul.f32 %v2019, 1.442695
      %v2209 = vpow.pop %v2208
      %v2210 = vmul.f32 %v2020, 1.442695
      %v2211 = vpow.pop %v2210
      %v2212 = vmul.f32 %v2021, 1.442695
      %v2213 = vpow.pop %v2212
      %v2214 = vmul.f32 %v2022, 1.442695
      %v2215 = vpow.pop %v2214
      %v2216 = vmul.f32 %v2023, 1.442695
      %v2217 = vpow.pop %v2216
      %v2218 = vmul.f32 %v2024, 1.442695
      %v2219 = vpow.pop %v2218
      %v2220 = vmul.f32 %v2025, 1.442695
      %v2221 = vpow.pop %v2220
      %v2222 = vmul.f32 %v2026, 1.442695
      %v2223 = vpow.pop %v2222
      %v2224 = vmul.f32 %v2027, 1.442695
      %v2225 = vpow.pop %v2224
      %v2226 = vmul.f32 %v2028, 1.442695
      %v2227 = vpow.pop %v2226
      %v2228 = vmul.f32 %v2029, 1.442695
      %v2229 = vpow.pop %v2228
      %v2230 = vmul.f32 %v2030, 1.442695
      %v2231 = vpow.pop %v2230
      %v2232 = vmul.f32 %v2031, 1.442695
      %v2233 = vpow.pop %v2232
      %v2234 = vmul.f32 %v2032, 1.442695
      %v2235 = vpow.pop %v2234
      %v2236 = vmul.f32 %v2033, 1.442695
      %v2237 = vpow.pop %v2236
      %v2238 = vmul.f32 %v2034, 1.442695
      %v2239 = vpow.pop %v2238
      %v2240 = vmul.f32 %v2035, 1.442695
      %v2241 = vpow.pop %v2240
      %v2242 = vmul.f32 %v2036, 1.442695
      %v2243 = vpow.pop %v2242
      %v2244 = vmul.f32 %v2037, 1.442695
      %v2245 = vpow.pop %v2244
      %v2246 = vmul.f32 %v2038, 1.442695
      %v2247 = vpow.pop %v2246
      %v2248 = vmul.f32 %v2039, 1.442695
      %v2249 = vpow.pop %v2248
      %v2250 = vmul.f32 %v2040, 1.442695
      %v2251 = vpow.pop %v2250
      %v2252 = vmul.f32 %v2041, 1.442695
      %v2253 = vpow.pop %v2252
      %v2254 = vmul.f32 %v2042, 1.442695
      %v2255 = vpow.pop %v2254
      %v2256 = vmul.f32 %v2043, 1.442695
      %v2257 = vpow.pop %v2256
      %v2258 = vmul.f32 %v2044, 1.442695
      %v2259 = vpow.pop %v2258
      %v2260 = vmul.f32 %v2045, 1.442695
      %v2261 = vpow.pop %v2260
      %v2262 = vmul.f32 %v2046, 1.442695
      %v2263 = vpow.pop %v2262
      %v2264 = vmul.f32 %v2047, 1.442695
      %v2265 = vpow.pop %v2264
      %v2266 = vmul.f32 %v2048, 1.442695
      %v2267 = vpow.pop %v2266
      %v2268 = vmul.f32 %v2049, 1.442695
      %v2269 = vpow.pop %v2268
      %v2270 = vmul.f32 %v2050, 1.442695
      %v2271 = vpow.pop %v2270
      %v2272 = vmul.f32 %v2051, 1.442695
      %v2273 = vpow.pop %v2272
      %v2274 = vmul.f32 %v2052, 1.442695
      %v2275 = vpow.pop %v2274
      %v2276 = vmul.f32 %v2053, 1.442695
      %v2277 = vpow.pop %v2276
      %v2278 = vmul.f32 %v2054, 1.442695
      %v2279 = vpow.pop %v2278
      %v2280 = vmul.f32 %v2055, 1.442695
      %v2281 = vpow.pop %v2280
      %v2282 = vmul.f32 %v2056, 1.442695
      %v2283 = vpow.pop %v2282
      %v2284 = vmul.f32 %v2057, 1.442695
      %v2285 = vpow.pop %v2284
      %v2286 = vmul.f32 %v2058, 1.442695
      %v2287 = vpow.pop %v2286
      %v2288 = vmul.f32 %v2059, 1.442695
      %v2289 = vpow.pop %v2288
      %v2290 = vmul.f32 %v2060, 1.442695
      %v2291 = vpow.pop %v2290
      %v2292 = vmul.f32 %v2061, 1.442695
      %v2293 = vpow.pop %v2292
      %v2294 = vmul.f32 %v2062, 1.442695
      %v2295 = vpow.pop %v2294
      %v2296 = vmul.f32 %v2063, 1.442695
      %v2297 = vpow.pop %v2296
      %v2298 = vmul.f32 %v2064, 1.442695
      %v2299 = vpow.pop %v2298
      %v2300 = vmul.f32 %v2065, 1.442695
      %v2301 = vpow.pop %v2300
      %v2302 = vmul.f32 %v2066, 1.442695
      %v2303 = vpow.pop %v2302
      %v2304 = vmul.f32 %v2067, 1.442695
      %v2305 = vpow.pop %v2304
      %v2306 = vmul.f32 %v2068, 1.442695
      %v2307 = vpow.pop %v2306
      %v2308 = vmul.f32 %v2069, 1.442695
      %v2309 = vpow.pop %v2308
      %v2310 = vmul.f32 %v2070, 1.442695
      %v2311 = vpow.pop %v2310
      %v2312 = vmul.f32 %v2071, 1.442695
      %v2313 = vpow.pop %v2312
      %v2314 = vmul.f32 %v2072, 1.442695
      %v2315 = vpow.pop %v2314
      %v2316 = vmul.f32 %v2073, 1.442695
      %v2317 = vpow.pop %v2316
      %v2318 = vmul.f32 %v2074, 1.442695
      %v2319 = vpow.pop %v2318
      %v2320 = vmul.f32 %v2075, 1.442695
      %v2321 = vpow.pop %v2320
      %v2322 = vmul.f32 %v2076, 1.442695
      %v2323 = vpow.pop %v2322
      %v2324 = vmul.f32 %v2077, 1.442695
      %v2325 = vpow.pop %v2324
      %v2326 = vmul.f32 %v2078, 1.442695
      %v2327 = vpow.pop %v2326
      %v2328 = vmul.f32 %v2079, 1.442695
      %v2329 = vpow.pop %v2328
      %v2330 = vmul.f32 %v2080, 1.442695
      %v2331 = vpow.pop %v2330
      %v2332 = vmul.f32 %v2081, 1.442695
      %v2333 = vpow.pop %v2332
      %v2334 = vmul.f32 %v2082, 1.442695
      %v2335 = vpow.pop %v2334
      %v2336 = vmul.f32 %v2083, 1.442695
      %v2337 = vpow.pop %v2336
      %v2338 = vmul.f32 %v2084, 1.442695
      %v2339 = vpow.pop %v2338
      %v2340 = vmul.f32 %v2085, 1.442695
      %v2341 = vpow.pop %v2340
      %v2342 = vmul.f32 %v2086, 1.442695
      %v2343 = vpow.pop %v2342
      %v2344 = vmul.f32 %v2087, 1.442695
      %v2345 = vpow.pop %v2344
      %v2346 = vmul.f32 %v2088, 1.442695
      %v2347 = vpow.pop %v2346
      %v2348 = vmul.f32 %v2089, 1.442695
      %v2349 = vpow.pop %v2348
      %v2350 = vmul.f32 %v2090, 1.442695
      %v2351 = vpow.pop %v2350
      %v2352 = vmul.f32 %v2091, 1.442695
      %v2353 = vpow.pop %v2352
      %v2354 = vmul.f32 %v2092, 1.442695
      %v2355 = vpow.pop %v2354
      %v2356 = vmul.f32 %v2093, 1.442695
      %v2357 = vpow.pop %v2356
      %v2358 = vmul.f32 %v2094, 1.442695
      %v2359 = vpow.pop %v2358
      %v2360 = vmul.f32 %v2095, 1.442695
      %v2361 = vpow.pop %v2360
      %v2362 = vmul.f32 %v2096, 1.442695
      %v2363 = vpow.pop %v2362
      %v2364 = vmul.f32 %v2097, 1.442695
      %v2365 = vpow.pop %v2364
      %v2366 = vmul.f32 %v2098, 1.442695
      %v2367 = vpow.pop %v2366
      %v2368 = vmul.f32 %v2099, 1.442695
      %v2369 = vpow.pop %v2368
      %v2370 = vmul.f32 %v2100, 1.442695
      %v2371 = vpow.pop %v2370
      %v2372 = vmul.f32 %v2101, 1.442695
      %v2373 = vpow.pop %v2372
      %v2374 = vmul.f32 %v2102, 1.442695
      %v2375 = vpow.pop %v2374
      %v2376 = vmul.f32 %v2103, 1.442695
      %v2377 = vpow.pop %v2376
      %v2378 = vmul.f32 %v2104, 1.442695
      %v2379 = vpow.pop %v2378
      %v2380 = vmul.f32 %v2105, 1.442695
      %v2381 = vpow.pop %v2380
      %v2382 = vmul.f32 %v2106, 1.442695
      %v2383 = vpow.pop %v2382
      %v2384 = vmul.f32 %v2107, 1.442695
      %v2385 = vpow.pop %v2384
      %v2386 = vmul.f32 %v2108, 1.442695
      %v2387 = vpow.pop %v2386
      %v2388 = vmul.f32 %v2109, 1.442695
      %v2389 = vpow.pop %v2388
      %v2390 = vmul.f32 %v2110, 1.442695
      %v2391 = vpow.pop %v2390
      %v2392 = vmul.f32 %v2111, 1.442695
      %v2393 = vpow.pop %v2392
      %v2394 = vmul.f32 %v2112, 1.442695
      %v2395 = vpow.pop %v2394
      %v2396 = vmul.f32 %v2113, 1.442695
      %v2397 = vpow.pop %v2396
      %v2398 = vmul.f32 %v2114, 1.442695
      %v2399 = vpow.pop %v2398
      %v2400 = vmul.f32 %v2115, 1.442695
      %v2401 = vpow.pop %v2400
      %v2402 = vmul.f32 %v2116, 1.442695
      %v2403 = vpow.pop %v2402
      %v2404 = vmul.f32 %v2117, 1.442695
      %v2405 = vpow.pop %v2404
      %v2406 = vmul.f32 %v2118, 1.442695
      %v2407 = vpow.pop %v2406
      %v2408 = vmul.f32 %v2119, 1.442695
      %v2409 = vpow.pop %v2408
      %v2410 = vmul.f32 %v2120, 1.442695
      %v2411 = vpow.pop %v2410
      %v2412 = vmul.f32 %v2121, 1.442695
      %v2413 = vpow.pop %v2412
      %v2414 = vmul.f32 %v2122, 1.442695
      %v2415 = vpow.pop %v2414
      %v2416 = vmul.f32 %v2123, 1.442695
      %v2417 = vpow.pop %v2416
      %v2418 = vmul.f32 %v2124, 1.442695
      %v2419 = vpow.pop %v2418
      %v2420 = vmul.f32 %v2125, 1.442695
      %v2421 = vpow.pop %v2420
      %v2422 = vmul.f32 %v2126, 1.442695
      %v2423 = vpow.pop %v2422
      %v2424 = vmul.f32 %v2127, 1.442695
      %v2425 = vpow.pop %v2424
      %v2426 = vmul.f32 %v2128, 1.442695
      %v2427 = vpow.pop %v2426
      %v2428 = vmul.f32 %v2129, 1.442695
      %v2429 = vpow.pop %v2428
      %v2430 = vmul.f32 %v2130, 1.442695
      %v2431 = vpow.pop %v2430
      %v2432 = vmul.f32 %v2131, 1.442695
      %v2433 = vpow.pop %v2432
      %v2434 = vmul.f32 %v2132, 1.442695
      %v2435 = vpow.pop %v2434
      %v2436 = vmul.f32 %v2133, 1.442695
      %v2437 = vpow.pop %v2436
      %v2438 = vmul.f32 %v2134, 1.442695
      %v2439 = vpow.pop %v2438
      %v2440 = vmul.f32 %v2135, 1.442695
      %v2441 = vpow.pop %v2440
      %v2442 = vmul.f32 %v2136, 1.442695
      %v2443 = vpow.pop %v2442
      %v2444 = vmul.f32 %v2137, 1.442695
      %v2445 = vpow.pop %v2444
      %v2446 = vmul.f32 %v2138, 1.442695
      %v2447 = vpow.pop %v2446
      %v2448 = vmul.f32 %v2139, 1.442695
      %v2449 = vpow.pop %v2448
      %v2450 = vmul.f32 %v2140, 1.442695
      %v2451 = vpow.pop %v2450
      %v2452 = vmul.f32 %v2141, 1.442695
      %v2453 = vpow.pop %v2452
      %v2454 = vmul.f32 %v2142, 1.442695
      %v2455 = vpow.pop %v2454
      %v2456 = vmul.f32 %v2143, 1.442695
      %v2457 = vpow.pop %v2456
      %v2458 = vmul.f32 %v2144, 1.442695
      %v2459 = vpow.pop %v2458
      %v2460 = vmul.f32 %v2145, 1.442695
      %v2461 = vpow.pop %v2460
      %v2462 = vmul.f32 %v2146, 1.442695
      %v2463 = vpow.pop %v2462
      %v2464 = vmul.f32 %v2147, 1.442695
      %v2465 = vpow.pop %v2464
      %v2466 = vmul.f32 %v2148, 1.442695
      %v2467 = vpow.pop %v2466
      %v2468 = vmul.f32 %v2149, 1.442695
      %v2469 = vpow.pop %v2468
      %v2470 = vadd.f32 %v2151, 1.0
      %v2471 = vadd.f32 %v2153, 1.0
      %v2472 = vadd.f32 %v2155, 1.0
      %v2473 = vadd.f32 %v2157, 1.0
      %v2474 = vadd.f32 %v2159, 1.0
      %v2475 = vadd.f32 %v2161, 1.0
      %v2476 = vadd.f32 %v2163, 1.0
      %v2477 = vadd.f32 %v2165, 1.0
      %v2478 = vadd.f32 %v2167, 1.0
      %v2479 = vadd.f32 %v2169, 1.0
      %v2480 = vadd.f32 %v2171, 1.0
      %v2481 = vadd.f32 %v2173, 1.0
      %v2482 = vadd.f32 %v2175, 1.0
      %v2483 = vadd.f32 %v2177, 1.0
      %v2484 = vadd.f32 %v2179, 1.0
      %v2485 = vadd.f32 %v2181, 1.0
      %v2486 = vadd.f32 %v2183, 1.0
      %v2487 = vadd.f32 %v2185, 1.0
      %v2488 = vadd.f32 %v2187, 1.0
      %v2489 = vadd.f32 %v2189, 1.0
      %v2490 = vadd.f32 %v2191, 1.0
      %v2491 = vadd.f32 %v2193, 1.0
      %v2492 = vadd.f32 %v2195, 1.0
      %v2493 = vadd.f32 %v2197, 1.0
      %v2494 = vadd.f32 %v2199, 1.0
      %v2495 = vadd.f32 %v2201, 1.0
      %v2496 = vadd.f32 %v2203, 1.0
      %v2497 = vadd.f32 %v2205, 1.0
      %v2498 = vadd.f32 %v2207, 1.0
      %v2499 = vadd.f32 %v2209, 1.0
      %v2500 = vadd.f32 %v2211, 1.0
      %v2501 = vadd.f32 %v2213, 1.0
      %v2502 = vadd.f32 %v2215, 1.0
      %v2503 = vadd.f32 %v2217, 1.0
      %v2504 = vadd.f32 %v2219, 1.0
      %v2505 = vadd.f32 %v2221, 1.0
      %v2506 = vadd.f32 %v2223, 1.0
      %v2507 = vadd.f32 %v2225, 1.0
      %v2508 = vadd.f32 %v2227, 1.0
      %v2509 = vadd.f32 %v2229, 1.0
      %v2510 = vadd.f32 %v2231, 1.0
      %v2511 = vadd.f32 %v2233, 1.0
      %v2512 = vadd.f32 %v2235, 1.0
      %v2513 = vadd.f32 %v2237, 1.0
      %v2514 = vadd.f32 %v2239, 1.0
      %v2515 = vadd.f32 %v2241, 1.0
      %v2516 = vadd.f32 %v2243, 1.0
      %v2517 = vadd.f32 %v2245, 1.0
      %v2518 = vadd.f32 %v2247, 1.0
      %v2519 = vadd.f32 %v2249, 1.0
      %v2520 = vadd.f32 %v2251, 1.0
      %v2521 = vadd.f32 %v2253, 1.0
      %v2522 = vadd.f32 %v2255, 1.0
      %v2523 = vadd.f32 %v2257, 1.0
      %v2524 = vadd.f32 %v2259, 1.0
      %v2525 = vadd.f32 %v2261, 1.0
      %v2526 = vadd.f32 %v2263, 1.0
      %v2527 = vadd.f32 %v2265, 1.0
      %v2528 = vadd.f32 %v2267, 1.0
      %v2529 = vadd.f32 %v2269, 1.0
      %v2530 = vadd.f32 %v2271, 1.0
      %v2531 = vadd.f32 %v2273, 1.0
      %v2532 = vadd.f32 %v2275, 1.0
      %v2533 = vadd.f32 %v2277, 1.0
      %v2534 = vadd.f32 %v2279, 1.0
      %v2535 = vadd.f32 %v2281, 1.0
      %v2536 = vadd.f32 %v2283, 1.0
      %v2537 = vadd.f32 %v2285, 1.0
      %v2538 = vadd.f32 %v2287, 1.0
      %v2539 = vadd.f32 %v2289, 1.0
      %v2540 = vadd.f32 %v2291, 1.0
      %v2541 = vadd.f32 %v2293, 1.0
      %v2542 = vadd.f32 %v2295, 1.0
      %v2543 = vadd.f32 %v2297, 1.0
      %v2544 = vadd.f32 %v2299, 1.0
      %v2545 = vadd.f32 %v2301, 1.0
      %v2546 = vadd.f32 %v2303, 1.0
      %v2547 = vadd.f32 %v2305, 1.0
      %v2548 = vadd.f32 %v2307, 1.0
      %v2549 = vadd.f32 %v2309, 1.0
      %v2550 = vadd.f32 %v2311, 1.0
      %v2551 = vadd.f32 %v2313, 1.0
      %v2552 = vadd.f32 %v2315, 1.0
      %v2553 = vadd.f32 %v2317, 1.0
      %v2554 = vadd.f32 %v2319, 1.0
      %v2555 = vadd.f32 %v2321, 1.0
      %v2556 = vadd.f32 %v2323, 1.0
      %v2557 = vadd.f32 %v2325, 1.0
      %v2558 = vadd.f32 %v2327, 1.0
      %v2559 = vadd.f32 %v2329, 1.0
      %v2560 = vadd.f32 %v2331, 1.0
      %v2561 = vadd.f32 %v2333, 1.0
      %v2562 = vadd.f32 %v2335, 1.0
      %v2563 = vadd.f32 %v2337, 1.0
      %v2564 = vadd.f32 %v2339, 1.0
      %v2565 = vadd.f32 %v2341, 1.0
      %v2566 = vadd.f32 %v2343, 1.0
      %v2567 = vadd.f32 %v2345, 1.0
      %v2568 = vadd.f32 %v2347, 1.0
      %v2569 = vadd.f32 %v2349, 1.0
      %v2570 = vadd.f32 %v2351, 1.0
      %v2571 = vadd.f32 %v2353, 1.0
      %v2572 = vadd.f32 %v2355, 1.0
      %v2573 = vadd.f32 %v2357, 1.0
      %v2574 = vadd.f32 %v2359, 1.0
      %v2575 = vadd.f32 %v2361, 1.0
      %v2576 = vadd.f32 %v2363, 1.0
      %v2577 = vadd.f32 %v2365, 1.0
      %v2578 = vadd.f32 %v2367, 1.0
      %v2579 = vadd.f32 %v2369, 1.0
      %v2580 = vadd.f32 %v2371, 1.0
      %v2581 = vadd.f32 %v2373, 1.0
      %v2582 = vadd.f32 %v2375, 1.0
      %v2583 = vadd.f32 %v2377, 1.0
      %v2584 = vadd.f32 %v2379, 1.0
      %v2585 = vadd.f32 %v2381, 1.0
      %v2586 = vadd.f32 %v2383, 1.0
      %v2587 = vadd.f32 %v2385, 1.0
      %v2588 = vadd.f32 %v2387, 1.0
      %v2589 = vadd.f32 %v2389, 1.0
      %v2590 = vadd.f32 %v2391, 1.0
      %v2591 = vadd.f32 %v2393, 1.0
      %v2592 = vadd.f32 %v2395, 1.0
      %v2593 = vadd.f32 %v2397, 1.0
      %v2594 = vadd.f32 %v2399, 1.0
      %v2595 = vadd.f32 %v2401, 1.0
      %v2596 = vadd.f32 %v2403, 1.0
      %v2597 = vadd.f32 %v2405, 1.0
      %v2598 = vadd.f32 %v2407, 1.0
      %v2599 = vadd.f32 %v2409, 1.0
      %v2600 = vadd.f32 %v2411, 1.0
      %v2601 = vadd.f32 %v2413, 1.0
      %v2602 = vadd.f32 %v2415, 1.0
      %v2603 = vadd.f32 %v2417, 1.0
      %v2604 = vadd.f32 %v2419, 1.0
      %v2605 = vadd.f32 %v2421, 1.0
      %v2606 = vadd.f32 %v2423, 1.0
      %v2607 = vadd.f32 %v2425, 1.0
      %v2608 = vadd.f32 %v2427, 1.0
      %v2609 = vadd.f32 %v2429, 1.0
      %v2610 = vadd.f32 %v2431, 1.0
      %v2611 = vadd.f32 %v2433, 1.0
      %v2612 = vadd.f32 %v2435, 1.0
      %v2613 = vadd.f32 %v2437, 1.0
      %v2614 = vadd.f32 %v2439, 1.0
      %v2615 = vadd.f32 %v2441, 1.0
      %v2616 = vadd.f32 %v2443, 1.0
      %v2617 = vadd.f32 %v2445, 1.0
      %v2618 = vadd.f32 %v2447, 1.0
      %v2619 = vadd.f32 %v2449, 1.0
      %v2620 = vadd.f32 %v2451, 1.0
      %v2621 = vadd.f32 %v2453, 1.0
      %v2622 = vadd.f32 %v2455, 1.0
      %v2623 = vadd.f32 %v2457, 1.0
      %v2624 = vadd.f32 %v2459, 1.0
      %v2625 = vadd.f32 %v2461, 1.0
      %v2626 = vadd.f32 %v2463, 1.0
      %v2627 = vadd.f32 %v2465, 1.0
      %v2628 = vadd.f32 %v2467, 1.0
      %v2629 = vadd.f32 %v2469, 1.0
      %v2630 = vrcp.pop %v2470
      %v2631 = vmul.f32 1.0, %v2630
      %v2632 = vrcp.pop %v2471
      %v2633 = vmul.f32 1.0, %v2632
      %v2634 = vrcp.pop %v2472
      %v2635 = vmul.f32 1.0, %v2634
      %v2636 = vrcp.pop %v2473
      %v2637 = vmul.f32 1.0, %v2636
      %v2638 = vrcp.pop %v2474
      %v2639 = vmul.f32 1.0, %v2638
      %v2640 = vrcp.pop %v2475
      %v2641 = vmul.f32 1.0, %v2640
      %v2642 = vrcp.pop %v2476
      %v2643 = vmul.f32 1.0, %v2642
      %v2644 = vrcp.pop %v2477
      %v2645 = vmul.f32 1.0, %v2644
      %v2646 = vrcp.pop %v2478
      %v2647 = vmul.f32 1.0, %v2646
      %v2648 = vrcp.pop %v2479
      %v2649 = vmul.f32 1.0, %v2648
      %v2650 = vrcp.pop %v2480
      %v2651 = vmul.f32 1.0, %v2650
      %v2652 = vrcp.pop %v2481
      %v2653 = vmul.f32 1.0, %v2652
      %v2654 = vrcp.pop %v2482
      %v2655 = vmul.f32 1.0, %v2654
      %v2656 = vrcp.pop %v2483
      %v2657 = vmul.f32 1.0, %v2656
      %v2658 = vrcp.pop %v2484
      %v2659 = vmul.f32 1.0, %v2658
      %v2660 = vrcp.pop %v2485
      %v2661 = vmul.f32 1.0, %v2660
      %v2662 = vrcp.pop %v2486
      %v2663 = vmul.f32 1.0, %v2662
      %v2664 = vrcp.pop %v2487
      %v2665 = vmul.f32 1.0, %v2664
      %v2666 = vrcp.pop %v2488
      %v2667 = vmul.f32 1.0, %v2666
      %v2668 = vrcp.pop %v2489
      %v2669 = vmul.f32 1.0, %v2668
      %v2670 = vrcp.pop %v2490
      %v2671 = vmul.f32 1.0, %v2670
      %v2672 = vrcp.pop %v2491
      %v2673 = vmul.f32 1.0, %v2672
      %v2674 = vrcp.pop %v2492
      %v2675 = vmul.f32 1.0, %v2674
      %v2676 = vrcp.pop %v2493
      %v2677 = vmul.f32 1.0, %v2676
      %v2678 = vrcp.pop %v2494
      %v2679 = vmul.f32 1.0, %v2678
      %v2680 = vrcp.pop %v2495
      %v2681 = vmul.f32 1.0, %v2680
      %v2682 = vrcp.pop %v2496
      %v2683 = vmul.f32 1.0, %v2682
      %v2684 = vrcp.pop %v2497
      %v2685 = vmul.f32 1.0, %v2684
      %v2686 = vrcp.pop %v2498
      %v2687 = vmul.f32 1.0, %v2686
      %v2688 = vrcp.pop %v2499
      %v2689 = vmul.f32 1.0, %v2688
      %v2690 = vrcp.pop %v2500
      %v2691 = vmul.f32 1.0, %v2690
      %v2692 = vrcp.pop %v2501
      %v2693 = vmul.f32 1.0, %v2692
      %v2694 = vrcp.pop %v2502
      %v2695 = vmul.f32 1.0, %v2694
      %v2696 = vrcp.pop %v2503
      %v2697 = vmul.f32 1.0, %v2696
      %v2698 = vrcp.pop %v2504
      %v2699 = vmul.f32 1.0, %v2698
      %v2700 = vrcp.pop %v2505
      %v2701 = vmul.f32 1.0, %v2700
      %v2702 = vrcp.pop %v2506
      %v2703 = vmul.f32 1.0, %v2702
      %v2704 = vrcp.pop %v2507
      %v2705 = vmul.f32 1.0, %v2704
      %v2706 = vrcp.pop %v2508
      %v2707 = vmul.f32 1.0, %v2706
      %v2708 = vrcp.pop %v2509
      %v2709 = vmul.f32 1.0, %v2708
      %v2710 = vrcp.pop %v2510
      %v2711 = vmul.f32 1.0, %v2710
      %v2712 = vrcp.pop %v2511
      %v2713 = vmul.f32 1.0, %v2712
      %v2714 = vrcp.pop %v2512
      %v2715 = vmul.f32 1.0, %v2714
      %v2716 = vrcp.pop %v2513
      %v2717 = vmul.f32 1.0, %v2716
      %v2718 = vrcp.pop %v2514
      %v2719 = vmul.f32 1.0, %v2718
      %v2720 = vrcp.pop %v2515
      %v2721 = vmul.f32 1.0, %v2720
      %v2722 = vrcp.pop %v2516
      %v2723 = vmul.f32 1.0, %v2722
      %v2724 = vrcp.pop %v2517
      %v2725 = vmul.f32 1.0, %v2724
      %v2726 = vrcp.pop %v2518
      %v2727 = vmul.f32 1.0, %v2726
      %v2728 = vrcp.pop %v2519
      %v2729 = vmul.f32 1.0, %v2728
      %v2730 = vrcp.pop %v2520
      %v2731 = vmul.f32 1.0, %v2730
      %v2732 = vrcp.pop %v2521
      %v2733 = vmul.f32 1.0, %v2732
      %v2734 = vrcp.pop %v2522
      %v2735 = vmul.f32 1.0, %v2734
      %v2736 = vrcp.pop %v2523
      %v2737 = vmul.f32 1.0, %v2736
      %v2738 = vrcp.pop %v2524
      %v2739 = vmul.f32 1.0, %v2738
      %v2740 = vrcp.pop %v2525
      %v2741 = vmul.f32 1.0, %v2740
      %v2742 = vrcp.pop %v2526
      %v2743 = vmul.f32 1.0, %v2742
      %v2744 = vrcp.pop %v2527
      %v2745 = vmul.f32 1.0, %v2744
      %v2746 = vrcp.pop %v2528
      %v2747 = vmul.f32 1.0, %v2746
      %v2748 = vrcp.pop %v2529
      %v2749 = vmul.f32 1.0, %v2748
      %v2750 = vrcp.pop %v2530
      %v2751 = vmul.f32 1.0, %v2750
      %v2752 = vrcp.pop %v2531
      %v2753 = vmul.f32 1.0, %v2752
      %v2754 = vrcp.pop %v2532
      %v2755 = vmul.f32 1.0, %v2754
      %v2756 = vrcp.pop %v2533
      %v2757 = vmul.f32 1.0, %v2756
      %v2758 = vrcp.pop %v2534
      %v2759 = vmul.f32 1.0, %v2758
      %v2760 = vrcp.pop %v2535
      %v2761 = vmul.f32 1.0, %v2760
      %v2762 = vrcp.pop %v2536
      %v2763 = vmul.f32 1.0, %v2762
      %v2764 = vrcp.pop %v2537
      %v2765 = vmul.f32 1.0, %v2764
      %v2766 = vrcp.pop %v2538
      %v2767 = vmul.f32 1.0, %v2766
      %v2768 = vrcp.pop %v2539
      %v2769 = vmul.f32 1.0, %v2768
      %v2770 = vrcp.pop %v2540
      %v2771 = vmul.f32 1.0, %v2770
      %v2772 = vrcp.pop %v2541
      %v2773 = vmul.f32 1.0, %v2772
      %v2774 = vrcp.pop %v2542
      %v2775 = vmul.f32 1.0, %v2774
      %v2776 = vrcp.pop %v2543
      %v2777 = vmul.f32 1.0, %v2776
      %v2778 = vrcp.pop %v2544
      %v2779 = vmul.f32 1.0, %v2778
      %v2780 = vrcp.pop %v2545
      %v2781 = vmul.f32 1.0, %v2780
      %v2782 = vrcp.pop %v2546
      %v2783 = vmul.f32 1.0, %v2782
      %v2784 = vrcp.pop %v2547
      %v2785 = vmul.f32 1.0, %v2784
      %v2786 = vrcp.pop %v2548
      %v2787 = vmul.f32 1.0, %v2786
      %v2788 = vrcp.pop %v2549
      %v2789 = vmul.f32 1.0, %v2788
      %v2790 = vrcp.pop %v2550
      %v2791 = vmul.f32 1.0, %v2790
      %v2792 = vrcp.pop %v2551
      %v2793 = vmul.f32 1.0, %v2792
      %v2794 = vrcp.pop %v2552
      %v2795 = vmul.f32 1.0, %v2794
      %v2796 = vrcp.pop %v2553
      %v2797 = vmul.f32 1.0, %v2796
      %v2798 = vrcp.pop %v2554
      %v2799 = vmul.f32 1.0, %v2798
      %v2800 = vrcp.pop %v2555
      %v2801 = vmul.f32 1.0, %v2800
      %v2802 = vrcp.pop %v2556
      %v2803 = vmul.f32 1.0, %v2802
      %v2804 = vrcp.pop %v2557
      %v2805 = vmul.f32 1.0, %v2804
      %v2806 = vrcp.pop %v2558
      %v2807 = vmul.f32 1.0, %v2806
      %v2808 = vrcp.pop %v2559
      %v2809 = vmul.f32 1.0, %v2808
      %v2810 = vrcp.pop %v2560
      %v2811 = vmul.f32 1.0, %v2810
      %v2812 = vrcp.pop %v2561
      %v2813 = vmul.f32 1.0, %v2812
      %v2814 = vrcp.pop %v2562
      %v2815 = vmul.f32 1.0, %v2814
      %v2816 = vrcp.pop %v2563
      %v2817 = vmul.f32 1.0, %v2816
      %v2818 = vrcp.pop %v2564
      %v2819 = vmul.f32 1.0, %v2818
      %v2820 = vrcp.pop %v2565
      %v2821 = vmul.f32 1.0, %v2820
      %v2822 = vrcp.pop %v2566
      %v2823 = vmul.f32 1.0, %v2822
      %v2824 = vrcp.pop %v2567
      %v2825 = vmul.f32 1.0, %v2824
      %v2826 = vrcp.pop %v2568
      %v2827 = vmul.f32 1.0, %v2826
      %v2828 = vrcp.pop %v2569
      %v2829 = vmul.f32 1.0, %v2828
      %v2830 = vrcp.pop %v2570
      %v2831 = vmul.f32 1.0, %v2830
      %v2832 = vrcp.pop %v2571
      %v2833 = vmul.f32 1.0, %v2832
      %v2834 = vrcp.pop %v2572
      %v2835 = vmul.f32 1.0, %v2834
      %v2836 = vrcp.pop %v2573
      %v2837 = vmul.f32 1.0, %v2836
      %v2838 = vrcp.pop %v2574
      %v2839 = vmul.f32 1.0, %v2838
      %v2840 = vrcp.pop %v2575
      %v2841 = vmul.f32 1.0, %v2840
      %v2842 = vrcp.pop %v2576
      %v2843 = vmul.f32 1.0, %v2842
      %v2844 = vrcp.pop %v2577
      %v2845 = vmul.f32 1.0, %v2844
      %v2846 = vrcp.pop %v2578
      %v2847 = vmul.f32 1.0, %v2846
      %v2848 = vrcp.pop %v2579
      %v2849 = vmul.f32 1.0, %v2848
      %v2850 = vrcp.pop %v2580
      %v2851 = vmul.f32 1.0, %v2850
      %v2852 = vrcp.pop %v2581
      %v2853 = vmul.f32 1.0, %v2852
      %v2854 = vrcp.pop %v2582
      %v2855 = vmul.f32 1.0, %v2854
      %v2856 = vrcp.pop %v2583
      %v2857 = vmul.f32 1.0, %v2856
      %v2858 = vrcp.pop %v2584
      %v2859 = vmul.f32 1.0, %v2858
      %v2860 = vrcp.pop %v2585
      %v2861 = vmul.f32 1.0, %v2860
      %v2862 = vrcp.pop %v2586
      %v2863 = vmul.f32 1.0, %v2862
      %v2864 = vrcp.pop %v2587
      %v2865 = vmul.f32 1.0, %v2864
      %v2866 = vrcp.pop %v2588
      %v2867 = vmul.f32 1.0, %v2866
      %v2868 = vrcp.pop %v2589
      %v2869 = vmul.f32 1.0, %v2868
      %v2870 = vrcp.pop %v2590
      %v2871 = vmul.f32 1.0, %v2870
      %v2872 = vrcp.pop %v2591
      %v2873 = vmul.f32 1.0, %v2872
      %v2874 = vrcp.pop %v2592
      %v2875 = vmul.f32 1.0, %v2874
      %v2876 = vrcp.pop %v2593
      %v2877 = vmul.f32 1.0, %v2876
      %v2878 = vrcp.pop %v2594
      %v2879 = vmul.f32 1.0, %v2878
      %v2880 = vrcp.pop %v2595
      %v2881 = vmul.f32 1.0, %v2880
      %v2882 = vrcp.pop %v2596
      %v2883 = vmul.f32 1.0, %v2882
      %v2884 = vrcp.pop %v2597
      %v2885 = vmul.f32 1.0, %v2884
      %v2886 = vrcp.pop %v2598
      %v2887 = vmul.f32 1.0, %v2886
      %v2888 = vrcp.pop %v2599
      %v2889 = vmul.f32 1.0, %v2888
      %v2890 = vrcp.pop %v2600
      %v2891 = vmul.f32 1.0, %v2890
      %v2892 = vrcp.pop %v2601
      %v2893 = vmul.f32 1.0, %v2892
      %v2894 = vrcp.pop %v2602
      %v2895 = vmul.f32 1.0, %v2894
      %v2896 = vrcp.pop %v2603
      %v2897 = vmul.f32 1.0, %v2896
      %v2898 = vrcp.pop %v2604
      %v2899 = vmul.f32 1.0, %v2898
      %v2900 = vrcp.pop %v2605
      %v2901 = vmul.f32 1.0, %v2900
      %v2902 = vrcp.pop %v2606
      %v2903 = vmul.f32 1.0, %v2902
      %v2904 = vrcp.pop %v2607
      %v2905 = vmul.f32 1.0, %v2904
      %v2906 = vrcp.pop %v2608
      %v2907 = vmul.f32 1.0, %v2906
      %v2908 = vrcp.pop %v2609
      %v2909 = vmul.f32 1.0, %v2908
      %v2910 = vrcp.pop %v2610
      %v2911 = vmul.f32 1.0, %v2910
      %v2912 = vrcp.pop %v2611
      %v2913 = vmul.f32 1.0, %v2912
      %v2914 = vrcp.pop %v2612
      %v2915 = vmul.f32 1.0, %v2914
      %v2916 = vrcp.pop %v2613
      %v2917 = vmul.f32 1.0, %v2916
      %v2918 = vrcp.pop %v2614
      %v2919 = vmul.f32 1.0, %v2918
      %v2920 = vrcp.pop %v2615
      %v2921 = vmul.f32 1.0, %v2920
      %v2922 = vrcp.pop %v2616
      %v2923 = vmul.f32 1.0, %v2922
      %v2924 = vrcp.pop %v2617
      %v2925 = vmul.f32 1.0, %v2924
      %v2926 = vrcp.pop %v2618
      %v2927 = vmul.f32 1.0, %v2926
      %v2928 = vrcp.pop %v2619
      %v2929 = vmul.f32 1.0, %v2928
      %v2930 = vrcp.pop %v2620
      %v2931 = vmul.f32 1.0, %v2930
      %v2932 = vrcp.pop %v2621
      %v2933 = vmul.f32 1.0, %v2932
      %v2934 = vrcp.pop %v2622
      %v2935 = vmul.f32 1.0, %v2934
      %v2936 = vrcp.pop %v2623
      %v2937 = vmul.f32 1.0, %v2936
      %v2938 = vrcp.pop %v2624
      %v2939 = vmul.f32 1.0, %v2938
      %v2940 = vrcp.pop %v2625
      %v2941 = vmul.f32 1.0, %v2940
      %v2942 = vrcp.pop %v2626
      %v2943 = vmul.f32 1.0, %v2942
      %v2944 = vrcp.pop %v2627
      %v2945 = vmul.f32 1.0, %v2944
      %v2946 = vrcp.pop %v2628
      %v2947 = vmul.f32 1.0, %v2946
      %v2948 = vrcp.pop %v2629
      %v2949 = vmul.f32 1.0, %v2948
      %v2950 = vmul.f32 %v1295, %v2631
      %v2951 = vmul.f32 %v1297, %v2633
      %v2952 = vmul.f32 %v1368, %v2635
      %v2953 = vmul.f32 %v1370, %v2637
      %v2954 = vmul.f32 %v1441, %v2639
      %v2955 = vmul.f32 %v1443, %v2641
      %v2956 = vmul.f32 %v1514, %v2643
      %v2957 = vmul.f32 %v1516, %v2645
      %v2958 = vmul.f32 %v1587, %v2647
      %v2959 = vmul.f32 %v1589, %v2649
      %v2960 = vmul.f32 %v1660, %v2651
      %v2961 = vmul.f32 %v1662, %v2653
      %v2962 = vmul.f32 %v1733, %v2655
      %v2963 = vmul.f32 %v1735, %v2657
      %v2964 = vmul.f32 %v1806, %v2659
      %v2965 = vmul.f32 %v1808, %v2661
      %v2966 = vmul.f32 %v1879, %v2663
      %v2967 = vmul.f32 %v1881, %v2665
      %v2968 = vmul.f32 %v1952, %v2667
      %v2969 = vmul.f32 %v1954, %v2669
      %v2970 = vmul.f32 %v1299, %v2671
      %v2971 = vmul.f32 %v1301, %v2673
      %v2972 = vmul.f32 %v1372, %v2675
      %v2973 = vmul.f32 %v1374, %v2677
      %v2974 = vmul.f32 %v1445, %v2679
      %v2975 = vmul.f32 %v1447, %v2681
      %v2976 = vmul.f32 %v1518, %v2683
      %v2977 = vmul.f32 %v1520, %v2685
      %v2978 = vmul.f32 %v1591, %v2687
      %v2979 = vmul.f32 %v1593, %v2689
      %v2980 = vmul.f32 %v1664, %v2691
      %v2981 = vmul.f32 %v1666, %v2693
      %v2982 = vmul.f32 %v1737, %v2695
      %v2983 = vmul.f32 %v1739, %v2697
      %v2984 = vmul.f32 %v1810, %v2699
      %v2985 = vmul.f32 %v1812, %v2701
      %v2986 = vmul.f32 %v1883, %v2703
      %v2987 = vmul.f32 %v1885, %v2705
      %v2988 = vmul.f32 %v1956, %v2707
      %v2989 = vmul.f32 %v1958, %v2709
      %v2990 = vmul.f32 %v1305, %v2711
      %v2991 = vmul.f32 %v1307, %v2713
      %v2992 = vmul.f32 %v1378, %v2715
      %v2993 = vmul.f32 %v1380, %v2717
      %v2994 = vmul.f32 %v1451, %v2719
      %v2995 = vmul.f32 %v1453, %v2721
      %v2996 = vmul.f32 %v1524, %v2723
      %v2997 = vmul.f32 %v1526, %v2725
      %v2998 = vmul.f32 %v1597, %v2727
      %v2999 = vmul.f32 %v1599, %v2729
      %v3000 = vmul.f32 %v1670, %v2731
      %v3001 = vmul.f32 %v1672, %v2733
      %v3002 = vmul.f32 %v1743, %v2735
      %v3003 = vmul.f32 %v1745, %v2737
      %v3004 = vmul.f32 %v1816, %v2739
      %v3005 = vmul.f32 %v1818, %v2741
      %v3006 = vmul.f32 %v1889, %v2743
      %v3007 = vmul.f32 %v1891, %v2745
      %v3008 = vmul.f32 %v1962, %v2747
      %v3009 = vmul.f32 %v1964, %v2749
      %v3010 = vmul.f32 %v1309, %v2751
      %v3011 = vmul.f32 %v1311, %v2753
      %v3012 = vmul.f32 %v1382, %v2755
      %v3013 = vmul.f32 %v1384, %v2757
      %v3014 = vmul.f32 %v1455, %v2759
      %v3015 = vmul.f32 %v1457, %v2761
      %v3016 = vmul.f32 %v1528, %v2763
      %v3017 = vmul.f32 %v1530, %v2765
      %v3018 = vmul.f32 %v1601, %v2767
      %v3019 = vmul.f32 %v1603, %v2769
      %v3020 = vmul.f32 %v1674, %v2771
      %v3021 = vmul.f32 %v1676, %v2773
      %v3022 = vmul.f32 %v1747, %v2775
      %v3023 = vmul.f32 %v1749, %v2777
      %v3024 = vmul.f32 %v1820, %v2779
      %v3025 = vmul.f32 %v1822, %v2781
      %v3026 = vmul.f32 %v1893, %v2783
      %v3027 = vmul.f32 %v1895, %v2785
      %v3028 = vmul.f32 %v1966, %v2787
      %v3029 = vmul.f32 %v1968, %v2789
      %v3030 = vmul.f32 %v1315, %v2791
      %v3031 = vmul.f32 %v1317, %v2793
      %v3032 = vmul.f32 %v1388, %v2795
      %v3033 = vmul.f32 %v1390, %v2797
      %v3034 = vmul.f32 %v1461, %v2799
      %v3035 = vmul.f32 %v1463, %v2801
      %v3036 = vmul.f32 %v1534, %v2803
      %v3037 = vmul.f32 %v1536, %v2805
      %v3038 = vmul.f32 %v1607, %v2807
      %v3039 = vmul.f32 %v1609, %v2809
      %v3040 = vmul.f32 %v1680, %v2811
      %v3041 = vmul.f32 %v1682, %v2813
      %v3042 = vmul.f32 %v1753, %v2815
      %v3043 = vmul.f32 %v1755, %v2817
      %v3044 = vmul.f32 %v1826, %v2819
      %v3045 = vmul.f32 %v1828, %v2821
      %v3046 = vmul.f32 %v1899, %v2823
      %v3047 = vmul.f32 %v1901, %v2825
      %v3048 = vmul.f32 %v1972, %v2827
      %v3049 = vmul.f32 %v1974, %v2829
      %v3050 = vmul.f32 %v1319, %v2831
      %v3051 = vmul.f32 %v1321, %v2833
      %v3052 = vmul.f32 %v1392, %v2835
      %v3053 = vmul.f32 %v1394, %v2837
      %v3054 = vmul.f32 %v1465, %v2839
      %v3055 = vmul.f32 %v1467, %v2841
      %v3056 = vmul.f32 %v1538, %v2843
      %v3057 = vmul.f32 %v1540, %v2845
      %v3058 = vmul.f32 %v1611, %v2847
      %v3059 = vmul.f32 %v1613, %v2849
      %v3060 = vmul.f32 %v1684, %v2851
      %v3061 = vmul.f32 %v1686, %v2853
      %v3062 = vmul.f32 %v1757, %v2855
      %v3063 = vmul.f32 %v1759, %v2857
      %v3064 = vmul.f32 %v1830, %v2859
      %v3065 = vmul.f32 %v1832, %v2861
      %v3066 = vmul.f32 %v1903, %v2863
      %v3067 = vmul.f32 %v1905, %v2865
      %v3068 = vmul.f32 %v1976, %v2867
      %v3069 = vmul.f32 %v1978, %v2869
      %v3070 = vmul.f32 %v1325, %v2871
      %v3071 = vmul.f32 %v1327, %v2873
      %v3072 = vmul.f32 %v1398, %v2875
      %v3073 = vmul.f32 %v1400, %v2877
      %v3074 = vmul.f32 %v1471, %v2879
      %v3075 = vmul.f32 %v1473, %v2881
      %v3076 = vmul.f32 %v1544, %v2883
      %v3077 = vmul.f32 %v1546, %v2885
      %v3078 = vmul.f32 %v1617, %v2887
      %v3079 = vmul.f32 %v1619, %v2889
      %v3080 = vmul.f32 %v1690, %v2891
      %v3081 = vmul.f32 %v1692, %v2893
      %v3082 = vmul.f32 %v1763, %v2895
      %v3083 = vmul.f32 %v1765, %v2897
      %v3084 = vmul.f32 %v1836, %v2899
      %v3085 = vmul.f32 %v1838, %v2901
      %v3086 = vmul.f32 %v1909, %v2903
      %v3087 = vmul.f32 %v1911, %v2905
      %v3088 = vmul.f32 %v1982, %v2907
      %v3089 = vmul.f32 %v1984, %v2909
      %v3090 = vmul.f32 %v1329, %v2911
      %v3091 = vmul.f32 %v1331, %v2913
      %v3092 = vmul.f32 %v1402, %v2915
      %v3093 = vmul.f32 %v1404, %v2917
      %v3094 = vmul.f32 %v1475, %v2919
      %v3095 = vmul.f32 %v1477, %v2921
      %v3096 = vmul.f32 %v1548, %v2923
      %v3097 = vmul.f32 %v1550, %v2925
      %v3098 = vmul.f32 %v1621, %v2927
      %v3099 = vmul.f32 %v1623, %v2929
      %v3100 = vmul.f32 %v1694, %v2931
      %v3101 = vmul.f32 %v1696, %v2933
      %v3102 = vmul.f32 %v1767, %v2935
      %v3103 = vmul.f32 %v1769, %v2937
      %v3104 = vmul.f32 %v1840, %v2939
      %v3105 = vmul.f32 %v1842, %v2941
      %v3106 = vmul.f32 %v1913, %v2943
      %v3107 = vmul.f32 %v1915, %v2945
      %v3108 = vmul.f32 %v1986, %v2947
      %v3109 = vmul.f32 %v1988, %v2949
      %v3110 = vld [vmem:[%s360] sm:$0xff]
      %v3111 = vld [vmem:[%s360 + $0x8] sm:$0xff]
      %v3112 = vld [vmem:[%s360 + $0x10] sm:$0xf]
      %v3113 = vadd.f32 %v2950, %v2970
      %v3114 = vadd.f32 %v3113, %v2990
      %v3115 = vadd.f32 %v3114, %v3010
      %v3116 = vadd.f32 %v3115, %v3030
      %v3117 = vadd.f32 %v3116, %v3050
      %v3118 = vadd.f32 %v3117, %v3070
      %v3119 = vadd.f32 %v3118, %v3090
      %v3120 = vrot.slane %v3119, 4
      %v3121 = vadd.f32 %v3119, %v3120
      %v3122 = vrot.slane %v3121, 2
      %v3123 = vadd.f32 %v3121, %v3122
      %v3124 = vrot.slane %v3123, 1
      %v3125 = vadd.f32 %v3123, %v3124
      %v3126 = vadd.f32 %v2951, %v2971
      %v3127 = vadd.f32 %v3126, %v2991
      %v3128 = vadd.f32 %v3127, %v3011
      %v3129 = vadd.f32 %v3128, %v3031
      %v3130 = vadd.f32 %v3129, %v3051
      %v3131 = vadd.f32 %v3130, %v3071
      %v3132 = vadd.f32 %v3131, %v3091
      %v3133 = vrot.slane %v3132, 4
      %v3134 = vadd.f32 %v3132, %v3133
      %v3135 = vrot.slane %v3134, 2
      %v3136 = vadd.f32 %v3134, %v3135
      %v3137 = vrot.slane %v3136, 1
      %v3138 = vadd.f32 %v3136, %v3137
      %v3139 = vadd.f32 %v2952, %v2972
      %v3140 = vadd.f32 %v3139, %v2992
      %v3141 = vadd.f32 %v3140, %v3012
      %v3142 = vadd.f32 %v3141, %v3032
      %v3143 = vadd.f32 %v3142, %v3052
      %v3144 = vadd.f32 %v3143, %v3072
      %v3145 = vadd.f32 %v3144, %v3092
      %v3146 = vrot.slane %v3145, 4
      %v3147 = vadd.f32 %v3145, %v3146
      %v3148 = vrot.slane %v3147, 2
      %v3149 = vadd.f32 %v3147, %v3148
      %v3150 = vrot.slane %v3149, 1
      %v3151 = vadd.f32 %v3149, %v3150
      %v3152 = vadd.f32 %v2953, %v2973
      %v3153 = vadd.f32 %v3152, %v2993
      %v3154 = vadd.f32 %v3153, %v3013
      %v3155 = vadd.f32 %v3154, %v3033
      %v3156 = vadd.f32 %v3155, %v3053
      %v3157 = vadd.f32 %v3156, %v3073
      %v3158 = vadd.f32 %v3157, %v3093
      %v3159 = vrot.slane %v3158, 4
      %v3160 = vadd.f32 %v3158, %v3159
      %v3161 = vrot.slane %v3160, 2
      %v3162 = vadd.f32 %v3160, %v3161
      %v3163 = vrot.slane %v3162, 1
      %v3164 = vadd.f32 %v3162, %v3163
      %v3165 = vadd.f32 %v2954, %v2974
      %v3166 = vadd.f32 %v3165, %v2994
      %v3167 = vadd.f32 %v3166, %v3014
      %v3168 = vadd.f32 %v3167, %v3034
      %v3169 = vadd.f32 %v3168, %v3054
      %v3170 = vadd.f32 %v3169, %v3074
      %v3171 = vadd.f32 %v3170, %v3094
      %v3172 = vrot.slane %v3171, 4
      %v3173 = vadd.f32 %v3171, %v3172
      %v3174 = vrot.slane %v3173, 2
      %v3175 = vadd.f32 %v3173, %v3174
      %v3176 = vrot.slane %v3175, 1
      %v3177 = vadd.f32 %v3175, %v3176
      %v3178 = vadd.f32 %v2955, %v2975
      %v3179 = vadd.f32 %v3178, %v2995
      %v3180 = vadd.f32 %v3179, %v3015
      %v3181 = vadd.f32 %v3180, %v3035
      %v3182 = vadd.f32 %v3181, %v3055
      %v3183 = vadd.f32 %v3182, %v3075
      %v3184 = vadd.f32 %v3183, %v3095
      %v3185 = vrot.slane %v3184, 4
      %v3186 = vadd.f32 %v3184, %v3185
      %v3187 = vrot.slane %v3186, 2
      %v3188 = vadd.f32 %v3186, %v3187
      %v3189 = vrot.slane %v3188, 1
      %v3190 = vadd.f32 %v3188, %v3189
      %v3191 = vadd.f32 %v2956, %v2976
      %v3192 = vadd.f32 %v3191, %v2996
      %v3193 = vadd.f32 %v3192, %v3016
      %v3194 = vadd.f32 %v3193, %v3036
      %v3195 = vadd.f32 %v3194, %v3056
      %v3196 = vadd.f32 %v3195, %v3076
      %v3197 = vadd.f32 %v3196, %v3096
      %v3198 = vrot.slane %v3197, 4
      %v3199 = vadd.f32 %v3197, %v3198
      %v3200 = vrot.slane %v3199, 2
      %v3201 = vadd.f32 %v3199, %v3200
      %v3202 = vrot.slane %v3201, 1
      %v3203 = vadd.f32 %v3201, %v3202
      %v3204 = vadd.f32 %v2957, %v2977
      %v3205 = vadd.f32 %v3204, %v2997
      %v3206 = vadd.f32 %v3205, %v3017
      %v3207 = vadd.f32 %v3206, %v3037
      %v3208 = vadd.f32 %v3207, %v3057
      %v3209 = vadd.f32 %v3208, %v3077
      %v3210 = vadd.f32 %v3209, %v3097
      %v3211 = vrot.slane %v3210, 4
      %v3212 = vadd.f32 %v3210, %v3211
      %v3213 = vrot.slane %v3212, 2
      %v3214 = vadd.f32 %v3212, %v3213
      %v3215 = vrot.slane %v3214, 1
      %v3216 = vadd.f32 %v3214, %v3215
      %v3217 = vadd.f32 %v2958, %v2978
      %v3218 = vadd.f32 %v3217, %v2998
      %v3219 = vadd.f32 %v3218, %v3018
      %v3220 = vadd.f32 %v3219, %v3038
      %v3221 = vadd.f32 %v3220, %v3058
      %v3222 = vadd.f32 %v3221, %v3078
      %v3223 = vadd.f32 %v3222, %v3098
      %v3224 = vrot.slane %v3223, 4
      %v3225 = vadd.f32 %v3223, %v3224
      %v3226 = vrot.slane %v3225, 2
      %v3227 = vadd.f32 %v3225, %v3226
      %v3228 = vrot.slane %v3227, 1
      %v3229 = vadd.f32 %v3227, %v3228
      %v3230 = vadd.f32 %v2959, %v2979
      %v3231 = vadd.f32 %v3230, %v2999
      %v3232 = vadd.f32 %v3231, %v3019
      %v3233 = vadd.f32 %v3232, %v3039
      %v3234 = vadd.f32 %v3233, %v3059
      %v3235 = vadd.f32 %v3234, %v3079
      %v3236 = vadd.f32 %v3235, %v3099
      %v3237 = vrot.slane %v3236, 4
      %v3238 = vadd.f32 %v3236, %v3237
      %v3239 = vrot.slane %v3238, 2
      %v3240 = vadd.f32 %v3238, %v3239
      %v3241 = vrot.slane %v3240, 1
      %v3242 = vadd.f32 %v3240, %v3241
      %v3243 = vadd.f32 %v2960, %v2980
      %v3244 = vadd.f32 %v3243, %v3000
      %v3245 = vadd.f32 %v3244, %v3020
      %v3246 = vadd.f32 %v3245, %v3040
      %v3247 = vadd.f32 %v3246, %v3060
      %v3248 = vadd.f32 %v3247, %v3080
      %v3249 = vadd.f32 %v3248, %v3100
      %v3250 = vrot.slane %v3249, 4
      %v3251 = vadd.f32 %v3249, %v3250
      %v3252 = vrot.slane %v3251, 2
      %v3253 = vadd.f32 %v3251, %v3252
      %v3254 = vrot.slane %v3253, 1
      %v3255 = vadd.f32 %v3253, %v3254
      %v3256 = vadd.f32 %v2961, %v2981
      %v3257 = vadd.f32 %v3256, %v3001
      %v3258 = vadd.f32 %v3257, %v3021
      %v3259 = vadd.f32 %v3258, %v3041
      %v3260 = vadd.f32 %v3259, %v3061
      %v3261 = vadd.f32 %v3260, %v3081
      %v3262 = vadd.f32 %v3261, %v3101
      %v3263 = vrot.slane %v3262, 4
      %v3264 = vadd.f32 %v3262, %v3263
      %v3265 = vrot.slane %v3264, 2
      %v3266 = vadd.f32 %v3264, %v3265
      %v3267 = vrot.slane %v3266, 1
      %v3268 = vadd.f32 %v3266, %v3267
      %v3269 = vadd.f32 %v2962, %v2982
      %v3270 = vadd.f32 %v3269, %v3002
      %v3271 = vadd.f32 %v3270, %v3022
      %v3272 = vadd.f32 %v3271, %v3042
      %v3273 = vadd.f32 %v3272, %v3062
      %v3274 = vadd.f32 %v3273, %v3082
      %v3275 = vadd.f32 %v3274, %v3102
      %v3276 = vrot.slane %v3275, 4
      %v3277 = vadd.f32 %v3275, %v3276
      %v3278 = vrot.slane %v3277, 2
      %v3279 = vadd.f32 %v3277, %v3278
      %v3280 = vrot.slane %v3279, 1
      %v3281 = vadd.f32 %v3279, %v3280
      %v3282 = vadd.f32 %v2963, %v2983
      %v3283 = vadd.f32 %v3282, %v3003
      %v3284 = vadd.f32 %v3283, %v3023
      %v3285 = vadd.f32 %v3284, %v3043
      %v3286 = vadd.f32 %v3285, %v3063
      %v3287 = vadd.f32 %v3286, %v3083
      %v3288 = vadd.f32 %v3287, %v3103
      %v3289 = vrot.slane %v3288, 4
      %v3290 = vadd.f32 %v3288, %v3289
      %v3291 = vrot.slane %v3290, 2
      %v3292 = vadd.f32 %v3290, %v3291
      %v3293 = vrot.slane %v3292, 1
      %v3294 = vadd.f32 %v3292, %v3293
      %v3295 = vadd.f32 %v2964, %v2984
      %v3296 = vadd.f32 %v3295, %v3004
      %v3297 = vadd.f32 %v3296, %v3024
      %v3298 = vadd.f32 %v3297, %v3044
      %v3299 = vadd.f32 %v3298, %v3064
      %v3300 = vadd.f32 %v3299, %v3084
      %v3301 = vadd.f32 %v3300, %v3104
      %v3302 = vrot.slane %v3301, 4
      %v3303 = vadd.f32 %v3301, %v3302
      %v3304 = vrot.slane %v3303, 2
      %v3305 = vadd.f32 %v3303, %v3304
      %v3306 = vrot.slane %v3305, 1
      %v3307 = vadd.f32 %v3305, %v3306
      %v3308 = vadd.f32 %v2965, %v2985
      %v3309 = vadd.f32 %v3308, %v3005
      %v3310 = vadd.f32 %v3309, %v3025
      %v3311 = vadd.f32 %v3310, %v3045
      %v3312 = vadd.f32 %v3311, %v3065
      %v3313 = vadd.f32 %v3312, %v3085
      %v3314 = vadd.f32 %v3313, %v3105
      %v3315 = vrot.slane %v3314, 4
      %v3316 = vadd.f32 %v3314, %v3315
      %v3317 = vrot.slane %v3316, 2
      %v3318 = vadd.f32 %v3316, %v3317
      %v3319 = vrot.slane %v3318, 1
      %v3320 = vadd.f32 %v3318, %v3319
      %v3321 = vadd.f32 %v2966, %v2986
      %v3322 = vadd.f32 %v3321, %v3006
      %v3323 = vadd.f32 %v3322, %v3026
      %v3324 = vadd.f32 %v3323, %v3046
      %v3325 = vadd.f32 %v3324, %v3066
      %v3326 = vadd.f32 %v3325, %v3086
      %v3327 = vadd.f32 %v3326, %v3106
      %v3328 = vrot.slane %v3327, 4
      %v3329 = vadd.f32 %v3327, %v3328
      %v3330 = vrot.slane %v3329, 2
      %v3331 = vadd.f32 %v3329, %v3330
      %v3332 = vrot.slane %v3331, 1
      %v3333 = vadd.f32 %v3331, %v3332
      %v3334 = vadd.f32 %v2967, %v2987
      %v3335 = vadd.f32 %v3334, %v3007
      %v3336 = vadd.f32 %v3335, %v3027
      %v3337 = vadd.f32 %v3336, %v3047
      %v3338 = vadd.f32 %v3337, %v3067
      %v3339 = vadd.f32 %v3338, %v3087
      %v3340 = vadd.f32 %v3339, %v3107
      %v3341 = vrot.slane %v3340, 4
      %v3342 = vadd.f32 %v3340, %v3341
      %v3343 = vrot.slane %v3342, 2
      %v3344 = vadd.f32 %v3342, %v3343
      %v3345 = vrot.slane %v3344, 1
      %v3346 = vadd.f32 %v3344, %v3345
      %v3347 = vadd.f32 %v2968, %v2988
      %v3348 = vadd.f32 %v3347, %v3008
      %v3349 = vadd.f32 %v3348, %v3028
      %v3350 = vadd.f32 %v3349, %v3048
      %v3351 = vadd.f32 %v3350, %v3068
      %v3352 = vadd.f32 %v3351, %v3088
      %v3353 = vadd.f32 %v3352, %v3108
      %v3354 = vrot.slane %v3353, 4
      %v3355 = vadd.f32 %v3353, %v3354
      %v3356 = vrot.slane %v3355, 2
      %v3357 = vadd.f32 %v3355, %v3356
      %v3358 = vrot.slane %v3357, 1
      %v3359 = vadd.f32 %v3357, %v3358
      %v3360 = vadd.f32 %v2969, %v2989
      %v3361 = vadd.f32 %v3360, %v3009
      %v3362 = vadd.f32 %v3361, %v3029
      %v3363 = vadd.f32 %v3362, %v3049
      %v3364 = vadd.f32 %v3363, %v3069
      %v3365 = vadd.f32 %v3364, %v3089
      %v3366 = vadd.f32 %v3365, %v3109
      %v3367 = vrot.slane %v3366, 4
      %v3368 = vadd.f32 %v3366, %v3367
      %v3369 = vrot.slane %v3368, 2
      %v3370 = vadd.f32 %v3368, %v3369
      %v3371 = vrot.slane %v3370, 1
      %v3372 = vadd.f32 %v3370, %v3371
      %v3373 = vmul.f32 %v3125, 0.015625
      %v3374 = vmul.f32 %v3138, 0.015625
      %v3375 = vmul.f32 %v3151, 0.015625
      %v3376 = vmul.f32 %v3164, 0.015625
      %v3377 = vmul.f32 %v3177, 0.015625
      %v3378 = vmul.f32 %v3190, 0.015625
      %v3379 = vmul.f32 %v3203, 0.015625
      %v3380 = vmul.f32 %v3216, 0.015625
      %v3381 = vmul.f32 %v3229, 0.015625
      %v3382 = vmul.f32 %v3242, 0.015625
      %v3383 = vmul.f32 %v3255, 0.015625
      %v3384 = vmul.f32 %v3268, 0.015625
      %v3385 = vmul.f32 %v3281, 0.015625
      %v3386 = vmul.f32 %v3294, 0.015625
      %v3387 = vmul.f32 %v3307, 0.015625
      %v3388 = vmul.f32 %v3320, 0.015625
      %v3389 = vmul.f32 %v3333, 0.015625
      %v3390 = vmul.f32 %v3346, 0.015625
      %v3391 = vmul.f32 %v3359, 0.015625
      %v3392 = vmul.f32 %v3372, 0.015625
      %v3413 = vcombine.low %v3373, %v3374
      %v3414 = vcombine.low %v3375, %v3376
      %v3415 = vcombine.low %v3377, %v3378
      %v3416 = vcombine.low %v3379, %v3380
      %v3418 = vunpack.c.l.s4 1966171168
      %v3419 = vunpack.c.0.s8 %v3418
      %v3420 = vlaneseq
      %v3421 = vshrl.u32 %v3420, 7
      %v3422 = vsub.s32 %v3419, %v3421
      %v3423 = vrot.slane %v3413, %v3422
      %v3425 = vunpack.c.l.s4 1966171168
      %v3426 = vunpack.c.0.s8 %v3425
      %v3427 = vlaneseq
      %v3428 = vshrl.u32 %v3427, 7
      %v3429 = vsub.s32 %v3426, %v3428
      %v3430 = vrot.slane %v3414, %v3429
      %v3432 = vunpack.c.l.s4 1966171168
      %v3433 = vunpack.c.0.s8 %v3432
      %v3434 = vlaneseq
      %v3435 = vshrl.u32 %v3434, 7
      %v3436 = vsub.s32 %v3433, %v3435
      %v3437 = vrot.slane %v3415, %v3436
      %v3439 = vunpack.c.l.s4 1966171168
      %v3440 = vunpack.c.0.s8 %v3439
      %v3441 = vlaneseq
      %v3442 = vshrl.u32 %v3441, 7
      %v3443 = vsub.s32 %v3440, %v3442
      %v3444 = vrot.slane %v3416, %v3443
      %v3445 = vcombine.low %v3423, %v3430
      %v3446 = vcombine.low %v3437, %v3444
      %v3448 = vunpack.c.l.s4 1966171168
      %v3449 = vunpack.c.0.s8 %v3448
      %v3450 = vlaneseq
      %v3451 = vshrl.u32 %v3450, 7
      %v3452 = vsub.s32 %v3449, %v3451
      %v3453 = vrot.slane %v3445, %v3452
      %v3455 = vunpack.c.l.s4 1966171168
      %v3456 = vunpack.c.0.s8 %v3455
      %v3457 = vlaneseq
      %v3458 = vshrl.u32 %v3457, 7
      %v3459 = vsub.s32 %v3456, %v3458
      %v3460 = vrot.slane %v3446, %v3459
      %v3461 = vcombine.low %v3453, %v3460
      %v3462 = vcombine.low %v3381, %v3382
      %v3463 = vcombine.low %v3383, %v3384
      %v3464 = vcombine.low %v3385, %v3386
      %v3465 = vcombine.low %v3387, %v3388
      %v3467 = vunpack.c.l.s4 1966171168
      %v3468 = vunpack.c.0.s8 %v3467
      %v3469 = vlaneseq
      %v3470 = vshrl.u32 %v3469, 7
      %v3471 = vsub.s32 %v3468, %v3470
      %v3472 = vrot.slane %v3462, %v3471
      %v3474 = vunpack.c.l.s4 1966171168
      %v3475 = vunpack.c.0.s8 %v3474
      %v3476 = vlaneseq
      %v3477 = vshrl.u32 %v3476, 7
      %v3478 = vsub.s32 %v3475, %v3477
      %v3479 = vrot.slane %v3463, %v3478
      %v3481 = vunpack.c.l.s4 1966171168
      %v3482 = vunpack.c.0.s8 %v3481
      %v3483 = vlaneseq
      %v3484 = vshrl.u32 %v3483, 7
      %v3485 = vsub.s32 %v3482, %v3484
      %v3486 = vrot.slane %v3464, %v3485
      %v3488 = vunpack.c.l.s4 1966171168
      %v3489 = vunpack.c.0.s8 %v3488
      %v3490 = vlaneseq
      %v3491 = vshrl.u32 %v3490, 7
      %v3492 = vsub.s32 %v3489, %v3491
      %v3493 = vrot.slane %v3465, %v3492
      %v3494 = vcombine.low %v3472, %v3479
      %v3495 = vcombine.low %v3486, %v3493
      %v3497 = vunpack.c.l.s4 1966171168
      %v3498 = vunpack.c.0.s8 %v3497
      %v3499 = vlaneseq
      %v3500 = vshrl.u32 %v3499, 7
      %v3501 = vsub.s32 %v3498, %v3500
      %v3502 = vrot.slane %v3494, %v3501
      %v3504 = vunpack.c.l.s4 1966171168
      %v3505 = vunpack.c.0.s8 %v3504
      %v3506 = vlaneseq
      %v3507 = vshrl.u32 %v3506, 7
      %v3508 = vsub.s32 %v3505, %v3507
      %v3509 = vrot.slane %v3495, %v3508
      %v3510 = vcombine.low %v3502, %v3509
      %v3511 = vcombine.low %v3389, %v3390
      %v3512 = vcombine.low %v3391, %v3392
      %v3514 = vunpack.c.l.s4 1966171168
      %v3515 = vunpack.c.0.s8 %v3514
      %v3516 = vlaneseq
      %v3517 = vshrl.u32 %v3516, 7
      %v3518 = vsub.s32 %v3515, %v3517
      %v3519 = vrot.slane %v3511, %v3518
      %v3521 = vunpack.c.l.s4 1966171168
      %v3522 = vunpack.c.0.s8 %v3521
      %v3523 = vlaneseq
      %v3524 = vshrl.u32 %v3523, 7
      %v3525 = vsub.s32 %v3522, %v3524
      %v3526 = vrot.slane %v3512, %v3525
      %v3527 = vcombine.low %v3519, %v3526
      %v3529 = vunpack.c.l.s4 1966171168
      %v3530 = vunpack.c.0.s8 %v3529
      %v3531 = vlaneseq
      %v3532 = vshrl.u32 %v3531, 7
      %v3533 = vsub.s32 %v3530, %v3532
      %v3534 = vrot.slane %v3527, %v3533
      %v3538 = vadd.f32 %v3110, %v3461
      %v3539 = vadd.f32 %v3111, %v3510
      %v3540 = vadd.f32 %v3112, %v3534
      %3541 = vst [vmem:[%s360] sm:$0xff] %v3538
      %3542 = vst [vmem:[%s360 + $0x8] sm:$0xff] %v3539
      %v3543 = vlaneseq
      %vm3544 = vcmp.ge.s32.totalorder %v3543, 0
      %vm3545 = vcmp.lt.s32.totalorder %v3543, 512
      %vm3546 = vmand %vm3544, %vm3545
      %3547 = vst.msk [vmem:[%s360 + $0x10] sm:$0xf] %vm3546, %v3540
      %p3548 = scmp.lt.s32.totalorder %s22, 1
      %s3549 = scalar_select %p3548, %s22, 1
      %s3550 = smul.addr %s3549, 20
      %s3551 = scalar_lea.vmem %s7, %s3550
      // Predicated region
      $region53: #{_lambda_.8} parent=47 // pred_check
        %p3552 = pneg %p214
      $region54: #{_lambda_.8} parent=47 // pred_check_branch
        %3554 = sbr.rel (%p3552) target = $region56
      $region55: #{_lambda_.8} parent=47 // pred_region
        _
      $region56: #{_lambda_.8} parent=47 // pred_fallthru
        _
    $region48: #{_lambda_.8} parent=5 // pred_fallthru
      _
    %p3555 = scmp.le.s32.totalorder 2, %s13
    // Predicated region
    $region57: #{_lambda_.8} parent=5 // pred_check
      %p3556 = pneg %p3555
    $region58: #{_lambda_.8} parent=5 // pred_check_branch
      %3558 = sbr.rel (%p3556) target = $region60
    $region59: #{_lambda_.8} parent=5 // pred_region
      %s3559 = ssub.s32 %s13, 2
      // Predicated region
      $region61: #{_lambda_.8} parent=59 // pred_check
        %p3560 = pneg %p220
      $region62: #{_lambda_.8} parent=59 // pred_check_branch
        %3562 = sbr.rel (%p3560) target = $region64
      $region63: #{_lambda_.8} parent=59 // pred_region
        %p3563 = scmp.lt.s32.totalorder %s24, 1
        %s3564 = scalar_select %p3563, %s24, 1
        %s3565 = smul.addr %s3564, 20
        %s3566 = scalar_lea.vmem %s7, %s3565
      $region64: #{_lambda_.8} parent=59 // pred_fallthru
        _
    $region60: #{_lambda_.8} parent=5 // pred_fallthru
      _
  $region6: #{_lambda_.8} parent=0 // loop_footer
    %s17 = sadd.s32 1, %s13
  $region7: #{_lambda_.8} parent=0 // loop_footer_branch
    %12 = sbr.rel target = $region3
  $region8: #{_lambda_.8} parent=0 // loop_exit
    _

// kernel: _lambda_.9
$region0: #{_lambda_.9}
  #allocation0 [shape = 'u32[]', space=smem, size = 0x4, offset = 0x4, fixed_abs, tag = 'smem constant byte address 0x4 - core index']
  #allocation1 [shape = 'u32[144,128]{1,0:T(1,128)}', space=vmem, size = 0x12000, scoped, tag = 'internal scratch']
  %s0 = inlined_call_operand.vmem [shape: f32[2,2560], index: 0, kind: input, shape index: {}]
  %s1 = inlined_call_operand.vmem [shape: bf16[2560,384], index: 1, kind: input, shape index: {}]
  %s2 = inlined_call_operand.vmem [shape: f32[1,384], index: 2, kind: input, shape index: {}]
  %s3 = inlined_call_operand.hbm [shape: f32[2,384], index: 3, kind: output, shape index: {}]
  %s4 = sld [smem:[#allocation0]]
  $region22: #{_lambda_.9} parent=0
    _
  %s6 = ssub.s32 1, %s4
  %s7 = scalar_select 0, %s6, %s4
  $region1: #{_lambda_.9} parent=0
    #allocation2 [shape = 'u8[3072]{0}', space=vmem, size = 0xc00, scoped, tag = 'output window, operand 0, single buffered']
    #allocation3 [shape = 's32[1]{0}', space=sflag, size = 0x4, scoped, tag = 'scoped memory for _lambda_.9']
    %8 = vsyncpa [#allocation3], 0
    // Predicated region
    $region2: #{_lambda_.9} parent=1 // pred_check
      _
    $region3: #{_lambda_.9} parent=1 // pred_check_branch
      %10 = sbr.rel (0) target = $region5
    $region4: #{_lambda_.9} parent=1 // pred_region
      _
    $region5: #{_lambda_.9} parent=1 // pred_fallthru
      _
    // Predicated region
    $region6: #{_lambda_.9} parent=1 // pred_check
      _
    $region7: #{_lambda_.9} parent=1 // pred_check_branch
      %12 = sbr.rel (0) target = $region9
    $region8: #{_lambda_.9} parent=1 // pred_region
      _
    $region9: #{_lambda_.9} parent=1 // pred_fallthru
      _
    // Predicated region
    $region10: #{_lambda_.9} parent=1 // pred_check
      _
    $region11: #{_lambda_.9} parent=1 // pred_check_branch
      %14 = sbr.rel (0) target = $region13
    $region12: #{_lambda_.9} parent=1 // pred_region
      _
    $region13: #{_lambda_.9} parent=1 // pred_fallthru
      _
    %v16 = vld [vmem:[%s0] sm:$0xff]
    %v17 = vld [vmem:[%s0 + $0x8] sm:$0xff]
    %v18 = vld [vmem:[%s0 + $0x10] sm:$0xff]
    %v19 = vld [vmem:[%s0 + $0x18] sm:$0xff]
    %v20 = vld [vmem:[%s0 + $0x20] sm:$0xff]
    %v26 = vcombine.high %v16, %v16
    %v28 = vunpack.c.l.s4 1983009808
    %v29 = vunpack.c.0.s8 %v28
    %v30 = vlaneseq
    %v31 = vshrl.u32 %v30, 7
    %v32 = vsub.s32 %v29, %v31
    %v33 = vrot.slane %v16, %v32
    %v35 = vunpack.c.l.s4 1983009808
    %v36 = vunpack.c.0.s8 %v35
    %v37 = vlaneseq
    %v38 = vshrl.u32 %v37, 7
    %v39 = vsub.s32 %v36, %v38
    %v40 = vrot.slane %v26, %v39
    %v41 = vcombine.high %v33, %v33
    %v42 = vcombine.high %v40, %v40
    %v43 = vcombine.high %v17, %v17
    %v45 = vunpack.c.l.s4 1983009808
    %v46 = vunpack.c.0.s8 %v45
    %v47 = vlaneseq
    %v48 = vshrl.u32 %v47, 7
    %v49 = vsub.s32 %v46, %v48
    %v50 = vrot.slane %v17, %v49
    %v52 = vunpack.c.l.s4 1983009808
    %v53 = vunpack.c.0.s8 %v52
    %v54 = vlaneseq
    %v55 = vshrl.u32 %v54, 7
    %v56 = vsub.s32 %v53, %v55
    %v57 = vrot.slane %v43, %v56
    %v58 = vcombine.high %v50, %v50
    %v59 = vcombine.high %v57, %v57
    %v60 = vcombine.high %v18, %v18
    %v62 = vunpack.c.l.s4 1983009808
    %v63 = vunpack.c.0.s8 %v62
    %v64 = vlaneseq
    %v65 = vshrl.u32 %v64, 7
    %v66 = vsub.s32 %v63, %v65
    %v67 = vrot.slane %v18, %v66
    %v69 = vunpack.c.l.s4 1983009808
    %v70 = vunpack.c.0.s8 %v69
    %v71 = vlaneseq
    %v72 = vshrl.u32 %v71, 7
    %v73 = vsub.s32 %v70, %v72
    %v74 = vrot.slane %v60, %v73
    %v75 = vcombine.high %v67, %v67
    %v76 = vcombine.high %v74, %v74
    %v77 = vcombine.high %v19, %v19
    %v79 = vunpack.c.l.s4 1983009808
    %v80 = vunpack.c.0.s8 %v79
    %v81 = vlaneseq
    %v82 = vshrl.u32 %v81, 7
    %v83 = vsub.s32 %v80, %v82
    %v84 = vrot.slane %v19, %v83
    %v86 = vunpack.c.l.s4 1983009808
    %v87 = vunpack.c.0.s8 %v86
    %v88 = vlaneseq
    %v89 = vshrl.u32 %v88, 7
    %v90 = vsub.s32 %v87, %v89
    %v91 = vrot.slane %v77, %v90
    %v92 = vcombine.high %v84, %v84
    %v93 = vcombine.high %v91, %v91
    %v94 = vcombine.high %v20, %v20
    %v96 = vunpack.c.l.s4 1983009808
    %v97 = vunpack.c.0.s8 %v96
    %v98 = vlaneseq
    %v99 = vshrl.u32 %v98, 7
    %v100 = vsub.s32 %v97, %v99
    %v101 = vrot.slane %v20, %v100
    %v103 = vunpack.c.l.s4 1983009808
    %v104 = vunpack.c.0.s8 %v103
    %v105 = vlaneseq
    %v106 = vshrl.u32 %v105, 7
    %v107 = vsub.s32 %v104, %v106
    %v108 = vrot.slane %v94, %v107
    %v109 = vcombine.high %v101, %v101
    %v110 = vcombine.high %v108, %v108
    %v131 = vpack.c.bf16 %v33, %v33
    %v132 = vpack.c.bf16 %v41, %v41
    %v133 = vpack.c.bf16 %v40, %v40
    %v134 = vpack.c.bf16 %v42, %v42
    %v135 = vpack.c.bf16 %v50, %v50
    %v136 = vpack.c.bf16 %v58, %v58
    %v137 = vpack.c.bf16 %v57, %v57
    %v138 = vpack.c.bf16 %v59, %v59
    %v139 = vpack.c.bf16 %v67, %v67
    %v140 = vpack.c.bf16 %v75, %v75
    %v141 = vpack.c.bf16 %v74, %v74
    %v142 = vpack.c.bf16 %v76, %v76
    %v143 = vpack.c.bf16 %v84, %v84
    %v144 = vpack.c.bf16 %v92, %v92
    %v145 = vpack.c.bf16 %v91, %v91
    %v146 = vpack.c.bf16 %v93, %v93
    %v147 = vpack.c.bf16 %v101, %v101
    %v148 = vpack.c.bf16 %v109, %v109
    %v149 = vpack.c.bf16 %v108, %v108
    %v150 = vpack.c.bf16 %v110, %v110
    %v151 = vld [vmem:[%s1] sm:$0xff]
    %v152 = vld [vmem:[%s1 + $0x8] sm:$0xf]
    %v153 = vld [vmem:[%s1 + $0xc] sm:$0xff]
    %v154 = vld [vmem:[%s1 + $0x14] sm:$0xf]
    %v155 = vld [vmem:[%s1 + $0x18] sm:$0xff]
    %v156 = vld [vmem:[%s1 + $0x20] sm:$0xf]
    %v157 = vld [vmem:[%s1 + $0x24] sm:$0xff]
    %v158 = vld [vmem:[%s1 + $0x2c] sm:$0xf]
    %v159 = vld [vmem:[%s1 + $0x30] sm:$0xff]
    %v160 = vld [vmem:[%s1 + $0x38] sm:$0xf]
    %v161 = vld [vmem:[%s1 + $0x3c] sm:$0xff]
    %v162 = vld [vmem:[%s1 + $0x44] sm:$0xf]
    %v163 = vld [vmem:[%s1 + $0x48] sm:$0xff]
    %v164 = vld [vmem:[%s1 + $0x50] sm:$0xf]
    %v165 = vld [vmem:[%s1 + $0x54] sm:$0xff]
    %v166 = vld [vmem:[%s1 + $0x5c] sm:$0xf]
    %v167 = vld [vmem:[%s1 + $0x60] sm:$0xff]
    %v168 = vld [vmem:[%s1 + $0x68] sm:$0xf]
    %v169 = vld [vmem:[%s1 + $0x6c] sm:$0xff]
    %v170 = vld [vmem:[%s1 + $0x74] sm:$0xf]
    %v171 = vld [vmem:[%s1 + $0x78] sm:$0xff]
    %v172 = vld [vmem:[%s1 + $0x80] sm:$0xf]
    %v173 = vld [vmem:[%s1 + $0x84] sm:$0xff]
    %v174 = vld [vmem:[%s1 + $0x8c] sm:$0xf]
    %v175 = vld [vmem:[%s1 + $0x90] sm:$0xff]
    %v176 = vld [vmem:[%s1 + $0x98] sm:$0xf]
    %v177 = vld [vmem:[%s1 + $0x9c] sm:$0xff]
    %v178 = vld [vmem:[%s1 + $0xa4] sm:$0xf]
    %v179 = vld [vmem:[%s1 + $0xa8] sm:$0xff]
    %v180 = vld [vmem:[%s1 + $0xb0] sm:$0xf]
    %v181 = vld [vmem:[%s1 + $0xb4] sm:$0xff]
    %v182 = vld [vmem:[%s1 + $0xbc] sm:$0xf]
    %v183 = vld [vmem:[%s1 + $0xc0] sm:$0xff]
    %v184 = vld [vmem:[%s1 + $0xc8] sm:$0xf]
    %v185 = vld [vmem:[%s1 + $0xcc] sm:$0xff]
    %v186 = vld [vmem:[%s1 + $0xd4] sm:$0xf]
    %v187 = vld [vmem:[%s1 + $0xd8] sm:$0xff]
    %v188 = vld [vmem:[%s1 + $0xe0] sm:$0xf]
    %v189 = vld [vmem:[%s1 + $0xe4] sm:$0xff]
    %v190 = vld [vmem:[%s1 + $0xec] sm:$0xf]
    %v191 = vld [vmem:[%s1 + $0xf0] sm:$0xff]
    %v192 = vld [vmem:[%s1 + $0xf8] sm:$0xf]
    %v193 = vld [vmem:[%s1 + $0xfc] sm:$0xff]
    %v194 = vld [vmem:[%s1 + $0x104] sm:$0xf]
    %v195 = vld [vmem:[%s1 + $0x108] sm:$0xff]
    %v196 = vld [vmem:[%s1 + $0x110] sm:$0xf]
    %v197 = vld [vmem:[%s1 + $0x114] sm:$0xff]
    %v198 = vld [vmem:[%s1 + $0x11c] sm:$0xf]
    %v199 = vld [vmem:[%s1 + $0x120] sm:$0xff]
    %v200 = vld [vmem:[%s1 + $0x128] sm:$0xf]
    %v201 = vld [vmem:[%s1 + $0x12c] sm:$0xff]
    %v202 = vld [vmem:[%s1 + $0x134] sm:$0xf]
    %v203 = vld [vmem:[%s1 + $0x138] sm:$0xff]
    %v204 = vld [vmem:[%s1 + $0x140] sm:$0xf]
    %v205 = vld [vmem:[%s1 + $0x144] sm:$0xff]
    %v206 = vld [vmem:[%s1 + $0x14c] sm:$0xf]
    %v207 = vld [vmem:[%s1 + $0x150] sm:$0xff]
    %v208 = vld [vmem:[%s1 + $0x158] sm:$0xf]
    %v209 = vld [vmem:[%s1 + $0x15c] sm:$0xff]
    %v210 = vld [vmem:[%s1 + $0x164] sm:$0xf]
    %v211 = vld [vmem:[%s1 + $0x168] sm:$0xff]
    %v212 = vld [vmem:[%s1 + $0x170] sm:$0xf]
    %v213 = vld [vmem:[%s1 + $0x174] sm:$0xff]
    %v214 = vld [vmem:[%s1 + $0x17c] sm:$0xf]
    %v215 = vld [vmem:[%s1 + $0x180] sm:$0xff]
    %v216 = vld [vmem:[%s1 + $0x188] sm:$0xf]
    %v217 = vld [vmem:[%s1 + $0x18c] sm:$0xff]
    %v218 = vld [vmem:[%s1 + $0x194] sm:$0xf]
    %v219 = vld [vmem:[%s1 + $0x198] sm:$0xff]
    %v220 = vld [vmem:[%s1 + $0x1a0] sm:$0xf]
    %v221 = vld [vmem:[%s1 + $0x1a4] sm:$0xff]
    %v222 = vld [vmem:[%s1 + $0x1ac] sm:$0xf]
    %v223 = vld [vmem:[%s1 + $0x1b0] sm:$0xff]
    %v224 = vld [vmem:[%s1 + $0x1b8] sm:$0xf]
    %v225 = vld [vmem:[%s1 + $0x1bc] sm:$0xff]
    %v226 = vld [vmem:[%s1 + $0x1c4] sm:$0xf]
    %v227 = vld [vmem:[%s1 + $0x1c8] sm:$0xff]
    %v228 = vld [vmem:[%s1 + $0x1d0] sm:$0xf]
    %v229 = vld [vmem:[%s1 + $0x1d4] sm:$0xff]
    %v230 = vld [vmem:[%s1 + $0x1dc] sm:$0xf]
    %v231 = vld [vmem:[%s1 + $0x1e0] sm:$0xff]
    %v232 = vld [vmem:[%s1 + $0x1e8] sm:$0xf]
    %v233 = vld [vmem:[%s1 + $0x1ec] sm:$0xff]
    %v234 = vld [vmem:[%s1 + $0x1f4] sm:$0xf]
    %v235 = vld [vmem:[%s1 + $0x1f8] sm:$0xff]
    %v236 = vld [vmem:[%s1 + $0x200] sm:$0xf]
    %v237 = vld [vmem:[%s1 + $0x204] sm:$0xff]
    %v238 = vld [vmem:[%s1 + $0x20c] sm:$0xf]
    %v239 = vld [vmem:[%s1 + $0x210] sm:$0xff]
    %v240 = vld [vmem:[%s1 + $0x218] sm:$0xf]
    %v241 = vld [vmem:[%s1 + $0x21c] sm:$0xff]
    %v242 = vld [vmem:[%s1 + $0x224] sm:$0xf]
    %v243 = vld [vmem:[%s1 + $0x228] sm:$0xff]
    %v244 = vld [vmem:[%s1 + $0x230] sm:$0xf]
    %v245 = vld [vmem:[%s1 + $0x234] sm:$0xff]
    %v246 = vld [vmem:[%s1 + $0x23c] sm:$0xf]
    %v247 = vld [vmem:[%s1 + $0x240] sm:$0xff]
    %v248 = vld [vmem:[%s1 + $0x248] sm:$0xf]
    %v249 = vld [vmem:[%s1 + $0x24c] sm:$0xff]
    %v250 = vld [vmem:[%s1 + $0x254] sm:$0xf]
    %v251 = vld [vmem:[%s1 + $0x258] sm:$0xff]
    %v252 = vld [vmem:[%s1 + $0x260] sm:$0xf]
    %v253 = vld [vmem:[%s1 + $0x264] sm:$0xff]
    %v254 = vld [vmem:[%s1 + $0x26c] sm:$0xf]
    %v255 = vld [vmem:[%s1 + $0x270] sm:$0xff]
    %v256 = vld [vmem:[%s1 + $0x278] sm:$0xf]
    %v257 = vld [vmem:[%s1 + $0x27c] sm:$0xff]
    %v258 = vld [vmem:[%s1 + $0x284] sm:$0xf]
    %v259 = vld [vmem:[%s1 + $0x288] sm:$0xff]
    %v260 = vld [vmem:[%s1 + $0x290] sm:$0xf]
    %v261 = vld [vmem:[%s1 + $0x294] sm:$0xff]
    %v262 = vld [vmem:[%s1 + $0x29c] sm:$0xf]
    %v263 = vld [vmem:[%s1 + $0x2a0] sm:$0xff]
    %v264 = vld [vmem:[%s1 + $0x2a8] sm:$0xf]
    %v265 = vld [vmem:[%s1 + $0x2ac] sm:$0xff]
    %v266 = vld [vmem:[%s1 + $0x2b4] sm:$0xf]
    %v267 = vld [vmem:[%s1 + $0x2b8] sm:$0xff]
    %v268 = vld [vmem:[%s1 + $0x2c0] sm:$0xf]
    %v269 = vld [vmem:[%s1 + $0x2c4] sm:$0xff]
    %v270 = vld [vmem:[%s1 + $0x2cc] sm:$0xf]
    %v271 = vld [vmem:[%s1 + $0x2d0] sm:$0xff]
    %v272 = vld [vmem:[%s1 + $0x2d8] sm:$0xf]
    %v273 = vld [vmem:[%s1 + $0x2dc] sm:$0xff]
    %v274 = vld [vmem:[%s1 + $0x2e4] sm:$0xf]
    %v275 = vld [vmem:[%s1 + $0x2e8] sm:$0xff]
    %v276 = vld [vmem:[%s1 + $0x2f0] sm:$0xf]
    %v277 = vld [vmem:[%s1 + $0x2f4] sm:$0xff]
    %v278 = vld [vmem:[%s1 + $0x2fc] sm:$0xf]
    %v279 = vld [vmem:[%s1 + $0x300] sm:$0xff]
    %v280 = vld [vmem:[%s1 + $0x308] sm:$0xf]
    %v281 = vld [vmem:[%s1 + $0x30c] sm:$0xff]
    %v282 = vld [vmem:[%s1 + $0x314] sm:$0xf]
    %v283 = vld [vmem:[%s1 + $0x318] sm:$0xff]
    %v284 = vld [vmem:[%s1 + $0x320] sm:$0xf]
    %v285 = vld [vmem:[%s1 + $0x324] sm:$0xff]
    %v286 = vld [vmem:[%s1 + $0x32c] sm:$0xf]
    %v287 = vld [vmem:[%s1 + $0x330] sm:$0xff]
    %v288 = vld [vmem:[%s1 + $0x338] sm:$0xf]
    %v289 = vld [vmem:[%s1 + $0x33c] sm:$0xff]
    %v290 = vld [vmem:[%s1 + $0x344] sm:$0xf]
    %v291 = vld [vmem:[%s1 + $0x348] sm:$0xff]
    %v292 = vld [vmem:[%s1 + $0x350] sm:$0xf]
    %v293 = vld [vmem:[%s1 + $0x354] sm:$0xff]
    %v294 = vld [vmem:[%s1 + $0x35c] sm:$0xf]
    %v295 = vld [vmem:[%s1 + $0x360] sm:$0xff]
    %v296 = vld [vmem:[%s1 + $0x368] sm:$0xf]
    %v297 = vld [vmem:[%s1 + $0x36c] sm:$0xff]
    %v298 = vld [vmem:[%s1 + $0x374] sm:$0xf]
    %v299 = vld [vmem:[%s1 + $0x378] sm:$0xff]
    %v300 = vld [vmem:[%s1 + $0x380] sm:$0xf]
    %v301 = vld [vmem:[%s1 + $0x384] sm:$0xff]
    %v302 = vld [vmem:[%s1 + $0x38c] sm:$0xf]
    %v303 = vld [vmem:[%s1 + $0x390] sm:$0xff]
    %v304 = vld [vmem:[%s1 + $0x398] sm:$0xf]
    %v305 = vld [vmem:[%s1 + $0x39c] sm:$0xff]
    %v306 = vld [vmem:[%s1 + $0x3a4] sm:$0xf]
    %v307 = vld [vmem:[%s1 + $0x3a8] sm:$0xff]
    %v308 = vld [vmem:[%s1 + $0x3b0] sm:$0xf]
    %v309 = vld [vmem:[%s1 + $0x3b4] sm:$0xff]
    %v310 = vld [vmem:[%s1 + $0x3bc] sm:$0xf]
    %v311 = vld [vmem:[%s1 + $0x3c0] sm:$0xff]
    %v312 = vld [vmem:[%s1 + $0x3c8] sm:$0xf]
    %v313 = vld [vmem:[%s1 + $0x3cc] sm:$0xff]
    %v314 = vld [vmem:[%s1 + $0x3d4] sm:$0xf]
    %v315 = vld [vmem:[%s1 + $0x3d8] sm:$0xff]
    %v316 = vld [vmem:[%s1 + $0x3e0] sm:$0xf]
    %v317 = vld [vmem:[%s1 + $0x3e4] sm:$0xff]
    %v318 = vld [vmem:[%s1 + $0x3ec] sm:$0xf]
    %v319 = vld [vmem:[%s1 + $0x3f0] sm:$0xff]
    %v320 = vld [vmem:[%s1 + $0x3f8] sm:$0xf]
    %v321 = vld [vmem:[%s1 + $0x3fc] sm:$0xff]
    %v322 = vld [vmem:[%s1 + $0x404] sm:$0xf]
    %v323 = vld [vmem:[%s1 + $0x408] sm:$0xff]
    %v324 = vld [vmem:[%s1 + $0x410] sm:$0xf]
    %v325 = vld [vmem:[%s1 + $0x414] sm:$0xff]
    %v326 = vld [vmem:[%s1 + $0x41c] sm:$0xf]
    %v327 = vld [vmem:[%s1 + $0x420] sm:$0xff]
    %v328 = vld [vmem:[%s1 + $0x428] sm:$0xf]
    %v329 = vld [vmem:[%s1 + $0x42c] sm:$0xff]
    %v330 = vld [vmem:[%s1 + $0x434] sm:$0xf]
    %v331 = vld [vmem:[%s1 + $0x438] sm:$0xff]
    %v332 = vld [vmem:[%s1 + $0x440] sm:$0xf]
    %v333 = vld [vmem:[%s1 + $0x444] sm:$0xff]
    %v334 = vld [vmem:[%s1 + $0x44c] sm:$0xf]
    %v335 = vld [vmem:[%s1 + $0x450] sm:$0xff]
    %v336 = vld [vmem:[%s1 + $0x458] sm:$0xf]
    %v337 = vld [vmem:[%s1 + $0x45c] sm:$0xff]
    %v338 = vld [vmem:[%s1 + $0x464] sm:$0xf]
    %v339 = vld [vmem:[%s1 + $0x468] sm:$0xff]
    %v340 = vld [vmem:[%s1 + $0x470] sm:$0xf]
    %v341 = vld [vmem:[%s1 + $0x474] sm:$0xff]
    %v342 = vld [vmem:[%s1 + $0x47c] sm:$0xf]
    %v343 = vld [vmem:[%s1 + $0x480] sm:$0xff]
    %v344 = vld [vmem:[%s1 + $0x488] sm:$0xf]
    %v345 = vld [vmem:[%s1 + $0x48c] sm:$0xff]
    %v346 = vld [vmem:[%s1 + $0x494] sm:$0xf]
    %v347 = vld [vmem:[%s1 + $0x498] sm:$0xff]
    %v348 = vld [vmem:[%s1 + $0x4a0] sm:$0xf]
    %v349 = vld [vmem:[%s1 + $0x4a4] sm:$0xff]
    %v350 = vld [vmem:[%s1 + $0x4ac] sm:$0xf]
    %v351 = vld [vmem:[%s1 + $0x4b0] sm:$0xff]
    %v352 = vld [vmem:[%s1 + $0x4b8] sm:$0xf]
    %v353 = vld [vmem:[%s1 + $0x4bc] sm:$0xff]
    %v354 = vld [vmem:[%s1 + $0x4c4] sm:$0xf]
    %v355 = vld [vmem:[%s1 + $0x4c8] sm:$0xff]
    %v356 = vld [vmem:[%s1 + $0x4d0] sm:$0xf]
    %v357 = vld [vmem:[%s1 + $0x4d4] sm:$0xff]
    %v358 = vld [vmem:[%s1 + $0x4dc] sm:$0xf]
    %v359 = vld [vmem:[%s1 + $0x4e0] sm:$0xff]
    %v360 = vld [vmem:[%s1 + $0x4e8] sm:$0xf]
    %v361 = vld [vmem:[%s1 + $0x4ec] sm:$0xff]
    %v362 = vld [vmem:[%s1 + $0x4f4] sm:$0xf]
    %v363 = vld [vmem:[%s1 + $0x4f8] sm:$0xff]
    %v364 = vld [vmem:[%s1 + $0x500] sm:$0xf]
    %v365 = vld [vmem:[%s1 + $0x504] sm:$0xff]
    %v366 = vld [vmem:[%s1 + $0x50c] sm:$0xf]
    %v367 = vld [vmem:[%s1 + $0x510] sm:$0xff]
    %v368 = vld [vmem:[%s1 + $0x518] sm:$0xf]
    %v369 = vld [vmem:[%s1 + $0x51c] sm:$0xff]
    %v370 = vld [vmem:[%s1 + $0x524] sm:$0xf]
    %v371 = vld [vmem:[%s1 + $0x528] sm:$0xff]
    %v372 = vld [vmem:[%s1 + $0x530] sm:$0xf]
    %v373 = vld [vmem:[%s1 + $0x534] sm:$0xff]
    %v374 = vld [vmem:[%s1 + $0x53c] sm:$0xf]
    %v375 = vld [vmem:[%s1 + $0x540] sm:$0xff]
    %v376 = vld [vmem:[%s1 + $0x548] sm:$0xf]
    %v377 = vld [vmem:[%s1 + $0x54c] sm:$0xff]
    %v378 = vld [vmem:[%s1 + $0x554] sm:$0xf]
    %v379 = vld [vmem:[%s1 + $0x558] sm:$0xff]
    %v380 = vld [vmem:[%s1 + $0x560] sm:$0xf]
    %v381 = vld [vmem:[%s1 + $0x564] sm:$0xff]
    %v382 = vld [vmem:[%s1 + $0x56c] sm:$0xf]
    %v383 = vld [vmem:[%s1 + $0x570] sm:$0xff]
    %v384 = vld [vmem:[%s1 + $0x578] sm:$0xf]
    %v385 = vld [vmem:[%s1 + $0x57c] sm:$0xff]
    %v386 = vld [vmem:[%s1 + $0x584] sm:$0xf]
    %v387 = vld [vmem:[%s1 + $0x588] sm:$0xff]
    %v388 = vld [vmem:[%s1 + $0x590] sm:$0xf]
    %v389 = vld [vmem:[%s1 + $0x594] sm:$0xff]
    %v390 = vld [vmem:[%s1 + $0x59c] sm:$0xf]
    %v391 = vld [vmem:[%s1 + $0x5a0] sm:$0xff]
    %v392 = vld [vmem:[%s1 + $0x5a8] sm:$0xf]
    %v393 = vld [vmem:[%s1 + $0x5ac] sm:$0xff]
    %v394 = vld [vmem:[%s1 + $0x5b4] sm:$0xf]
    %v395 = vld [vmem:[%s1 + $0x5b8] sm:$0xff]
    %v396 = vld [vmem:[%s1 + $0x5c0] sm:$0xf]
    %v397 = vld [vmem:[%s1 + $0x5c4] sm:$0xff]
    %v398 = vld [vmem:[%s1 + $0x5cc] sm:$0xf]
    %v399 = vld [vmem:[%s1 + $0x5d0] sm:$0xff]
    %v400 = vld [vmem:[%s1 + $0x5d8] sm:$0xf]
    %v401 = vld [vmem:[%s1 + $0x5dc] sm:$0xff]
    %v402 = vld [vmem:[%s1 + $0x5e4] sm:$0xf]
    %v403 = vld [vmem:[%s1 + $0x5e8] sm:$0xff]
    %v404 = vld [vmem:[%s1 + $0x5f0] sm:$0xf]
    %v405 = vld [vmem:[%s1 + $0x5f4] sm:$0xff]
    %v406 = vld [vmem:[%s1 + $0x5fc] sm:$0xf]
    %v407 = vld [vmem:[%s1 + $0x600] sm:$0xff]
    %v408 = vld [vmem:[%s1 + $0x608] sm:$0xf]
    %v409 = vld [vmem:[%s1 + $0x60c] sm:$0xff]
    %v410 = vld [vmem:[%s1 + $0x614] sm:$0xf]
    %v411 = vld [vmem:[%s1 + $0x618] sm:$0xff]
    %v412 = vld [vmem:[%s1 + $0x620] sm:$0xf]
    %v413 = vld [vmem:[%s1 + $0x624] sm:$0xff]
    %v414 = vld [vmem:[%s1 + $0x62c] sm:$0xf]
    %v415 = vld [vmem:[%s1 + $0x630] sm:$0xff]
    %v416 = vld [vmem:[%s1 + $0x638] sm:$0xf]
    %v417 = vld [vmem:[%s1 + $0x63c] sm:$0xff]
    %v418 = vld [vmem:[%s1 + $0x644] sm:$0xf]
    %v419 = vld [vmem:[%s1 + $0x648] sm:$0xff]
    %v420 = vld [vmem:[%s1 + $0x650] sm:$0xf]
    %v421 = vld [vmem:[%s1 + $0x654] sm:$0xff]
    %v422 = vld [vmem:[%s1 + $0x65c] sm:$0xf]
    %v423 = vld [vmem:[%s1 + $0x660] sm:$0xff]
    %v424 = vld [vmem:[%s1 + $0x668] sm:$0xf]
    %v425 = vld [vmem:[%s1 + $0x66c] sm:$0xff]
    %v426 = vld [vmem:[%s1 + $0x674] sm:$0xf]
    %v427 = vld [vmem:[%s1 + $0x678] sm:$0xff]
    %v428 = vld [vmem:[%s1 + $0x680] sm:$0xf]
    %v429 = vld [vmem:[%s1 + $0x684] sm:$0xff]
    %v430 = vld [vmem:[%s1 + $0x68c] sm:$0xf]
    %v431 = vld [vmem:[%s1 + $0x690] sm:$0xff]
    %v432 = vld [vmem:[%s1 + $0x698] sm:$0xf]
    %v433 = vld [vmem:[%s1 + $0x69c] sm:$0xff]
    %v434 = vld [vmem:[%s1 + $0x6a4] sm:$0xf]
    %v435 = vld [vmem:[%s1 + $0x6a8] sm:$0xff]
    %v436 = vld [vmem:[%s1 + $0x6b0] sm:$0xf]
    %v437 = vld [vmem:[%s1 + $0x6b4] sm:$0xff]
    %v438 = vld [vmem:[%s1 + $0x6bc] sm:$0xf]
    %v439 = vld [vmem:[%s1 + $0x6c0] sm:$0xff]
    %v440 = vld [vmem:[%s1 + $0x6c8] sm:$0xf]
    %v441 = vld [vmem:[%s1 + $0x6cc] sm:$0xff]
    %v442 = vld [vmem:[%s1 + $0x6d4] sm:$0xf]
    %v443 = vld [vmem:[%s1 + $0x6d8] sm:$0xff]
    %v444 = vld [vmem:[%s1 + $0x6e0] sm:$0xf]
    %v445 = vld [vmem:[%s1 + $0x6e4] sm:$0xff]
    %v446 = vld [vmem:[%s1 + $0x6ec] sm:$0xf]
    %v447 = vld [vmem:[%s1 + $0x6f0] sm:$0xff]
    %v448 = vld [vmem:[%s1 + $0x6f8] sm:$0xf]
    %v449 = vld [vmem:[%s1 + $0x6fc] sm:$0xff]
    %v450 = vld [vmem:[%s1 + $0x704] sm:$0xf]
    %v451 = vld [vmem:[%s1 + $0x708] sm:$0xff]
    %v452 = vld [vmem:[%s1 + $0x710] sm:$0xf]
    %v453 = vld [vmem:[%s1 + $0x714] sm:$0xff]
    %v454 = vld [vmem:[%s1 + $0x71c] sm:$0xf]
    %v455 = vld [vmem:[%s1 + $0x720] sm:$0xff]
    %v456 = vld [vmem:[%s1 + $0x728] sm:$0xf]
    %v457 = vld [vmem:[%s1 + $0x72c] sm:$0xff]
    %v458 = vld [vmem:[%s1 + $0x734] sm:$0xf]
    %v459 = vld [vmem:[%s1 + $0x738] sm:$0xff]
    %v460 = vld [vmem:[%s1 + $0x740] sm:$0xf]
    %v461 = vld [vmem:[%s1 + $0x744] sm:$0xff]
    %v462 = vld [vmem:[%s1 + $0x74c] sm:$0xf]
    %v463 = vld [vmem:[%s1 + $0x750] sm:$0xff]
    %v464 = vld [vmem:[%s1 + $0x758] sm:$0xf]
    %v465 = vld [vmem:[%s1 + $0x75c] sm:$0xff]
    %v466 = vld [vmem:[%s1 + $0x764] sm:$0xf]
    %v467 = vld [vmem:[%s1 + $0x768] sm:$0xff]
    %v468 = vld [vmem:[%s1 + $0x770] sm:$0xf]
    %v469 = vld [vmem:[%s1 + $0x774] sm:$0xff]
    %v470 = vld [vmem:[%s1 + $0x77c] sm:$0xf]
    %v471 = vld [vmem:[%s1 + $0x780] sm:$0xff]
    %v472 = vld [vmem:[%s1 + $0x788] sm:$0xf]
    %v473 = vld [vmem:[%s1 + $0x78c] sm:$0xff]
    %v474 = vld [vmem:[%s1 + $0x794] sm:$0xf]
    %v475 = vld [vmem:[%s1 + $0x798] sm:$0xff]
    %v476 = vld [vmem:[%s1 + $0x7a0] sm:$0xf]
    %v477 = vld [vmem:[%s1 + $0x7a4] sm:$0xff]
    %v478 = vld [vmem:[%s1 + $0x7ac] sm:$0xf]
    %v479 = vld [vmem:[%s1 + $0x7b0] sm:$0xff]
    %v480 = vld [vmem:[%s1 + $0x7b8] sm:$0xf]
    %v481 = vld [vmem:[%s1 + $0x7bc] sm:$0xff]
    %v482 = vld [vmem:[%s1 + $0x7c4] sm:$0xf]
    %v483 = vld [vmem:[%s1 + $0x7c8] sm:$0xff]
    %v484 = vld [vmem:[%s1 + $0x7d0] sm:$0xf]
    %v485 = vld [vmem:[%s1 + $0x7d4] sm:$0xff]
    %v486 = vld [vmem:[%s1 + $0x7dc] sm:$0xf]
    %v487 = vld [vmem:[%s1 + $0x7e0] sm:$0xff]
    %v488 = vld [vmem:[%s1 + $0x7e8] sm:$0xf]
    %v489 = vld [vmem:[%s1 + $0x7ec] sm:$0xff]
    %v490 = vld [vmem:[%s1 + $0x7f4] sm:$0xf]
    %v491 = vld [vmem:[%s1 + $0x7f8] sm:$0xff]
    %v492 = vld [vmem:[%s1 + $0x800] sm:$0xf]
    %v493 = vld [vmem:[%s1 + $0x804] sm:$0xff]
    %v494 = vld [vmem:[%s1 + $0x80c] sm:$0xf]
    %v495 = vld [vmem:[%s1 + $0x810] sm:$0xff]
    %v496 = vld [vmem:[%s1 + $0x818] sm:$0xf]
    %v497 = vld [vmem:[%s1 + $0x81c] sm:$0xff]
    %v498 = vld [vmem:[%s1 + $0x824] sm:$0xf]
    %v499 = vld [vmem:[%s1 + $0x828] sm:$0xff]
    %v500 = vld [vmem:[%s1 + $0x830] sm:$0xf]
    %v501 = vld [vmem:[%s1 + $0x834] sm:$0xff]
    %v502 = vld [vmem:[%s1 + $0x83c] sm:$0xf]
    %v503 = vld [vmem:[%s1 + $0x840] sm:$0xff]
    %v504 = vld [vmem:[%s1 + $0x848] sm:$0xf]
    %v505 = vld [vmem:[%s1 + $0x84c] sm:$0xff]
    %v506 = vld [vmem:[%s1 + $0x854] sm:$0xf]
    %v507 = vld [vmem:[%s1 + $0x858] sm:$0xff]
    %v508 = vld [vmem:[%s1 + $0x860] sm:$0xf]
    %v509 = vld [vmem:[%s1 + $0x864] sm:$0xff]
    %v510 = vld [vmem:[%s1 + $0x86c] sm:$0xf]
    %v511 = vld [vmem:[%s1 + $0x870] sm:$0xff]
    %v512 = vld [vmem:[%s1 + $0x878] sm:$0xf]
    %v513 = vld [vmem:[%s1 + $0x87c] sm:$0xff]
    %v514 = vld [vmem:[%s1 + $0x884] sm:$0xf]
    %v515 = vld [vmem:[%s1 + $0x888] sm:$0xff]
    %v516 = vld [vmem:[%s1 + $0x890] sm:$0xf]
    %v517 = vld [vmem:[%s1 + $0x894] sm:$0xff]
    %v518 = vld [vmem:[%s1 + $0x89c] sm:$0xf]
    %v519 = vld [vmem:[%s1 + $0x8a0] sm:$0xff]
    %v520 = vld [vmem:[%s1 + $0x8a8] sm:$0xf]
    %v521 = vld [vmem:[%s1 + $0x8ac] sm:$0xff]
    %v522 = vld [vmem:[%s1 + $0x8b4] sm:$0xf]
    %v523 = vld [vmem:[%s1 + $0x8b8] sm:$0xff]
    %v524 = vld [vmem:[%s1 + $0x8c0] sm:$0xf]
    %v525 = vld [vmem:[%s1 + $0x8c4] sm:$0xff]
    %v526 = vld [vmem:[%s1 + $0x8cc] sm:$0xf]
    %v527 = vld [vmem:[%s1 + $0x8d0] sm:$0xff]
    %v528 = vld [vmem:[%s1 + $0x8d8] sm:$0xf]
    %v529 = vld [vmem:[%s1 + $0x8dc] sm:$0xff]
    %v530 = vld [vmem:[%s1 + $0x8e4] sm:$0xf]
    %v531 = vld [vmem:[%s1 + $0x8e8] sm:$0xff]
    %v532 = vld [vmem:[%s1 + $0x8f0] sm:$0xf]
    %v533 = vld [vmem:[%s1 + $0x8f4] sm:$0xff]
    %v534 = vld [vmem:[%s1 + $0x8fc] sm:$0xf]
    %v535 = vld [vmem:[%s1 + $0x900] sm:$0xff]
    %v536 = vld [vmem:[%s1 + $0x908] sm:$0xf]
    %v537 = vld [vmem:[%s1 + $0x90c] sm:$0xff]
    %v538 = vld [vmem:[%s1 + $0x914] sm:$0xf]
    %v539 = vld [vmem:[%s1 + $0x918] sm:$0xff]
    %v540 = vld [vmem:[%s1 + $0x920] sm:$0xf]
    %v541 = vld [vmem:[%s1 + $0x924] sm:$0xff]
    %v542 = vld [vmem:[%s1 + $0x92c] sm:$0xf]
    %v543 = vld [vmem:[%s1 + $0x930] sm:$0xff]
    %v544 = vld [vmem:[%s1 + $0x938] sm:$0xf]
    %v545 = vld [vmem:[%s1 + $0x93c] sm:$0xff]
    %v546 = vld [vmem:[%s1 + $0x944] sm:$0xf]
    %v547 = vld [vmem:[%s1 + $0x948] sm:$0xff]
    %v548 = vld [vmem:[%s1 + $0x950] sm:$0xf]
    %v549 = vld [vmem:[%s1 + $0x954] sm:$0xff]
    %v550 = vld [vmem:[%s1 + $0x95c] sm:$0xf]
    %v551 = vld [vmem:[%s1 + $0x960] sm:$0xff]
    %v552 = vld [vmem:[%s1 + $0x968] sm:$0xf]
    %v553 = vld [vmem:[%s1 + $0x96c] sm:$0xff]
    %v554 = vld [vmem:[%s1 + $0x974] sm:$0xf]
    %v555 = vld [vmem:[%s1 + $0x978] sm:$0xff]
    %v556 = vld [vmem:[%s1 + $0x980] sm:$0xf]
    %v557 = vld [vmem:[%s1 + $0x984] sm:$0xff]
    %v558 = vld [vmem:[%s1 + $0x98c] sm:$0xf]
    %v559 = vld [vmem:[%s1 + $0x990] sm:$0xff]
    %v560 = vld [vmem:[%s1 + $0x998] sm:$0xf]
    %v561 = vld [vmem:[%s1 + $0x99c] sm:$0xff]
    %v562 = vld [vmem:[%s1 + $0x9a4] sm:$0xf]
    %v563 = vld [vmem:[%s1 + $0x9a8] sm:$0xff]
    %v564 = vld [vmem:[%s1 + $0x9b0] sm:$0xf]
    %v565 = vld [vmem:[%s1 + $0x9b4] sm:$0xff]
    %v566 = vld [vmem:[%s1 + $0x9bc] sm:$0xf]
    %v567 = vld [vmem:[%s1 + $0x9c0] sm:$0xff]
    %v568 = vld [vmem:[%s1 + $0x9c8] sm:$0xf]
    %v569 = vld [vmem:[%s1 + $0x9cc] sm:$0xff]
    %v570 = vld [vmem:[%s1 + $0x9d4] sm:$0xf]
    %v571 = vld [vmem:[%s1 + $0x9d8] sm:$0xff]
    %v572 = vld [vmem:[%s1 + $0x9e0] sm:$0xf]
    %v573 = vld [vmem:[%s1 + $0x9e4] sm:$0xff]
    %v574 = vld [vmem:[%s1 + $0x9ec] sm:$0xf]
    %v575 = vld [vmem:[%s1 + $0x9f0] sm:$0xff]
    %v576 = vld [vmem:[%s1 + $0x9f8] sm:$0xf]
    %v577 = vld [vmem:[%s1 + $0x9fc] sm:$0xff]
    %v578 = vld [vmem:[%s1 + $0xa04] sm:$0xf]
    %v579 = vld [vmem:[%s1 + $0xa08] sm:$0xff]
    %v580 = vld [vmem:[%s1 + $0xa10] sm:$0xf]
    %v581 = vld [vmem:[%s1 + $0xa14] sm:$0xff]
    %v582 = vld [vmem:[%s1 + $0xa1c] sm:$0xf]
    %v583 = vld [vmem:[%s1 + $0xa20] sm:$0xff]
    %v584 = vld [vmem:[%s1 + $0xa28] sm:$0xf]
    %v585 = vld [vmem:[%s1 + $0xa2c] sm:$0xff]
    %v586 = vld [vmem:[%s1 + $0xa34] sm:$0xf]
    %v587 = vld [vmem:[%s1 + $0xa38] sm:$0xff]
    %v588 = vld [vmem:[%s1 + $0xa40] sm:$0xf]
    %v589 = vld [vmem:[%s1 + $0xa44] sm:$0xff]
    %v590 = vld [vmem:[%s1 + $0xa4c] sm:$0xf]
    %v591 = vld [vmem:[%s1 + $0xa50] sm:$0xff]
    %v592 = vld [vmem:[%s1 + $0xa58] sm:$0xf]
    %v593 = vld [vmem:[%s1 + $0xa5c] sm:$0xff]
    %v594 = vld [vmem:[%s1 + $0xa64] sm:$0xf]
    %v595 = vld [vmem:[%s1 + $0xa68] sm:$0xff]
    %v596 = vld [vmem:[%s1 + $0xa70] sm:$0xf]
    %v597 = vld [vmem:[%s1 + $0xa74] sm:$0xff]
    %v598 = vld [vmem:[%s1 + $0xa7c] sm:$0xf]
    %v599 = vld [vmem:[%s1 + $0xa80] sm:$0xff]
    %v600 = vld [vmem:[%s1 + $0xa88] sm:$0xf]
    %v601 = vld [vmem:[%s1 + $0xa8c] sm:$0xff]
    %v602 = vld [vmem:[%s1 + $0xa94] sm:$0xf]
    %v603 = vld [vmem:[%s1 + $0xa98] sm:$0xff]
    %v604 = vld [vmem:[%s1 + $0xaa0] sm:$0xf]
    %v605 = vld [vmem:[%s1 + $0xaa4] sm:$0xff]
    %v606 = vld [vmem:[%s1 + $0xaac] sm:$0xf]
    %v607 = vld [vmem:[%s1 + $0xab0] sm:$0xff]
    %v608 = vld [vmem:[%s1 + $0xab8] sm:$0xf]
    %v609 = vld [vmem:[%s1 + $0xabc] sm:$0xff]
    %v610 = vld [vmem:[%s1 + $0xac4] sm:$0xf]
    %v611 = vld [vmem:[%s1 + $0xac8] sm:$0xff]
    %v612 = vld [vmem:[%s1 + $0xad0] sm:$0xf]
    %v613 = vld [vmem:[%s1 + $0xad4] sm:$0xff]
    %v614 = vld [vmem:[%s1 + $0xadc] sm:$0xf]
    %v615 = vld [vmem:[%s1 + $0xae0] sm:$0xff]
    %v616 = vld [vmem:[%s1 + $0xae8] sm:$0xf]
    %v617 = vld [vmem:[%s1 + $0xaec] sm:$0xff]
    %v618 = vld [vmem:[%s1 + $0xaf4] sm:$0xf]
    %v619 = vld [vmem:[%s1 + $0xaf8] sm:$0xff]
    %v620 = vld [vmem:[%s1 + $0xb00] sm:$0xf]
    %v621 = vld [vmem:[%s1 + $0xb04] sm:$0xff]
    %v622 = vld [vmem:[%s1 + $0xb0c] sm:$0xf]
    %v623 = vld [vmem:[%s1 + $0xb10] sm:$0xff]
    %v624 = vld [vmem:[%s1 + $0xb18] sm:$0xf]
    %v625 = vld [vmem:[%s1 + $0xb1c] sm:$0xff]
    %v626 = vld [vmem:[%s1 + $0xb24] sm:$0xf]
    %v627 = vld [vmem:[%s1 + $0xb28] sm:$0xff]
    %v628 = vld [vmem:[%s1 + $0xb30] sm:$0xf]
    %v629 = vld [vmem:[%s1 + $0xb34] sm:$0xff]
    %v630 = vld [vmem:[%s1 + $0xb3c] sm:$0xf]
    %v631 = vld [vmem:[%s1 + $0xb40] sm:$0xff]
    %v632 = vld [vmem:[%s1 + $0xb48] sm:$0xf]
    %v633 = vld [vmem:[%s1 + $0xb4c] sm:$0xff]
    %v634 = vld [vmem:[%s1 + $0xb54] sm:$0xf]
    %v635 = vld [vmem:[%s1 + $0xb58] sm:$0xff]
    %v636 = vld [vmem:[%s1 + $0xb60] sm:$0xf]
    %v637 = vld [vmem:[%s1 + $0xb64] sm:$0xff]
    %v638 = vld [vmem:[%s1 + $0xb6c] sm:$0xf]
    %v639 = vld [vmem:[%s1 + $0xb70] sm:$0xff]
    %v640 = vld [vmem:[%s1 + $0xb78] sm:$0xf]
    %v641 = vld [vmem:[%s1 + $0xb7c] sm:$0xff]
    %v642 = vld [vmem:[%s1 + $0xb84] sm:$0xf]
    %v643 = vld [vmem:[%s1 + $0xb88] sm:$0xff]
    %v644 = vld [vmem:[%s1 + $0xb90] sm:$0xf]
    %v645 = vld [vmem:[%s1 + $0xb94] sm:$0xff]
    %v646 = vld [vmem:[%s1 + $0xb9c] sm:$0xf]
    %v647 = vld [vmem:[%s1 + $0xba0] sm:$0xff]
    %v648 = vld [vmem:[%s1 + $0xba8] sm:$0xf]
    %v649 = vld [vmem:[%s1 + $0xbac] sm:$0xff]
    %v650 = vld [vmem:[%s1 + $0xbb4] sm:$0xf]
    %v651 = vld [vmem:[%s1 + $0xbb8] sm:$0xff]
    %v652 = vld [vmem:[%s1 + $0xbc0] sm:$0xf]
    %v653 = vld [vmem:[%s1 + $0xbc4] sm:$0xff]
    %v654 = vld [vmem:[%s1 + $0xbcc] sm:$0xf]
    %v655 = vld [vmem:[%s1 + $0xbd0] sm:$0xff]
    %v656 = vld [vmem:[%s1 + $0xbd8] sm:$0xf]
    %v657 = vld [vmem:[%s1 + $0xbdc] sm:$0xff]
    %v658 = vld [vmem:[%s1 + $0xbe4] sm:$0xf]
    %v659 = vld [vmem:[%s1 + $0xbe8] sm:$0xff]
    %v660 = vld [vmem:[%s1 + $0xbf0] sm:$0xf]
    %v661 = vld [vmem:[%s1 + $0xbf4] sm:$0xff]
    %v662 = vld [vmem:[%s1 + $0xbfc] sm:$0xf]
    %v663 = vld [vmem:[%s1 + $0xc00] sm:$0xff]
    %v664 = vld [vmem:[%s1 + $0xc08] sm:$0xf]
    %v665 = vld [vmem:[%s1 + $0xc0c] sm:$0xff]
    %v666 = vld [vmem:[%s1 + $0xc14] sm:$0xf]
    %v667 = vld [vmem:[%s1 + $0xc18] sm:$0xff]
    %v668 = vld [vmem:[%s1 + $0xc20] sm:$0xf]
    %v669 = vld [vmem:[%s1 + $0xc24] sm:$0xff]
    %v670 = vld [vmem:[%s1 + $0xc2c] sm:$0xf]
    %v671 = vld [vmem:[%s1 + $0xc30] sm:$0xff]
    %v672 = vld [vmem:[%s1 + $0xc38] sm:$0xf]
    %v673 = vld [vmem:[%s1 + $0xc3c] sm:$0xff]
    %v674 = vld [vmem:[%s1 + $0xc44] sm:$0xf]
    %v675 = vld [vmem:[%s1 + $0xc48] sm:$0xff]
    %v676 = vld [vmem:[%s1 + $0xc50] sm:$0xf]
    %v677 = vld [vmem:[%s1 + $0xc54] sm:$0xff]
    %v678 = vld [vmem:[%s1 + $0xc5c] sm:$0xf]
    %v679 = vld [vmem:[%s1 + $0xc60] sm:$0xff]
    %v680 = vld [vmem:[%s1 + $0xc68] sm:$0xf]
    %v681 = vld [vmem:[%s1 + $0xc6c] sm:$0xff]
    %v682 = vld [vmem:[%s1 + $0xc74] sm:$0xf]
    %v683 = vld [vmem:[%s1 + $0xc78] sm:$0xff]
    %v684 = vld [vmem:[%s1 + $0xc80] sm:$0xf]
    %v685 = vld [vmem:[%s1 + $0xc84] sm:$0xff]
    %v686 = vld [vmem:[%s1 + $0xc8c] sm:$0xf]
    %v687 = vld [vmem:[%s1 + $0xc90] sm:$0xff]
    %v688 = vld [vmem:[%s1 + $0xc98] sm:$0xf]
    %v689 = vld [vmem:[%s1 + $0xc9c] sm:$0xff]
    %v690 = vld [vmem:[%s1 + $0xca4] sm:$0xf]
    %v691 = vld [vmem:[%s1 + $0xca8] sm:$0xff]
    %v692 = vld [vmem:[%s1 + $0xcb0] sm:$0xf]
    %v693 = vld [vmem:[%s1 + $0xcb4] sm:$0xff]
    %v694 = vld [vmem:[%s1 + $0xcbc] sm:$0xf]
    %v695 = vld [vmem:[%s1 + $0xcc0] sm:$0xff]
    %v696 = vld [vmem:[%s1 + $0xcc8] sm:$0xf]
    %v697 = vld [vmem:[%s1 + $0xccc] sm:$0xff]
    %v698 = vld [vmem:[%s1 + $0xcd4] sm:$0xf]
    %v699 = vld [vmem:[%s1 + $0xcd8] sm:$0xff]
    %v700 = vld [vmem:[%s1 + $0xce0] sm:$0xf]
    %v701 = vld [vmem:[%s1 + $0xce4] sm:$0xff]
    %v702 = vld [vmem:[%s1 + $0xcec] sm:$0xf]
    %v703 = vld [vmem:[%s1 + $0xcf0] sm:$0xff]
    %v704 = vld [vmem:[%s1 + $0xcf8] sm:$0xf]
    %v705 = vld [vmem:[%s1 + $0xcfc] sm:$0xff]
    %v706 = vld [vmem:[%s1 + $0xd04] sm:$0xf]
    %v707 = vld [vmem:[%s1 + $0xd08] sm:$0xff]
    %v708 = vld [vmem:[%s1 + $0xd10] sm:$0xf]
    %v709 = vld [vmem:[%s1 + $0xd14] sm:$0xff]
    %v710 = vld [vmem:[%s1 + $0xd1c] sm:$0xf]
    %v711 = vld [vmem:[%s1 + $0xd20] sm:$0xff]
    %v712 = vld [vmem:[%s1 + $0xd28] sm:$0xf]
    %v713 = vld [vmem:[%s1 + $0xd2c] sm:$0xff]
    %v714 = vld [vmem:[%s1 + $0xd34] sm:$0xf]
    %v715 = vld [vmem:[%s1 + $0xd38] sm:$0xff]
    %v716 = vld [vmem:[%s1 + $0xd40] sm:$0xf]
    %v717 = vld [vmem:[%s1 + $0xd44] sm:$0xff]
    %v718 = vld [vmem:[%s1 + $0xd4c] sm:$0xf]
    %v719 = vld [vmem:[%s1 + $0xd50] sm:$0xff]
    %v720 = vld [vmem:[%s1 + $0xd58] sm:$0xf]
    %v721 = vld [vmem:[%s1 + $0xd5c] sm:$0xff]
    %v722 = vld [vmem:[%s1 + $0xd64] sm:$0xf]
    %v723 = vld [vmem:[%s1 + $0xd68] sm:$0xff]
    %v724 = vld [vmem:[%s1 + $0xd70] sm:$0xf]
    %v725 = vld [vmem:[%s1 + $0xd74] sm:$0xff]
    %v726 = vld [vmem:[%s1 + $0xd7c] sm:$0xf]
    %v727 = vld [vmem:[%s1 + $0xd80] sm:$0xff]
    %v728 = vld [vmem:[%s1 + $0xd88] sm:$0xf]
    %v729 = vld [vmem:[%s1 + $0xd8c] sm:$0xff]
    %v730 = vld [vmem:[%s1 + $0xd94] sm:$0xf]
    %v731 = vld [vmem:[%s1 + $0xd98] sm:$0xff]
    %v732 = vld [vmem:[%s1 + $0xda0] sm:$0xf]
    %v733 = vld [vmem:[%s1 + $0xda4] sm:$0xff]
    %v734 = vld [vmem:[%s1 + $0xdac] sm:$0xf]
    %v735 = vld [vmem:[%s1 + $0xdb0] sm:$0xff]
    %v736 = vld [vmem:[%s1 + $0xdb8] sm:$0xf]
    %v737 = vld [vmem:[%s1 + $0xdbc] sm:$0xff]
    %v738 = vld [vmem:[%s1 + $0xdc4] sm:$0xf]
    %v739 = vld [vmem:[%s1 + $0xdc8] sm:$0xff]
    %v740 = vld [vmem:[%s1 + $0xdd0] sm:$0xf]
    %v741 = vld [vmem:[%s1 + $0xdd4] sm:$0xff]
    %v742 = vld [vmem:[%s1 + $0xddc] sm:$0xf]
    %v743 = vld [vmem:[%s1 + $0xde0] sm:$0xff]
    %v744 = vld [vmem:[%s1 + $0xde8] sm:$0xf]
    %v745 = vld [vmem:[%s1 + $0xdec] sm:$0xff]
    %v746 = vld [vmem:[%s1 + $0xdf4] sm:$0xf]
    %v747 = vld [vmem:[%s1 + $0xdf8] sm:$0xff]
    %v748 = vld [vmem:[%s1 + $0xe00] sm:$0xf]
    %v749 = vld [vmem:[%s1 + $0xe04] sm:$0xff]
    %v750 = vld [vmem:[%s1 + $0xe0c] sm:$0xf]
    %v751 = vld [vmem:[%s1 + $0xe10] sm:$0xff]
    %v752 = vld [vmem:[%s1 + $0xe18] sm:$0xf]
    %v753 = vld [vmem:[%s1 + $0xe1c] sm:$0xff]
    %v754 = vld [vmem:[%s1 + $0xe24] sm:$0xf]
    %v755 = vld [vmem:[%s1 + $0xe28] sm:$0xff]
    %v756 = vld [vmem:[%s1 + $0xe30] sm:$0xf]
    %v757 = vld [vmem:[%s1 + $0xe34] sm:$0xff]
    %v758 = vld [vmem:[%s1 + $0xe3c] sm:$0xf]
    %v759 = vld [vmem:[%s1 + $0xe40] sm:$0xff]
    %v760 = vld [vmem:[%s1 + $0xe48] sm:$0xf]
    %v761 = vld [vmem:[%s1 + $0xe4c] sm:$0xff]
    %v762 = vld [vmem:[%s1 + $0xe54] sm:$0xf]
    %v763 = vld [vmem:[%s1 + $0xe58] sm:$0xff]
    %v764 = vld [vmem:[%s1 + $0xe60] sm:$0xf]
    %v765 = vld [vmem:[%s1 + $0xe64] sm:$0xff]
    %v766 = vld [vmem:[%s1 + $0xe6c] sm:$0xf]
    %v767 = vld [vmem:[%s1 + $0xe70] sm:$0xff]
    %v768 = vld [vmem:[%s1 + $0xe78] sm:$0xf]
    %v769 = vld [vmem:[%s1 + $0xe7c] sm:$0xff]
    %v770 = vld [vmem:[%s1 + $0xe84] sm:$0xf]
    %v771 = vld [vmem:[%s1 + $0xe88] sm:$0xff]
    %v772 = vld [vmem:[%s1 + $0xe90] sm:$0xf]
    %v773 = vld [vmem:[%s1 + $0xe94] sm:$0xff]
    %v774 = vld [vmem:[%s1 + $0xe9c] sm:$0xf]
    %v775 = vld [vmem:[%s1 + $0xea0] sm:$0xff]
    %v776 = vld [vmem:[%s1 + $0xea8] sm:$0xf]
    %v777 = vld [vmem:[%s1 + $0xeac] sm:$0xff]
    %v778 = vld [vmem:[%s1 + $0xeb4] sm:$0xf]
    %v779 = vld [vmem:[%s1 + $0xeb8] sm:$0xff]
    %v780 = vld [vmem:[%s1 + $0xec0] sm:$0xf]
    %v781 = vld [vmem:[%s1 + $0xec4] sm:$0xff]
    %v782 = vld [vmem:[%s1 + $0xecc] sm:$0xf]
    %v783 = vld [vmem:[%s1 + $0xed0] sm:$0xff]
    %v784 = vld [vmem:[%s1 + $0xed8] sm:$0xf]
    %v785 = vld [vmem:[%s1 + $0xedc] sm:$0xff]
    %v786 = vld [vmem:[%s1 + $0xee4] sm:$0xf]
    %v787 = vld [vmem:[%s1 + $0xee8] sm:$0xff]
    %v788 = vld [vmem:[%s1 + $0xef0] sm:$0xf]
    %v789 = vld [vmem:[%s1 + $0xef4] sm:$0xff]
    %v790 = vld [vmem:[%s1 + $0xefc] sm:$0xf]
    %v791 = vld [vmem:[%s2] sm:$0x7]
    %v793 = vlaneseq
    %v794 = vshrl.u32 %v793, 7
    %v795 = vsub.s32 0, %v794
    %v796 = vrot.slane %v791, %v795
    %v797 = vlaneseq
    %v798 = vshrl.u32 %v797, 7
    %v799 = vsub.s32 1, %v798
    %v800 = vrot.slane %v791, %v799
    %v801 = vlaneseq
    %v802 = vshrl.u32 %v801, 7
    %v803 = vsub.s32 2, %v802
    %v804 = vrot.slane %v791, %v803
    %v1448 = vunpack.c.l.b16 %v151
    %v1449 = vunpack.c.h.b16 %v151
    %v1450 = vunpack.c.l.b16 %v152
    %v1451 = vunpack.c.l.b16 %v153
    %v1452 = vunpack.c.h.b16 %v153
    %v1453 = vunpack.c.l.b16 %v154
    %v1454 = vunpack.c.l.b16 %v155
    %v1455 = vunpack.c.h.b16 %v155
    %v1456 = vunpack.c.l.b16 %v156
    %v1457 = vunpack.c.l.b16 %v157
    %v1458 = vunpack.c.h.b16 %v157
    %v1459 = vunpack.c.l.b16 %v158
    %v1460 = vunpack.c.l.b16 %v159
    %v1461 = vunpack.c.h.b16 %v159
    %v1462 = vunpack.c.l.b16 %v160
    %v1463 = vunpack.c.l.b16 %v161
    %v1464 = vunpack.c.h.b16 %v161
    %v1465 = vunpack.c.l.b16 %v162
    %v1466 = vunpack.c.l.b16 %v163
    %v1467 = vunpack.c.h.b16 %v163
    %v1468 = vunpack.c.l.b16 %v164
    %v1469 = vunpack.c.l.b16 %v165
    %v1470 = vunpack.c.h.b16 %v165
    %v1471 = vunpack.c.l.b16 %v166
    %v1472 = vunpack.c.l.b16 %v167
    %v1473 = vunpack.c.h.b16 %v167
    %v1474 = vunpack.c.l.b16 %v168
    %v1475 = vunpack.c.l.b16 %v169
    %v1476 = vunpack.c.h.b16 %v169
    %v1477 = vunpack.c.l.b16 %v170
    %v1478 = vunpack.c.l.b16 %v171
    %v1479 = vunpack.c.h.b16 %v171
    %v1480 = vunpack.c.l.b16 %v172
    %v1481 = vunpack.c.l.b16 %v173
    %v1482 = vunpack.c.h.b16 %v173
    %v1483 = vunpack.c.l.b16 %v174
    %v1484 = vunpack.c.l.b16 %v175
    %v1485 = vunpack.c.h.b16 %v175
    %v1486 = vunpack.c.l.b16 %v176
    %v1487 = vunpack.c.l.b16 %v177
    %v1488 = vunpack.c.h.b16 %v177
    %v1489 = vunpack.c.l.b16 %v178
    %v1490 = vunpack.c.l.b16 %v179
    %v1491 = vunpack.c.h.b16 %v179
    %v1492 = vunpack.c.l.b16 %v180
    %v1493 = vunpack.c.l.b16 %v181
    %v1494 = vunpack.c.h.b16 %v181
    %v1495 = vunpack.c.l.b16 %v182
    %v1496 = vunpack.c.l.b16 %v183
    %v1497 = vunpack.c.h.b16 %v183
    %v1498 = vunpack.c.l.b16 %v184
    %v1499 = vunpack.c.l.b16 %v185
    %v1500 = vunpack.c.h.b16 %v185
    %v1501 = vunpack.c.l.b16 %v186
    %v1502 = vunpack.c.l.b16 %v187
    %v1503 = vunpack.c.h.b16 %v187
    %v1504 = vunpack.c.l.b16 %v188
    %v1505 = vunpack.c.l.b16 %v189
    %v1506 = vunpack.c.h.b16 %v189
    %v1507 = vunpack.c.l.b16 %v190
    %v1508 = vunpack.c.l.b16 %v191
    %v1509 = vunpack.c.h.b16 %v191
    %v1510 = vunpack.c.l.b16 %v192
    %v1511 = vunpack.c.l.b16 %v193
    %v1512 = vunpack.c.h.b16 %v193
    %v1513 = vunpack.c.l.b16 %v194
    %v1514 = vunpack.c.l.b16 %v195
    %v1515 = vunpack.c.h.b16 %v195
    %v1516 = vunpack.c.l.b16 %v196
    %v1517 = vunpack.c.l.b16 %v197
    %v1518 = vunpack.c.h.b16 %v197
    %v1519 = vunpack.c.l.b16 %v198
    %v1520 = vunpack.c.l.b16 %v199
    %v1521 = vunpack.c.h.b16 %v199
    %v1522 = vunpack.c.l.b16 %v200
    %v1523 = vunpack.c.l.b16 %v201
    %v1524 = vunpack.c.h.b16 %v201
    %v1525 = vunpack.c.l.b16 %v202
    %v1526 = vunpack.c.l.b16 %v203
    %v1527 = vunpack.c.h.b16 %v203
    %v1528 = vunpack.c.l.b16 %v204
    %v1529 = vunpack.c.l.b16 %v205
    %v1530 = vunpack.c.h.b16 %v205
    %v1531 = vunpack.c.l.b16 %v206
    %v1532 = vunpack.c.l.b16 %v207
    %v1533 = vunpack.c.h.b16 %v207
    %v1534 = vunpack.c.l.b16 %v208
    %v1535 = vunpack.c.l.b16 %v209
    %v1536 = vunpack.c.h.b16 %v209
    %v1537 = vunpack.c.l.b16 %v210
    %v1538 = vunpack.c.l.b16 %v211
    %v1539 = vunpack.c.h.b16 %v211
    %v1540 = vunpack.c.l.b16 %v212
    %v1541 = vunpack.c.l.b16 %v213
    %v1542 = vunpack.c.h.b16 %v213
    %v1543 = vunpack.c.l.b16 %v214
    %v1544 = vunpack.c.l.b16 %v215
    %v1545 = vunpack.c.h.b16 %v215
    %v1546 = vunpack.c.l.b16 %v216
    %v1547 = vunpack.c.l.b16 %v217
    %v1548 = vunpack.c.h.b16 %v217
    %v1549 = vunpack.c.l.b16 %v218
    %v1550 = vunpack.c.l.b16 %v219
    %v1551 = vunpack.c.h.b16 %v219
    %v1552 = vunpack.c.l.b16 %v220
    %v1553 = vunpack.c.l.b16 %v221
    %v1554 = vunpack.c.h.b16 %v221
    %v1555 = vunpack.c.l.b16 %v222
    %v1556 = vunpack.c.l.b16 %v223
    %v1557 = vunpack.c.h.b16 %v223
    %v1558 = vunpack.c.l.b16 %v224
    %v1559 = vunpack.c.l.b16 %v225
    %v1560 = vunpack.c.h.b16 %v225
    %v1561 = vunpack.c.l.b16 %v226
    %v1562 = vunpack.c.l.b16 %v227
    %v1563 = vunpack.c.h.b16 %v227
    %v1564 = vunpack.c.l.b16 %v228
    %v1565 = vunpack.c.l.b16 %v229
    %v1566 = vunpack.c.h.b16 %v229
    %v1567 = vunpack.c.l.b16 %v230
    %v1568 = vunpack.c.l.b16 %v231
    %v1569 = vunpack.c.h.b16 %v231
    %v1570 = vunpack.c.l.b16 %v232
    %v1571 = vunpack.c.l.b16 %v233
    %v1572 = vunpack.c.h.b16 %v233
    %v1573 = vunpack.c.l.b16 %v234
    %v1574 = vunpack.c.l.b16 %v235
    %v1575 = vunpack.c.h.b16 %v235
    %v1576 = vunpack.c.l.b16 %v236
    %v1577 = vunpack.c.l.b16 %v237
    %v1578 = vunpack.c.h.b16 %v237
    %v1579 = vunpack.c.l.b16 %v238
    %v1580 = vunpack.c.l.b16 %v239
    %v1581 = vunpack.c.h.b16 %v239
    %v1582 = vunpack.c.l.b16 %v240
    %v1583 = vunpack.c.l.b16 %v241
    %v1584 = vunpack.c.h.b16 %v241
    %v1585 = vunpack.c.l.b16 %v242
    %v1586 = vunpack.c.l.b16 %v243
    %v1587 = vunpack.c.h.b16 %v243
    %v1588 = vunpack.c.l.b16 %v244
    %v1589 = vunpack.c.l.b16 %v245
    %v1590 = vunpack.c.h.b16 %v245
    %v1591 = vunpack.c.l.b16 %v246
    %v1592 = vunpack.c.l.b16 %v247
    %v1593 = vunpack.c.h.b16 %v247
    %v1594 = vunpack.c.l.b16 %v248
    %v1595 = vunpack.c.l.b16 %v249
    %v1596 = vunpack.c.h.b16 %v249
    %v1597 = vunpack.c.l.b16 %v250
    %v1598 = vunpack.c.l.b16 %v251
    %v1599 = vunpack.c.h.b16 %v251
    %v1600 = vunpack.c.l.b16 %v252
    %v1601 = vunpack.c.l.b16 %v253
    %v1602 = vunpack.c.h.b16 %v253
    %v1603 = vunpack.c.l.b16 %v254
    %v1604 = vunpack.c.l.b16 %v255
    %v1605 = vunpack.c.h.b16 %v255
    %v1606 = vunpack.c.l.b16 %v256
    %v1607 = vunpack.c.l.b16 %v257
    %v1608 = vunpack.c.h.b16 %v257
    %v1609 = vunpack.c.l.b16 %v258
    %v1610 = vunpack.c.l.b16 %v259
    %v1611 = vunpack.c.h.b16 %v259
    %v1612 = vunpack.c.l.b16 %v260
    %v1613 = vunpack.c.l.b16 %v261
    %v1614 = vunpack.c.h.b16 %v261
    %v1615 = vunpack.c.l.b16 %v262
    %v1616 = vunpack.c.l.b16 %v263
    %v1617 = vunpack.c.h.b16 %v263
    %v1618 = vunpack.c.l.b16 %v264
    %v1619 = vunpack.c.l.b16 %v265
    %v1620 = vunpack.c.h.b16 %v265
    %v1621 = vunpack.c.l.b16 %v266
    %v1622 = vunpack.c.l.b16 %v267
    %v1623 = vunpack.c.h.b16 %v267
    %v1624 = vunpack.c.l.b16 %v268
    %v1625 = vunpack.c.l.b16 %v269
    %v1626 = vunpack.c.h.b16 %v269
    %v1627 = vunpack.c.l.b16 %v270
    %v1628 = vunpack.c.l.b16 %v271
    %v1629 = vunpack.c.h.b16 %v271
    %v1630 = vunpack.c.l.b16 %v272
    %v1631 = vunpack.c.l.b16 %v273
    %v1632 = vunpack.c.h.b16 %v273
    %v1633 = vunpack.c.l.b16 %v274
    %v1634 = vunpack.c.l.b16 %v275
    %v1635 = vunpack.c.h.b16 %v275
    %v1636 = vunpack.c.l.b16 %v276
    %v1637 = vunpack.c.l.b16 %v277
    %v1638 = vunpack.c.h.b16 %v277
    %v1639 = vunpack.c.l.b16 %v278
    %v1640 = vunpack.c.l.b16 %v279
    %v1641 = vunpack.c.h.b16 %v279
    %v1642 = vunpack.c.l.b16 %v280
    %v1643 = vunpack.c.l.b16 %v281
    %v1644 = vunpack.c.h.b16 %v281
    %v1645 = vunpack.c.l.b16 %v282
    %v1646 = vunpack.c.l.b16 %v283
    %v1647 = vunpack.c.h.b16 %v283
    %v1648 = vunpack.c.l.b16 %v284
    %v1649 = vunpack.c.l.b16 %v285
    %v1650 = vunpack.c.h.b16 %v285
    %v1651 = vunpack.c.l.b16 %v286
    %v1652 = vunpack.c.l.b16 %v287
    %v1653 = vunpack.c.h.b16 %v287
    %v1654 = vunpack.c.l.b16 %v288
    %v1655 = vunpack.c.l.b16 %v289
    %v1656 = vunpack.c.h.b16 %v289
    %v1657 = vunpack.c.l.b16 %v290
    %v1658 = vunpack.c.l.b16 %v291
    %v1659 = vunpack.c.h.b16 %v291
    %v1660 = vunpack.c.l.b16 %v292
    %v1661 = vunpack.c.l.b16 %v293
    %v1662 = vunpack.c.h.b16 %v293
    %v1663 = vunpack.c.l.b16 %v294
    %v1664 = vunpack.c.l.b16 %v295
    %v1665 = vunpack.c.h.b16 %v295
    %v1666 = vunpack.c.l.b16 %v296
    %v1667 = vunpack.c.l.b16 %v297
    %v1668 = vunpack.c.h.b16 %v297
    %v1669 = vunpack.c.l.b16 %v298
    %v1670 = vunpack.c.l.b16 %v299
    %v1671 = vunpack.c.h.b16 %v299
    %v1672 = vunpack.c.l.b16 %v300
    %v1673 = vunpack.c.l.b16 %v301
    %v1674 = vunpack.c.h.b16 %v301
    %v1675 = vunpack.c.l.b16 %v302
    %v1676 = vunpack.c.l.b16 %v303
    %v1677 = vunpack.c.h.b16 %v303
    %v1678 = vunpack.c.l.b16 %v304
    %v1679 = vunpack.c.l.b16 %v305
    %v1680 = vunpack.c.h.b16 %v305
    %v1681 = vunpack.c.l.b16 %v306
    %v1682 = vunpack.c.l.b16 %v307
    %v1683 = vunpack.c.h.b16 %v307
    %v1684 = vunpack.c.l.b16 %v308
    %v1685 = vunpack.c.l.b16 %v309
    %v1686 = vunpack.c.h.b16 %v309
    %v1687 = vunpack.c.l.b16 %v310
    %v1688 = vunpack.c.l.b16 %v311
    %v1689 = vunpack.c.h.b16 %v311
    %v1690 = vunpack.c.l.b16 %v312
    %v1691 = vunpack.c.l.b16 %v313
    %v1692 = vunpack.c.h.b16 %v313
    %v1693 = vunpack.c.l.b16 %v314
    %v1694 = vunpack.c.l.b16 %v315
    %v1695 = vunpack.c.h.b16 %v315
    %v1696 = vunpack.c.l.b16 %v316
    %v1697 = vunpack.c.l.b16 %v317
    %v1698 = vunpack.c.h.b16 %v317
    %v1699 = vunpack.c.l.b16 %v318
    %v1700 = vunpack.c.l.b16 %v319
    %v1701 = vunpack.c.h.b16 %v319
    %v1702 = vunpack.c.l.b16 %v320
    %v1703 = vunpack.c.l.b16 %v321
    %v1704 = vunpack.c.h.b16 %v321
    %v1705 = vunpack.c.l.b16 %v322
    %v1706 = vunpack.c.l.b16 %v323
    %v1707 = vunpack.c.h.b16 %v323
    %v1708 = vunpack.c.l.b16 %v324
    %v1709 = vunpack.c.l.b16 %v325
    %v1710 = vunpack.c.h.b16 %v325
    %v1711 = vunpack.c.l.b16 %v326
    %v1712 = vunpack.c.l.b16 %v327
    %v1713 = vunpack.c.h.b16 %v327
    %v1714 = vunpack.c.l.b16 %v328
    %v1715 = vunpack.c.l.b16 %v329
    %v1716 = vunpack.c.h.b16 %v329
    %v1717 = vunpack.c.l.b16 %v330
    %v1718 = vunpack.c.l.b16 %v331
    %v1719 = vunpack.c.h.b16 %v331
    %v1720 = vunpack.c.l.b16 %v332
    %v1721 = vunpack.c.l.b16 %v333
    %v1722 = vunpack.c.h.b16 %v333
    %v1723 = vunpack.c.l.b16 %v334
    %v1724 = vunpack.c.l.b16 %v335
    %v1725 = vunpack.c.h.b16 %v335
    %v1726 = vunpack.c.l.b16 %v336
    %v1727 = vunpack.c.l.b16 %v337
    %v1728 = vunpack.c.h.b16 %v337
    %v1729 = vunpack.c.l.b16 %v338
    %v1730 = vunpack.c.l.b16 %v339
    %v1731 = vunpack.c.h.b16 %v339
    %v1732 = vunpack.c.l.b16 %v340
    %v1733 = vunpack.c.l.b16 %v341
    %v1734 = vunpack.c.h.b16 %v341
    %v1735 = vunpack.c.l.b16 %v342
    %v1736 = vunpack.c.l.b16 %v343
    %v1737 = vunpack.c.h.b16 %v343
    %v1738 = vunpack.c.l.b16 %v344
    %v1739 = vunpack.c.l.b16 %v345
    %v1740 = vunpack.c.h.b16 %v345
    %v1741 = vunpack.c.l.b16 %v346
    %v1742 = vunpack.c.l.b16 %v347
    %v1743 = vunpack.c.h.b16 %v347
    %v1744 = vunpack.c.l.b16 %v348
    %v1745 = vunpack.c.l.b16 %v349
    %v1746 = vunpack.c.h.b16 %v349
    %v1747 = vunpack.c.l.b16 %v350
    %v1748 = vunpack.c.l.b16 %v351
    %v1749 = vunpack.c.h.b16 %v351
    %v1750 = vunpack.c.l.b16 %v352
    %v1751 = vunpack.c.l.b16 %v353
    %v1752 = vunpack.c.h.b16 %v353
    %v1753 = vunpack.c.l.b16 %v354
    %v1754 = vunpack.c.l.b16 %v355
    %v1755 = vunpack.c.h.b16 %v355
    %v1756 = vunpack.c.l.b16 %v356
    %v1757 = vunpack.c.l.b16 %v357
    %v1758 = vunpack.c.h.b16 %v357
    %v1759 = vunpack.c.l.b16 %v358
    %v1760 = vunpack.c.l.b16 %v359
    %v1761 = vunpack.c.h.b16 %v359
    %v1762 = vunpack.c.l.b16 %v360
    %v1763 = vunpack.c.l.b16 %v361
    %v1764 = vunpack.c.h.b16 %v361
    %v1765 = vunpack.c.l.b16 %v362
    %v1766 = vunpack.c.l.b16 %v363
    %v1767 = vunpack.c.h.b16 %v363
    %v1768 = vunpack.c.l.b16 %v364
    %v1769 = vunpack.c.l.b16 %v365
    %v1770 = vunpack.c.h.b16 %v365
    %v1771 = vunpack.c.l.b16 %v366
    %v1772 = vunpack.c.l.b16 %v367
    %v1773 = vunpack.c.h.b16 %v367
    %v1774 = vunpack.c.l.b16 %v368
    %v1775 = vunpack.c.l.b16 %v369
    %v1776 = vunpack.c.h.b16 %v369
    %v1777 = vunpack.c.l.b16 %v370
    %v1778 = vunpack.c.l.b16 %v371
    %v1779 = vunpack.c.h.b16 %v371
    %v1780 = vunpack.c.l.b16 %v372
    %v1781 = vunpack.c.l.b16 %v373
    %v1782 = vunpack.c.h.b16 %v373
    %v1783 = vunpack.c.l.b16 %v374
    %v1784 = vunpack.c.l.b16 %v375
    %v1785 = vunpack.c.h.b16 %v375
    %v1786 = vunpack.c.l.b16 %v376
    %v1787 = vunpack.c.l.b16 %v377
    %v1788 = vunpack.c.h.b16 %v377
    %v1789 = vunpack.c.l.b16 %v378
    %v1790 = vunpack.c.l.b16 %v379
    %v1791 = vunpack.c.h.b16 %v379
    %v1792 = vunpack.c.l.b16 %v380
    %v1793 = vunpack.c.l.b16 %v381
    %v1794 = vunpack.c.h.b16 %v381
    %v1795 = vunpack.c.l.b16 %v382
    %v1796 = vunpack.c.l.b16 %v383
    %v1797 = vunpack.c.h.b16 %v383
    %v1798 = vunpack.c.l.b16 %v384
    %v1799 = vunpack.c.l.b16 %v385
    %v1800 = vunpack.c.h.b16 %v385
    %v1801 = vunpack.c.l.b16 %v386
    %v1802 = vunpack.c.l.b16 %v387
    %v1803 = vunpack.c.h.b16 %v387
    %v1804 = vunpack.c.l.b16 %v388
    %v1805 = vunpack.c.l.b16 %v389
    %v1806 = vunpack.c.h.b16 %v389
    %v1807 = vunpack.c.l.b16 %v390
    %v1808 = vunpack.c.l.b16 %v391
    %v1809 = vunpack.c.h.b16 %v391
    %v1810 = vunpack.c.l.b16 %v392
    %v1811 = vunpack.c.l.b16 %v393
    %v1812 = vunpack.c.h.b16 %v393
    %v1813 = vunpack.c.l.b16 %v394
    %v1814 = vunpack.c.l.b16 %v395
    %v1815 = vunpack.c.h.b16 %v395
    %v1816 = vunpack.c.l.b16 %v396
    %v1817 = vunpack.c.l.b16 %v397
    %v1818 = vunpack.c.h.b16 %v397
    %v1819 = vunpack.c.l.b16 %v398
    %v1820 = vunpack.c.l.b16 %v399
    %v1821 = vunpack.c.h.b16 %v399
    %v1822 = vunpack.c.l.b16 %v400
    %v1823 = vunpack.c.l.b16 %v401
    %v1824 = vunpack.c.h.b16 %v401
    %v1825 = vunpack.c.l.b16 %v402
    %v1826 = vunpack.c.l.b16 %v403
    %v1827 = vunpack.c.h.b16 %v403
    %v1828 = vunpack.c.l.b16 %v404
    %v1829 = vunpack.c.l.b16 %v405
    %v1830 = vunpack.c.h.b16 %v405
    %v1831 = vunpack.c.l.b16 %v406
    %v1832 = vunpack.c.l.b16 %v407
    %v1833 = vunpack.c.h.b16 %v407
    %v1834 = vunpack.c.l.b16 %v408
    %v1835 = vunpack.c.l.b16 %v409
    %v1836 = vunpack.c.h.b16 %v409
    %v1837 = vunpack.c.l.b16 %v410
    %v1838 = vunpack.c.l.b16 %v411
    %v1839 = vunpack.c.h.b16 %v411
    %v1840 = vunpack.c.l.b16 %v412
    %v1841 = vunpack.c.l.b16 %v413
    %v1842 = vunpack.c.h.b16 %v413
    %v1843 = vunpack.c.l.b16 %v414
    %v1844 = vunpack.c.l.b16 %v415
    %v1845 = vunpack.c.h.b16 %v415
    %v1846 = vunpack.c.l.b16 %v416
    %v1847 = vunpack.c.l.b16 %v417
    %v1848 = vunpack.c.h.b16 %v417
    %v1849 = vunpack.c.l.b16 %v418
    %v1850 = vunpack.c.l.b16 %v419
    %v1851 = vunpack.c.h.b16 %v419
    %v1852 = vunpack.c.l.b16 %v420
    %v1853 = vunpack.c.l.b16 %v421
    %v1854 = vunpack.c.h.b16 %v421
    %v1855 = vunpack.c.l.b16 %v422
    %v1856 = vunpack.c.l.b16 %v423
    %v1857 = vunpack.c.h.b16 %v423
    %v1858 = vunpack.c.l.b16 %v424
    %v1859 = vunpack.c.l.b16 %v425
    %v1860 = vunpack.c.h.b16 %v425
    %v1861 = vunpack.c.l.b16 %v426
    %v1862 = vunpack.c.l.b16 %v427
    %v1863 = vunpack.c.h.b16 %v427
    %v1864 = vunpack.c.l.b16 %v428
    %v1865 = vunpack.c.l.b16 %v429
    %v1866 = vunpack.c.h.b16 %v429
    %v1867 = vunpack.c.l.b16 %v430
    %v1868 = vunpack.c.l.b16 %v431
    %v1869 = vunpack.c.h.b16 %v431
    %v1870 = vunpack.c.l.b16 %v432
    %v1871 = vunpack.c.l.b16 %v433
    %v1872 = vunpack.c.h.b16 %v433
    %v1873 = vunpack.c.l.b16 %v434
    %v1874 = vunpack.c.l.b16 %v435
    %v1875 = vunpack.c.h.b16 %v435
    %v1876 = vunpack.c.l.b16 %v436
    %v1877 = vunpack.c.l.b16 %v437
    %v1878 = vunpack.c.h.b16 %v437
    %v1879 = vunpack.c.l.b16 %v438
    %v1880 = vunpack.c.l.b16 %v439
    %v1881 = vunpack.c.h.b16 %v439
    %v1882 = vunpack.c.l.b16 %v440
    %v1883 = vunpack.c.l.b16 %v441
    %v1884 = vunpack.c.h.b16 %v441
    %v1885 = vunpack.c.l.b16 %v442
    %v1886 = vunpack.c.l.b16 %v443
    %v1887 = vunpack.c.h.b16 %v443
    %v1888 = vunpack.c.l.b16 %v444
    %v1889 = vunpack.c.l.b16 %v445
    %v1890 = vunpack.c.h.b16 %v445
    %v1891 = vunpack.c.l.b16 %v446
    %v1892 = vunpack.c.l.b16 %v447
    %v1893 = vunpack.c.h.b16 %v447
    %v1894 = vunpack.c.l.b16 %v448
    %v1895 = vunpack.c.l.b16 %v449
    %v1896 = vunpack.c.h.b16 %v449
    %v1897 = vunpack.c.l.b16 %v450
    %v1898 = vunpack.c.l.b16 %v451
    %v1899 = vunpack.c.h.b16 %v451
    %v1900 = vunpack.c.l.b16 %v452
    %v1901 = vunpack.c.l.b16 %v453
    %v1902 = vunpack.c.h.b16 %v453
    %v1903 = vunpack.c.l.b16 %v454
    %v1904 = vunpack.c.l.b16 %v455
    %v1905 = vunpack.c.h.b16 %v455
    %v1906 = vunpack.c.l.b16 %v456
    %v1907 = vunpack.c.l.b16 %v457
    %v1908 = vunpack.c.h.b16 %v457
    %v1909 = vunpack.c.l.b16 %v458
    %v1910 = vunpack.c.l.b16 %v459
    %v1911 = vunpack.c.h.b16 %v459
    %v1912 = vunpack.c.l.b16 %v460
    %v1913 = vunpack.c.l.b16 %v461
    %v1914 = vunpack.c.h.b16 %v461
    %v1915 = vunpack.c.l.b16 %v462
    %v1916 = vunpack.c.l.b16 %v463
    %v1917 = vunpack.c.h.b16 %v463
    %v1918 = vunpack.c.l.b16 %v464
    %v1919 = vunpack.c.l.b16 %v465
    %v1920 = vunpack.c.h.b16 %v465
    %v1921 = vunpack.c.l.b16 %v466
    %v1922 = vunpack.c.l.b16 %v467
    %v1923 = vunpack.c.h.b16 %v467
    %v1924 = vunpack.c.l.b16 %v468
    %v1925 = vunpack.c.l.b16 %v469
    %v1926 = vunpack.c.h.b16 %v469
    %v1927 = vunpack.c.l.b16 %v470
    %v1928 = vunpack.c.l.b16 %v471
    %v1929 = vunpack.c.h.b16 %v471
    %v1930 = vunpack.c.l.b16 %v472
    %v1931 = vunpack.c.l.b16 %v473
    %v1932 = vunpack.c.h.b16 %v473
    %v1933 = vunpack.c.l.b16 %v474
    %v1934 = vunpack.c.l.b16 %v475
    %v1935 = vunpack.c.h.b16 %v475
    %v1936 = vunpack.c.l.b16 %v476
    %v1937 = vunpack.c.l.b16 %v477
    %v1938 = vunpack.c.h.b16 %v477
    %v1939 = vunpack.c.l.b16 %v478
    %v1940 = vunpack.c.l.b16 %v479
    %v1941 = vunpack.c.h.b16 %v479
    %v1942 = vunpack.c.l.b16 %v480
    %v1943 = vunpack.c.l.b16 %v481
    %v1944 = vunpack.c.h.b16 %v481
    %v1945 = vunpack.c.l.b16 %v482
    %v1946 = vunpack.c.l.b16 %v483
    %v1947 = vunpack.c.h.b16 %v483
    %v1948 = vunpack.c.l.b16 %v484
    %v1949 = vunpack.c.l.b16 %v485
    %v1950 = vunpack.c.h.b16 %v485
    %v1951 = vunpack.c.l.b16 %v486
    %v1952 = vunpack.c.l.b16 %v487
    %v1953 = vunpack.c.h.b16 %v487
    %v1954 = vunpack.c.l.b16 %v488
    %v1955 = vunpack.c.l.b16 %v489
    %v1956 = vunpack.c.h.b16 %v489
    %v1957 = vunpack.c.l.b16 %v490
    %v1958 = vunpack.c.l.b16 %v491
    %v1959 = vunpack.c.h.b16 %v491
    %v1960 = vunpack.c.l.b16 %v492
    %v1961 = vunpack.c.l.b16 %v493
    %v1962 = vunpack.c.h.b16 %v493
    %v1963 = vunpack.c.l.b16 %v494
    %v1964 = vunpack.c.l.b16 %v495
    %v1965 = vunpack.c.h.b16 %v495
    %v1966 = vunpack.c.l.b16 %v496
    %v1967 = vunpack.c.l.b16 %v497
    %v1968 = vunpack.c.h.b16 %v497
    %v1969 = vunpack.c.l.b16 %v498
    %v1970 = vunpack.c.l.b16 %v499
    %v1971 = vunpack.c.h.b16 %v499
    %v1972 = vunpack.c.l.b16 %v500
    %v1973 = vunpack.c.l.b16 %v501
    %v1974 = vunpack.c.h.b16 %v501
    %v1975 = vunpack.c.l.b16 %v502
    %v1976 = vunpack.c.l.b16 %v503
    %v1977 = vunpack.c.h.b16 %v503
    %v1978 = vunpack.c.l.b16 %v504
    %v1979 = vunpack.c.l.b16 %v505
    %v1980 = vunpack.c.h.b16 %v505
    %v1981 = vunpack.c.l.b16 %v506
    %v1982 = vunpack.c.l.b16 %v507
    %v1983 = vunpack.c.h.b16 %v507
    %v1984 = vunpack.c.l.b16 %v508
    %v1985 = vunpack.c.l.b16 %v509
    %v1986 = vunpack.c.h.b16 %v509
    %v1987 = vunpack.c.l.b16 %v510
    %v1988 = vunpack.c.l.b16 %v511
    %v1989 = vunpack.c.h.b16 %v511
    %v1990 = vunpack.c.l.b16 %v512
    %v1991 = vunpack.c.l.b16 %v513
    %v1992 = vunpack.c.h.b16 %v513
    %v1993 = vunpack.c.l.b16 %v514
    %v1994 = vunpack.c.l.b16 %v515
    %v1995 = vunpack.c.h.b16 %v515
    %v1996 = vunpack.c.l.b16 %v516
    %v1997 = vunpack.c.l.b16 %v517
    %v1998 = vunpack.c.h.b16 %v517
    %v1999 = vunpack.c.l.b16 %v518
    %v2000 = vunpack.c.l.b16 %v519
    %v2001 = vunpack.c.h.b16 %v519
    %v2002 = vunpack.c.l.b16 %v520
    %v2003 = vunpack.c.l.b16 %v521
    %v2004 = vunpack.c.h.b16 %v521
    %v2005 = vunpack.c.l.b16 %v522
    %v2006 = vunpack.c.l.b16 %v523
    %v2007 = vunpack.c.h.b16 %v523
    %v2008 = vunpack.c.l.b16 %v524
    %v2009 = vunpack.c.l.b16 %v525
    %v2010 = vunpack.c.h.b16 %v525
    %v2011 = vunpack.c.l.b16 %v526
    %v2012 = vunpack.c.l.b16 %v527
    %v2013 = vunpack.c.h.b16 %v527
    %v2014 = vunpack.c.l.b16 %v528
    %v2015 = vunpack.c.l.b16 %v529
    %v2016 = vunpack.c.h.b16 %v529
    %v2017 = vunpack.c.l.b16 %v530
    %v2018 = vunpack.c.l.b16 %v531
    %v2019 = vunpack.c.h.b16 %v531
    %v2020 = vunpack.c.l.b16 %v532
    %v2021 = vunpack.c.l.b16 %v533
    %v2022 = vunpack.c.h.b16 %v533
    %v2023 = vunpack.c.l.b16 %v534
    %v2024 = vunpack.c.l.b16 %v535
    %v2025 = vunpack.c.h.b16 %v535
    %v2026 = vunpack.c.l.b16 %v536
    %v2027 = vunpack.c.l.b16 %v537
    %v2028 = vunpack.c.h.b16 %v537
    %v2029 = vunpack.c.l.b16 %v538
    %v2030 = vunpack.c.l.b16 %v539
    %v2031 = vunpack.c.h.b16 %v539
    %v2032 = vunpack.c.l.b16 %v540
    %v2033 = vunpack.c.l.b16 %v541
    %v2034 = vunpack.c.h.b16 %v541
    %v2035 = vunpack.c.l.b16 %v542
    %v2036 = vunpack.c.l.b16 %v543
    %v2037 = vunpack.c.h.b16 %v543
    %v2038 = vunpack.c.l.b16 %v544
    %v2039 = vunpack.c.l.b16 %v545
    %v2040 = vunpack.c.h.b16 %v545
    %v2041 = vunpack.c.l.b16 %v546
    %v2042 = vunpack.c.l.b16 %v547
    %v2043 = vunpack.c.h.b16 %v547
    %v2044 = vunpack.c.l.b16 %v548
    %v2045 = vunpack.c.l.b16 %v549
    %v2046 = vunpack.c.h.b16 %v549
    %v2047 = vunpack.c.l.b16 %v550
    %v2048 = vunpack.c.l.b16 %v551
    %v2049 = vunpack.c.h.b16 %v551
    %v2050 = vunpack.c.l.b16 %v552
    %v2051 = vunpack.c.l.b16 %v553
    %v2052 = vunpack.c.h.b16 %v553
    %v2053 = vunpack.c.l.b16 %v554
    %v2054 = vunpack.c.l.b16 %v555
    %v2055 = vunpack.c.h.b16 %v555
    %v2056 = vunpack.c.l.b16 %v556
    %v2057 = vunpack.c.l.b16 %v557
    %v2058 = vunpack.c.h.b16 %v557
    %v2059 = vunpack.c.l.b16 %v558
    %v2060 = vunpack.c.l.b16 %v559
    %v2061 = vunpack.c.h.b16 %v559
    %v2062 = vunpack.c.l.b16 %v560
    %v2063 = vunpack.c.l.b16 %v561
    %v2064 = vunpack.c.h.b16 %v561
    %v2065 = vunpack.c.l.b16 %v562
    %v2066 = vunpack.c.l.b16 %v563
    %v2067 = vunpack.c.h.b16 %v563
    %v2068 = vunpack.c.l.b16 %v564
    %v2069 = vunpack.c.l.b16 %v565
    %v2070 = vunpack.c.h.b16 %v565
    %v2071 = vunpack.c.l.b16 %v566
    %v2072 = vunpack.c.l.b16 %v567
    %v2073 = vunpack.c.h.b16 %v567
    %v2074 = vunpack.c.l.b16 %v568
    %v2075 = vunpack.c.l.b16 %v569
    %v2076 = vunpack.c.h.b16 %v569
    %v2077 = vunpack.c.l.b16 %v570
    %v2078 = vunpack.c.l.b16 %v571
    %v2079 = vunpack.c.h.b16 %v571
    %v2080 = vunpack.c.l.b16 %v572
    %v2081 = vunpack.c.l.b16 %v573
    %v2082 = vunpack.c.h.b16 %v573
    %v2083 = vunpack.c.l.b16 %v574
    %v2084 = vunpack.c.l.b16 %v575
    %v2085 = vunpack.c.h.b16 %v575
    %v2086 = vunpack.c.l.b16 %v576
    %v2087 = vunpack.c.l.b16 %v577
    %v2088 = vunpack.c.h.b16 %v577
    %v2089 = vunpack.c.l.b16 %v578
    %v2090 = vunpack.c.l.b16 %v579
    %v2091 = vunpack.c.h.b16 %v579
    %v2092 = vunpack.c.l.b16 %v580
    %v2093 = vunpack.c.l.b16 %v581
    %v2094 = vunpack.c.h.b16 %v581
    %v2095 = vunpack.c.l.b16 %v582
    %v2096 = vunpack.c.l.b16 %v583
    %v2097 = vunpack.c.h.b16 %v583
    %v2098 = vunpack.c.l.b16 %v584
    %v2099 = vunpack.c.l.b16 %v585
    %v2100 = vunpack.c.h.b16 %v585
    %v2101 = vunpack.c.l.b16 %v586
    %v2102 = vunpack.c.l.b16 %v587
    %v2103 = vunpack.c.h.b16 %v587
    %v2104 = vunpack.c.l.b16 %v588
    %v2105 = vunpack.c.l.b16 %v589
    %v2106 = vunpack.c.h.b16 %v589
    %v2107 = vunpack.c.l.b16 %v590
    %v2108 = vunpack.c.l.b16 %v591
    %v2109 = vunpack.c.h.b16 %v591
    %v2110 = vunpack.c.l.b16 %v592
    %v2111 = vunpack.c.l.b16 %v593
    %v2112 = vunpack.c.h.b16 %v593
    %v2113 = vunpack.c.l.b16 %v594
    %v2114 = vunpack.c.l.b16 %v595
    %v2115 = vunpack.c.h.b16 %v595
    %v2116 = vunpack.c.l.b16 %v596
    %v2117 = vunpack.c.l.b16 %v597
    %v2118 = vunpack.c.h.b16 %v597
    %v2119 = vunpack.c.l.b16 %v598
    %v2120 = vunpack.c.l.b16 %v599
    %v2121 = vunpack.c.h.b16 %v599
    %v2122 = vunpack.c.l.b16 %v600
    %v2123 = vunpack.c.l.b16 %v601
    %v2124 = vunpack.c.h.b16 %v601
    %v2125 = vunpack.c.l.b16 %v602
    %v2126 = vunpack.c.l.b16 %v603
    %v2127 = vunpack.c.h.b16 %v603
    %v2128 = vunpack.c.l.b16 %v604
    %v2129 = vunpack.c.l.b16 %v605
    %v2130 = vunpack.c.h.b16 %v605
    %v2131 = vunpack.c.l.b16 %v606
    %v2132 = vunpack.c.l.b16 %v607
    %v2133 = vunpack.c.h.b16 %v607
    %v2134 = vunpack.c.l.b16 %v608
    %v2135 = vunpack.c.l.b16 %v609
    %v2136 = vunpack.c.h.b16 %v609
    %v2137 = vunpack.c.l.b16 %v610
    %v2138 = vunpack.c.l.b16 %v611
    %v2139 = vunpack.c.h.b16 %v611
    %v2140 = vunpack.c.l.b16 %v612
    %v2141 = vunpack.c.l.b16 %v613
    %v2142 = vunpack.c.h.b16 %v613
    %v2143 = vunpack.c.l.b16 %v614
    %v2144 = vunpack.c.l.b16 %v615
    %v2145 = vunpack.c.h.b16 %v615
    %v2146 = vunpack.c.l.b16 %v616
    %v2147 = vunpack.c.l.b16 %v617
    %v2148 = vunpack.c.h.b16 %v617
    %v2149 = vunpack.c.l.b16 %v618
    %v2150 = vunpack.c.l.b16 %v619
    %v2151 = vunpack.c.h.b16 %v619
    %v2152 = vunpack.c.l.b16 %v620
    %v2153 = vunpack.c.l.b16 %v621
    %v2154 = vunpack.c.h.b16 %v621
    %v2155 = vunpack.c.l.b16 %v622
    %v2156 = vunpack.c.l.b16 %v623
    %v2157 = vunpack.c.h.b16 %v623
    %v2158 = vunpack.c.l.b16 %v624
    %v2159 = vunpack.c.l.b16 %v625
    %v2160 = vunpack.c.h.b16 %v625
    %v2161 = vunpack.c.l.b16 %v626
    %v2162 = vunpack.c.l.b16 %v627
    %v2163 = vunpack.c.h.b16 %v627
    %v2164 = vunpack.c.l.b16 %v628
    %v2165 = vunpack.c.l.b16 %v629
    %v2166 = vunpack.c.h.b16 %v629
    %v2167 = vunpack.c.l.b16 %v630
    %v2168 = vunpack.c.l.b16 %v631
    %v2169 = vunpack.c.h.b16 %v631
    %v2170 = vunpack.c.l.b16 %v632
    %v2171 = vunpack.c.l.b16 %v633
    %v2172 = vunpack.c.h.b16 %v633
    %v2173 = vunpack.c.l.b16 %v634
    %v2174 = vunpack.c.l.b16 %v635
    %v2175 = vunpack.c.h.b16 %v635
    %v2176 = vunpack.c.l.b16 %v636
    %v2177 = vunpack.c.l.b16 %v637
    %v2178 = vunpack.c.h.b16 %v637
    %v2179 = vunpack.c.l.b16 %v638
    %v2180 = vunpack.c.l.b16 %v639
    %v2181 = vunpack.c.h.b16 %v639
    %v2182 = vunpack.c.l.b16 %v640
    %v2183 = vunpack.c.l.b16 %v641
    %v2184 = vunpack.c.h.b16 %v641
    %v2185 = vunpack.c.l.b16 %v642
    %v2186 = vunpack.c.l.b16 %v643
    %v2187 = vunpack.c.h.b16 %v643
    %v2188 = vunpack.c.l.b16 %v644
    %v2189 = vunpack.c.l.b16 %v645
    %v2190 = vunpack.c.h.b16 %v645
    %v2191 = vunpack.c.l.b16 %v646
    %v2192 = vunpack.c.l.b16 %v647
    %v2193 = vunpack.c.h.b16 %v647
    %v2194 = vunpack.c.l.b16 %v648
    %v2195 = vunpack.c.l.b16 %v649
    %v2196 = vunpack.c.h.b16 %v649
    %v2197 = vunpack.c.l.b16 %v650
    %v2198 = vunpack.c.l.b16 %v651
    %v2199 = vunpack.c.h.b16 %v651
    %v2200 = vunpack.c.l.b16 %v652
    %v2201 = vunpack.c.l.b16 %v653
    %v2202 = vunpack.c.h.b16 %v653
    %v2203 = vunpack.c.l.b16 %v654
    %v2204 = vunpack.c.l.b16 %v655
    %v2205 = vunpack.c.h.b16 %v655
    %v2206 = vunpack.c.l.b16 %v656
    %v2207 = vunpack.c.l.b16 %v657
    %v2208 = vunpack.c.h.b16 %v657
    %v2209 = vunpack.c.l.b16 %v658
    %v2210 = vunpack.c.l.b16 %v659
    %v2211 = vunpack.c.h.b16 %v659
    %v2212 = vunpack.c.l.b16 %v660
    %v2213 = vunpack.c.l.b16 %v661
    %v2214 = vunpack.c.h.b16 %v661
    %v2215 = vunpack.c.l.b16 %v662
    %v2216 = vunpack.c.l.b16 %v663
    %v2217 = vunpack.c.h.b16 %v663
    %v2218 = vunpack.c.l.b16 %v664
    %v2219 = vunpack.c.l.b16 %v665
    %v2220 = vunpack.c.h.b16 %v665
    %v2221 = vunpack.c.l.b16 %v666
    %v2222 = vunpack.c.l.b16 %v667
    %v2223 = vunpack.c.h.b16 %v667
    %v2224 = vunpack.c.l.b16 %v668
    %v2225 = vunpack.c.l.b16 %v669
    %v2226 = vunpack.c.h.b16 %v669
    %v2227 = vunpack.c.l.b16 %v670
    %v2228 = vunpack.c.l.b16 %v671
    %v2229 = vunpack.c.h.b16 %v671
    %v2230 = vunpack.c.l.b16 %v672
    %v2231 = vunpack.c.l.b16 %v673
    %v2232 = vunpack.c.h.b16 %v673
    %v2233 = vunpack.c.l.b16 %v674
    %v2234 = vunpack.c.l.b16 %v675
    %v2235 = vunpack.c.h.b16 %v675
    %v2236 = vunpack.c.l.b16 %v676
    %v2237 = vunpack.c.l.b16 %v677
    %v2238 = vunpack.c.h.b16 %v677
    %v2239 = vunpack.c.l.b16 %v678
    %v2240 = vunpack.c.l.b16 %v679
    %v2241 = vunpack.c.h.b16 %v679
    %v2242 = vunpack.c.l.b16 %v680
    %v2243 = vunpack.c.l.b16 %v681
    %v2244 = vunpack.c.h.b16 %v681
    %v2245 = vunpack.c.l.b16 %v682
    %v2246 = vunpack.c.l.b16 %v683
    %v2247 = vunpack.c.h.b16 %v683
    %v2248 = vunpack.c.l.b16 %v684
    %v2249 = vunpack.c.l.b16 %v685
    %v2250 = vunpack.c.h.b16 %v685
    %v2251 = vunpack.c.l.b16 %v686
    %v2252 = vunpack.c.l.b16 %v687
    %v2253 = vunpack.c.h.b16 %v687
    %v2254 = vunpack.c.l.b16 %v688
    %v2255 = vunpack.c.l.b16 %v689
    %v2256 = vunpack.c.h.b16 %v689
    %v2257 = vunpack.c.l.b16 %v690
    %v2258 = vunpack.c.l.b16 %v691
    %v2259 = vunpack.c.h.b16 %v691
    %v2260 = vunpack.c.l.b16 %v692
    %v2261 = vunpack.c.l.b16 %v693
    %v2262 = vunpack.c.h.b16 %v693
    %v2263 = vunpack.c.l.b16 %v694
    %v2264 = vunpack.c.l.b16 %v695
    %v2265 = vunpack.c.h.b16 %v695
    %v2266 = vunpack.c.l.b16 %v696
    %v2267 = vunpack.c.l.b16 %v697
    %v2268 = vunpack.c.h.b16 %v697
    %v2269 = vunpack.c.l.b16 %v698
    %v2270 = vunpack.c.l.b16 %v699
    %v2271 = vunpack.c.h.b16 %v699
    %v2272 = vunpack.c.l.b16 %v700
    %v2273 = vunpack.c.l.b16 %v701
    %v2274 = vunpack.c.h.b16 %v701
    %v2275 = vunpack.c.l.b16 %v702
    %v2276 = vunpack.c.l.b16 %v703
    %v2277 = vunpack.c.h.b16 %v703
    %v2278 = vunpack.c.l.b16 %v704
    %v2279 = vunpack.c.l.b16 %v705
    %v2280 = vunpack.c.h.b16 %v705
    %v2281 = vunpack.c.l.b16 %v706
    %v2282 = vunpack.c.l.b16 %v707
    %v2283 = vunpack.c.h.b16 %v707
    %v2284 = vunpack.c.l.b16 %v708
    %v2285 = vunpack.c.l.b16 %v709
    %v2286 = vunpack.c.h.b16 %v709
    %v2287 = vunpack.c.l.b16 %v710
    %v2288 = vunpack.c.l.b16 %v711
    %v2289 = vunpack.c.h.b16 %v711
    %v2290 = vunpack.c.l.b16 %v712
    %v2291 = vunpack.c.l.b16 %v713
    %v2292 = vunpack.c.h.b16 %v713
    %v2293 = vunpack.c.l.b16 %v714
    %v2294 = vunpack.c.l.b16 %v715
    %v2295 = vunpack.c.h.b16 %v715
    %v2296 = vunpack.c.l.b16 %v716
    %v2297 = vunpack.c.l.b16 %v717
    %v2298 = vunpack.c.h.b16 %v717
    %v2299 = vunpack.c.l.b16 %v718
    %v2300 = vunpack.c.l.b16 %v719
    %v2301 = vunpack.c.h.b16 %v719
    %v2302 = vunpack.c.l.b16 %v720
    %v2303 = vunpack.c.l.b16 %v721
    %v2304 = vunpack.c.h.b16 %v721
    %v2305 = vunpack.c.l.b16 %v722
    %v2306 = vunpack.c.l.b16 %v723
    %v2307 = vunpack.c.h.b16 %v723
    %v2308 = vunpack.c.l.b16 %v724
    %v2309 = vunpack.c.l.b16 %v725
    %v2310 = vunpack.c.h.b16 %v725
    %v2311 = vunpack.c.l.b16 %v726
    %v2312 = vunpack.c.l.b16 %v727
    %v2313 = vunpack.c.h.b16 %v727
    %v2314 = vunpack.c.l.b16 %v728
    %v2315 = vunpack.c.l.b16 %v729
    %v2316 = vunpack.c.h.b16 %v729
    %v2317 = vunpack.c.l.b16 %v730
    %v2318 = vunpack.c.l.b16 %v731
    %v2319 = vunpack.c.h.b16 %v731
    %v2320 = vunpack.c.l.b16 %v732
    %v2321 = vunpack.c.l.b16 %v733
    %v2322 = vunpack.c.h.b16 %v733
    %v2323 = vunpack.c.l.b16 %v734
    %v2324 = vunpack.c.l.b16 %v735
    %v2325 = vunpack.c.h.b16 %v735
    %v2326 = vunpack.c.l.b16 %v736
    %v2327 = vunpack.c.l.b16 %v737
    %v2328 = vunpack.c.h.b16 %v737
    %v2329 = vunpack.c.l.b16 %v738
    %v2330 = vunpack.c.l.b16 %v739
    %v2331 = vunpack.c.h.b16 %v739
    %v2332 = vunpack.c.l.b16 %v740
    %v2333 = vunpack.c.l.b16 %v741
    %v2334 = vunpack.c.h.b16 %v741
    %v2335 = vunpack.c.l.b16 %v742
    %v2336 = vunpack.c.l.b16 %v743
    %v2337 = vunpack.c.h.b16 %v743
    %v2338 = vunpack.c.l.b16 %v744
    %v2339 = vunpack.c.l.b16 %v745
    %v2340 = vunpack.c.h.b16 %v745
    %v2341 = vunpack.c.l.b16 %v746
    %v2342 = vunpack.c.l.b16 %v747
    %v2343 = vunpack.c.h.b16 %v747
    %v2344 = vunpack.c.l.b16 %v748
    %v2345 = vunpack.c.l.b16 %v749
    %v2346 = vunpack.c.h.b16 %v749
    %v2347 = vunpack.c.l.b16 %v750
    %v2348 = vunpack.c.l.b16 %v751
    %v2349 = vunpack.c.h.b16 %v751
    %v2350 = vunpack.c.l.b16 %v752
    %v2351 = vunpack.c.l.b16 %v753
    %v2352 = vunpack.c.h.b16 %v753
    %v2353 = vunpack.c.l.b16 %v754
    %v2354 = vunpack.c.l.b16 %v755
    %v2355 = vunpack.c.h.b16 %v755
    %v2356 = vunpack.c.l.b16 %v756
    %v2357 = vunpack.c.l.b16 %v757
    %v2358 = vunpack.c.h.b16 %v757
    %v2359 = vunpack.c.l.b16 %v758
    %v2360 = vunpack.c.l.b16 %v759
    %v2361 = vunpack.c.h.b16 %v759
    %v2362 = vunpack.c.l.b16 %v760
    %v2363 = vunpack.c.l.b16 %v761
    %v2364 = vunpack.c.h.b16 %v761
    %v2365 = vunpack.c.l.b16 %v762
    %v2366 = vunpack.c.l.b16 %v763
    %v2367 = vunpack.c.h.b16 %v763
    %v2368 = vunpack.c.l.b16 %v764
    %v2369 = vunpack.c.l.b16 %v765
    %v2370 = vunpack.c.h.b16 %v765
    %v2371 = vunpack.c.l.b16 %v766
    %v2372 = vunpack.c.l.b16 %v767
    %v2373 = vunpack.c.h.b16 %v767
    %v2374 = vunpack.c.l.b16 %v768
    %v2375 = vunpack.c.l.b16 %v769
    %v2376 = vunpack.c.h.b16 %v769
    %v2377 = vunpack.c.l.b16 %v770
    %v2378 = vunpack.c.l.b16 %v771
    %v2379 = vunpack.c.h.b16 %v771
    %v2380 = vunpack.c.l.b16 %v772
    %v2381 = vunpack.c.l.b16 %v773
    %v2382 = vunpack.c.h.b16 %v773
    %v2383 = vunpack.c.l.b16 %v774
    %v2384 = vunpack.c.l.b16 %v775
    %v2385 = vunpack.c.h.b16 %v775
    %v2386 = vunpack.c.l.b16 %v776
    %v2387 = vunpack.c.l.b16 %v777
    %v2388 = vunpack.c.h.b16 %v777
    %v2389 = vunpack.c.l.b16 %v778
    %v2390 = vunpack.c.l.b16 %v779
    %v2391 = vunpack.c.h.b16 %v779
    %v2392 = vunpack.c.l.b16 %v780
    %v2393 = vunpack.c.l.b16 %v781
    %v2394 = vunpack.c.h.b16 %v781
    %v2395 = vunpack.c.l.b16 %v782
    %v2396 = vunpack.c.l.b16 %v783
    %v2397 = vunpack.c.h.b16 %v783
    %v2398 = vunpack.c.l.b16 %v784
    %v2399 = vunpack.c.l.b16 %v785
    %v2400 = vunpack.c.h.b16 %v785
    %v2401 = vunpack.c.l.b16 %v786
    %v2402 = vunpack.c.l.b16 %v787
    %v2403 = vunpack.c.h.b16 %v787
    %v2404 = vunpack.c.l.b16 %v788
    %v2405 = vunpack.c.l.b16 %v789
    %v2406 = vunpack.c.h.b16 %v789
    %v2407 = vunpack.c.l.b16 %v790
    %v2408 = vpack.c.b16 %v1451, %v1448
    %v2409 = vpack.c.b16 %v1452, %v1449
    %v2410 = vpack.c.b16 %v1453, %v1450
    %v2411 = vpack.c.b16 %v1457, %v1454
    %v2412 = vpack.c.b16 %v1458, %v1455
    %v2413 = vpack.c.b16 %v1459, %v1456
    %v2414 = vpack.c.b16 %v1463, %v1460
    %v2415 = vpack.c.b16 %v1464, %v1461
    %v2416 = vpack.c.b16 %v1465, %v1462
    %v2417 = vpack.c.b16 %v1469, %v1466
    %v2418 = vpack.c.b16 %v1470, %v1467
    %v2419 = vpack.c.b16 %v1471, %v1468
    %v2420 = vpack.c.b16 %v1475, %v1472
    %v2421 = vpack.c.b16 %v1476, %v1473
    %v2422 = vpack.c.b16 %v1477, %v1474
    %v2423 = vpack.c.b16 %v1481, %v1478
    %v2424 = vpack.c.b16 %v1482, %v1479
    %v2425 = vpack.c.b16 %v1483, %v1480
    %v2426 = vpack.c.b16 %v1487, %v1484
    %v2427 = vpack.c.b16 %v1488, %v1485
    %v2428 = vpack.c.b16 %v1489, %v1486
    %v2429 = vpack.c.b16 %v1493, %v1490
    %v2430 = vpack.c.b16 %v1494, %v1491
    %v2431 = vpack.c.b16 %v1495, %v1492
    %v2432 = vpack.c.b16 %v1499, %v1496
    %v2433 = vpack.c.b16 %v1500, %v1497
    %v2434 = vpack.c.b16 %v1501, %v1498
    %v2435 = vpack.c.b16 %v1505, %v1502
    %v2436 = vpack.c.b16 %v1506, %v1503
    %v2437 = vpack.c.b16 %v1507, %v1504
    %v2438 = vpack.c.b16 %v1511, %v1508
    %v2439 = vpack.c.b16 %v1512, %v1509
    %v2440 = vpack.c.b16 %v1513, %v1510
    %v2441 = vpack.c.b16 %v1517, %v1514
    %v2442 = vpack.c.b16 %v1518, %v1515
    %v2443 = vpack.c.b16 %v1519, %v1516
    %v2444 = vpack.c.b16 %v1523, %v1520
    %v2445 = vpack.c.b16 %v1524, %v1521
    %v2446 = vpack.c.b16 %v1525, %v1522
    %v2447 = vpack.c.b16 %v1529, %v1526
    %v2448 = vpack.c.b16 %v1530, %v1527
    %v2449 = vpack.c.b16 %v1531, %v1528
    %v2450 = vpack.c.b16 %v1535, %v1532
    %v2451 = vpack.c.b16 %v1536, %v1533
    %v2452 = vpack.c.b16 %v1537, %v1534
    %v2453 = vpack.c.b16 %v1541, %v1538
    %v2454 = vpack.c.b16 %v1542, %v1539
    %v2455 = vpack.c.b16 %v1543, %v1540
    %v2456 = vpack.c.b16 %v1547, %v1544
    %v2457 = vpack.c.b16 %v1548, %v1545
    %v2458 = vpack.c.b16 %v1549, %v1546
    %v2459 = vpack.c.b16 %v1553, %v1550
    %v2460 = vpack.c.b16 %v1554, %v1551
    %v2461 = vpack.c.b16 %v1555, %v1552
    %v2462 = vpack.c.b16 %v1559, %v1556
    %v2463 = vpack.c.b16 %v1560, %v1557
    %v2464 = vpack.c.b16 %v1561, %v1558
    %v2465 = vpack.c.b16 %v1565, %v1562
    %v2466 = vpack.c.b16 %v1566, %v1563
    %v2467 = vpack.c.b16 %v1567, %v1564
    %v2468 = vpack.c.b16 %v1571, %v1568
    %v2469 = vpack.c.b16 %v1572, %v1569
    %v2470 = vpack.c.b16 %v1573, %v1570
    %v2471 = vpack.c.b16 %v1577, %v1574
    %v2472 = vpack.c.b16 %v1578, %v1575
    %v2473 = vpack.c.b16 %v1579, %v1576
    %v2474 = vpack.c.b16 %v1583, %v1580
    %v2475 = vpack.c.b16 %v1584, %v1581
    %v2476 = vpack.c.b16 %v1585, %v1582
    %v2477 = vpack.c.b16 %v1589, %v1586
    %v2478 = vpack.c.b16 %v1590, %v1587
    %v2479 = vpack.c.b16 %v1591, %v1588
    %v2480 = vpack.c.b16 %v1595, %v1592
    %v2481 = vpack.c.b16 %v1596, %v1593
    %v2482 = vpack.c.b16 %v1597, %v1594
    %v2483 = vpack.c.b16 %v1601, %v1598
    %v2484 = vpack.c.b16 %v1602, %v1599
    %v2485 = vpack.c.b16 %v1603, %v1600
    %v2486 = vpack.c.b16 %v1607, %v1604
    %v2487 = vpack.c.b16 %v1608, %v1605
    %v2488 = vpack.c.b16 %v1609, %v1606
    %v2489 = vpack.c.b16 %v1613, %v1610
    %v2490 = vpack.c.b16 %v1614, %v1611
    %v2491 = vpack.c.b16 %v1615, %v1612
    %v2492 = vpack.c.b16 %v1619, %v1616
    %v2493 = vpack.c.b16 %v1620, %v1617
    %v2494 = vpack.c.b16 %v1621, %v1618
    %v2495 = vpack.c.b16 %v1625, %v1622
    %v2496 = vpack.c.b16 %v1626, %v1623
    %v2497 = vpack.c.b16 %v1627, %v1624
    %v2498 = vpack.c.b16 %v1631, %v1628
    %v2499 = vpack.c.b16 %v1632, %v1629
    %v2500 = vpack.c.b16 %v1633, %v1630
    %v2501 = vpack.c.b16 %v1637, %v1634
    %v2502 = vpack.c.b16 %v1638, %v1635
    %v2503 = vpack.c.b16 %v1639, %v1636
    %v2504 = vpack.c.b16 %v1643, %v1640
    %v2505 = vpack.c.b16 %v1644, %v1641
    %v2506 = vpack.c.b16 %v1645, %v1642
    %v2507 = vpack.c.b16 %v1649, %v1646
    %v2508 = vpack.c.b16 %v1650, %v1647
    %v2509 = vpack.c.b16 %v1651, %v1648
    %v2510 = vpack.c.b16 %v1655, %v1652
    %v2511 = vpack.c.b16 %v1656, %v1653
    %v2512 = vpack.c.b16 %v1657, %v1654
    %v2513 = vpack.c.b16 %v1661, %v1658
    %v2514 = vpack.c.b16 %v1662, %v1659
    %v2515 = vpack.c.b16 %v1663, %v1660
    %v2516 = vpack.c.b16 %v1667, %v1664
    %v2517 = vpack.c.b16 %v1668, %v1665
    %v2518 = vpack.c.b16 %v1669, %v1666
    %v2519 = vpack.c.b16 %v1673, %v1670
    %v2520 = vpack.c.b16 %v1674, %v1671
    %v2521 = vpack.c.b16 %v1675, %v1672
    %v2522 = vpack.c.b16 %v1679, %v1676
    %v2523 = vpack.c.b16 %v1680, %v1677
    %v2524 = vpack.c.b16 %v1681, %v1678
    %v2525 = vpack.c.b16 %v1685, %v1682
    %v2526 = vpack.c.b16 %v1686, %v1683
    %v2527 = vpack.c.b16 %v1687, %v1684
    %v2528 = vpack.c.b16 %v1691, %v1688
    %v2529 = vpack.c.b16 %v1692, %v1689
    %v2530 = vpack.c.b16 %v1693, %v1690
    %v2531 = vpack.c.b16 %v1697, %v1694
    %v2532 = vpack.c.b16 %v1698, %v1695
    %v2533 = vpack.c.b16 %v1699, %v1696
    %v2534 = vpack.c.b16 %v1703, %v1700
    %v2535 = vpack.c.b16 %v1704, %v1701
    %v2536 = vpack.c.b16 %v1705, %v1702
    %v2537 = vpack.c.b16 %v1709, %v1706
    %v2538 = vpack.c.b16 %v1710, %v1707
    %v2539 = vpack.c.b16 %v1711, %v1708
    %v2540 = vpack.c.b16 %v1715, %v1712
    %v2541 = vpack.c.b16 %v1716, %v1713
    %v2542 = vpack.c.b16 %v1717, %v1714
    %v2543 = vpack.c.b16 %v1721, %v1718
    %v2544 = vpack.c.b16 %v1722, %v1719
    %v2545 = vpack.c.b16 %v1723, %v1720
    %v2546 = vpack.c.b16 %v1727, %v1724
    %v2547 = vpack.c.b16 %v1728, %v1725
    %v2548 = vpack.c.b16 %v1729, %v1726
    %v2549 = vpack.c.b16 %v1733, %v1730
    %v2550 = vpack.c.b16 %v1734, %v1731
    %v2551 = vpack.c.b16 %v1735, %v1732
    %v2552 = vpack.c.b16 %v1739, %v1736
    %v2553 = vpack.c.b16 %v1740, %v1737
    %v2554 = vpack.c.b16 %v1741, %v1738
    %v2555 = vpack.c.b16 %v1745, %v1742
    %v2556 = vpack.c.b16 %v1746, %v1743
    %v2557 = vpack.c.b16 %v1747, %v1744
    %v2558 = vpack.c.b16 %v1751, %v1748
    %v2559 = vpack.c.b16 %v1752, %v1749
    %v2560 = vpack.c.b16 %v1753, %v1750
    %v2561 = vpack.c.b16 %v1757, %v1754
    %v2562 = vpack.c.b16 %v1758, %v1755
    %v2563 = vpack.c.b16 %v1759, %v1756
    %v2564 = vpack.c.b16 %v1763, %v1760
    %v2565 = vpack.c.b16 %v1764, %v1761
    %v2566 = vpack.c.b16 %v1765, %v1762
    %v2567 = vpack.c.b16 %v1769, %v1766
    %v2568 = vpack.c.b16 %v1770, %v1767
    %v2569 = vpack.c.b16 %v1771, %v1768
    %v2570 = vpack.c.b16 %v1775, %v1772
    %v2571 = vpack.c.b16 %v1776, %v1773
    %v2572 = vpack.c.b16 %v1777, %v1774
    %v2573 = vpack.c.b16 %v1781, %v1778
    %v2574 = vpack.c.b16 %v1782, %v1779
    %v2575 = vpack.c.b16 %v1783, %v1780
    %v2576 = vpack.c.b16 %v1787, %v1784
    %v2577 = vpack.c.b16 %v1788, %v1785
    %v2578 = vpack.c.b16 %v1789, %v1786
    %v2579 = vpack.c.b16 %v1793, %v1790
    %v2580 = vpack.c.b16 %v1794, %v1791
    %v2581 = vpack.c.b16 %v1795, %v1792
    %v2582 = vpack.c.b16 %v1799, %v1796
    %v2583 = vpack.c.b16 %v1800, %v1797
    %v2584 = vpack.c.b16 %v1801, %v1798
    %v2585 = vpack.c.b16 %v1805, %v1802
    %v2586 = vpack.c.b16 %v1806, %v1803
    %v2587 = vpack.c.b16 %v1807, %v1804
    %v2588 = vpack.c.b16 %v1811, %v1808
    %v2589 = vpack.c.b16 %v1812, %v1809
    %v2590 = vpack.c.b16 %v1813, %v1810
    %v2591 = vpack.c.b16 %v1817, %v1814
    %v2592 = vpack.c.b16 %v1818, %v1815
    %v2593 = vpack.c.b16 %v1819, %v1816
    %v2594 = vpack.c.b16 %v1823, %v1820
    %v2595 = vpack.c.b16 %v1824, %v1821
    %v2596 = vpack.c.b16 %v1825, %v1822
    %v2597 = vpack.c.b16 %v1829, %v1826
    %v2598 = vpack.c.b16 %v1830, %v1827
    %v2599 = vpack.c.b16 %v1831, %v1828
    %v2600 = vpack.c.b16 %v1835, %v1832
    %v2601 = vpack.c.b16 %v1836, %v1833
    %v2602 = vpack.c.b16 %v1837, %v1834
    %v2603 = vpack.c.b16 %v1841, %v1838
    %v2604 = vpack.c.b16 %v1842, %v1839
    %v2605 = vpack.c.b16 %v1843, %v1840
    %v2606 = vpack.c.b16 %v1847, %v1844
    %v2607 = vpack.c.b16 %v1848, %v1845
    %v2608 = vpack.c.b16 %v1849, %v1846
    %v2609 = vpack.c.b16 %v1853, %v1850
    %v2610 = vpack.c.b16 %v1854, %v1851
    %v2611 = vpack.c.b16 %v1855, %v1852
    %v2612 = vpack.c.b16 %v1859, %v1856
    %v2613 = vpack.c.b16 %v1860, %v1857
    %v2614 = vpack.c.b16 %v1861, %v1858
    %v2615 = vpack.c.b16 %v1865, %v1862
    %v2616 = vpack.c.b16 %v1866, %v1863
    %v2617 = vpack.c.b16 %v1867, %v1864
    %v2618 = vpack.c.b16 %v1871, %v1868
    %v2619 = vpack.c.b16 %v1872, %v1869
    %v2620 = vpack.c.b16 %v1873, %v1870
    %v2621 = vpack.c.b16 %v1877, %v1874
    %v2622 = vpack.c.b16 %v1878, %v1875
    %v2623 = vpack.c.b16 %v1879, %v1876
    %v2624 = vpack.c.b16 %v1883, %v1880
    %v2625 = vpack.c.b16 %v1884, %v1881
    %v2626 = vpack.c.b16 %v1885, %v1882
    %v2627 = vpack.c.b16 %v1889, %v1886
    %v2628 = vpack.c.b16 %v1890, %v1887
    %v2629 = vpack.c.b16 %v1891, %v1888
    %v2630 = vpack.c.b16 %v1895, %v1892
    %v2631 = vpack.c.b16 %v1896, %v1893
    %v2632 = vpack.c.b16 %v1897, %v1894
    %v2633 = vpack.c.b16 %v1901, %v1898
    %v2634 = vpack.c.b16 %v1902, %v1899
    %v2635 = vpack.c.b16 %v1903, %v1900
    %v2636 = vpack.c.b16 %v1907, %v1904
    %v2637 = vpack.c.b16 %v1908, %v1905
    %v2638 = vpack.c.b16 %v1909, %v1906
    %v2639 = vpack.c.b16 %v1913, %v1910
    %v2640 = vpack.c.b16 %v1914, %v1911
    %v2641 = vpack.c.b16 %v1915, %v1912
    %v2642 = vpack.c.b16 %v1919, %v1916
    %v2643 = vpack.c.b16 %v1920, %v1917
    %v2644 = vpack.c.b16 %v1921, %v1918
    %v2645 = vpack.c.b16 %v1925, %v1922
    %v2646 = vpack.c.b16 %v1926, %v1923
    %v2647 = vpack.c.b16 %v1927, %v1924
    %v2648 = vpack.c.b16 %v1931, %v1928
    %v2649 = vpack.c.b16 %v1932, %v1929
    %v2650 = vpack.c.b16 %v1933, %v1930
    %v2651 = vpack.c.b16 %v1937, %v1934
    %v2652 = vpack.c.b16 %v1938, %v1935
    %v2653 = vpack.c.b16 %v1939, %v1936
    %v2654 = vpack.c.b16 %v1943, %v1940
    %v2655 = vpack.c.b16 %v1944, %v1941
    %v2656 = vpack.c.b16 %v1945, %v1942
    %v2657 = vpack.c.b16 %v1949, %v1946
    %v2658 = vpack.c.b16 %v1950, %v1947
    %v2659 = vpack.c.b16 %v1951, %v1948
    %v2660 = vpack.c.b16 %v1955, %v1952
    %v2661 = vpack.c.b16 %v1956, %v1953
    %v2662 = vpack.c.b16 %v1957, %v1954
    %v2663 = vpack.c.b16 %v1961, %v1958
    %v2664 = vpack.c.b16 %v1962, %v1959
    %v2665 = vpack.c.b16 %v1963, %v1960
    %v2666 = vpack.c.b16 %v1967, %v1964
    %v2667 = vpack.c.b16 %v1968, %v1965
    %v2668 = vpack.c.b16 %v1969, %v1966
    %v2669 = vpack.c.b16 %v1973, %v1970
    %v2670 = vpack.c.b16 %v1974, %v1971
    %v2671 = vpack.c.b16 %v1975, %v1972
    %v2672 = vpack.c.b16 %v1979, %v1976
    %v2673 = vpack.c.b16 %v1980, %v1977
    %v2674 = vpack.c.b16 %v1981, %v1978
    %v2675 = vpack.c.b16 %v1985, %v1982
    %v2676 = vpack.c.b16 %v1986, %v1983
    %v2677 = vpack.c.b16 %v1987, %v1984
    %v2678 = vpack.c.b16 %v1991, %v1988
    %v2679 = vpack.c.b16 %v1992, %v1989
    %v2680 = vpack.c.b16 %v1993, %v1990
    %v2681 = vpack.c.b16 %v1997, %v1994
    %v2682 = vpack.c.b16 %v1998, %v1995
    %v2683 = vpack.c.b16 %v1999, %v1996
    %v2684 = vpack.c.b16 %v2003, %v2000
    %v2685 = vpack.c.b16 %v2004, %v2001
    %v2686 = vpack.c.b16 %v2005, %v2002
    %v2687 = vpack.c.b16 %v2009, %v2006
    %v2688 = vpack.c.b16 %v2010, %v2007
    %v2689 = vpack.c.b16 %v2011, %v2008
    %v2690 = vpack.c.b16 %v2015, %v2012
    %v2691 = vpack.c.b16 %v2016, %v2013
    %v2692 = vpack.c.b16 %v2017, %v2014
    %v2693 = vpack.c.b16 %v2021, %v2018
    %v2694 = vpack.c.b16 %v2022, %v2019
    %v2695 = vpack.c.b16 %v2023, %v2020
    %v2696 = vpack.c.b16 %v2027, %v2024
    %v2697 = vpack.c.b16 %v2028, %v2025
    %v2698 = vpack.c.b16 %v2029, %v2026
    %v2699 = vpack.c.b16 %v2033, %v2030
    %v2700 = vpack.c.b16 %v2034, %v2031
    %v2701 = vpack.c.b16 %v2035, %v2032
    %v2702 = vpack.c.b16 %v2039, %v2036
    %v2703 = vpack.c.b16 %v2040, %v2037
    %v2704 = vpack.c.b16 %v2041, %v2038
    %v2705 = vpack.c.b16 %v2045, %v2042
    %v2706 = vpack.c.b16 %v2046, %v2043
    %v2707 = vpack.c.b16 %v2047, %v2044
    %v2708 = vpack.c.b16 %v2051, %v2048
    %v2709 = vpack.c.b16 %v2052, %v2049
    %v2710 = vpack.c.b16 %v2053, %v2050
    %v2711 = vpack.c.b16 %v2057, %v2054
    %v2712 = vpack.c.b16 %v2058, %v2055
    %v2713 = vpack.c.b16 %v2059, %v2056
    %v2714 = vpack.c.b16 %v2063, %v2060
    %v2715 = vpack.c.b16 %v2064, %v2061
    %v2716 = vpack.c.b16 %v2065, %v2062
    %v2717 = vpack.c.b16 %v2069, %v2066
    %v2718 = vpack.c.b16 %v2070, %v2067
    %v2719 = vpack.c.b16 %v2071, %v2068
    %v2720 = vpack.c.b16 %v2075, %v2072
    %v2721 = vpack.c.b16 %v2076, %v2073
    %v2722 = vpack.c.b16 %v2077, %v2074
    %v2723 = vpack.c.b16 %v2081, %v2078
    %v2724 = vpack.c.b16 %v2082, %v2079
    %v2725 = vpack.c.b16 %v2083, %v2080
    %v2726 = vpack.c.b16 %v2087, %v2084
    %v2727 = vpack.c.b16 %v2088, %v2085
    %v2728 = vpack.c.b16 %v2089, %v2086
    %v2729 = vpack.c.b16 %v2093, %v2090
    %v2730 = vpack.c.b16 %v2094, %v2091
    %v2731 = vpack.c.b16 %v2095, %v2092
    %v2732 = vpack.c.b16 %v2099, %v2096
    %v2733 = vpack.c.b16 %v2100, %v2097
    %v2734 = vpack.c.b16 %v2101, %v2098
    %v2735 = vpack.c.b16 %v2105, %v2102
    %v2736 = vpack.c.b16 %v2106, %v2103
    %v2737 = vpack.c.b16 %v2107, %v2104
    %v2738 = vpack.c.b16 %v2111, %v2108
    %v2739 = vpack.c.b16 %v2112, %v2109
    %v2740 = vpack.c.b16 %v2113, %v2110
    %v2741 = vpack.c.b16 %v2117, %v2114
    %v2742 = vpack.c.b16 %v2118, %v2115
    %v2743 = vpack.c.b16 %v2119, %v2116
    %v2744 = vpack.c.b16 %v2123, %v2120
    %v2745 = vpack.c.b16 %v2124, %v2121
    %v2746 = vpack.c.b16 %v2125, %v2122
    %v2747 = vpack.c.b16 %v2129, %v2126
    %v2748 = vpack.c.b16 %v2130, %v2127
    %v2749 = vpack.c.b16 %v2131, %v2128
    %v2750 = vpack.c.b16 %v2135, %v2132
    %v2751 = vpack.c.b16 %v2136, %v2133
    %v2752 = vpack.c.b16 %v2137, %v2134
    %v2753 = vpack.c.b16 %v2141, %v2138
    %v2754 = vpack.c.b16 %v2142, %v2139
    %v2755 = vpack.c.b16 %v2143, %v2140
    %v2756 = vpack.c.b16 %v2147, %v2144
    %v2757 = vpack.c.b16 %v2148, %v2145
    %v2758 = vpack.c.b16 %v2149, %v2146
    %v2759 = vpack.c.b16 %v2153, %v2150
    %v2760 = vpack.c.b16 %v2154, %v2151
    %v2761 = vpack.c.b16 %v2155, %v2152
    %v2762 = vpack.c.b16 %v2159, %v2156
    %v2763 = vpack.c.b16 %v2160, %v2157
    %v2764 = vpack.c.b16 %v2161, %v2158
    %v2765 = vpack.c.b16 %v2165, %v2162
    %v2766 = vpack.c.b16 %v2166, %v2163
    %v2767 = vpack.c.b16 %v2167, %v2164
    %v2768 = vpack.c.b16 %v2171, %v2168
    %v2769 = vpack.c.b16 %v2172, %v2169
    %v2770 = vpack.c.b16 %v2173, %v2170
    %v2771 = vpack.c.b16 %v2177, %v2174
    %v2772 = vpack.c.b16 %v2178, %v2175
    %v2773 = vpack.c.b16 %v2179, %v2176
    %v2774 = vpack.c.b16 %v2183, %v2180
    %v2775 = vpack.c.b16 %v2184, %v2181
    %v2776 = vpack.c.b16 %v2185, %v2182
    %v2777 = vpack.c.b16 %v2189, %v2186
    %v2778 = vpack.c.b16 %v2190, %v2187
    %v2779 = vpack.c.b16 %v2191, %v2188
    %v2780 = vpack.c.b16 %v2195, %v2192
    %v2781 = vpack.c.b16 %v2196, %v2193
    %v2782 = vpack.c.b16 %v2197, %v2194
    %v2783 = vpack.c.b16 %v2201, %v2198
    %v2784 = vpack.c.b16 %v2202, %v2199
    %v2785 = vpack.c.b16 %v2203, %v2200
    %v2786 = vpack.c.b16 %v2207, %v2204
    %v2787 = vpack.c.b16 %v2208, %v2205
    %v2788 = vpack.c.b16 %v2209, %v2206
    %v2789 = vpack.c.b16 %v2213, %v2210
    %v2790 = vpack.c.b16 %v2214, %v2211
    %v2791 = vpack.c.b16 %v2215, %v2212
    %v2792 = vpack.c.b16 %v2219, %v2216
    %v2793 = vpack.c.b16 %v2220, %v2217
    %v2794 = vpack.c.b16 %v2221, %v2218
    %v2795 = vpack.c.b16 %v2225, %v2222
    %v2796 = vpack.c.b16 %v2226, %v2223
    %v2797 = vpack.c.b16 %v2227, %v2224
    %v2798 = vpack.c.b16 %v2231, %v2228
    %v2799 = vpack.c.b16 %v2232, %v2229
    %v2800 = vpack.c.b16 %v2233, %v2230
    %v2801 = vpack.c.b16 %v2237, %v2234
    %v2802 = vpack.c.b16 %v2238, %v2235
    %v2803 = vpack.c.b16 %v2239, %v2236
    %v2804 = vpack.c.b16 %v2243, %v2240
    %v2805 = vpack.c.b16 %v2244, %v2241
    %v2806 = vpack.c.b16 %v2245, %v2242
    %v2807 = vpack.c.b16 %v2249, %v2246
    %v2808 = vpack.c.b16 %v2250, %v2247
    %v2809 = vpack.c.b16 %v2251, %v2248
    %v2810 = vpack.c.b16 %v2255, %v2252
    %v2811 = vpack.c.b16 %v2256, %v2253
    %v2812 = vpack.c.b16 %v2257, %v2254
    %v2813 = vpack.c.b16 %v2261, %v2258
    %v2814 = vpack.c.b16 %v2262, %v2259
    %v2815 = vpack.c.b16 %v2263, %v2260
    %v2816 = vpack.c.b16 %v2267, %v2264
    %v2817 = vpack.c.b16 %v2268, %v2265
    %v2818 = vpack.c.b16 %v2269, %v2266
    %v2819 = vpack.c.b16 %v2273, %v2270
    %v2820 = vpack.c.b16 %v2274, %v2271
    %v2821 = vpack.c.b16 %v2275, %v2272
    %v2822 = vpack.c.b16 %v2279, %v2276
    %v2823 = vpack.c.b16 %v2280, %v2277
    %v2824 = vpack.c.b16 %v2281, %v2278
    %v2825 = vpack.c.b16 %v2285, %v2282
    %v2826 = vpack.c.b16 %v2286, %v2283
    %v2827 = vpack.c.b16 %v2287, %v2284
    %v2828 = vpack.c.b16 %v2291, %v2288
    %v2829 = vpack.c.b16 %v2292, %v2289
    %v2830 = vpack.c.b16 %v2293, %v2290
    %v2831 = vpack.c.b16 %v2297, %v2294
    %v2832 = vpack.c.b16 %v2298, %v2295
    %v2833 = vpack.c.b16 %v2299, %v2296
    %v2834 = vpack.c.b16 %v2303, %v2300
    %v2835 = vpack.c.b16 %v2304, %v2301
    %v2836 = vpack.c.b16 %v2305, %v2302
    %v2837 = vpack.c.b16 %v2309, %v2306
    %v2838 = vpack.c.b16 %v2310, %v2307
    %v2839 = vpack.c.b16 %v2311, %v2308
    %v2840 = vpack.c.b16 %v2315, %v2312
    %v2841 = vpack.c.b16 %v2316, %v2313
    %v2842 = vpack.c.b16 %v2317, %v2314
    %v2843 = vpack.c.b16 %v2321, %v2318
    %v2844 = vpack.c.b16 %v2322, %v2319
    %v2845 = vpack.c.b16 %v2323, %v2320
    %v2846 = vpack.c.b16 %v2327, %v2324
    %v2847 = vpack.c.b16 %v2328, %v2325
    %v2848 = vpack.c.b16 %v2329, %v2326
    %v2849 = vpack.c.b16 %v2333, %v2330
    %v2850 = vpack.c.b16 %v2334, %v2331
    %v2851 = vpack.c.b16 %v2335, %v2332
    %v2852 = vpack.c.b16 %v2339, %v2336
    %v2853 = vpack.c.b16 %v2340, %v2337
    %v2854 = vpack.c.b16 %v2341, %v2338
    %v2855 = vpack.c.b16 %v2345, %v2342
    %v2856 = vpack.c.b16 %v2346, %v2343
    %v2857 = vpack.c.b16 %v2347, %v2344
    %v2858 = vpack.c.b16 %v2351, %v2348
    %v2859 = vpack.c.b16 %v2352, %v2349
    %v2860 = vpack.c.b16 %v2353, %v2350
    %v2861 = vpack.c.b16 %v2357, %v2354
    %v2862 = vpack.c.b16 %v2358, %v2355
    %v2863 = vpack.c.b16 %v2359, %v2356
    %v2864 = vpack.c.b16 %v2363, %v2360
    %v2865 = vpack.c.b16 %v2364, %v2361
    %v2866 = vpack.c.b16 %v2365, %v2362
    %v2867 = vpack.c.b16 %v2369, %v2366
    %v2868 = vpack.c.b16 %v2370, %v2367
    %v2869 = vpack.c.b16 %v2371, %v2368
    %v2870 = vpack.c.b16 %v2375, %v2372
    %v2871 = vpack.c.b16 %v2376, %v2373
    %v2872 = vpack.c.b16 %v2377, %v2374
    %v2873 = vpack.c.b16 %v2381, %v2378
    %v2874 = vpack.c.b16 %v2382, %v2379
    %v2875 = vpack.c.b16 %v2383, %v2380
    %v2876 = vpack.c.b16 %v2387, %v2384
    %v2877 = vpack.c.b16 %v2388, %v2385
    %v2878 = vpack.c.b16 %v2389, %v2386
    %v2879 = vpack.c.b16 %v2393, %v2390
    %v2880 = vpack.c.b16 %v2394, %v2391
    %v2881 = vpack.c.b16 %v2395, %v2392
    %v2882 = vpack.c.b16 %v2399, %v2396
    %v2883 = vpack.c.b16 %v2400, %v2397
    %v2884 = vpack.c.b16 %v2401, %v2398
    %v2885 = vpack.c.b16 %v2405, %v2402
    %v2886 = vpack.c.b16 %v2406, %v2403
    %v2887 = vpack.c.b16 %v2407, %v2404
    %3368 = vmatprep.subr.bf16.mxu0 %v2409
    %3369 = vmatpush1.bf16.msra.mxu0 %v2408
    %3370 = vmatprep.subr.bf16.mxu0 %v2412
    %3371 = vmatpush1.bf16.msra.mxu0 %v2411
    %3372 = vmatprep.subr.bf16.mxu0 %v2415
    %3373 = vmatpush1.bf16.msra.mxu0 %v2414
    %3374 = vmatprep.subr.bf16.mxu0 %v2418
    %3375 = vmatpush1.bf16.msra.mxu0 %v2417
    %3376 = vmatprep.subr.bf16.mxu0 %v2421
    %3377 = vmatpush1.bf16.msra.mxu0 %v2420
    %3378 = vmatprep.subr.bf16.mxu0 %v2424
    %3379 = vmatpush1.bf16.msra.mxu0 %v2423
    %3380 = vmatprep.subr.bf16.mxu0 %v2427
    %3381 = vmatpush1.bf16.msra.mxu0 %v2426
    %3382 = vmatprep.subr.bf16.mxu0 %v2430
    %3383 = vmatpush1.bf16.msra.mxu0 %v2429
    %3384 = vmatprep.subr.bf16.mxu0 %v2433
    %3385 = vmatpush1.bf16.msra.mxu0 %v2432
    %3386 = vmatprep.subr.bf16.mxu0 %v2436
    %3387 = vmatpush1.bf16.msra.mxu0 %v2435
    %3388 = vmatprep.subr.bf16.mxu0 %v2439
    %3389 = vmatpush1.bf16.msra.mxu0 %v2438
    %3390 = vmatprep.subr.bf16.mxu0 %v2442
    %3391 = vmatpush1.bf16.msra.mxu0 %v2441
    %3392 = vmatprep.subr.bf16.mxu0 %v2445
    %3393 = vmatpush1.bf16.msra.mxu0 %v2444
    %3394 = vmatprep.subr.bf16.mxu0 %v2448
    %3395 = vmatpush1.bf16.msra.mxu0 %v2447
    %3396 = vmatprep.subr.bf16.mxu0 %v2451
    %3397 = vmatpush1.bf16.msra.mxu0 %v2450
    %3398 = vmatprep.subr.bf16.mxu0 %v2454
    %3399 = vmatpush1.bf16.msra.mxu0 %v2453
    %3400 = vmatprep.mubr.bf16.mxu0 %v132
    %3401 = vmatmul.mubr.bf16.gmra.mrb[0].mxu0 %v131
    %v3402 = vpop.f32.mrb[0].mxu0
    %v3403 = vadd.f32 %v796, %v3402
    %v3404 = vpop.f32.mrb[0].mxu0
    %v3405 = vadd.f32 %v800, %v3404
    %v3406 = vpop.f32.mrb[0].mxu0
    %v3407 = vpop.f32.mrb[0].mxu0
    %3408 = vdwg.mxu0
    %3409 = vmatprep.subr.bf16.mxu0 %v2457
    %3410 = vmatpush1.bf16.msra.mxu0 %v2456
    %3411 = vmatprep.subr.bf16.mxu0 %v2460
    %3412 = vmatpush1.bf16.msra.mxu0 %v2459
    %3413 = vmatprep.subr.bf16.mxu0 %v2463
    %3414 = vmatpush1.bf16.msra.mxu0 %v2462
    %3415 = vmatprep.subr.bf16.mxu0 %v2466
    %3416 = vmatpush1.bf16.msra.mxu0 %v2465
    %3417 = vmatprep.subr.bf16.mxu0 %v2469
    %3418 = vmatpush1.bf16.msra.mxu0 %v2468
    %3419 = vmatprep.subr.bf16.mxu0 %v2472
    %3420 = vmatpush1.bf16.msra.mxu0 %v2471
    %3421 = vmatprep.subr.bf16.mxu0 %v2475
    %3422 = vmatpush1.bf16.msra.mxu0 %v2474
    %3423 = vmatprep.subr.bf16.mxu0 %v2478
    %3424 = vmatpush1.bf16.msra.mxu0 %v2477
    %3425 = vmatprep.subr.bf16.mxu0 %v2481
    %3426 = vmatpush1.bf16.msra.mxu0 %v2480
    %3427 = vmatprep.subr.bf16.mxu0 %v2484
    %3428 = vmatpush1.bf16.msra.mxu0 %v2483
    %3429 = vmatprep.subr.bf16.mxu0 %v2487
    %3430 = vmatpush1.bf16.msra.mxu0 %v2486
    %3431 = vmatprep.subr.bf16.mxu0 %v2490
    %3432 = vmatpush1.bf16.msra.mxu0 %v2489
    %3433 = vmatprep.subr.bf16.mxu0 %v2493
    %3434 = vmatpush1.bf16.msra.mxu0 %v2492
    %3435 = vmatprep.subr.bf16.mxu0 %v2496
    %3436 = vmatpush1.bf16.msra.mxu0 %v2495
    %3437 = vmatprep.subr.bf16.mxu0 %v2499
    %3438 = vmatpush1.bf16.msra.mxu0 %v2498
    %3439 = vmatprep.subr.bf16.mxu0 %v2502
    %3440 = vmatpush1.bf16.msra.mxu0 %v2501
    %3441 = vmatprep.mubr.bf16.mxu0 %v134
    %3442 = vmatmul.mubr.bf16.gmra.mrb[0].mxu0 %v133
    %v3443 = vpop.f32.mrb[0].mxu0
    %v3444 = vadd.f32 %v3403, %v3443
    %v3445 = vpop.f32.mrb[0].mxu0
    %v3446 = vadd.f32 %v3405, %v3445
    %v3447 = vpop.f32.mrb[0].mxu0
    %v3448 = vpop.f32.mrb[0].mxu0
    %3449 = vdwg.mxu0
    %3450 = vmatprep.subr.bf16.mxu0 %v2505
    %3451 = vmatpush1.bf16.msra.mxu0 %v2504
    %3452 = vmatprep.subr.bf16.mxu0 %v2508
    %3453 = vmatpush1.bf16.msra.mxu0 %v2507
    %3454 = vmatprep.subr.bf16.mxu0 %v2511
    %3455 = vmatpush1.bf16.msra.mxu0 %v2510
    %3456 = vmatprep.subr.bf16.mxu0 %v2514
    %3457 = vmatpush1.bf16.msra.mxu0 %v2513
    %3458 = vmatprep.subr.bf16.mxu0 %v2517
    %3459 = vmatpush1.bf16.msra.mxu0 %v2516
    %3460 = vmatprep.subr.bf16.mxu0 %v2520
    %3461 = vmatpush1.bf16.msra.mxu0 %v2519
    %3462 = vmatprep.subr.bf16.mxu0 %v2523
    %3463 = vmatpush1.bf16.msra.mxu0 %v2522
    %3464 = vmatprep.subr.bf16.mxu0 %v2526
    %3465 = vmatpush1.bf16.msra.mxu0 %v2525
    %3466 = vmatprep.subr.bf16.mxu0 %v2529
    %3467 = vmatpush1.bf16.msra.mxu0 %v2528
    %3468 = vmatprep.subr.bf16.mxu0 %v2532
    %3469 = vmatpush1.bf16.msra.mxu0 %v2531
    %3470 = vmatprep.subr.bf16.mxu0 %v2535
    %3471 = vmatpush1.bf16.msra.mxu0 %v2534
    %3472 = vmatprep.subr.bf16.mxu0 %v2538
    %3473 = vmatpush1.bf16.msra.mxu0 %v2537
    %3474 = vmatprep.subr.bf16.mxu0 %v2541
    %3475 = vmatpush1.bf16.msra.mxu0 %v2540
    %3476 = vmatprep.subr.bf16.mxu0 %v2544
    %3477 = vmatpush1.bf16.msra.mxu0 %v2543
    %3478 = vmatprep.subr.bf16.mxu0 %v2547
    %3479 = vmatpush1.bf16.msra.mxu0 %v2546
    %3480 = vmatprep.subr.bf16.mxu0 %v2550
    %3481 = vmatpush1.bf16.msra.mxu0 %v2549
    %3482 = vmatprep.mubr.bf16.mxu0 %v136
    %3483 = vmatmul.mubr.bf16.gmra.mrb[0].mxu0 %v135
    %v3484 = vpop.f32.mrb[0].mxu0
    %v3485 = vadd.f32 %v3444, %v3484
    %v3486 = vpop.f32.mrb[0].mxu0
    %v3487 = vadd.f32 %v3446, %v3486
    %v3488 = vpop.f32.mrb[0].mxu0
    %v3489 = vpop.f32.mrb[0].mxu0
    %3490 = vdwg.mxu0
    %3491 = vmatprep.subr.bf16.mxu0 %v2553
    %3492 = vmatpush1.bf16.msra.mxu0 %v2552
    %3493 = vmatprep.subr.bf16.mxu0 %v2556
    %3494 = vmatpush1.bf16.msra.mxu0 %v2555
    %3495 = vmatprep.subr.bf16.mxu0 %v2559
    %3496 = vmatpush1.bf16.msra.mxu0 %v2558
    %3497 = vmatprep.subr.bf16.mxu0 %v2562
    %3498 = vmatpush1.bf16.msra.mxu0 %v2561
    %3499 = vmatprep.subr.bf16.mxu0 %v2565
    %3500 = vmatpush1.bf16.msra.mxu0 %v2564
    %3501 = vmatprep.subr.bf16.mxu0 %v2568
    %3502 = vmatpush1.bf16.msra.mxu0 %v2567
    %3503 = vmatprep.subr.bf16.mxu0 %v2571
    %3504 = vmatpush1.bf16.msra.mxu0 %v2570
    %3505 = vmatprep.subr.bf16.mxu0 %v2574
    %3506 = vmatpush1.bf16.msra.mxu0 %v2573
    %3507 = vmatprep.subr.bf16.mxu0 %v2577
    %3508 = vmatpush1.bf16.msra.mxu0 %v2576
    %3509 = vmatprep.subr.bf16.mxu0 %v2580
    %3510 = vmatpush1.bf16.msra.mxu0 %v2579
    %3511 = vmatprep.subr.bf16.mxu0 %v2583
    %3512 = vmatpush1.bf16.msra.mxu0 %v2582
    %3513 = vmatprep.subr.bf16.mxu0 %v2586
    %3514 = vmatpush1.bf16.msra.mxu0 %v2585
    %3515 = vmatprep.subr.bf16.mxu0 %v2589
    %3516 = vmatpush1.bf16.msra.mxu0 %v2588
    %3517 = vmatprep.subr.bf16.mxu0 %v2592
    %3518 = vmatpush1.bf16.msra.mxu0 %v2591
    %3519 = vmatprep.subr.bf16.mxu0 %v2595
    %3520 = vmatpush1.bf16.msra.mxu0 %v2594
    %3521 = vmatprep.subr.bf16.mxu0 %v2598
    %3522 = vmatpush1.bf16.msra.mxu0 %v2597
    %3523 = vmatprep.mubr.bf16.mxu0 %v138
    %3524 = vmatmul.mubr.bf16.gmra.mrb[0].mxu0 %v137
    %v3525 = vpop.f32.mrb[0].mxu0
    %v3526 = vadd.f32 %v3485, %v3525
    %v3527 = vpop.f32.mrb[0].mxu0
    %v3528 = vadd.f32 %v3487, %v3527
    %v3529 = vpop.f32.mrb[0].mxu0
    %v3530 = vpop.f32.mrb[0].mxu0
    %3531 = vdwg.mxu0
    %3532 = vmatprep.subr.bf16.mxu0 %v2601
    %3533 = vmatpush1.bf16.msra.mxu0 %v2600
    %3534 = vmatprep.subr.bf16.mxu0 %v2604
    %3535 = vmatpush1.bf16.msra.mxu0 %v2603
    %3536 = vmatprep.subr.bf16.mxu0 %v2607
    %3537 = vmatpush1.bf16.msra.mxu0 %v2606
    %3538 = vmatprep.subr.bf16.mxu0 %v2610
    %3539 = vmatpush1.bf16.msra.mxu0 %v2609
    %3540 = vmatprep.subr.bf16.mxu0 %v2613
    %3541 = vmatpush1.bf16.msra.mxu0 %v2612
    %3542 = vmatprep.subr.bf16.mxu0 %v2616
    %3543 = vmatpush1.bf16.msra.mxu0 %v2615
    %3544 = vmatprep.subr.bf16.mxu0 %v2619
    %3545 = vmatpush1.bf16.msra.mxu0 %v2618
    %3546 = vmatprep.subr.bf16.mxu0 %v2622
    %3547 = vmatpush1.bf16.msra.mxu0 %v2621
    %3548 = vmatprep.subr.bf16.mxu0 %v2625
    %3549 = vmatpush1.bf16.msra.mxu0 %v2624
    %3550 = vmatprep.subr.bf16.mxu0 %v2628
    %3551 = vmatpush1.bf16.msra.mxu0 %v2627
    %3552 = vmatprep.subr.bf16.mxu0 %v2631
    %3553 = vmatpush1.bf16.msra.mxu0 %v2630
    %3554 = vmatprep.subr.bf16.mxu0 %v2634
    %3555 = vmatpush1.bf16.msra.mxu0 %v2633
    %3556 = vmatprep.subr.bf16.mxu0 %v2637
    %3557 = vmatpush1.bf16.msra.mxu0 %v2636
    %3558 = vmatprep.subr.bf16.mxu0 %v2640
    %3559 = vmatpush1.bf16.msra.mxu0 %v2639
    %3560 = vmatprep.subr.bf16.mxu0 %v2643
    %3561 = vmatpush1.bf16.msra.mxu0 %v2642
    %3562 = vmatprep.subr.bf16.mxu0 %v2646
    %3563 = vmatpush1.bf16.msra.mxu0 %v2645
    %3564 = vmatprep.mubr.bf16.mxu0 %v140
    %3565 = vmatmul.mubr.bf16.gmra.mrb[0].mxu0 %v139
    %v3566 = vpop.f32.mrb[0].mxu0
    %v3567 = vadd.f32 %v3526, %v3566
    %v3568 = vpop.f32.mrb[0].mxu0
    %v3569 = vadd.f32 %v3528, %v3568
    %v3570 = vpop.f32.mrb[0].mxu0
    %v3571 = vpop.f32.mrb[0].mxu0
    %3572 = vdwg.mxu0
    %3573 = vmatprep.subr.bf16.mxu0 %v2649
    %3574 = vmatpush1.bf16.msra.mxu0 %v2648
    %3575 = vmatprep.subr.bf16.mxu0 %v2652
    %3576 = vmatpush1.bf16.msra.mxu0 %v2651
    %3577 = vmatprep.subr.bf16.mxu0 %v2655
    %3578 = vmatpush1.bf16.msra.mxu0 %v2654
    %3579 = vmatprep.subr.bf16.mxu0 %v2658
    %3580 = vmatpush1.bf16.msra.mxu0 %v2657
    %3581 = vmatprep.subr.bf16.mxu0 %v2661
    %3582 = vmatpush1.bf16.msra.mxu0 %v2660
    %3583 = vmatprep.subr.bf16.mxu0 %v2664
    %3584 = vmatpush1.bf16.msra.mxu0 %v2663
    %3585 = vmatprep.subr.bf16.mxu0 %v2667
    %3586 = vmatpush1.bf16.msra.mxu0 %v2666
    %3587 = vmatprep.subr.bf16.mxu0 %v2670
    %3588 = vmatpush1.bf16.msra.mxu0 %v2669
    %3589 = vmatprep.subr.bf16.mxu0 %v2673
    %3590 = vmatpush1.bf16.msra.mxu0 %v2672
    %3591 = vmatprep.subr.bf16.mxu0 %v2676
    %3592 = vmatpush1.bf16.msra.mxu0 %v2675
    %3593 = vmatprep.subr.bf16.mxu0 %v2679
    %3594 = vmatpush1.bf16.msra.mxu0 %v2678
    %3595 = vmatprep.subr.bf16.mxu0 %v2682
    %3596 = vmatpush1.bf16.msra.mxu0 %v2681
    %3597 = vmatprep.subr.bf16.mxu0 %v2685
    %3598 = vmatpush1.bf16.msra.mxu0 %v2684
    %3599 = vmatprep.subr.bf16.mxu0 %v2688
    %3600 = vmatpush1.bf16.msra.mxu0 %v2687
    %3601 = vmatprep.subr.bf16.mxu0 %v2691
    %3602 = vmatpush1.bf16.msra.mxu0 %v2690
    %3603 = vmatprep.subr.bf16.mxu0 %v2694
    %3604 = vmatpush1.bf16.msra.mxu0 %v2693
    %3605 = vmatprep.mubr.bf16.mxu0 %v142
    %3606 = vmatmul.mubr.bf16.gmra.mrb[0].mxu0 %v141
    %v3607 = vpop.f32.mrb[0].mxu0
    %v3608 = vadd.f32 %v3567, %v3607
    %v3609 = vpop.f32.mrb[0].mxu0
    %v3610 = vadd.f32 %v3569, %v3609
    %v3611 = vpop.f32.mrb[0].mxu0
    %v3612 = vpop.f32.mrb[0].mxu0
    %3613 = vdwg.mxu0
    %3614 = vmatprep.subr.bf16.mxu0 %v2697
    %3615 = vmatpush1.bf16.msra.mxu0 %v2696
    %3616 = vmatprep.subr.bf16.mxu0 %v2700
    %3617 = vmatpush1.bf16.msra.mxu0 %v2699
    %3618 = vmatprep.subr.bf16.mxu0 %v2703
    %3619 = vmatpush1.bf16.msra.mxu0 %v2702
    %3620 = vmatprep.subr.bf16.mxu0 %v2706
    %3621 = vmatpush1.bf16.msra.mxu0 %v2705
    %3622 = vmatprep.subr.bf16.mxu0 %v2709
    %3623 = vmatpush1.bf16.msra.mxu0 %v2708
    %3624 = vmatprep.subr.bf16.mxu0 %v2712
    %3625 = vmatpush1.bf16.msra.mxu0 %v2711
    %3626 = vmatprep.subr.bf16.mxu0 %v2715
    %3627 = vmatpush1.bf16.msra.mxu0 %v2714
    %3628 = vmatprep.subr.bf16.mxu0 %v2718
    %3629 = vmatpush1.bf16.msra.mxu0 %v2717
    %3630 = vmatprep.subr.bf16.mxu0 %v2721
    %3631 = vmatpush1.bf16.msra.mxu0 %v2720
    %3632 = vmatprep.subr.bf16.mxu0 %v2724
    %3633 = vmatpush1.bf16.msra.mxu0 %v2723
    %3634 = vmatprep.subr.bf16.mxu0 %v2727
    %3635 = vmatpush1.bf16.msra.mxu0 %v2726
    %3636 = vmatprep.subr.bf16.mxu0 %v2730
    %3637 = vmatpush1.bf16.msra.mxu0 %v2729
    %3638 = vmatprep.subr.bf16.mxu0 %v2733
    %3639 = vmatpush1.bf16.msra.mxu0 %v2732
    %3640 = vmatprep.subr.bf16.mxu0 %v2736
    %3641 = vmatpush1.bf16.msra.mxu0 %v2735
    %3642 = vmatprep.subr.bf16.mxu0 %v2739
    %3643 = vmatpush1.bf16.msra.mxu0 %v2738
    %3644 = vmatprep.subr.bf16.mxu0 %v2742
    %3645 = vmatpush1.bf16.msra.mxu0 %v2741
    %3646 = vmatprep.mubr.bf16.mxu0 %v144
    %3647 = vmatmul.mubr.bf16.gmra.mrb[0].mxu0 %v143
    %v3648 = vpop.f32.mrb[0].mxu0
    %v3649 = vadd.f32 %v3608, %v3648
    %v3650 = vpop.f32.mrb[0].mxu0
    %v3651 = vadd.f32 %v3610, %v3650
    %v3652 = vpop.f32.mrb[0].mxu0
    %v3653 = vpop.f32.mrb[0].mxu0
    %3654 = vdwg.mxu0
    %3655 = vmatprep.subr.bf16.mxu0 %v2745
    %3656 = vmatpush1.bf16.msra.mxu0 %v2744
    %3657 = vmatprep.subr.bf16.mxu0 %v2748
    %3658 = vmatpush1.bf16.msra.mxu0 %v2747
    %3659 = vmatprep.subr.bf16.mxu0 %v2751
    %3660 = vmatpush1.bf16.msra.mxu0 %v2750
    %3661 = vmatprep.subr.bf16.mxu0 %v2754
    %3662 = vmatpush1.bf16.msra.mxu0 %v2753
    %3663 = vmatprep.subr.bf16.mxu0 %v2757
    %3664 = vmatpush1.bf16.msra.mxu0 %v2756
    %3665 = vmatprep.subr.bf16.mxu0 %v2760
    %3666 = vmatpush1.bf16.msra.mxu0 %v2759
    %3667 = vmatprep.subr.bf16.mxu0 %v2763
    %3668 = vmatpush1.bf16.msra.mxu0 %v2762
    %3669 = vmatprep.subr.bf16.mxu0 %v2766
    %3670 = vmatpush1.bf16.msra.mxu0 %v2765
    %3671 = vmatprep.subr.bf16.mxu0 %v2769
    %3672 = vmatpush1.bf16.msra.mxu0 %v2768
    %3673 = vmatprep.subr.bf16.mxu0 %v2772
    %3674 = vmatpush1.bf16.msra.mxu0 %v2771
    %3675 = vmatprep.subr.bf16.mxu0 %v2775
    %3676 = vmatpush1.bf16.msra.mxu0 %v2774
    %3677 = vmatprep.subr.bf16.mxu0 %v2778
    %3678 = vmatpush1.bf16.msra.mxu0 %v2777
    %3679 = vmatprep.subr.bf16.mxu0 %v2781
    %3680 = vmatpush1.bf16.msra.mxu0 %v2780
    %3681 = vmatprep.subr.bf16.mxu0 %v2784
    %3682 = vmatpush1.bf16.msra.mxu0 %v2783
    %3683 = vmatprep.subr.bf16.mxu0 %v2787
    %3684 = vmatpush1.bf16.msra.mxu0 %v2786
    %3685 = vmatprep.subr.bf16.mxu0 %v2790
    %3686 = vmatpush1.bf16.msra.mxu0 %v2789
    %3687 = vmatprep.mubr.bf16.mxu0 %v146
    %3688 = vmatmul.mubr.bf16.gmra.mrb[0].mxu0 %v145
    %v3689 = vpop.f32.mrb[0].mxu0
    %v3690 = vadd.f32 %v3649, %v3689
    %v3691 = vpop.f32.mrb[0].mxu0
    %v3692 = vadd.f32 %v3651, %v3691
    %v3693 = vpop.f32.mrb[0].mxu0
    %v3694 = vpop.f32.mrb[0].mxu0
    %3695 = vdwg.mxu0
    %3696 = vmatprep.subr.bf16.mxu0 %v2793
    %3697 = vmatpush1.bf16.msra.mxu0 %v2792
    %3698 = vmatprep.subr.bf16.mxu0 %v2796
    %3699 = vmatpush1.bf16.msra.mxu0 %v2795
    %3700 = vmatprep.subr.bf16.mxu0 %v2799
    %3701 = vmatpush1.bf16.msra.mxu0 %v2798
    %3702 = vmatprep.subr.bf16.mxu0 %v2802
    %3703 = vmatpush1.bf16.msra.mxu0 %v2801
    %3704 = vmatprep.subr.bf16.mxu0 %v2805
    %3705 = vmatpush1.bf16.msra.mxu0 %v2804
    %3706 = vmatprep.subr.bf16.mxu0 %v2808
    %3707 = vmatpush1.bf16.msra.mxu0 %v2807
    %3708 = vmatprep.subr.bf16.mxu0 %v2811
    %3709 = vmatpush1.bf16.msra.mxu0 %v2810
    %3710 = vmatprep.subr.bf16.mxu0 %v2814
    %3711 = vmatpush1.bf16.msra.mxu0 %v2813
    %3712 = vmatprep.subr.bf16.mxu0 %v2817
    %3713 = vmatpush1.bf16.msra.mxu0 %v2816
    %3714 = vmatprep.subr.bf16.mxu0 %v2820
    %3715 = vmatpush1.bf16.msra.mxu0 %v2819
    %3716 = vmatprep.subr.bf16.mxu0 %v2823
    %3717 = vmatpush1.bf16.msra.mxu0 %v2822
    %3718 = vmatprep.subr.bf16.mxu0 %v2826
    %3719 = vmatpush1.bf16.msra.mxu0 %v2825
    %3720 = vmatprep.subr.bf16.mxu0 %v2829
    %3721 = vmatpush1.bf16.msra.mxu0 %v2828
    %3722 = vmatprep.subr.bf16.mxu0 %v2832
    %3723 = vmatpush1.bf16.msra.mxu0 %v2831
    %3724 = vmatprep.subr.bf16.mxu0 %v2835
    %3725 = vmatpush1.bf16.msra.mxu0 %v2834
    %3726 = vmatprep.subr.bf16.mxu0 %v2838
    %3727 = vmatpush1.bf16.msra.mxu0 %v2837
    %3728 = vmatprep.mubr.bf16.mxu0 %v148
    %3729 = vmatmul.mubr.bf16.gmra.mrb[0].mxu0 %v147
    %v3730 = vpop.f32.mrb[0].mxu0
    %v3731 = vadd.f32 %v3690, %v3730
    %v3732 = vpop.f32.mrb[0].mxu0
    %v3733 = vadd.f32 %v3692, %v3732
    %v3734 = vpop.f32.mrb[0].mxu0
    %v3735 = vpop.f32.mrb[0].mxu0
    %3736 = vdwg.mxu0
    %3737 = vmatprep.subr.bf16.mxu0 %v2841
    %3738 = vmatpush1.bf16.msra.mxu0 %v2840
    %3739 = vmatprep.subr.bf16.mxu0 %v2844
    %3740 = vmatpush1.bf16.msra.mxu0 %v2843
    %3741 = vmatprep.subr.bf16.mxu0 %v2847
    %3742 = vmatpush1.bf16.msra.mxu0 %v2846
    %3743 = vmatprep.subr.bf16.mxu0 %v2850
    %3744 = vmatpush1.bf16.msra.mxu0 %v2849
    %3745 = vmatprep.subr.bf16.mxu0 %v2853
    %3746 = vmatpush1.bf16.msra.mxu0 %v2852
    %3747 = vmatprep.subr.bf16.mxu0 %v2856
    %3748 = vmatpush1.bf16.msra.mxu0 %v2855
    %3749 = vmatprep.subr.bf16.mxu0 %v2859
    %3750 = vmatpush1.bf16.msra.mxu0 %v2858
    %3751 = vmatprep.subr.bf16.mxu0 %v2862
    %3752 = vmatpush1.bf16.msra.mxu0 %v2861
    %3753 = vmatprep.subr.bf16.mxu0 %v2865
    %3754 = vmatpush1.bf16.msra.mxu0 %v2864
    %3755 = vmatprep.subr.bf16.mxu0 %v2868
    %3756 = vmatpush1.bf16.msra.mxu0 %v2867
    %3757 = vmatprep.subr.bf16.mxu0 %v2871
    %3758 = vmatpush1.bf16.msra.mxu0 %v2870
    %3759 = vmatprep.subr.bf16.mxu0 %v2874
    %3760 = vmatpush1.bf16.msra.mxu0 %v2873
    %3761 = vmatprep.subr.bf16.mxu0 %v2877
    %3762 = vmatpush1.bf16.msra.mxu0 %v2876
    %3763 = vmatprep.subr.bf16.mxu0 %v2880
    %3764 = vmatpush1.bf16.msra.mxu0 %v2879
    %3765 = vmatprep.subr.bf16.mxu0 %v2883
    %3766 = vmatpush1.bf16.msra.mxu0 %v2882
    %3767 = vmatprep.subr.bf16.mxu0 %v2886
    %3768 = vmatpush1.bf16.msra.mxu0 %v2885
    %3769 = vmatprep.mubr.bf16.mxu0 %v150
    %3770 = vmatmul.mubr.bf16.gmra.mrb[0].mxu0 %v149
    %v3771 = vpop.f32.mrb[0].mxu0
    %v3772 = vadd.f32 %v3731, %v3771
    %v3773 = vpop.f32.mrb[0].mxu0
    %v3774 = vadd.f32 %v3733, %v3773
    %v3775 = vpop.f32.mrb[0].mxu0
    %v3776 = vpop.f32.mrb[0].mxu0
    %3777 = vdwg.mxu0
    %3778 = vmatprep.subr.bf16.mxu0 0
    %3779 = vmatpush1.bf16.msra.mxu0 %v2410
    %3780 = vmatprep.subr.bf16.mxu0 0
    %3781 = vmatpush1.bf16.msra.mxu0 %v2413
    %3782 = vmatprep.subr.bf16.mxu0 0
    %3783 = vmatpush1.bf16.msra.mxu0 %v2416
    %3784 = vmatprep.subr.bf16.mxu0 0
    %3785 = vmatpush1.bf16.msra.mxu0 %v2419
    %3786 = vmatprep.subr.bf16.mxu0 0
    %3787 = vmatpush1.bf16.msra.mxu0 %v2422
    %3788 = vmatprep.subr.bf16.mxu0 0
    %3789 = vmatpush1.bf16.msra.mxu0 %v2425
    %3790 = vmatprep.subr.bf16.mxu0 0
    %3791 = vmatpush1.bf16.msra.mxu0 %v2428
    %3792 = vmatprep.subr.bf16.mxu0 0
    %3793 = vmatpush1.bf16.msra.mxu0 %v2431
    %3794 = vmatprep.subr.bf16.mxu0 0
    %3795 = vmatpush1.bf16.msra.mxu0 %v2434
    %3796 = vmatprep.subr.bf16.mxu0 0
    %3797 = vmatpush1.bf16.msra.mxu0 %v2437
    %3798 = vmatprep.subr.bf16.mxu0 0
    %3799 = vmatpush1.bf16.msra.mxu0 %v2440
    %3800 = vmatprep.subr.bf16.mxu0 0
    %3801 = vmatpush1.bf16.msra.mxu0 %v2443
    %3802 = vmatprep.subr.bf16.mxu0 0
    %3803 = vmatpush1.bf16.msra.mxu0 %v2446
    %3804 = vmatprep.subr.bf16.mxu0 0
    %3805 = vmatpush1.bf16.msra.mxu0 %v2449
    %3806 = vmatprep.subr.bf16.mxu0 0
    %3807 = vmatpush1.bf16.msra.mxu0 %v2452
    %3808 = vmatprep.subr.bf16.mxu0 0
    %3809 = vmatpush1.bf16.msra.mxu0 %v2455
    %3810 = vmatprep.mubr.bf16.mxu0 %v132
    %3811 = vmatmul.mubr.bf16.gmra.mrb[0].mxu0 %v131
    %v3812 = vpop.f32.mrb[0].mxu0
    %v3813 = vadd.f32 %v804, %v3812
    %v3814 = vpop.f32.mrb[0].mxu0
    %v3815 = vpop.f32.mrb[0].mxu0
    %v3816 = vpop.f32.mrb[0].mxu0
    %3817 = vdwg.mxu0
    %3818 = vmatprep.subr.bf16.mxu0 0
    %3819 = vmatpush1.bf16.msra.mxu0 %v2458
    %3820 = vmatprep.subr.bf16.mxu0 0
    %3821 = vmatpush1.bf16.msra.mxu0 %v2461
    %3822 = vmatprep.subr.bf16.mxu0 0
    %3823 = vmatpush1.bf16.msra.mxu0 %v2464
    %3824 = vmatprep.subr.bf16.mxu0 0
    %3825 = vmatpush1.bf16.msra.mxu0 %v2467
    %3826 = vmatprep.subr.bf16.mxu0 0
    %3827 = vmatpush1.bf16.msra.mxu0 %v2470
    %3828 = vmatprep.subr.bf16.mxu0 0
    %3829 = vmatpush1.bf16.msra.mxu0 %v2473
    %3830 = vmatprep.subr.bf16.mxu0 0
    %3831 = vmatpush1.bf16.msra.mxu0 %v2476
    %3832 = vmatprep.subr.bf16.mxu0 0
    %3833 = vmatpush1.bf16.msra.mxu0 %v2479
    %3834 = vmatprep.subr.bf16.mxu0 0
    %3835 = vmatpush1.bf16.msra.mxu0 %v2482
    %3836 = vmatprep.subr.bf16.mxu0 0
    %3837 = vmatpush1.bf16.msra.mxu0 %v2485
    %3838 = vmatprep.subr.bf16.mxu0 0
    %3839 = vmatpush1.bf16.msra.mxu0 %v2488
    %3840 = vmatprep.subr.bf16.mxu0 0
    %3841 = vmatpush1.bf16.msra.mxu0 %v2491
    %3842 = vmatprep.subr.bf16.mxu0 0
    %3843 = vmatpush1.bf16.msra.mxu0 %v2494
    %3844 = vmatprep.subr.bf16.mxu0 0
    %3845 = vmatpush1.bf16.msra.mxu0 %v2497
    %3846 = vmatprep.subr.bf16.mxu0 0
    %3847 = vmatpush1.bf16.msra.mxu0 %v2500
    %3848 = vmatprep.subr.bf16.mxu0 0
    %3849 = vmatpush1.bf16.msra.mxu0 %v2503
    %3850 = vmatprep.mubr.bf16.mxu0 %v134
    %3851 = vmatmul.mubr.bf16.gmra.mrb[0].mxu0 %v133
    %v3852 = vpop.f32.mrb[0].mxu0
    %v3853 = vadd.f32 %v3813, %v3852
    %v3854 = vpop.f32.mrb[0].mxu0
    %v3855 = vpop.f32.mrb[0].mxu0
    %v3856 = vpop.f32.mrb[0].mxu0
    %3857 = vdwg.mxu0
    %3858 = vmatprep.subr.bf16.mxu0 0
    %3859 = vmatpush1.bf16.msra.mxu0 %v2506
    %3860 = vmatprep.subr.bf16.mxu0 0
    %3861 = vmatpush1.bf16.msra.mxu0 %v2509
    %3862 = vmatprep.subr.bf16.mxu0 0
    %3863 = vmatpush1.bf16.msra.mxu0 %v2512
    %3864 = vmatprep.subr.bf16.mxu0 0
    %3865 = vmatpush1.bf16.msra.mxu0 %v2515
    %3866 = vmatprep.subr.bf16.mxu0 0
    %3867 = vmatpush1.bf16.msra.mxu0 %v2518
    %3868 = vmatprep.subr.bf16.mxu0 0
    %3869 = vmatpush1.bf16.msra.mxu0 %v2521
    %3870 = vmatprep.subr.bf16.mxu0 0
    %3871 = vmatpush1.bf16.msra.mxu0 %v2524
    %3872 = vmatprep.subr.bf16.mxu0 0
    %3873 = vmatpush1.bf16.msra.mxu0 %v2527
    %3874 = vmatprep.subr.bf16.mxu0 0
    %3875 = vmatpush1.bf16.msra.mxu0 %v2530
    %3876 = vmatprep.subr.bf16.mxu0 0
    %3877 = vmatpush1.bf16.msra.mxu0 %v2533
    %3878 = vmatprep.subr.bf16.mxu0 0
    %3879 = vmatpush1.bf16.msra.mxu0 %v2536
    %3880 = vmatprep.subr.bf16.mxu0 0
    %3881 = vmatpush1.bf16.msra.mxu0 %v2539
    %3882 = vmatprep.subr.bf16.mxu0 0
    %3883 = vmatpush1.bf16.msra.mxu0 %v2542
    %3884 = vmatprep.subr.bf16.mxu0 0
    %3885 = vmatpush1.bf16.msra.mxu0 %v2545
    %3886 = vmatprep.subr.bf16.mxu0 0
    %3887 = vmatpush1.bf16.msra.mxu0 %v2548
    %3888 = vmatprep.subr.bf16.mxu0 0
    %3889 = vmatpush1.bf16.msra.mxu0 %v2551
    %3890 = vmatprep.mubr.bf16.mxu0 %v136
    %3891 = vmatmul.mubr.bf16.gmra.mrb[0].mxu0 %v135
    %v3892 = vpop.f32.mrb[0].mxu0
    %v3893 = vadd.f32 %v3853, %v3892
    %v3894 = vpop.f32.mrb[0].mxu0
    %v3895 = vpop.f32.mrb[0].mxu0
    %v3896 = vpop.f32.mrb[0].mxu0
    %3897 = vdwg.mxu0
    %3898 = vmatprep.subr.bf16.mxu0 0
    %3899 = vmatpush1.bf16.msra.mxu0 %v2554
    %3900 = vmatprep.subr.bf16.mxu0 0
    %3901 = vmatpush1.bf16.msra.mxu0 %v2557
    %3902 = vmatprep.subr.bf16.mxu0 0
    %3903 = vmatpush1.bf16.msra.mxu0 %v2560
    %3904 = vmatprep.subr.bf16.mxu0 0
    %3905 = vmatpush1.bf16.msra.mxu0 %v2563
    %3906 = vmatprep.subr.bf16.mxu0 0
    %3907 = vmatpush1.bf16.msra.mxu0 %v2566
    %3908 = vmatprep.subr.bf16.mxu0 0
    %3909 = vmatpush1.bf16.msra.mxu0 %v2569
    %3910 = vmatprep.subr.bf16.mxu0 0
    %3911 = vmatpush1.bf16.msra.mxu0 %v2572
    %3912 = vmatprep.subr.bf16.mxu0 0
    %3913 = vmatpush1.bf16.msra.mxu0 %v2575
    %3914 = vmatprep.subr.bf16.mxu0 0
    %3915 = vmatpush1.bf16.msra.mxu0 %v2578
    %3916 = vmatprep.subr.bf16.mxu0 0
    %3917 = vmatpush1.bf16.msra.mxu0 %v2581
    %3918 = vmatprep.subr.bf16.mxu0 0
    %3919 = vmatpush1.bf16.msra.mxu0 %v2584
    %3920 = vmatprep.subr.bf16.mxu0 0
    %3921 = vmatpush1.bf16.msra.mxu0 %v2587
    %3922 = vmatprep.subr.bf16.mxu0 0
    %3923 = vmatpush1.bf16.msra.mxu0 %v2590
    %3924 = vmatprep.subr.bf16.mxu0 0
    %3925 = vmatpush1.bf16.msra.mxu0 %v2593
    %3926 = vmatprep.subr.bf16.mxu0 0
    %3927 = vmatpush1.bf16.msra.mxu0 %v2596
    %3928 = vmatprep.subr.bf16.mxu0 0
    %3929 = vmatpush1.bf16.msra.mxu0 %v2599
    %3930 = vmatprep.mubr.bf16.mxu0 %v138
    %3931 = vmatmul.mubr.bf16.gmra.mrb[0].mxu0 %v137
    %v3932 = vpop.f32.mrb[0].mxu0
    %v3933 = vadd.f32 %v3893, %v3932
    %v3934 = vpop.f32.mrb[0].mxu0
    %v3935 = vpop.f32.mrb[0].mxu0
    %v3936 = vpop.f32.mrb[0].mxu0
    %3937 = vdwg.mxu0
    %3938 = vmatprep.subr.bf16.mxu0 0
    %3939 = vmatpush1.bf16.msra.mxu0 %v2602
    %3940 = vmatprep.subr.bf16.mxu0 0
    %3941 = vmatpush1.bf16.msra.mxu0 %v2605
    %3942 = vmatprep.subr.bf16.mxu0 0
    %3943 = vmatpush1.bf16.msra.mxu0 %v2608
    %3944 = vmatprep.subr.bf16.mxu0 0
    %3945 = vmatpush1.bf16.msra.mxu0 %v2611
    %3946 = vmatprep.subr.bf16.mxu0 0
    %3947 = vmatpush1.bf16.msra.mxu0 %v2614
    %3948 = vmatprep.subr.bf16.mxu0 0
    %3949 = vmatpush1.bf16.msra.mxu0 %v2617
    %3950 = vmatprep.subr.bf16.mxu0 0
    %3951 = vmatpush1.bf16.msra.mxu0 %v2620
    %3952 = vmatprep.subr.bf16.mxu0 0
    %3953 = vmatpush1.bf16.msra.mxu0 %v2623
    %3954 = vmatprep.subr.bf16.mxu0 0
    %3955 = vmatpush1.bf16.msra.mxu0 %v2626
    %3956 = vmatprep.subr.bf16.mxu0 0
    %3957 = vmatpush1.bf16.msra.mxu0 %v2629
    %3958 = vmatprep.subr.bf16.mxu0 0
    %3959 = vmatpush1.bf16.msra.mxu0 %v2632
    %3960 = vmatprep.subr.bf16.mxu0 0
    %3961 = vmatpush1.bf16.msra.mxu0 %v2635
    %3962 = vmatprep.subr.bf16.mxu0 0
    %3963 = vmatpush1.bf16.msra.mxu0 %v2638
    %3964 = vmatprep.subr.bf16.mxu0 0
    %3965 = vmatpush1.bf16.msra.mxu0 %v2641
    %3966 = vmatprep.subr.bf16.mxu0 0
    %3967 = vmatpush1.bf16.msra.mxu0 %v2644
    %3968 = vmatprep.subr.bf16.mxu0 0
    %3969 = vmatpush1.bf16.msra.mxu0 %v2647
    %3970 = vmatprep.mubr.bf16.mxu0 %v140
    %3971 = vmatmul.mubr.bf16.gmra.mrb[0].mxu0 %v139
    %v3972 = vpop.f32.mrb[0].mxu0
    %v3973 = vadd.f32 %v3933, %v3972
    %v3974 = vpop.f32.mrb[0].mxu0
    %v3975 = vpop.f32.mrb[0].mxu0
    %v3976 = vpop.f32.mrb[0].mxu0
    %3977 = vdwg.mxu0
    %3978 = vmatprep.subr.bf16.mxu0 0
    %3979 = vmatpush1.bf16.msra.mxu0 %v2650
    %3980 = vmatprep.subr.bf16.mxu0 0
    %3981 = vmatpush1.bf16.msra.mxu0 %v2653
    %3982 = vmatprep.subr.bf16.mxu0 0
    %3983 = vmatpush1.bf16.msra.mxu0 %v2656
    %3984 = vmatprep.subr.bf16.mxu0 0
    %3985 = vmatpush1.bf16.msra.mxu0 %v2659
    %3986 = vmatprep.subr.bf16.mxu0 0
    %3987 = vmatpush1.bf16.msra.mxu0 %v2662
    %3988 = vmatprep.subr.bf16.mxu0 0
    %3989 = vmatpush1.bf16.msra.mxu0 %v2665
    %3990 = vmatprep.subr.bf16.mxu0 0
    %3991 = vmatpush1.bf16.msra.mxu0 %v2668
    %3992 = vmatprep.subr.bf16.mxu0 0
    %3993 = vmatpush1.bf16.msra.mxu0 %v2671
    %3994 = vmatprep.subr.bf16.mxu0 0
    %3995 = vmatpush1.bf16.msra.mxu0 %v2674
    %3996 = vmatprep.subr.bf16.mxu0 0
    %3997 = vmatpush1.bf16.msra.mxu0 %v2677
    %3998 = vmatprep.subr.bf16.mxu0 0
    %3999 = vmatpush1.bf16.msra.mxu0 %v2680
    %4000 = vmatprep.subr.bf16.mxu0 0
    %4001 = vmatpush1.bf16.msra.mxu0 %v2683
    %4002 = vmatprep.subr.bf16.mxu0 0
    %4003 = vmatpush1.bf16.msra.mxu0 %v2686
    %4004 = vmatprep.subr.bf16.mxu0 0
    %4005 = vmatpush1.bf16.msra.mxu0 %v2689
    %4006 = vmatprep.subr.bf16.mxu0 0
    %4007 = vmatpush1.bf16.msra.mxu0 %v2692
    %4008 = vmatprep.subr.bf16.mxu0 0
    %4009 = vmatpush1.bf16.msra.mxu0 %v2695
    %4010 = vmatprep.mubr.bf16.mxu0 %v142
    %4011 = vmatmul.mubr.bf16.gmra.mrb[0].mxu0 %v141
    %v4012 = vpop.f32.mrb[0].mxu0
    %v4013 = vadd.f32 %v3973, %v4012
    %v4014 = vpop.f32.mrb[0].mxu0
    %v4015 = vpop.f32.mrb[0].mxu0
    %v4016 = vpop.f32.mrb[0].mxu0
    %4017 = vdwg.mxu0
    %4018 = vmatprep.subr.bf16.mxu0 0
    %4019 = vmatpush1.bf16.msra.mxu0 %v2698
    %4020 = vmatprep.subr.bf16.mxu0 0
    %4021 = vmatpush1.bf16.msra.mxu0 %v2701
    %4022 = vmatprep.subr.bf16.mxu0 0
    %4023 = vmatpush1.bf16.msra.mxu0 %v2704
    %4024 = vmatprep.subr.bf16.mxu0 0
    %4025 = vmatpush1.bf16.msra.mxu0 %v2707
    %4026 = vmatprep.subr.bf16.mxu0 0
    %4027 = vmatpush1.bf16.msra.mxu0 %v2710
    %4028 = vmatprep.subr.bf16.mxu0 0
    %4029 = vmatpush1.bf16.msra.mxu0 %v2713
    %4030 = vmatprep.subr.bf16.mxu0 0
    %4031 = vmatpush1.bf16.msra.mxu0 %v2716
    %4032 = vmatprep.subr.bf16.mxu0 0
    %4033 = vmatpush1.bf16.msra.mxu0 %v2719
    %4034 = vmatprep.subr.bf16.mxu0 0
    %4035 = vmatpush1.bf16.msra.mxu0 %v2722
    %4036 = vmatprep.subr.bf16.mxu0 0
    %4037 = vmatpush1.bf16.msra.mxu0 %v2725
    %4038 = vmatprep.subr.bf16.mxu0 0
    %4039 = vmatpush1.bf16.msra.mxu0 %v2728
    %4040 = vmatprep.subr.bf16.mxu0 0
    %4041 = vmatpush1.bf16.msra.mxu0 %v2731
    %4042 = vmatprep.subr.bf16.mxu0 0
    %4043 = vmatpush1.bf16.msra.mxu0 %v2734
    %4044 = vmatprep.subr.bf16.mxu0 0
    %4045 = vmatpush1.bf16.msra.mxu0 %v2737
    %4046 = vmatprep.subr.bf16.mxu0 0
    %4047 = vmatpush1.bf16.msra.mxu0 %v2740
    %4048 = vmatprep.subr.bf16.mxu0 0
    %4049 = vmatpush1.bf16.msra.mxu0 %v2743
    %4050 = vmatprep.mubr.bf16.mxu0 %v144
    %4051 = vmatmul.mubr.bf16.gmra.mrb[0].mxu0 %v143
    %v4052 = vpop.f32.mrb[0].mxu0
    %v4053 = vadd.f32 %v4013, %v4052
    %v4054 = vpop.f32.mrb[0].mxu0
    %v4055 = vpop.f32.mrb[0].mxu0
    %v4056 = vpop.f32.mrb[0].mxu0
    %4057 = vdwg.mxu0
    %4058 = vmatprep.subr.bf16.mxu0 0
    %4059 = vmatpush1.bf16.msra.mxu0 %v2746
    %4060 = vmatprep.subr.bf16.mxu0 0
    %4061 = vmatpush1.bf16.msra.mxu0 %v2749
    %4062 = vmatprep.subr.bf16.mxu0 0
    %4063 = vmatpush1.bf16.msra.mxu0 %v2752
    %4064 = vmatprep.subr.bf16.mxu0 0
    %4065 = vmatpush1.bf16.msra.mxu0 %v2755
    %4066 = vmatprep.subr.bf16.mxu0 0
    %4067 = vmatpush1.bf16.msra.mxu0 %v2758
    %4068 = vmatprep.subr.bf16.mxu0 0
    %4069 = vmatpush1.bf16.msra.mxu0 %v2761
    %4070 = vmatprep.subr.bf16.mxu0 0
    %4071 = vmatpush1.bf16.msra.mxu0 %v2764
    %4072 = vmatprep.subr.bf16.mxu0 0
    %4073 = vmatpush1.bf16.msra.mxu0 %v2767
    %4074 = vmatprep.subr.bf16.mxu0 0
    %4075 = vmatpush1.bf16.msra.mxu0 %v2770
    %4076 = vmatprep.subr.bf16.mxu0 0
    %4077 = vmatpush1.bf16.msra.mxu0 %v2773
    %4078 = vmatprep.subr.bf16.mxu0 0
    %4079 = vmatpush1.bf16.msra.mxu0 %v2776
    %4080 = vmatprep.subr.bf16.mxu0 0
    %4081 = vmatpush1.bf16.msra.mxu0 %v2779
    %4082 = vmatprep.subr.bf16.mxu0 0
    %4083 = vmatpush1.bf16.msra.mxu0 %v2782
    %4084 = vmatprep.subr.bf16.mxu0 0
    %4085 = vmatpush1.bf16.msra.mxu0 %v2785
    %4086 = vmatprep.subr.bf16.mxu0 0
    %4087 = vmatpush1.bf16.msra.mxu0 %v2788
    %4088 = vmatprep.subr.bf16.mxu0 0
    %4089 = vmatpush1.bf16.msra.mxu0 %v2791
    %4090 = vmatprep.mubr.bf16.mxu0 %v146
    %4091 = vmatmul.mubr.bf16.gmra.mrb[0].mxu0 %v145
    %v4092 = vpop.f32.mrb[0].mxu0
    %v4093 = vadd.f32 %v4053, %v4092
    %v4094 = vpop.f32.mrb[0].mxu0
    %v4095 = vpop.f32.mrb[0].mxu0
    %v4096 = vpop.f32.mrb[0].mxu0
    %4097 = vdwg.mxu0
    %4098 = vmatprep.subr.bf16.mxu0 0
    %4099 = vmatpush1.bf16.msra.mxu0 %v2794
    %4100 = vmatprep.subr.bf16.mxu0 0
    %4101 = vmatpush1.bf16.msra.mxu0 %v2797
    %4102 = vmatprep.subr.bf16.mxu0 0
    %4103 = vmatpush1.bf16.msra.mxu0 %v2800
    %4104 = vmatprep.subr.bf16.mxu0 0
    %4105 = vmatpush1.bf16.msra.mxu0 %v2803
    %4106 = vmatprep.subr.bf16.mxu0 0
    %4107 = vmatpush1.bf16.msra.mxu0 %v2806
    %4108 = vmatprep.subr.bf16.mxu0 0
    %4109 = vmatpush1.bf16.msra.mxu0 %v2809
    %4110 = vmatprep.subr.bf16.mxu0 0
    %4111 = vmatpush1.bf16.msra.mxu0 %v2812
    %4112 = vmatprep.subr.bf16.mxu0 0
    %4113 = vmatpush1.bf16.msra.mxu0 %v2815
    %4114 = vmatprep.subr.bf16.mxu0 0
    %4115 = vmatpush1.bf16.msra.mxu0 %v2818
    %4116 = vmatprep.subr.bf16.mxu0 0
    %4117 = vmatpush1.bf16.msra.mxu0 %v2821
    %4118 = vmatprep.subr.bf16.mxu0 0
    %4119 = vmatpush1.bf16.msra.mxu0 %v2824
    %4120 = vmatprep.subr.bf16.mxu0 0
    %4121 = vmatpush1.bf16.msra.mxu0 %v2827
    %4122 = vmatprep.subr.bf16.mxu0 0
    %4123 = vmatpush1.bf16.msra.mxu0 %v2830
    %4124 = vmatprep.subr.bf16.mxu0 0
    %4125 = vmatpush1.bf16.msra.mxu0 %v2833
    %4126 = vmatprep.subr.bf16.mxu0 0
    %4127 = vmatpush1.bf16.msra.mxu0 %v2836
    %4128 = vmatprep.subr.bf16.mxu0 0
    %4129 = vmatpush1.bf16.msra.mxu0 %v2839
    %4130 = vmatprep.mubr.bf16.mxu0 %v148
    %4131 = vmatmul.mubr.bf16.gmra.mrb[0].mxu0 %v147
    %v4132 = vpop.f32.mrb[0].mxu0
    %v4133 = vadd.f32 %v4093, %v4132
    %v4134 = vpop.f32.mrb[0].mxu0
    %v4135 = vpop.f32.mrb[0].mxu0
    %v4136 = vpop.f32.mrb[0].mxu0
    %4137 = vdwg.mxu0
    %4138 = vmatprep.subr.bf16.mxu0 0
    %4139 = vmatpush1.bf16.msra.mxu0 %v2842
    %4140 = vmatprep.subr.bf16.mxu0 0
    %4141 = vmatpush1.bf16.msra.mxu0 %v2845
    %4142 = vmatprep.subr.bf16.mxu0 0
    %4143 = vmatpush1.bf16.msra.mxu0 %v2848
    %4144 = vmatprep.subr.bf16.mxu0 0
    %4145 = vmatpush1.bf16.msra.mxu0 %v2851
    %4146 = vmatprep.subr.bf16.mxu0 0
    %4147 = vmatpush1.bf16.msra.mxu0 %v2854
    %4148 = vmatprep.subr.bf16.mxu0 0
    %4149 = vmatpush1.bf16.msra.mxu0 %v2857
    %4150 = vmatprep.subr.bf16.mxu0 0
    %4151 = vmatpush1.bf16.msra.mxu0 %v2860
    %4152 = vmatprep.subr.bf16.mxu0 0
    %4153 = vmatpush1.bf16.msra.mxu0 %v2863
    %4154 = vmatprep.subr.bf16.mxu0 0
    %4155 = vmatpush1.bf16.msra.mxu0 %v2866
    %4156 = vmatprep.subr.bf16.mxu0 0
    %4157 = vmatpush1.bf16.msra.mxu0 %v2869
    %4158 = vmatprep.subr.bf16.mxu0 0
    %4159 = vmatpush1.bf16.msra.mxu0 %v2872
    %4160 = vmatprep.subr.bf16.mxu0 0
    %4161 = vmatpush1.bf16.msra.mxu0 %v2875
    %4162 = vmatprep.subr.bf16.mxu0 0
    %4163 = vmatpush1.bf16.msra.mxu0 %v2878
    %4164 = vmatprep.subr.bf16.mxu0 0
    %4165 = vmatpush1.bf16.msra.mxu0 %v2881
    %4166 = vmatprep.subr.bf16.mxu0 0
    %4167 = vmatpush1.bf16.msra.mxu0 %v2884
    %4168 = vmatprep.subr.bf16.mxu0 0
    %4169 = vmatpush1.bf16.msra.mxu0 %v2887
    %4170 = vmatprep.mubr.bf16.mxu0 %v150
    %4171 = vmatmul.mubr.bf16.gmra.mrb[0].mxu0 %v149
    %v4172 = vpop.f32.mrb[0].mxu0
    %v4173 = vadd.f32 %v4133, %v4172
    %v4174 = vpop.f32.mrb[0].mxu0
    %v4175 = vpop.f32.mrb[0].mxu0
    %v4176 = vpop.f32.mrb[0].mxu0
    %4177 = vdwg.mxu0
    %v4181 = vcombine.low %v3772, %v3774
    %v4183 = vunpack.c.l.s4 1983009808
    %v4184 = vunpack.c.0.s8 %v4183
    %v4185 = vlaneseq
    %v4186 = vshrl.u32 %v4185, 7
    %v4187 = vsub.s32 %v4184, %v4186
    %v4188 = vrot.slane %v4181, %v4187
    %v4190 = vunpack.c.l.s4 1983009808
    %v4191 = vunpack.c.0.s8 %v4190
    %v4192 = vlaneseq
    %v4193 = vshrl.u32 %v4192, 7
    %v4194 = vsub.s32 %v4191, %v4193
    %v4195 = vrot.slane %v4173, %v4194
    %v4196 = vcombine.low %v4188, %v4195
    %4198 = vst [vmem:[#allocation2] sm:$0x3f] %v4196
    // Predicated region
    $region14: #{_lambda_.9} parent=1 // pred_check
      _
    $region15: #{_lambda_.9} parent=1 // pred_check_branch
      %4200 = sbr.rel (0) target = $region17
    $region16: #{_lambda_.9} parent=1 // pred_region
      %s4202 = ssub.s32 96, 96
      %4203 = vsyncadd [#allocation3], %s4202
      %s4205 = sshll.u32 [#allocation2], 4
      %s4206 = int_to_ptr.vmem [resolvable:$true] %s4205
      %4208 = dma.vmem_to_hbm [thread:$0]  %s4206, 96, %s3, [#allocation3]
    $region17: #{_lambda_.9} parent=1 // pred_fallthru
      _
    // Predicated region
    $region18: #{_lambda_.9} parent=1 // pred_check
      _
    $region19: #{_lambda_.9} parent=1 // pred_check_branch
      %4210 = sbr.rel (0) target = $region21
    $region20: #{_lambda_.9} parent=1 // pred_region
      %4211 = dma.done [#allocation3], 96
    $region21: #{_lambda_.9} parent=1 // pred_fallthru
      _
    %4212 = vsyncpa [#allocation3], 1

</llo_original>
